<compile_context>
chip_gen: v7x
topology: tpu7x:2x2x1
jax: 0.10.0
libtpu: 0.0.40
codegen_flags: <defaults>
</compile_context>

<pallas_src>
import functools

import jax
import jax.numpy as jnp
from jax import lax
from jax.experimental import pallas as pl
from jax.experimental.pallas import tpu as pltpu

# --------------------------- model configuration ----------------------------
# TODO(synk): MONAI DenseNet121 (pretrained=True, init_features=64, growth=32,
# blocks=(6,12,24,16)) is scaled down to a synthetic-weight DenseNet with
# init_features=16, growth=8, blocks=(2,2,2,2) so the script runs at small
# shapes; the layer structure (conv0/BN/ReLU/maxpool, BN-ReLU-conv1x1-BN-ReLU-
# conv3x3 dense layers with channel concat, BN-ReLU-conv1x1-avgpool
# transitions, final BN) is preserved.
INIT_FEATURES = 16
GROWTH = 8
BN_SIZE = 4
BLOCK_CONFIG = (2, 2, 2, 2)
BN_EPS = 1e-5

_MM_TM = 256                      # LHS row tile (fits v6e/v7x 256-wide MXU)
_FC_TK = 512                      # FC reduction (K) tile, multiple of 128
_POOL_TR = 512                    # pooling row tile
_VMEM_LIMIT = 32 * 1024 * 1024    # safe on v5e/v6e (128 MiB) and v7x (64 MiB)


def _bn_scale_shift(p):
    # TODO(synk): BatchNorm is implemented in inference (eval) mode using
    # running statistics (the intended usage of a pretrained backbone), not
    # train-mode batch statistics.
    scale = p["gamma"] * lax.rsqrt(p["var"] + BN_EPS)
    shift = p["beta"] - p["mean"] * scale
    return scale, shift


# ------------------------------ Pallas kernels -------------------------------
def _fused_mm_kernel(*refs, has_in, in_relu, has_out, out_relu):
    """o = epilogue( prologue(x) @ w ).

    prologue: per-K-column affine (+ReLU)  -- folds an eval-mode BN(+ReLU)
              sitting *before* the conv.
    epilogue: per-N-column affine (+ReLU)  -- folds an eval-mode BN(+ReLU)
              sitting *after* the conv.  Both ride the VPU while the MXU
              result drains; nothing but the final activation hits HBM.
    """
    i = 0
    x_ref = refs[i]; i += 1
    w_ref = refs[i]; i += 1
    if has_in:
        is_ref, it_ref = refs[i], refs[i + 1]; i += 2
    if has_out:
        os_ref, ot_ref = refs[i], refs[i + 1]; i += 2
    o_ref = refs[i]

    x = x_ref[...]
    if has_in:
        x = x * is_ref[...] + it_ref[...]
        if in_relu:
            x = jnp.maximum(x, 0.0)
    y = jnp.dot(x, w_ref[...], preferred_element_type=jnp.float32)
    if has_out:
        y = y * os_ref[...] + ot_ref[...]
        if out_relu:
            y = jnp.maximum(y, 0.0)
    o_ref[...] = y


def pallas_fused_matmul(x, w, *, in_scale=None, in_shift=None, in_relu=False,
                        out_scale=None, out_shift=None, out_relu=False,
                        tm=_MM_TM):
    """(M, K) @ (K, N) with optional fused BN/ReLU prologue and epilogue.

    No row padding: the grid masks the ragged last M block.  Whole K stays in
    VMEM (K <= ~1.2k for every conv here, well under any VMEM budget).
    """
    M, K = x.shape
    N = w.shape[1]
    has_in = in_scale is not None
    has_out = out_scale is not None
    tm_eff = min(tm, M)                      # full-M single block when M < tm
    grid = (pl.cdiv(M, tm_eff),)

    in_specs = [pl.BlockSpec((tm_eff, K), lambda i: (i, 0)),
                pl.BlockSpec((K, N), lambda i: (0, 0))]
    args = [x, w]
    if has_in:
        in_specs += [pl.BlockSpec((1, K), lambda i: (0, 0)),
                     pl.BlockSpec((1, K), lambda i: (0, 0))]
        args += [in_scale.reshape(1, K), in_shift.reshape(1, K)]
    if has_out:
        in_specs += [pl.BlockSpec((1, N), lambda i: (0, 0)),
                     pl.BlockSpec((1, N), lambda i: (0, 0))]
        args += [out_scale.reshape(1, N), out_shift.reshape(1, N)]

    kernel = functools.partial(_fused_mm_kernel, has_in=has_in, in_relu=in_relu,
                               has_out=has_out, out_relu=out_relu)
    return pl.pallas_call(
        kernel,
        out_shape=jax.ShapeDtypeStruct((M, N), jnp.float32),
        grid=grid,
        in_specs=in_specs,
        out_specs=pl.BlockSpec((tm_eff, N), lambda i: (i, 0)),
        compiler_params=pltpu.CompilerParams(
            dimension_semantics=("parallel",),
            vmem_limit_bytes=_VMEM_LIMIT),
        cost_estimate=pl.CostEstimate(
            flops=2 * M * K * N,
            transcendentals=0,
            bytes_accessed=4 * (M * K + K * N + M * N)),
    )(*args)


def _conv3x3_kernel(x_ref, w_ref, o_ref, *, Ho, Wo):
    """3x3 / stride-1 / pad-1 conv for one batch element, NHWC.

    x_ref: (1, Ho+2, Wo+2, Cin) zero-padded input block (VMEM resident)
    w_ref: (9, Cin, Cout) taps ordered (dy, dx)
    o_ref: (1, Ho, Wo, Cout)
    The 9 window taps are gathered in-kernel (no host-side im2col); one
    (Wo, Cin) x (Cin, Cout) MXU dot per tap per output row.
    """
    def row_body(h, carry):
        acc = None
        for dy in range(3):
            for dx in range(3):
                win = x_ref[0, pl.ds(h + dy, 1), pl.ds(dx, Wo), :][0]  # (Wo, Cin)
                part = jnp.dot(win, w_ref[dy * 3 + dx],
                               preferred_element_type=jnp.float32)
                acc = part if acc is None else acc + part
        o_ref[0, pl.ds(h, 1)] = acc[None]
        return carry

    lax.fori_loop(0, Ho, row_body, 0)


def pallas_conv3x3_s1(x, w):
    """3x3, stride-1, pad-1, bias-free conv.  x: (B,H,W,Cin) NHWC, w: (O,I,3,3)."""
    B, H, W, Cin = x.shape
    O = w.shape[0]
    xp = jnp.pad(x, ((0, 0), (1, 1), (1, 1), (0, 0)))
    wt = jnp.transpose(w, (2, 3, 1, 0)).reshape(9, Cin, O)   # taps (dy, dx)-major
    return pl.pallas_call(
        functools.partial(_conv3x3_kernel, Ho=H, Wo=W),
        out_shape=jax.ShapeDtypeStruct((B, H, W, O), jnp.float32),
        grid=(B,),
        in_specs=[pl.BlockSpec((1, H + 2, W + 2, Cin), lambda b: (b, 0, 0, 0)),
                  pl.BlockSpec((9, Cin, O), lambda b: (0, 0, 0))],
        out_specs=pl.BlockSpec((1, H, W, O), lambda b: (b, 0, 0, 0)),
        compiler_params=pltpu.CompilerParams(
            dimension_semantics=("parallel",),
            vmem_limit_bytes=_VMEM_LIMIT),
        cost_estimate=pl.CostEstimate(
            flops=2 * B * H * W * 9 * Cin * O,
            transcendentals=0,
            bytes_accessed=4 * (B * (H + 2) * (W + 2) * Cin
                                + 9 * Cin * O + B * H * W * O)),
    )(xp, wt)


def _window_reduce_kernel(*refs, op, nwin):
    """Elementwise max/mean of nwin equally-shaped window slices."""
    acc = refs[0][...]
    for r in refs[1:nwin]:
        acc = jnp.maximum(acc, r[...]) if op == "max" else acc + r[...]
    if op == "mean":
        acc = acc * (1.0 / nwin)
    refs[nwin][...] = acc


def pallas_window_reduce(windows, op):
    """Reduce a list of (R, C) pooling-window slices -> (R, C), row-tiled."""
    R, C = windows[0].shape
    n = len(windows)
    tr = R if R <= _POOL_TR else _POOL_TR
    spec = pl.BlockSpec((tr, C), lambda i: (i, 0))
    return pl.pallas_call(
        functools.partial(_window_reduce_kernel, op=op, nwin=n),
        out_shape=jax.ShapeDtypeStruct((R, C), jnp.float32),
        grid=(pl.cdiv(R, tr),),
        in_specs=[spec] * n,
        out_specs=spec,
        compiler_params=pltpu.CompilerParams(
            dimension_semantics=("parallel",),
            vmem_limit_bytes=_VMEM_LIMIT),
    )(*windows)


def _fc_kernel(x_ref, w_ref, s_ref, t_ref, b_ref, o_ref, acc_ref):
    """FC as a streamed K reduction; prologue folds the final BN (norm5)."""
    @pl.when(pl.program_id(0) == 0)
    def _():
        acc_ref[...] = jnp.zeros_like(acc_ref)

    x = x_ref[...] * s_ref[...] + t_ref[...]          # final BN, no ReLU
    acc_ref[...] += jnp.dot(x, w_ref[...], preferred_element_type=jnp.float32)

    @pl.when(pl.program_id(0) == pl.num_programs(0) - 1)
    def _():
        o_ref[...] = acc_ref[...] + b_ref[...]


def pallas_fc(flat, w, b, in_scale, in_shift, tk=_FC_TK):
    """(B, K) @ (K, N) + b with per-K-column affine prologue; K tiled so the
    production-scale K (~300k) never needs a full-K VMEM block."""
    B, K = flat.shape
    N = w.shape[1]
    Kp = pl.cdiv(K, tk) * tk
    if Kp != K:                                   # zero-pad K (exact: w pad = 0)
        pad = Kp - K
        flat = jnp.pad(flat, ((0, 0), (0, pad)))
        w = jnp.pad(w, ((0, pad), (0, 0)))
        in_scale = jnp.pad(in_scale, ((0, pad),))
        in_shift = jnp.pad(in_shift, ((0, pad),))
    return pl.pallas_call(
        _fc_kernel,
        out_shape=jax.ShapeDtypeStruct((B, N), jnp.float32),
        grid=(Kp // tk,),
        in_specs=[
            pl.BlockSpec((B, tk), lambda k: (0, k)),
            pl.BlockSpec((tk, N), lambda k: (k, 0)),
            pl.BlockSpec((1, tk), lambda k: (0, k)),
            pl.BlockSpec((1, tk), lambda k: (0, k)),
            pl.BlockSpec((1, N), lambda k: (0, 0)),
        ],
        out_specs=pl.BlockSpec((B, N), lambda k: (0, 0)),
        scratch_shapes=[pltpu.VMEM((B, N), jnp.float32)],
        compiler_params=pltpu.CompilerParams(
            dimension_semantics=("arbitrary",),
            vmem_limit_bytes=_VMEM_LIMIT),
        cost_estimate=pl.CostEstimate(
            flops=2 * B * Kp * N,
            transcendentals=0,
            bytes_accessed=4 * (B * Kp + Kp * N + B * N + 2 * Kp + N)),
    )(flat, w, in_scale.reshape(1, Kp), in_shift.reshape(1, Kp), b.reshape(1, N))


# ------------------------- layer implementations -----------------------------
def conv_im2col(x, w, stride, padding, **fuse_kwargs):
    """General conv via im2col + fused matmul (only used for the 7x7/s2 conv0,
    whose single input channel keeps the patch matrix small)."""
    B, H, W, C = x.shape
    O, I, kh, kw = w.shape
    xp = jnp.pad(x, ((0, 0), (padding, padding), (padding, padding), (0, 0)))
    Ho = (H + 2 * padding - kh) // stride + 1
    Wo = (W + 2 * padding - kw) // stride + 1
    patches = []
    for dy in range(kh):
        for dx in range(kw):
            patches.append(lax.slice(
                xp,
                (0, dy, dx, 0),
                (B, dy + (Ho - 1) * stride + 1, dx + (Wo - 1) * stride + 1, C),
                (1, stride, stride, 1)))
    pat = jnp.stack(patches, axis=3).reshape(B * Ho * Wo, kh * kw * C)
    wm = jnp.transpose(w, (2, 3, 1, 0)).reshape(kh * kw * I, O)
    out = pallas_fused_matmul(pat, wm, **fuse_kwargs)
    return out.reshape(B, Ho, Wo, O)


def conv1x1_fused(x, w, **fuse_kwargs):
    """1x1 conv as a plain matmul on (B*H*W, C); no im2col copy."""
    B, H, W, C = x.shape
    O = w.shape[0]
    wm = w.reshape(O, C).T
    y = pallas_fused_matmul(x.reshape(B * H * W, C), wm, **fuse_kwargs)
    return y.reshape(B, H, W, O)


def maxpool_3x3_s2_p1(x):
    B, H, W, C = x.shape
    xp = jnp.pad(x, ((0, 0), (1, 1), (1, 1), (0, 0)), constant_values=-jnp.inf)
    Ho = (H + 2 - 3) // 2 + 1
    Wo = (W + 2 - 3) // 2 + 1
    windows = []
    for dy in range(3):
        for dx in range(3):
            windows.append(lax.slice(
                xp, (0, dy, dx, 0),
                (B, dy + (Ho - 1) * 2 + 1, dx + (Wo - 1) * 2 + 1, C),
                (1, 2, 2, 1)).reshape(B * Ho * Wo, C))
    return pallas_window_reduce(windows, "max").reshape(B, Ho, Wo, C)


def avgpool_2x2_s2(x):
    B, H, W, C = x.shape
    Ho, Wo = H // 2, W // 2
    windows = []
    for dy in range(2):
        for dx in range(2):
            windows.append(lax.slice(
                x, (0, dy, dx, 0),
                (B, dy + (Ho - 1) * 2 + 1, dx + (Wo - 1) * 2 + 1, C),
                (1, 2, 2, 1)).reshape(B * Ho * Wo, C))
    return pallas_window_reduce(windows, "mean").reshape(B, Ho, Wo, C)


# ------------------------ DenseNet ".features" ------------------------------
def densenet_features(x, p):
    """MONAI DenseNet .features with every eval-mode BN(+ReLU) fused into the
    adjacent conv kernel.  The final BN (norm5) is NOT applied here -- the
    caller folds it (exactly) into the FC kernel's per-column prologue."""
    s0, t0 = _bn_scale_shift(p["norm0"])
    x = conv_im2col(x, p["conv0"], stride=2, padding=3,
                    out_scale=s0, out_shift=t0, out_relu=True)   # conv0+norm0+relu0
    x = maxpool_3x3_s2_p1(x)
    for bi, n_layers in enumerate(BLOCK_CONFIG):
        for li in range(n_layers):
            lp = p[f"b{bi}_l{li}"]
            s1, t1 = _bn_scale_shift(lp["norm1"])
            s2, t2 = _bn_scale_shift(lp["norm2"])
            # norm1+relu (prologue) -> conv1x1 -> norm2+relu (epilogue)
            y = conv1x1_fused(x, lp["conv1"],
                              in_scale=s1, in_shift=t1, in_relu=True,
                              out_scale=s2, out_shift=t2, out_relu=True)
            y = pallas_conv3x3_s1(y, lp["conv2"])
            x = jnp.concatenate([x, y], axis=-1)      # dense concat (dim=1 in NCHW)
        if bi != len(BLOCK_CONFIG) - 1:
            tp = p[f"t{bi}"]
            st, tt = _bn_scale_shift(tp["norm"])
            x = conv1x1_fused(x, tp["conv"],
                              in_scale=st, in_shift=tt, in_relu=True)
            x = avgpool_2x2_s2(x)
    return x


# ----------------------------- param init -----------------------------------
def _bn_params(key, c):
    ks = jax.random.split(key, 4)
    return dict(
        gamma=1.0 + 0.05 * jax.random.normal(ks[0], (c,), jnp.float32),
        beta=0.05 * jax.random.normal(ks[1], (c,), jnp.float32),
        mean=0.05 * jax.random.normal(ks[2], (c,), jnp.float32),
        var=1.0 + 0.05 * jnp.abs(jax.random.normal(ks[3], (c,), jnp.float32)),
    )


def _conv_w(key, o, i, kh, kw):
    fan_in = i * kh * kw
    return jax.random.normal(key, (o, i, kh, kw), jnp.float32) / (fan_in ** 0.5)


def init_densenet_params(key):
    counter = [0]

    def nk():
        counter[0] += 1
        return jax.random.fold_in(key, counter[0])

    p = {}
    c = INIT_FEATURES
    p["conv0"] = _conv_w(nk(), c, 1, 7, 7)
    p["norm0"] = _bn_params(nk(), c)
    for bi, n_layers in enumerate(BLOCK_CONFIG):
        for li in range(n_layers):
            p[f"b{bi}_l{li}"] = dict(
                norm1=_bn_params(nk(), c),
                conv1=_conv_w(nk(), BN_SIZE * GROWTH, c, 1, 1),
                norm2=_bn_params(nk(), BN_SIZE * GROWTH),
                conv2=_conv_w(nk(), GROWTH, BN_SIZE * GROWTH, 3, 3),
            )
            c += GROWTH
        if bi != len(BLOCK_CONFIG) - 1:
            p[f"t{bi}"] = dict(norm=_bn_params(nk(), c),
                               conv=_conv_w(nk(), c // 2, c, 1, 1))
            c //= 2
    p["norm5"] = _bn_params(nk(), c)
    return p, c


def _feature_spatial(h):
    h = (h + 2 * 3 - 7) // 2 + 1          # conv0 (k7 s2 p3)
    h = (h + 2 * 1 - 3) // 2 + 1          # maxpool (k3 s2 p1)
    for _ in range(len(BLOCK_CONFIG) - 1):
        h //= 2                           # transition avgpool (k2 s2)
    return h


def init_all_params(key, H, W):
    densenets = []
    c_final = None
    for b in range(2):
        row = []
        for m in range(3):
            p, c_final = init_densenet_params(jax.random.fold_in(key, 10 * b + m))
            row.append(p)
        densenets.append(row)
    ho, wo = _feature_spatial(H), _feature_spatial(W)
    # analogue of nn.Linear(in_features=150528 * 2, out_features=2) at 224x224
    in_features = c_final * ho * wo * 3 * 2
    fc_w = jax.random.normal(jax.random.fold_in(key, 99),
                             (2, in_features), jnp.float32) / (in_features ** 0.5)
    fc_b = 0.01 * jax.random.normal(jax.random.fold_in(key, 100), (2,), jnp.float32)
    return dict(densenets=densenets, fc_w=fc_w, fc_b=fc_b)


# ------------------------ multi_mri_fc_layers forward ------------------------
def multi_mri_fc_layers_forward(params, x1, x2, x3, x4, x5, x6):
    inputs = (x1, x2, x3, x4, x5, x6)
    feats, scales, shifts = [], [], []
    for b in range(2):                                    # mri_1, mri_2
        for m in range(3):                                # model, model2, model3
            p = params["densenets"][b][m]
            x_nhwc = jnp.transpose(inputs[3 * b + m], (0, 2, 3, 1))   # NCHW -> NHWC
            f = densenet_features(x_nhwc, p)              # pre-norm5 features
            feats.append(f)
            s5, t5 = _bn_scale_shift(p["norm5"])
            hw = f.shape[1] * f.shape[2]
            # norm5 is per-channel; expand to the NCHW flatten order so it can
            # be applied exactly as the FC kernel's per-K-column prologue.
            scales.append(jnp.repeat(s5, hw))
            shifts.append(jnp.repeat(t5, hw))
    feat = jnp.concatenate(feats, axis=-1)                # torch.cat(dim=1), both levels
    x_nchw = jnp.transpose(feat, (0, 3, 1, 2))            # flatten in NCHW order
    flat = x_nchw.reshape(x_nchw.shape[0], -1)
    in_scale = jnp.concatenate(scales)
    in_shift = jnp.concatenate(shifts)
    logits = pallas_fc(flat, params["fc_w"].T, params["fc_b"], in_scale, in_shift)
    return logits


if __name__ == "__main__":
    key = jax.random.PRNGKey(0)
    B, H, W = 2, 32, 32
    params = init_all_params(jax.random.fold_in(key, 1), H, W)
    xs = [jax.random.normal(jax.random.fold_in(key, 1000 + i), (B, 1, H, W), jnp.float32)
          for i in range(6)]
    fwd = jax.jit(multi_mri_fc_layers_forward)
    logits = fwd(params, *xs)
    jax.block_until_ready(logits)
    assert logits.shape == (B, 2) and logits.dtype == jnp.float32
    assert bool(jnp.all(jnp.isfinite(logits)))
    print("KERNEL_OK")
</pallas_src>

<mosaic_0001>
module attributes {stable_mosaic.version = 11 : i64} {
  func.func @_fused_mm_kernel(%arg0: i32, %arg1: memref<256x49xf32, #tpu.memory_space<vmem>>, %arg2: memref<49x16xf32, #tpu.memory_space<vmem>>, %arg3: memref<1x16xf32, #tpu.memory_space<vmem>>, %arg4: memref<1x16xf32, #tpu.memory_space<vmem>>, %arg5: memref<256x16xf32, #tpu.memory_space<vmem>>) attributes {dimension_semantics = [#tpu.dimension_semantics<parallel>], iteration_bounds = array<i64: 2>, scalar_prefetch = 0 : i64, scratch_operands = 0 : i64, tpu.core_type = #tpu.core_type<tc>, window_params = [{transform_indices = @transform_0, window_bounds = array<i64: 256, 49>}, {pipeline_mode = #tpu.pipeline_mode<synchronous>, transform_indices = @transform_1, window_bounds = array<i64: 49, 16>}, {pipeline_mode = #tpu.pipeline_mode<synchronous>, transform_indices = @transform_2, window_bounds = array<i64: 1, 16>}, {pipeline_mode = #tpu.pipeline_mode<synchronous>, transform_indices = @transform_3, window_bounds = array<i64: 1, 16>}, {transform_indices = @transform_4, window_bounds = array<i64: 256, 16>}]} {
    %c0 = arith.constant 0 : index
    %c0_0 = arith.constant 0 : index
    %0 = vector.load %arg1[%c0, %c0_0] : memref<256x49xf32, #tpu.memory_space<vmem>>, vector<256x49xf32>
    %c0_1 = arith.constant 0 : index
    %c0_2 = arith.constant 0 : index
    %1 = vector.load %arg2[%c0_1, %c0_2] : memref<49x16xf32, #tpu.memory_space<vmem>>, vector<49x16xf32>
    %cst = arith.constant dense<0.000000e+00> : vector<256x16xf32>
    %2 = tpu.matmul %0, %1, %cst {dimension_numbers = #tpu.dot_dimension_numbers<[1], [0], [0], [1], [0, 0, 1, 1], [], []>} : vector<256x49xf32>, vector<49x16xf32>, vector<256x16xf32> -> vector<256x16xf32>
    %c0_3 = arith.constant 0 : index
    %c0_4 = arith.constant 0 : index
    %3 = vector.load %arg3[%c0_3, %c0_4] : memref<1x16xf32, #tpu.memory_space<vmem>>, vector<1x16xf32>
    %4 = vector.broadcast %3 : vector<1x16xf32> to vector<256x16xf32>
    %5 = arith.mulf %2, %4 : vector<256x16xf32>
    %c0_5 = arith.constant 0 : index
    %c0_6 = arith.constant 0 : index
    %6 = vector.load %arg4[%c0_5, %c0_6] : memref<1x16xf32, #tpu.memory_space<vmem>>, vector<1x16xf32>
    %7 = vector.broadcast %6 : vector<1x16xf32> to vector<256x16xf32>
    %8 = arith.addf %5, %7 : vector<256x16xf32>
    %cst_7 = arith.constant 0.000000e+00 : f32
    %9 = vector.broadcast %cst_7 : f32 to vector<256x16xf32>
    %10 = arith.maximumf %8, %9 : vector<256x16xf32>
    %c0_8 = arith.constant 0 : index
    %c0_9 = arith.constant 0 : index
    %11 = vector.load %arg5[%c0_8, %c0_9] : memref<256x16xf32, #tpu.memory_space<vmem>>, vector<256x16xf32>
    tpu.vector_store %arg5[%c0_8, %c0_9], %10 {strides = array<i32>} : memref<256x16xf32, #tpu.memory_space<vmem>>, vector<256x16xf32>,
    return
  }
  func.func @transform_0(%arg0: i32) -> (i32, i32) {
    %c0_i32 = arith.constant 0 : i32
    %c0_i32_0 = arith.constant 0 : i32
    return %arg0, %c0_i32 : i32, i32
  }
  func.func @transform_1(%arg0: i32) -> (i32, i32) {
    %c0_i32 = arith.constant 0 : i32
    %c0_i32_0 = arith.constant 0 : i32
    %c0_i32_1 = arith.constant 0 : i32
    return %c0_i32, %c0_i32_0 : i32, i32
  }
  func.func @transform_2(%arg0: i32) -> (i32, i32) {
    %c0_i32 = arith.constant 0 : i32
    %c0_i32_0 = arith.constant 0 : i32
    %c0_i32_1 = arith.constant 0 : i32
    return %c0_i32, %c0_i32_0 : i32, i32
  }
  func.func @transform_3(%arg0: i32) -> (i32, i32) {
    %c0_i32 = arith.constant 0 : i32
    %c0_i32_0 = arith.constant 0 : i32
    %c0_i32_1 = arith.constant 0 : i32
    return %c0_i32, %c0_i32_0 : i32, i32
  }
  func.func @transform_4(%arg0: i32) -> (i32, i32) {
    %c0_i32 = arith.constant 0 : i32
    %c0_i32_0 = arith.constant 0 : i32
    return %arg0, %c0_i32 : i32, i32
  }
}

module attributes {stable_mosaic.version = 11 : i64} {
  func.func @_window_reduce_kernel(%arg0: i32, %arg1: memref<128x16xf32, #tpu.memory_space<vmem>>, %arg2: memref<128x16xf32, #tpu.memory_space<vmem>>, %arg3: memref<128x16xf32, #tpu.memory_space<vmem>>, %arg4: memref<128x16xf32, #tpu.memory_space<vmem>>, %arg5: memref<128x16xf32, #tpu.memory_space<vmem>>, %arg6: memref<128x16xf32, #tpu.memory_space<vmem>>, %arg7: memref<128x16xf32, #tpu.memory_space<vmem>>, %arg8: memref<128x16xf32, #tpu.memory_space<vmem>>, %arg9: memref<128x16xf32, #tpu.memory_space<vmem>>, %arg10: memref<128x16xf32, #tpu.memory_space<vmem>>) attributes {dimension_semantics = [#tpu.dimension_semantics<parallel>], iteration_bounds = array<i64: 1>, scalar_prefetch = 0 : i64, scratch_operands = 0 : i64, tpu.core_type = #tpu.core_type<tc>, window_params = [{transform_indices = @transform_0, window_bounds = array<i64: 128, 16>}, {transform_indices = @transform_1, window_bounds = array<i64: 128, 16>}, {transform_indices = @transform_2, window_bounds = array<i64: 128, 16>}, {transform_indices = @transform_3, window_bounds = array<i64: 128, 16>}, {transform_indices = @transform_4, window_bounds = array<i64: 128, 16>}, {transform_indices = @transform_5, window_bounds = array<i64: 128, 16>}, {transform_indices = @transform_6, window_bounds = array<i64: 128, 16>}, {transform_indices = @transform_7, window_bounds = array<i64: 128, 16>}, {transform_indices = @transform_8, window_bounds = array<i64: 128, 16>}, {transform_indices = @transform_9, window_bounds = array<i64: 128, 16>}]} {
    %c0 = arith.constant 0 : index
    %c0_0 = arith.constant 0 : index
    %0 = vector.load %arg1[%c0, %c0_0] : memref<128x16xf32, #tpu.memory_space<vmem>>, vector<128x16xf32>
    %c0_1 = arith.constant 0 : index
    %c0_2 = arith.constant 0 : index
    %1 = vector.load %arg2[%c0_1, %c0_2] : memref<128x16xf32, #tpu.memory_space<vmem>>, vector<128x16xf32>
    %2 = arith.maximumf %0, %1 : vector<128x16xf32>
    %c0_3 = arith.constant 0 : index
    %c0_4 = arith.constant 0 : index
    %3 = vector.load %arg3[%c0_3, %c0_4] : memref<128x16xf32, #tpu.memory_space<vmem>>, vector<128x16xf32>
    %4 = arith.maximumf %2, %3 : vector<128x16xf32>
    %c0_5 = arith.constant 0 : index
    %c0_6 = arith.constant 0 : index
    %5 = vector.load %arg4[%c0_5, %c0_6] : memref<128x16xf32, #tpu.memory_space<vmem>>, vector<128x16xf32>
    %6 = arith.maximumf %4, %5 : vector<128x16xf32>
    %c0_7 = arith.constant 0 : index
    %c0_8 = arith.constant 0 : index
    %7 = vector.load %arg5[%c0_7, %c0_8] : memref<128x16xf32, #tpu.memory_space<vmem>>, vector<128x16xf32>
    %8 = arith.maximumf %6, %7 : vector<128x16xf32>
    %c0_9 = arith.constant 0 : index
    %c0_10 = arith.constant 0 : index
    %9 = vector.load %arg6[%c0_9, %c0_10] : memref<128x16xf32, #tpu.memory_space<vmem>>, vector<128x16xf32>
    %10 = arith.maximumf %8, %9 : vector<128x16xf32>
    %c0_11 = arith.constant 0 : index
    %c0_12 = arith.constant 0 : index
    %11 = vector.load %arg7[%c0_11, %c0_12] : memref<128x16xf32, #tpu.memory_space<vmem>>, vector<128x16xf32>
    %12 = arith.maximumf %10, %11 : vector<128x16xf32>
    %c0_13 = arith.constant 0 : index
    %c0_14 = arith.constant 0 : index
    %13 = vector.load %arg8[%c0_13, %c0_14] : memref<128x16xf32, #tpu.memory_space<vmem>>, vector<128x16xf32>
    %14 = arith.maximumf %12, %13 : vector<128x16xf32>
    %c0_15 = arith.constant 0 : index
    %c0_16 = arith.constant 0 : index
    %15 = vector.load %arg9[%c0_15, %c0_16] : memref<128x16xf32, #tpu.memory_space<vmem>>, vector<128x16xf32>
    %16 = arith.maximumf %14, %15 : vector<128x16xf32>
    %c0_17 = arith.constant 0 : index
    %c0_18 = arith.constant 0 : index
    %17 = vector.load %arg10[%c0_17, %c0_18] : memref<128x16xf32, #tpu.memory_space<vmem>>, vector<128x16xf32>
    tpu.vector_store %arg10[%c0_17, %c0_18], %16 {strides = array<i32>} : memref<128x16xf32, #tpu.memory_space<vmem>>, vector<128x16xf32>,
    return
  }
  func.func @transform_0(%arg0: i32) -> (i32, i32) {
    %c0_i32 = arith.constant 0 : i32
    %c0_i32_0 = arith.constant 0 : i32
    return %arg0, %c0_i32 : i32, i32
  }
  func.func @transform_1(%arg0: i32) -> (i32, i32) {
    %c0_i32 = arith.constant 0 : i32
    %c0_i32_0 = arith.constant 0 : i32
    return %arg0, %c0_i32 : i32, i32
  }
  func.func @transform_2(%arg0: i32) -> (i32, i32) {
    %c0_i32 = arith.constant 0 : i32
    %c0_i32_0 = arith.constant 0 : i32
    return %arg0, %c0_i32 : i32, i32
  }
  func.func @transform_3(%arg0: i32) -> (i32, i32) {
    %c0_i32 = arith.constant 0 : i32
    %c0_i32_0 = arith.constant 0 : i32
    return %arg0, %c0_i32 : i32, i32
  }
  func.func @transform_4(%arg0: i32) -> (i32, i32) {
    %c0_i32 = arith.constant 0 : i32
    %c0_i32_0 = arith.constant 0 : i32
    return %arg0, %c0_i32 : i32, i32
  }
  func.func @transform_5(%arg0: i32) -> (i32, i32) {
    %c0_i32 = arith.constant 0 : i32
    %c0_i32_0 = arith.constant 0 : i32
    return %arg0, %c0_i32 : i32, i32
  }
  func.func @transform_6(%arg0: i32) -> (i32, i32) {
    %c0_i32 = arith.constant 0 : i32
    %c0_i32_0 = arith.constant 0 : i32
    return %arg0, %c0_i32 : i32, i32
  }
  func.func @transform_7(%arg0: i32) -> (i32, i32) {
    %c0_i32 = arith.constant 0 : i32
    %c0_i32_0 = arith.constant 0 : i32
    return %arg0, %c0_i32 : i32, i32
  }
  func.func @transform_8(%arg0: i32) -> (i32, i32) {
    %c0_i32 = arith.constant 0 : i32
    %c0_i32_0 = arith.constant 0 : i32
    return %arg0, %c0_i32 : i32, i32
  }
  func.func @transform_9(%arg0: i32) -> (i32, i32) {
    %c0_i32 = arith.constant 0 : i32
    %c0_i32_0 = arith.constant 0 : i32
    return %arg0, %c0_i32 : i32, i32
  }
}

module attributes {stable_mosaic.version = 11 : i64} {
  func.func @_fused_mm_kernel(%arg0: i32, %arg1: memref<128x16xf32, #tpu.memory_space<vmem>>, %arg2: memref<16x32xf32, #tpu.memory_space<vmem>>, %arg3: memref<1x16xf32, #tpu.memory_space<vmem>>, %arg4: memref<1x16xf32, #tpu.memory_space<vmem>>, %arg5: memref<1x32xf32, #tpu.memory_space<vmem>>, %arg6: memref<1x32xf32, #tpu.memory_space<vmem>>, %arg7: memref<128x32xf32, #tpu.memory_space<vmem>>) attributes {dimension_semantics = [#tpu.dimension_semantics<parallel>], iteration_bounds = array<i64: 1>, scalar_prefetch = 0 : i64, scratch_operands = 0 : i64, tpu.core_type = #tpu.core_type<tc>, window_params = [{transform_indices = @transform_0, window_bounds = array<i64: 128, 16>}, {pipeline_mode = #tpu.pipeline_mode<synchronous>, transform_indices = @transform_1, window_bounds = array<i64: 16, 32>}, {pipeline_mode = #tpu.pipeline_mode<synchronous>, transform_indices = @transform_2, window_bounds = array<i64: 1, 16>}, {pipeline_mode = #tpu.pipeline_mode<synchronous>, transform_indices = @transform_3, window_bounds = array<i64: 1, 16>}, {pipeline_mode = #tpu.pipeline_mode<synchronous>, transform_indices = @transform_4, window_bounds = array<i64: 1, 32>}, {pipeline_mode = #tpu.pipeline_mode<synchronous>, transform_indices = @transform_5, window_bounds = array<i64: 1, 32>}, {transform_indices = @transform_6, window_bounds = array<i64: 128, 32>}]} {
    %c0 = arith.constant 0 : index
    %c0_0 = arith.constant 0 : index
    %0 = vector.load %arg1[%c0, %c0_0] : memref<128x16xf32, #tpu.memory_space<vmem>>, vector<128x16xf32>
    %c0_1 = arith.constant 0 : index
    %c0_2 = arith.constant 0 : index
    %1 = vector.load %arg3[%c0_1, %c0_2] : memref<1x16xf32, #tpu.memory_space<vmem>>, vector<1x16xf32>
    %2 = vector.broadcast %1 : vector<1x16xf32> to vector<128x16xf32>
    %3 = arith.mulf %0, %2 : vector<128x16xf32>
    %c0_3 = arith.constant 0 : index
    %c0_4 = arith.constant 0 : index
    %4 = vector.load %arg4[%c0_3, %c0_4] : memref<1x16xf32, #tpu.memory_space<vmem>>, vector<1x16xf32>
    %5 = vector.broadcast %4 : vector<1x16xf32> to vector<128x16xf32>
    %6 = arith.addf %3, %5 : vector<128x16xf32>
    %cst = arith.constant 0.000000e+00 : f32
    %7 = vector.broadcast %cst : f32 to vector<128x16xf32>
    %8 = arith.maximumf %6, %7 : vector<128x16xf32>
    %c0_5 = arith.constant 0 : index
    %c0_6 = arith.constant 0 : index
    %9 = vector.load %arg2[%c0_5, %c0_6] : memref<16x32xf32, #tpu.memory_space<vmem>>, vector<16x32xf32>
    %cst_7 = arith.constant dense<0.000000e+00> : vector<128x32xf32>
    %10 = tpu.matmul %8, %9, %cst_7 {dimension_numbers = #tpu.dot_dimension_numbers<[1], [0], [0], [1], [0, 0, 1, 1], [], []>} : vector<128x16xf32>, vector<16x32xf32>, vector<128x32xf32> -> vector<128x32xf32>
    %c0_8 = arith.constant 0 : index
    %c0_9 = arith.constant 0 : index
    %11 = vector.load %arg5[%c0_8, %c0_9] : memref<1x32xf32, #tpu.memory_space<vmem>>, vector<1x32xf32>
    %12 = vector.broadcast %11 : vector<1x32xf32> to vector<128x32xf32>
    %13 = arith.mulf %10, %12 : vector<128x32xf32>
    %c0_10 = arith.constant 0 : index
    %c0_11 = arith.constant 0 : index
    %14 = vector.load %arg6[%c0_10, %c0_11] : memref<1x32xf32, #tpu.memory_space<vmem>>, vector<1x32xf32>
    %15 = vector.broadcast %14 : vector<1x32xf32> to vector<128x32xf32>
    %16 = arith.addf %13, %15 : vector<128x32xf32>
    %cst_12 = arith.constant 0.000000e+00 : f32
    %17 = vector.broadcast %cst_12 : f32 to vector<128x32xf32>
    %18 = arith.maximumf %16, %17 : vector<128x32xf32>
    %c0_13 = arith.constant 0 : index
    %c0_14 = arith.constant 0 : index
    %19 = vector.load %arg7[%c0_13, %c0_14] : memref<128x32xf32, #tpu.memory_space<vmem>>, vector<128x32xf32>
    tpu.vector_store %arg7[%c0_13, %c0_14], %18 {strides = array<i32>} : memref<128x32xf32, #tpu.memory_space<vmem>>, vector<128x32xf32>,
    return
  }
  func.func @transform_0(%arg0: i32) -> (i32, i32) {
    %c0_i32 = arith.constant 0 : i32
    %c0_i32_0 = arith.constant 0 : i32
    return %arg0, %c0_i32 : i32, i32
  }
  func.func @transform_1(%arg0: i32) -> (i32, i32) {
    %c0_i32 = arith.constant 0 : i32
    %c0_i32_0 = arith.constant 0 : i32
    %c0_i32_1 = arith.constant 0 : i32
    return %c0_i32, %c0_i32_0 : i32, i32
  }
  func.func @transform_2(%arg0: i32) -> (i32, i32) {
    %c0_i32 = arith.constant 0 : i32
    %c0_i32_0 = arith.constant 0 : i32
    %c0_i32_1 = arith.constant 0 : i32
    return %c0_i32, %c0_i32_0 : i32, i32
  }
  func.func @transform_3(%arg0: i32) -> (i32, i32) {
    %c0_i32 = arith.constant 0 : i32
    %c0_i32_0 = arith.constant 0 : i32
    %c0_i32_1 = arith.constant 0 : i32
    return %c0_i32, %c0_i32_0 : i32, i32
  }
  func.func @transform_4(%arg0: i32) -> (i32, i32) {
    %c0_i32 = arith.constant 0 : i32
    %c0_i32_0 = arith.constant 0 : i32
    %c0_i32_1 = arith.constant 0 : i32
    return %c0_i32, %c0_i32_0 : i32, i32
  }
  func.func @transform_5(%arg0: i32) -> (i32, i32) {
    %c0_i32 = arith.constant 0 : i32
    %c0_i32_0 = arith.constant 0 : i32
    %c0_i32_1 = arith.constant 0 : i32
    return %c0_i32, %c0_i32_0 : i32, i32
  }
  func.func @transform_6(%arg0: i32) -> (i32, i32) {
    %c0_i32 = arith.constant 0 : i32
    %c0_i32_0 = arith.constant 0 : i32
    return %arg0, %c0_i32 : i32, i32
  }
}

module attributes {stable_mosaic.version = 11 : i64} {
  func.func @_conv3x3_kernel(%arg0: i32, %arg1: memref<1x10x10x32xf32, #tpu.memory_space<vmem>>, %arg2: memref<9x32x8xf32, #tpu.memory_space<vmem>>, %arg3: memref<1x8x8x8xf32, #tpu.memory_space<vmem>>) attributes {dimension_semantics = [#tpu.dimension_semantics<parallel>], iteration_bounds = array<i64: 2>, scalar_prefetch = 0 : i64, scratch_operands = 0 : i64, tpu.core_type = #tpu.core_type<tc>, window_params = [{transform_indices = @transform_0, window_bounds = array<i64: 1, 10, 10, 32>}, {pipeline_mode = #tpu.pipeline_mode<synchronous>, transform_indices = @transform_1, window_bounds = array<i64: 9, 32, 8>}, {transform_indices = @transform_2, window_bounds = array<i64: 1, 8, 8, 8>}]} {
    %c0_i32 = arith.constant 0 : i32
    %c8_i32 = arith.constant 8 : i32
    %0 = arith.addi %c0_i32, %c8_i32 : i32
    %c1_i32 = arith.constant 1 : i32
    scf.for %arg4 = %c0_i32 to %0 step %c1_i32  : i32 {
      %c0_i32_1 = arith.constant 0 : i32
      %1 = arith.addi %arg4, %c0_i32_1 : i32
      %c0 = arith.constant 0 : index
      %2 = arith.index_cast %1 : i32 to index
      %c0_2 = arith.constant 0 : index
      %c0_3 = arith.constant 0 : index
      %3 = vector.load %arg1[%c0, %2, %c0_2, %c0_3] : memref<1x10x10x32xf32, #tpu.memory_space<vmem>>, vector<1x1x8x32xf32>
      %4 = vector.shape_cast %3 : vector<1x1x8x32xf32> to vector<1x8x32xf32>
      %5 = vector.shape_cast %4 : vector<1x8x32xf32> to vector<8x32xf32>
      %c0_4 = arith.constant 0 : index
      %c0_5 = arith.constant 0 : index
      %c0_6 = arith.constant 0 : index
      %6 = vector.load %arg2[%c0_4, %c0_5, %c0_6] : memref<9x32x8xf32, #tpu.memory_space<vmem>>, vector<1x32x8xf32>
      %7 = vector.shape_cast %6 : vector<1x32x8xf32> to vector<32x8xf32>
      %cst = arith.constant dense<0.000000e+00> : vector<8x8xf32>
      %8 = tpu.matmul %5, %7, %cst {dimension_numbers = #tpu.dot_dimension_numbers<[1], [0], [0], [1], [0, 0, 1, 1], [], []>} : vector<8x32xf32>, vector<32x8xf32>, vector<8x8xf32> -> vector<8x8xf32>
      %c0_i32_7 = arith.constant 0 : i32
      %9 = arith.addi %arg4, %c0_i32_7 : i32
      %c0_8 = arith.constant 0 : index
      %10 = arith.index_cast %9 : i32 to index
      %c1 = arith.constant 1 : index
      %c0_9 = arith.constant 0 : index
      %11 = vector.load %arg1[%c0_8, %10, %c1, %c0_9] : memref<1x10x10x32xf32, #tpu.memory_space<vmem>>, vector<1x1x8x32xf32>
      %12 = vector.shape_cast %11 : vector<1x1x8x32xf32> to vector<1x8x32xf32>
      %13 = vector.shape_cast %12 : vector<1x8x32xf32> to vector<8x32xf32>
      %c1_10 = arith.constant 1 : index
      %c0_11 = arith.constant 0 : index
      %c0_12 = arith.constant 0 : index
      %14 = vector.load %arg2[%c1_10, %c0_11, %c0_12] : memref<9x32x8xf32, #tpu.memory_space<vmem>>, vector<1x32x8xf32>
      %15 = vector.shape_cast %14 : vector<1x32x8xf32> to vector<32x8xf32>
      %cst_13 = arith.constant dense<0.000000e+00> : vector<8x8xf32>
      %16 = tpu.matmul %13, %15, %cst_13 {dimension_numbers = #tpu.dot_dimension_numbers<[1], [0], [0], [1], [0, 0, 1, 1], [], []>} : vector<8x32xf32>, vector<32x8xf32>, vector<8x8xf32> -> vector<8x8xf32>
      %17 = arith.addf %8, %16 : vector<8x8xf32>
      %c0_i32_14 = arith.constant 0 : i32
      %18 = arith.addi %arg4, %c0_i32_14 : i32
      %c0_15 = arith.constant 0 : index
      %19 = arith.index_cast %18 : i32 to index
      %c2 = arith.constant 2 : index
      %c0_16 = arith.constant 0 : index
      %20 = vector.load %arg1[%c0_15, %19, %c2, %c0_16] : memref<1x10x10x32xf32, #tpu.memory_space<vmem>>, vector<1x1x8x32xf32>
      %21 = vector.shape_cast %20 : vector<1x1x8x32xf32> to vector<1x8x32xf32>
      %22 = vector.shape_cast %21 : vector<1x8x32xf32> to vector<8x32xf32>
      %c2_17 = arith.constant 2 : index
      %c0_18 = arith.constant 0 : index
      %c0_19 = arith.constant 0 : index
      %23 = vector.load %arg2[%c2_17, %c0_18, %c0_19] : memref<9x32x8xf32, #tpu.memory_space<vmem>>, vector<1x32x8xf32>
      %24 = vector.shape_cast %23 : vector<1x32x8xf32> to vector<32x8xf32>
      %cst_20 = arith.constant dense<0.000000e+00> : vector<8x8xf32>
      %25 = tpu.matmul %22, %24, %cst_20 {dimension_numbers = #tpu.dot_dimension_numbers<[1], [0], [0], [1], [0, 0, 1, 1], [], []>} : vector<8x32xf32>, vector<32x8xf32>, vector<8x8xf32> -> vector<8x8xf32>
      %26 = arith.addf %17, %25 : vector<8x8xf32>
      %c1_i32_21 = arith.constant 1 : i32
      %27 = arith.addi %arg4, %c1_i32_21 : i32
      %c0_22 = arith.constant 0 : index
      %28 = arith.index_cast %27 : i32 to index
      %c0_23 = arith.constant 0 : index
      %c0_24 = arith.constant 0 : index
      %29 = vector.load %arg1[%c0_22, %28, %c0_23, %c0_24] : memref<1x10x10x32xf32, #tpu.memory_space<vmem>>, vector<1x1x8x32xf32>
      %30 = vector.shape_cast %29 : vector<1x1x8x32xf32> to vector<1x8x32xf32>
      %31 = vector.shape_cast %30 : vector<1x8x32xf32> to vector<8x32xf32>
      %c3 = arith.constant 3 : index
      %c0_25 = arith.constant 0 : index
      %c0_26 = arith.constant 0 : index
      %32 = vector.load %arg2[%c3, %c0_25, %c0_26] : memref<9x32x8xf32, #tpu.memory_space<vmem>>, vector<1x32x8xf32>
      %33 = vector.shape_cast %32 : vector<1x32x8xf32> to vector<32x8xf32>
      %cst_27 = arith.constant dense<0.000000e+00> : vector<8x8xf32>
      %34 = tpu.matmul %31, %33, %cst_27 {dimension_numbers = #tpu.dot_dimension_numbers<[1], [0], [0], [1], [0, 0, 1, 1], [], []>} : vector<8x32xf32>, vector<32x8xf32>, vector<8x8xf32> -> vector<8x8xf32>
      %35 = arith.addf %26, %34 : vector<8x8xf32>
      %c1_i32_28 = arith.constant 1 : i32
      %36 = arith.addi %arg4, %c1_i32_28 : i32
      %c0_29 = arith.constant 0 : index
      %37 = arith.index_cast %36 : i32 to index
      %c1_30 = arith.constant 1 : index
      %c0_31 = arith.constant 0 : index
      %38 = vector.load %arg1[%c0_29, %37, %c1_30, %c0_31] : memref<1x10x10x32xf32, #tpu.memory_space<vmem>>, vector<1x1x8x32xf32>
      %39 = vector.shape_cast %38 : vector<1x1x8x32xf32> to vector<1x8x32xf32>
      %40 = vector.shape_cast %39 : vector<1x8x32xf32> to vector<8x32xf32>
      %c4 = arith.constant 4 : index
      %c0_32 = arith.constant 0 : index
      %c0_33 = arith.constant 0 : index
      %41 = vector.load %arg2[%c4, %c0_32, %c0_33] : memref<9x32x8xf32, #tpu.memory_space<vmem>>, vector<1x32x8xf32>
      %42 = vector.shape_cast %41 : vector<1x32x8xf32> to vector<32x8xf32>
      %cst_34 = arith.constant dense<0.000000e+00> : vector<8x8xf32>
      %43 = tpu.matmul %40, %42, %cst_34 {dimension_numbers = #tpu.dot_dimension_numbers<[1], [0], [0], [1], [0, 0, 1, 1], [], []>} : vector<8x32xf32>, vector<32x8xf32>, vector<8x8xf32> -> vector<8x8xf32>
      %44 = arith.addf %35, %43 : vector<8x8xf32>
      %c1_i32_35 = arith.constant 1 : i32
      %45 = arith.addi %arg4, %c1_i32_35 : i32
      %c0_36 = arith.constant 0 : index
      %46 = arith.index_cast %45 : i32 to index
      %c2_37 = arith.constant 2 : index
      %c0_38 = arith.constant 0 : index
      %47 = vector.load %arg1[%c0_36, %46, %c2_37, %c0_38] : memref<1x10x10x32xf32, #tpu.memory_space<vmem>>, vector<1x1x8x32xf32>
      %48 = vector.shape_cast %47 : vector<1x1x8x32xf32> to vector<1x8x32xf32>
      %49 = vector.shape_cast %48 : vector<1x8x32xf32> to vector<8x32xf32>
      %c5 = arith.constant 5 : index
      %c0_39 = arith.constant 0 : index
      %c0_40 = arith.constant 0 : index
      %50 = vector.load %arg2[%c5, %c0_39, %c0_40] : memref<9x32x8xf32, #tpu.memory_space<vmem>>, vector<1x32x8xf32>
      %51 = vector.shape_cast %50 : vector<1x32x8xf32> to vector<32x8xf32>
      %cst_41 = arith.constant dense<0.000000e+00> : vector<8x8xf32>
      %52 = tpu.matmul %49, %51, %cst_41 {dimension_numbers = #tpu.dot_dimension_numbers<[1], [0], [0], [1], [0, 0, 1, 1], [], []>} : vector<8x32xf32>, vector<32x8xf32>, vector<8x8xf32> -> vector<8x8xf32>
      %53 = arith.addf %44, %52 : vector<8x8xf32>
      %c2_i32 = arith.constant 2 : i32
      %54 = arith.addi %arg4, %c2_i32 : i32
      %c0_42 = arith.constant 0 : index
      %55 = arith.index_cast %54 : i32 to index
      %c0_43 = arith.constant 0 : index
      %c0_44 = arith.constant 0 : index
      %56 = vector.load %arg1[%c0_42, %55, %c0_43, %c0_44] : memref<1x10x10x32xf32, #tpu.memory_space<vmem>>, vector<1x1x8x32xf32>
      %57 = vector.shape_cast %56 : vector<1x1x8x32xf32> to vector<1x8x32xf32>
      %58 = vector.shape_cast %57 : vector<1x8x32xf32> to vector<8x32xf32>
      %c6 = arith.constant 6 : index
      %c0_45 = arith.constant 0 : index
      %c0_46 = arith.constant 0 : index
      %59 = vector.load %arg2[%c6, %c0_45, %c0_46] : memref<9x32x8xf32, #tpu.memory_space<vmem>>, vector<1x32x8xf32>
      %60 = vector.shape_cast %59 : vector<1x32x8xf32> to vector<32x8xf32>
      %cst_47 = arith.constant dense<0.000000e+00> : vector<8x8xf32>
      %61 = tpu.matmul %58, %60, %cst_47 {dimension_numbers = #tpu.dot_dimension_numbers<[1], [0], [0], [1], [0, 0, 1, 1], [], []>} : vector<8x32xf32>, vector<32x8xf32>, vector<8x8xf32> -> vector<8x8xf32>
      %62 = arith.addf %53, %61 : vector<8x8xf32>
      %c2_i32_48 = arith.constant 2 : i32
      %63 = arith.addi %arg4, %c2_i32_48 : i32
      %c0_49 = arith.constant 0 : index
      %64 = arith.index_cast %63 : i32 to index
      %c1_50 = arith.constant 1 : index
      %c0_51 = arith.constant 0 : index
      %65 = vector.load %arg1[%c0_49, %64, %c1_50, %c0_51] : memref<1x10x10x32xf32, #tpu.memory_space<vmem>>, vector<1x1x8x32xf32>
      %66 = vector.shape_cast %65 : vector<1x1x8x32xf32> to vector<1x8x32xf32>
      %67 = vector.shape_cast %66 : vector<1x8x32xf32> to vector<8x32xf32>
      %c7 = arith.constant 7 : index
      %c0_52 = arith.constant 0 : index
      %c0_53 = arith.constant 0 : index
      %68 = vector.load %arg2[%c7, %c0_52, %c0_53] : memref<9x32x8xf32, #tpu.memory_space<vmem>>, vector<1x32x8xf32>
      %69 = vector.shape_cast %68 : vector<1x32x8xf32> to vector<32x8xf32>
      %cst_54 = arith.constant dense<0.000000e+00> : vector<8x8xf32>
      %70 = tpu.matmul %67, %69, %cst_54 {dimension_numbers = #tpu.dot_dimension_numbers<[1], [0], [0], [1], [0, 0, 1, 1], [], []>} : vector<8x32xf32>, vector<32x8xf32>, vector<8x8xf32> -> vector<8x8xf32>
      %71 = arith.addf %62, %70 : vector<8x8xf32>
      %c2_i32_55 = arith.constant 2 : i32
      %72 = arith.addi %arg4, %c2_i32_55 : i32
      %c0_56 = arith.constant 0 : index
      %73 = arith.index_cast %72 : i32 to index
      %c2_57 = arith.constant 2 : index
      %c0_58 = arith.constant 0 : index
      %74 = vector.load %arg1[%c0_56, %73, %c2_57, %c0_58] : memref<1x10x10x32xf32, #tpu.memory_space<vmem>>, vector<1x1x8x32xf32>
      %75 = vector.shape_cast %74 : vector<1x1x8x32xf32> to vector<1x8x32xf32>
      %76 = vector.shape_cast %75 : vector<1x8x32xf32> to vector<8x32xf32>
      %c8 = arith.constant 8 : index
      %c0_59 = arith.constant 0 : index
      %c0_60 = arith.constant 0 : index
      %77 = vector.load %arg2[%c8, %c0_59, %c0_60] : memref<9x32x8xf32, #tpu.memory_space<vmem>>, vector<1x32x8xf32>
      %78 = vector.shape_cast %77 : vector<1x32x8xf32> to vector<32x8xf32>
      %cst_61 = arith.constant dense<0.000000e+00> : vector<8x8xf32>
      %79 = tpu.matmul %76, %78, %cst_61 {dimension_numbers = #tpu.dot_dimension_numbers<[1], [0], [0], [1], [0, 0, 1, 1], [], []>} : vector<8x32xf32>, vector<32x8xf32>, vector<8x8xf32> -> vector<8x8xf32>
      %80 = arith.addf %71, %79 : vector<8x8xf32>
      %81 = vector.shape_cast %80 : vector<8x8xf32> to vector<1x8x8xf32>
      %c0_62 = arith.constant 0 : index
      %82 = arith.index_cast %arg4 : i32 to index
      %c0_63 = arith.constant 0 : index
      %c0_64 = arith.constant 0 : index
      %83 = vector.load %arg3[%c0_62, %82, %c0_63, %c0_64] : memref<1x8x8x8xf32, #tpu.memory_space<vmem>>, vector<1x1x8x8xf32>
      %84 = vector.shape_cast %83 : vector<1x1x8x8xf32> to vector<1x8x8xf32>
      %85 = vector.shape_cast %81 : vector<1x8x8xf32> to vector<1x1x8x8xf32>
      tpu.vector_store %arg3[%c0_62, %82, %c0_63, %c0_64], %85 {strides = array<i32>} : memref<1x8x8x8xf32, #tpu.memory_space<vmem>>, vector<1x1x8x8xf32>,
    }
    %c8_i32_0 = arith.constant 8 : i32
    return
  }
  func.func @transform_0(%arg0: i32) -> (i32, i32, i32, i32) {
    %c0_i32 = arith.constant 0 : i32
    %c0_i32_0 = arith.constant 0 : i32
    %c0_i32_1 = arith.constant 0 : i32
    %c0_i32_2 = arith.constant 0 : i32
    return %arg0, %c0_i32, %c0_i32_0, %c0_i32_1 : i32, i32, i32, i32
  }
  func.func @transform_1(%arg0: i32) -> (i32, i32, i32) {
    %c0_i32 = arith.constant 0 : i32
    %c0_i32_0 = arith.constant 0 : i32
    %c0_i32_1 = arith.constant 0 : i32
    %c0_i32_2 = arith.constant 0 : i32
    return %c0_i32, %c0_i32_0, %c0_i32_1 : i32, i32, i32
  }
  func.func @transform_2(%arg0: i32) -> (i32, i32, i32, i32) {
    %c0_i32 = arith.constant 0 : i32
    %c0_i32_0 = arith.constant 0 : i32
    %c0_i32_1 = arith.constant 0 : i32
    %c0_i32_2 = arith.constant 0 : i32
    return %arg0, %c0_i32, %c0_i32_0, %c0_i32_1 : i32, i32, i32, i32
  }
}

module attributes {stable_mosaic.version = 11 : i64} {
  func.func @_fused_mm_kernel(%arg0: i32, %arg1: memref<128x24xf32, #tpu.memory_space<vmem>>, %arg2: memref<24x32xf32, #tpu.memory_space<vmem>>, %arg3: memref<1x24xf32, #tpu.memory_space<vmem>>, %arg4: memref<1x24xf32, #tpu.memory_space<vmem>>, %arg5: memref<1x32xf32, #tpu.memory_space<vmem>>, %arg6: memref<1x32xf32, #tpu.memory_space<vmem>>, %arg7: memref<128x32xf32, #tpu.memory_space<vmem>>) attributes {dimension_semantics = [#tpu.dimension_semantics<parallel>], iteration_bounds = array<i64: 1>, scalar_prefetch = 0 : i64, scratch_operands = 0 : i64, tpu.core_type = #tpu.core_type<tc>, window_params = [{transform_indices = @transform_0, window_bounds = array<i64: 128, 24>}, {pipeline_mode = #tpu.pipeline_mode<synchronous>, transform_indices = @transform_1, window_bounds = array<i64: 24, 32>}, {pipeline_mode = #tpu.pipeline_mode<synchronous>, transform_indices = @transform_2, window_bounds = array<i64: 1, 24>}, {pipeline_mode = #tpu.pipeline_mode<synchronous>, transform_indices = @transform_3, window_bounds = array<i64: 1, 24>}, {pipeline_mode = #tpu.pipeline_mode<synchronous>, transform_indices = @transform_4, window_bounds = array<i64: 1, 32>}, {pipeline_mode = #tpu.pipeline_mode<synchronous>, transform_indices = @transform_5, window_bounds = array<i64: 1, 32>}, {transform_indices = @transform_6, window_bounds = array<i64: 128, 32>}]} {
    %c0 = arith.constant 0 : index
    %c0_0 = arith.constant 0 : index
    %0 = vector.load %arg1[%c0, %c0_0] : memref<128x24xf32, #tpu.memory_space<vmem>>, vector<128x24xf32>
    %c0_1 = arith.constant 0 : index
    %c0_2 = arith.constant 0 : index
    %1 = vector.load %arg3[%c0_1, %c0_2] : memref<1x24xf32, #tpu.memory_space<vmem>>, vector<1x24xf32>
    %2 = vector.broadcast %1 : vector<1x24xf32> to vector<128x24xf32>
    %3 = arith.mulf %0, %2 : vector<128x24xf32>
    %c0_3 = arith.constant 0 : index
    %c0_4 = arith.constant 0 : index
    %4 = vector.load %arg4[%c0_3, %c0_4] : memref<1x24xf32, #tpu.memory_space<vmem>>, vector<1x24xf32>
    %5 = vector.broadcast %4 : vector<1x24xf32> to vector<128x24xf32>
    %6 = arith.addf %3, %5 : vector<128x24xf32>
    %cst = arith.constant 0.000000e+00 : f32
    %7 = vector.broadcast %cst : f32 to vector<128x24xf32>
    %8 = arith.maximumf %6, %7 : vector<128x24xf32>
    %c0_5 = arith.constant 0 : index
    %c0_6 = arith.constant 0 : index
    %9 = vector.load %arg2[%c0_5, %c0_6] : memref<24x32xf32, #tpu.memory_space<vmem>>, vector<24x32xf32>
    %cst_7 = arith.constant dense<0.000000e+00> : vector<128x32xf32>
    %10 = tpu.matmul %8, %9, %cst_7 {dimension_numbers = #tpu.dot_dimension_numbers<[1], [0], [0], [1], [0, 0, 1, 1], [], []>} : vector<128x24xf32>, vector<24x32xf32>, vector<128x32xf32> -> vector<128x32xf32>
    %c0_8 = arith.constant 0 : index
    %c0_9 = arith.constant 0 : index
    %11 = vector.load %arg5[%c0_8, %c0_9] : memref<1x32xf32, #tpu.memory_space<vmem>>, vector<1x32xf32>
    %12 = vector.broadcast %11 : vector<1x32xf32> to vector<128x32xf32>
    %13 = arith.mulf %10, %12 : vector<128x32xf32>
    %c0_10 = arith.constant 0 : index
    %c0_11 = arith.constant 0 : index
    %14 = vector.load %arg6[%c0_10, %c0_11] : memref<1x32xf32, #tpu.memory_space<vmem>>, vector<1x32xf32>
    %15 = vector.broadcast %14 : vector<1x32xf32> to vector<128x32xf32>
    %16 = arith.addf %13, %15 : vector<128x32xf32>
    %cst_12 = arith.constant 0.000000e+00 : f32
    %17 = vector.broadcast %cst_12 : f32 to vector<128x32xf32>
    %18 = arith.maximumf %16, %17 : vector<128x32xf32>
    %c0_13 = arith.constant 0 : index
    %c0_14 = arith.constant 0 : index
    %19 = vector.load %arg7[%c0_13, %c0_14] : memref<128x32xf32, #tpu.memory_space<vmem>>, vector<128x32xf32>
    tpu.vector_store %arg7[%c0_13, %c0_14], %18 {strides = array<i32>} : memref<128x32xf32, #tpu.memory_space<vmem>>, vector<128x32xf32>,
    return
  }
  func.func @transform_0(%arg0: i32) -> (i32, i32) {
    %c0_i32 = arith.constant 0 : i32
    %c0_i32_0 = arith.constant 0 : i32
    return %arg0, %c0_i32 : i32, i32
  }
  func.func @transform_1(%arg0: i32) -> (i32, i32) {
    %c0_i32 = arith.constant 0 : i32
    %c0_i32_0 = arith.constant 0 : i32
    %c0_i32_1 = arith.constant 0 : i32
    return %c0_i32, %c0_i32_0 : i32, i32
  }
  func.func @transform_2(%arg0: i32) -> (i32, i32) {
    %c0_i32 = arith.constant 0 : i32
    %c0_i32_0 = arith.constant 0 : i32
    %c0_i32_1 = arith.constant 0 : i32
    return %c0_i32, %c0_i32_0 : i32, i32
  }
  func.func @transform_3(%arg0: i32) -> (i32, i32) {
    %c0_i32 = arith.constant 0 : i32
    %c0_i32_0 = arith.constant 0 : i32
    %c0_i32_1 = arith.constant 0 : i32
    return %c0_i32, %c0_i32_0 : i32, i32
  }
  func.func @transform_4(%arg0: i32) -> (i32, i32) {
    %c0_i32 = arith.constant 0 : i32
    %c0_i32_0 = arith.constant 0 : i32
    %c0_i32_1 = arith.constant 0 : i32
    return %c0_i32, %c0_i32_0 : i32, i32
  }
  func.func @transform_5(%arg0: i32) -> (i32, i32) {
    %c0_i32 = arith.constant 0 : i32
    %c0_i32_0 = arith.constant 0 : i32
    %c0_i32_1 = arith.constant 0 : i32
    return %c0_i32, %c0_i32_0 : i32, i32
  }
  func.func @transform_6(%arg0: i32) -> (i32, i32) {
    %c0_i32 = arith.constant 0 : i32
    %c0_i32_0 = arith.constant 0 : i32
    return %arg0, %c0_i32 : i32, i32
  }
}

module attributes {stable_mosaic.version = 11 : i64} {
  func.func @_fused_mm_kernel(%arg0: i32, %arg1: memref<128x32xf32, #tpu.memory_space<vmem>>, %arg2: memref<32x16xf32, #tpu.memory_space<vmem>>, %arg3: memref<1x32xf32, #tpu.memory_space<vmem>>, %arg4: memref<1x32xf32, #tpu.memory_space<vmem>>, %arg5: memref<128x16xf32, #tpu.memory_space<vmem>>) attributes {dimension_semantics = [#tpu.dimension_semantics<parallel>], iteration_bounds = array<i64: 1>, scalar_prefetch = 0 : i64, scratch_operands = 0 : i64, tpu.core_type = #tpu.core_type<tc>, window_params = [{transform_indices = @transform_0, window_bounds = array<i64: 128, 32>}, {pipeline_mode = #tpu.pipeline_mode<synchronous>, transform_indices = @transform_1, window_bounds = array<i64: 32, 16>}, {pipeline_mode = #tpu.pipeline_mode<synchronous>, transform_indices = @transform_2, window_bounds = array<i64: 1, 32>}, {pipeline_mode = #tpu.pipeline_mode<synchronous>, transform_indices = @transform_3, window_bounds = array<i64: 1, 32>}, {transform_indices = @transform_4, window_bounds = array<i64: 128, 16>}]} {
    %c0 = arith.constant 0 : index
    %c0_0 = arith.constant 0 : index
    %0 = vector.load %arg1[%c0, %c0_0] : memref<128x32xf32, #tpu.memory_space<vmem>>, vector<128x32xf32>
    %c0_1 = arith.constant 0 : index
    %c0_2 = arith.constant 0 : index
    %1 = vector.load %arg3[%c0_1, %c0_2] : memref<1x32xf32, #tpu.memory_space<vmem>>, vector<1x32xf32>
    %2 = vector.broadcast %1 : vector<1x32xf32> to vector<128x32xf32>
    %3 = arith.mulf %0, %2 : vector<128x32xf32>
    %c0_3 = arith.constant 0 : index
    %c0_4 = arith.constant 0 : index
    %4 = vector.load %arg4[%c0_3, %c0_4] : memref<1x32xf32, #tpu.memory_space<vmem>>, vector<1x32xf32>
    %5 = vector.broadcast %4 : vector<1x32xf32> to vector<128x32xf32>
    %6 = arith.addf %3, %5 : vector<128x32xf32>
    %cst = arith.constant 0.000000e+00 : f32
    %7 = vector.broadcast %cst : f32 to vector<128x32xf32>
    %8 = arith.maximumf %6, %7 : vector<128x32xf32>
    %c0_5 = arith.constant 0 : index
    %c0_6 = arith.constant 0 : index
    %9 = vector.load %arg2[%c0_5, %c0_6] : memref<32x16xf32, #tpu.memory_space<vmem>>, vector<32x16xf32>
    %cst_7 = arith.constant dense<0.000000e+00> : vector<128x16xf32>
    %10 = tpu.matmul %8, %9, %cst_7 {dimension_numbers = #tpu.dot_dimension_numbers<[1], [0], [0], [1], [0, 0, 1, 1], [], []>} : vector<128x32xf32>, vector<32x16xf32>, vector<128x16xf32> -> vector<128x16xf32>
    %c0_8 = arith.constant 0 : index
    %c0_9 = arith.constant 0 : index
    %11 = vector.load %arg5[%c0_8, %c0_9] : memref<128x16xf32, #tpu.memory_space<vmem>>, vector<128x16xf32>
    tpu.vector_store %arg5[%c0_8, %c0_9], %10 {strides = array<i32>} : memref<128x16xf32, #tpu.memory_space<vmem>>, vector<128x16xf32>,
    return
  }
  func.func @transform_0(%arg0: i32) -> (i32, i32) {
    %c0_i32 = arith.constant 0 : i32
    %c0_i32_0 = arith.constant 0 : i32
    return %arg0, %c0_i32 : i32, i32
  }
  func.func @transform_1(%arg0: i32) -> (i32, i32) {
    %c0_i32 = arith.constant 0 : i32
    %c0_i32_0 = arith.constant 0 : i32
    %c0_i32_1 = arith.constant 0 : i32
    return %c0_i32, %c0_i32_0 : i32, i32
  }
  func.func @transform_2(%arg0: i32) -> (i32, i32) {
    %c0_i32 = arith.constant 0 : i32
    %c0_i32_0 = arith.constant 0 : i32
    %c0_i32_1 = arith.constant 0 : i32
    return %c0_i32, %c0_i32_0 : i32, i32
  }
  func.func @transform_3(%arg0: i32) -> (i32, i32) {
    %c0_i32 = arith.constant 0 : i32
    %c0_i32_0 = arith.constant 0 : i32
    %c0_i32_1 = arith.constant 0 : i32
    return %c0_i32, %c0_i32_0 : i32, i32
  }
  func.func @transform_4(%arg0: i32) -> (i32, i32) {
    %c0_i32 = arith.constant 0 : i32
    %c0_i32_0 = arith.constant 0 : i32
    return %arg0, %c0_i32 : i32, i32
  }
}

module attributes {stable_mosaic.version = 11 : i64} {
  func.func @_window_reduce_kernel(%arg0: i32, %arg1: memref<32x16xf32, #tpu.memory_space<vmem>>, %arg2: memref<32x16xf32, #tpu.memory_space<vmem>>, %arg3: memref<32x16xf32, #tpu.memory_space<vmem>>, %arg4: memref<32x16xf32, #tpu.memory_space<vmem>>, %arg5: memref<32x16xf32, #tpu.memory_space<vmem>>) attributes {dimension_semantics = [#tpu.dimension_semantics<parallel>], iteration_bounds = array<i64: 1>, scalar_prefetch = 0 : i64, scratch_operands = 0 : i64, tpu.core_type = #tpu.core_type<tc>, window_params = [{transform_indices = @transform_0, window_bounds = array<i64: 32, 16>}, {transform_indices = @transform_1, window_bounds = array<i64: 32, 16>}, {transform_indices = @transform_2, window_bounds = array<i64: 32, 16>}, {transform_indices = @transform_3, window_bounds = array<i64: 32, 16>}, {transform_indices = @transform_4, window_bounds = array<i64: 32, 16>}]} {
    %c0 = arith.constant 0 : index
    %c0_0 = arith.constant 0 : index
    %0 = vector.load %arg1[%c0, %c0_0] : memref<32x16xf32, #tpu.memory_space<vmem>>, vector<32x16xf32>
    %c0_1 = arith.constant 0 : index
    %c0_2 = arith.constant 0 : index
    %1 = vector.load %arg2[%c0_1, %c0_2] : memref<32x16xf32, #tpu.memory_space<vmem>>, vector<32x16xf32>
    %2 = arith.addf %0, %1 : vector<32x16xf32>
    %c0_3 = arith.constant 0 : index
    %c0_4 = arith.constant 0 : index
    %3 = vector.load %arg3[%c0_3, %c0_4] : memref<32x16xf32, #tpu.memory_space<vmem>>, vector<32x16xf32>
    %4 = arith.addf %2, %3 : vector<32x16xf32>
    %c0_5 = arith.constant 0 : index
    %c0_6 = arith.constant 0 : index
    %5 = vector.load %arg4[%c0_5, %c0_6] : memref<32x16xf32, #tpu.memory_space<vmem>>, vector<32x16xf32>
    %6 = arith.addf %4, %5 : vector<32x16xf32>
    %cst = arith.constant 2.500000e-01 : f32
    %7 = vector.broadcast %cst : f32 to vector<32x16xf32>
    %8 = arith.mulf %6, %7 : vector<32x16xf32>
    %c0_7 = arith.constant 0 : index
    %c0_8 = arith.constant 0 : index
    %9 = vector.load %arg5[%c0_7, %c0_8] : memref<32x16xf32, #tpu.memory_space<vmem>>, vector<32x16xf32>
    tpu.vector_store %arg5[%c0_7, %c0_8], %8 {strides = array<i32>} : memref<32x16xf32, #tpu.memory_space<vmem>>, vector<32x16xf32>,
    return
  }
  func.func @transform_0(%arg0: i32) -> (i32, i32) {
    %c0_i32 = arith.constant 0 : i32
    %c0_i32_0 = arith.constant 0 : i32
    return %arg0, %c0_i32 : i32, i32
  }
  func.func @transform_1(%arg0: i32) -> (i32, i32) {
    %c0_i32 = arith.constant 0 : i32
    %c0_i32_0 = arith.constant 0 : i32
    return %arg0, %c0_i32 : i32, i32
  }
  func.func @transform_2(%arg0: i32) -> (i32, i32) {
    %c0_i32 = arith.constant 0 : i32
    %c0_i32_0 = arith.constant 0 : i32
    return %arg0, %c0_i32 : i32, i32
  }
  func.func @transform_3(%arg0: i32) -> (i32, i32) {
    %c0_i32 = arith.constant 0 : i32
    %c0_i32_0 = arith.constant 0 : i32
    return %arg0, %c0_i32 : i32, i32
  }
  func.func @transform_4(%arg0: i32) -> (i32, i32) {
    %c0_i32 = arith.constant 0 : i32
    %c0_i32_0 = arith.constant 0 : i32
    return %arg0, %c0_i32 : i32, i32
  }
}

module attributes {stable_mosaic.version = 11 : i64} {
  func.func @_fused_mm_kernel(%arg0: i32, %arg1: memref<32x16xf32, #tpu.memory_space<vmem>>, %arg2: memref<16x32xf32, #tpu.memory_space<vmem>>, %arg3: memref<1x16xf32, #tpu.memory_space<vmem>>, %arg4: memref<1x16xf32, #tpu.memory_space<vmem>>, %arg5: memref<1x32xf32, #tpu.memory_space<vmem>>, %arg6: memref<1x32xf32, #tpu.memory_space<vmem>>, %arg7: memref<32x32xf32, #tpu.memory_space<vmem>>) attributes {dimension_semantics = [#tpu.dimension_semantics<parallel>], iteration_bounds = array<i64: 1>, scalar_prefetch = 0 : i64, scratch_operands = 0 : i64, tpu.core_type = #tpu.core_type<tc>, window_params = [{transform_indices = @transform_0, window_bounds = array<i64: 32, 16>}, {pipeline_mode = #tpu.pipeline_mode<synchronous>, transform_indices = @transform_1, window_bounds = array<i64: 16, 32>}, {pipeline_mode = #tpu.pipeline_mode<synchronous>, transform_indices = @transform_2, window_bounds = array<i64: 1, 16>}, {pipeline_mode = #tpu.pipeline_mode<synchronous>, transform_indices = @transform_3, window_bounds = array<i64: 1, 16>}, {pipeline_mode = #tpu.pipeline_mode<synchronous>, transform_indices = @transform_4, window_bounds = array<i64: 1, 32>}, {pipeline_mode = #tpu.pipeline_mode<synchronous>, transform_indices = @transform_5, window_bounds = array<i64: 1, 32>}, {transform_indices = @transform_6, window_bounds = array<i64: 32, 32>}]} {
    %c0 = arith.constant 0 : index
    %c0_0 = arith.constant 0 : index
    %0 = vector.load %arg1[%c0, %c0_0] : memref<32x16xf32, #tpu.memory_space<vmem>>, vector<32x16xf32>
    %c0_1 = arith.constant 0 : index
    %c0_2 = arith.constant 0 : index
    %1 = vector.load %arg3[%c0_1, %c0_2] : memref<1x16xf32, #tpu.memory_space<vmem>>, vector<1x16xf32>
    %2 = vector.broadcast %1 : vector<1x16xf32> to vector<32x16xf32>
    %3 = arith.mulf %0, %2 : vector<32x16xf32>
    %c0_3 = arith.constant 0 : index
    %c0_4 = arith.constant 0 : index
    %4 = vector.load %arg4[%c0_3, %c0_4] : memref<1x16xf32, #tpu.memory_space<vmem>>, vector<1x16xf32>
    %5 = vector.broadcast %4 : vector<1x16xf32> to vector<32x16xf32>
    %6 = arith.addf %3, %5 : vector<32x16xf32>
    %cst = arith.constant 0.000000e+00 : f32
    %7 = vector.broadcast %cst : f32 to vector<32x16xf32>
    %8 = arith.maximumf %6, %7 : vector<32x16xf32>
    %c0_5 = arith.constant 0 : index
    %c0_6 = arith.constant 0 : index
    %9 = vector.load %arg2[%c0_5, %c0_6] : memref<16x32xf32, #tpu.memory_space<vmem>>, vector<16x32xf32>
    %cst_7 = arith.constant dense<0.000000e+00> : vector<32x32xf32>
    %10 = tpu.matmul %8, %9, %cst_7 {dimension_numbers = #tpu.dot_dimension_numbers<[1], [0], [0], [1], [0, 0, 1, 1], [], []>} : vector<32x16xf32>, vector<16x32xf32>, vector<32x32xf32> -> vector<32x32xf32>
    %c0_8 = arith.constant 0 : index
    %c0_9 = arith.constant 0 : index
    %11 = vector.load %arg5[%c0_8, %c0_9] : memref<1x32xf32, #tpu.memory_space<vmem>>, vector<1x32xf32>
    %12 = vector.broadcast %11 : vector<1x32xf32> to vector<32x32xf32>
    %13 = arith.mulf %10, %12 : vector<32x32xf32>
    %c0_10 = arith.constant 0 : index
    %c0_11 = arith.constant 0 : index
    %14 = vector.load %arg6[%c0_10, %c0_11] : memref<1x32xf32, #tpu.memory_space<vmem>>, vector<1x32xf32>
    %15 = vector.broadcast %14 : vector<1x32xf32> to vector<32x32xf32>
    %16 = arith.addf %13, %15 : vector<32x32xf32>
    %cst_12 = arith.constant 0.000000e+00 : f32
    %17 = vector.broadcast %cst_12 : f32 to vector<32x32xf32>
    %18 = arith.maximumf %16, %17 : vector<32x32xf32>
    %c0_13 = arith.constant 0 : index
    %c0_14 = arith.constant 0 : index
    %19 = vector.load %arg7[%c0_13, %c0_14] : memref<32x32xf32, #tpu.memory_space<vmem>>, vector<32x32xf32>
    tpu.vector_store %arg7[%c0_13, %c0_14], %18 {strides = array<i32>} : memref<32x32xf32, #tpu.memory_space<vmem>>, vector<32x32xf32>,
    return
  }
  func.func @transform_0(%arg0: i32) -> (i32, i32) {
    %c0_i32 = arith.constant 0 : i32
    %c0_i32_0 = arith.constant 0 : i32
    return %arg0, %c0_i32 : i32, i32
  }
  func.func @transform_1(%arg0: i32) -> (i32, i32) {
    %c0_i32 = arith.constant 0 : i32
    %c0_i32_0 = arith.constant 0 : i32
    %c0_i32_1 = arith.constant 0 : i32
    return %c0_i32, %c0_i32_0 : i32, i32
  }
  func.func @transform_2(%arg0: i32) -> (i32, i32) {
    %c0_i32 = arith.constant 0 : i32
    %c0_i32_0 = arith.constant 0 : i32
    %c0_i32_1 = arith.constant 0 : i32
    return %c0_i32, %c0_i32_0 : i32, i32
  }
  func.func @transform_3(%arg0: i32) -> (i32, i32) {
    %c0_i32 = arith.constant 0 : i32
    %c0_i32_0 = arith.constant 0 : i32
    %c0_i32_1 = arith.constant 0 : i32
    return %c0_i32, %c0_i32_0 : i32, i32
  }
  func.func @transform_4(%arg0: i32) -> (i32, i32) {
    %c0_i32 = arith.constant 0 : i32
    %c0_i32_0 = arith.constant 0 : i32
    %c0_i32_1 = arith.constant 0 : i32
    return %c0_i32, %c0_i32_0 : i32, i32
  }
  func.func @transform_5(%arg0: i32) -> (i32, i32) {
    %c0_i32 = arith.constant 0 : i32
    %c0_i32_0 = arith.constant 0 : i32
    %c0_i32_1 = arith.constant 0 : i32
    return %c0_i32, %c0_i32_0 : i32, i32
  }
  func.func @transform_6(%arg0: i32) -> (i32, i32) {
    %c0_i32 = arith.constant 0 : i32
    %c0_i32_0 = arith.constant 0 : i32
    return %arg0, %c0_i32 : i32, i32
  }
}

module attributes {stable_mosaic.version = 11 : i64} {
  func.func @_conv3x3_kernel(%arg0: i32, %arg1: memref<1x6x6x32xf32, #tpu.memory_space<vmem>>, %arg2: memref<9x32x8xf32, #tpu.memory_space<vmem>>, %arg3: memref<1x4x4x8xf32, #tpu.memory_space<vmem>>) attributes {dimension_semantics = [#tpu.dimension_semantics<parallel>], iteration_bounds = array<i64: 2>, scalar_prefetch = 0 : i64, scratch_operands = 0 : i64, tpu.core_type = #tpu.core_type<tc>, window_params = [{transform_indices = @transform_0, window_bounds = array<i64: 1, 6, 6, 32>}, {pipeline_mode = #tpu.pipeline_mode<synchronous>, transform_indices = @transform_1, window_bounds = array<i64: 9, 32, 8>}, {transform_indices = @transform_2, window_bounds = array<i64: 1, 4, 4, 8>}]} {
    %c0_i32 = arith.constant 0 : i32
    %c4_i32 = arith.constant 4 : i32
    %0 = arith.addi %c0_i32, %c4_i32 : i32
    %c1_i32 = arith.constant 1 : i32
    scf.for %arg4 = %c0_i32 to %0 step %c1_i32  : i32 {
      %c0_i32_1 = arith.constant 0 : i32
      %1 = arith.addi %arg4, %c0_i32_1 : i32
      %c0 = arith.constant 0 : index
      %2 = arith.index_cast %1 : i32 to index
      %c0_2 = arith.constant 0 : index
      %c0_3 = arith.constant 0 : index
      %3 = vector.load %arg1[%c0, %2, %c0_2, %c0_3] : memref<1x6x6x32xf32, #tpu.memory_space<vmem>>, vector<1x1x4x32xf32>
      %4 = vector.shape_cast %3 : vector<1x1x4x32xf32> to vector<1x4x32xf32>
      %5 = vector.shape_cast %4 : vector<1x4x32xf32> to vector<4x32xf32>
      %c0_4 = arith.constant 0 : index
      %c0_5 = arith.constant 0 : index
      %c0_6 = arith.constant 0 : index
      %6 = vector.load %arg2[%c0_4, %c0_5, %c0_6] : memref<9x32x8xf32, #tpu.memory_space<vmem>>, vector<1x32x8xf32>
      %7 = vector.shape_cast %6 : vector<1x32x8xf32> to vector<32x8xf32>
      %cst = arith.constant dense<0.000000e+00> : vector<4x8xf32>
      %8 = tpu.matmul %5, %7, %cst {dimension_numbers = #tpu.dot_dimension_numbers<[1], [0], [0], [1], [0, 0, 1, 1], [], []>} : vector<4x32xf32>, vector<32x8xf32>, vector<4x8xf32> -> vector<4x8xf32>
      %c0_i32_7 = arith.constant 0 : i32
      %9 = arith.addi %arg4, %c0_i32_7 : i32
      %c0_8 = arith.constant 0 : index
      %10 = arith.index_cast %9 : i32 to index
      %c1 = arith.constant 1 : index
      %c0_9 = arith.constant 0 : index
      %11 = vector.load %arg1[%c0_8, %10, %c1, %c0_9] : memref<1x6x6x32xf32, #tpu.memory_space<vmem>>, vector<1x1x4x32xf32>
      %12 = vector.shape_cast %11 : vector<1x1x4x32xf32> to vector<1x4x32xf32>
      %13 = vector.shape_cast %12 : vector<1x4x32xf32> to vector<4x32xf32>
      %c1_10 = arith.constant 1 : index
      %c0_11 = arith.constant 0 : index
      %c0_12 = arith.constant 0 : index
      %14 = vector.load %arg2[%c1_10, %c0_11, %c0_12] : memref<9x32x8xf32, #tpu.memory_space<vmem>>, vector<1x32x8xf32>
      %15 = vector.shape_cast %14 : vector<1x32x8xf32> to vector<32x8xf32>
      %cst_13 = arith.constant dense<0.000000e+00> : vector<4x8xf32>
      %16 = tpu.matmul %13, %15, %cst_13 {dimension_numbers = #tpu.dot_dimension_numbers<[1], [0], [0], [1], [0, 0, 1, 1], [], []>} : vector<4x32xf32>, vector<32x8xf32>, vector<4x8xf32> -> vector<4x8xf32>
      %17 = arith.addf %8, %16 : vector<4x8xf32>
      %c0_i32_14 = arith.constant 0 : i32
      %18 = arith.addi %arg4, %c0_i32_14 : i32
      %c0_15 = arith.constant 0 : index
      %19 = arith.index_cast %18 : i32 to index
      %c2 = arith.constant 2 : index
      %c0_16 = arith.constant 0 : index
      %20 = vector.load %arg1[%c0_15, %19, %c2, %c0_16] : memref<1x6x6x32xf32, #tpu.memory_space<vmem>>, vector<1x1x4x32xf32>
      %21 = vector.shape_cast %20 : vector<1x1x4x32xf32> to vector<1x4x32xf32>
      %22 = vector.shape_cast %21 : vector<1x4x32xf32> to vector<4x32xf32>
      %c2_17 = arith.constant 2 : index
      %c0_18 = arith.constant 0 : index
      %c0_19 = arith.constant 0 : index
      %23 = vector.load %arg2[%c2_17, %c0_18, %c0_19] : memref<9x32x8xf32, #tpu.memory_space<vmem>>, vector<1x32x8xf32>
      %24 = vector.shape_cast %23 : vector<1x32x8xf32> to vector<32x8xf32>
      %cst_20 = arith.constant dense<0.000000e+00> : vector<4x8xf32>
      %25 = tpu.matmul %22, %24, %cst_20 {dimension_numbers = #tpu.dot_dimension_numbers<[1], [0], [0], [1], [0, 0, 1, 1], [], []>} : vector<4x32xf32>, vector<32x8xf32>, vector<4x8xf32> -> vector<4x8xf32>
      %26 = arith.addf %17, %25 : vector<4x8xf32>
      %c1_i32_21 = arith.constant 1 : i32
      %27 = arith.addi %arg4, %c1_i32_21 : i32
      %c0_22 = arith.constant 0 : index
      %28 = arith.index_cast %27 : i32 to index
      %c0_23 = arith.constant 0 : index
      %c0_24 = arith.constant 0 : index
      %29 = vector.load %arg1[%c0_22, %28, %c0_23, %c0_24] : memref<1x6x6x32xf32, #tpu.memory_space<vmem>>, vector<1x1x4x32xf32>
      %30 = vector.shape_cast %29 : vector<1x1x4x32xf32> to vector<1x4x32xf32>
      %31 = vector.shape_cast %30 : vector<1x4x32xf32> to vector<4x32xf32>
      %c3 = arith.constant 3 : index
      %c0_25 = arith.constant 0 : index
      %c0_26 = arith.constant 0 : index
      %32 = vector.load %arg2[%c3, %c0_25, %c0_26] : memref<9x32x8xf32, #tpu.memory_space<vmem>>, vector<1x32x8xf32>
      %33 = vector.shape_cast %32 : vector<1x32x8xf32> to vector<32x8xf32>
      %cst_27 = arith.constant dense<0.000000e+00> : vector<4x8xf32>
      %34 = tpu.matmul %31, %33, %cst_27 {dimension_numbers = #tpu.dot_dimension_numbers<[1], [0], [0], [1], [0, 0, 1, 1], [], []>} : vector<4x32xf32>, vector<32x8xf32>, vector<4x8xf32> -> vector<4x8xf32>
      %35 = arith.addf %26, %34 : vector<4x8xf32>
      %c1_i32_28 = arith.constant 1 : i32
      %36 = arith.addi %arg4, %c1_i32_28 : i32
      %c0_29 = arith.constant 0 : index
      %37 = arith.index_cast %36 : i32 to index
      %c1_30 = arith.constant 1 : index
      %c0_31 = arith.constant 0 : index
      %38 = vector.load %arg1[%c0_29, %37, %c1_30, %c0_31] : memref<1x6x6x32xf32, #tpu.memory_space<vmem>>, vector<1x1x4x32xf32>
      %39 = vector.shape_cast %38 : vector<1x1x4x32xf32> to vector<1x4x32xf32>
      %40 = vector.shape_cast %39 : vector<1x4x32xf32> to vector<4x32xf32>
      %c4 = arith.constant 4 : index
      %c0_32 = arith.constant 0 : index
      %c0_33 = arith.constant 0 : index
      %41 = vector.load %arg2[%c4, %c0_32, %c0_33] : memref<9x32x8xf32, #tpu.memory_space<vmem>>, vector<1x32x8xf32>
      %42 = vector.shape_cast %41 : vector<1x32x8xf32> to vector<32x8xf32>
      %cst_34 = arith.constant dense<0.000000e+00> : vector<4x8xf32>
      %43 = tpu.matmul %40, %42, %cst_34 {dimension_numbers = #tpu.dot_dimension_numbers<[1], [0], [0], [1], [0, 0, 1, 1], [], []>} : vector<4x32xf32>, vector<32x8xf32>, vector<4x8xf32> -> vector<4x8xf32>
      %44 = arith.addf %35, %43 : vector<4x8xf32>
      %c1_i32_35 = arith.constant 1 : i32
      %45 = arith.addi %arg4, %c1_i32_35 : i32
      %c0_36 = arith.constant 0 : index
      %46 = arith.index_cast %45 : i32 to index
      %c2_37 = arith.constant 2 : index
      %c0_38 = arith.constant 0 : index
      %47 = vector.load %arg1[%c0_36, %46, %c2_37, %c0_38] : memref<1x6x6x32xf32, #tpu.memory_space<vmem>>, vector<1x1x4x32xf32>
      %48 = vector.shape_cast %47 : vector<1x1x4x32xf32> to vector<1x4x32xf32>
      %49 = vector.shape_cast %48 : vector<1x4x32xf32> to vector<4x32xf32>
      %c5 = arith.constant 5 : index
      %c0_39 = arith.constant 0 : index
      %c0_40 = arith.constant 0 : index
      %50 = vector.load %arg2[%c5, %c0_39, %c0_40] : memref<9x32x8xf32, #tpu.memory_space<vmem>>, vector<1x32x8xf32>
      %51 = vector.shape_cast %50 : vector<1x32x8xf32> to vector<32x8xf32>
      %cst_41 = arith.constant dense<0.000000e+00> : vector<4x8xf32>
      %52 = tpu.matmul %49, %51, %cst_41 {dimension_numbers = #tpu.dot_dimension_numbers<[1], [0], [0], [1], [0, 0, 1, 1], [], []>} : vector<4x32xf32>, vector<32x8xf32>, vector<4x8xf32> -> vector<4x8xf32>
      %53 = arith.addf %44, %52 : vector<4x8xf32>
      %c2_i32 = arith.constant 2 : i32
      %54 = arith.addi %arg4, %c2_i32 : i32
      %c0_42 = arith.constant 0 : index
      %55 = arith.index_cast %54 : i32 to index
      %c0_43 = arith.constant 0 : index
      %c0_44 = arith.constant 0 : index
      %56 = vector.load %arg1[%c0_42, %55, %c0_43, %c0_44] : memref<1x6x6x32xf32, #tpu.memory_space<vmem>>, vector<1x1x4x32xf32>
      %57 = vector.shape_cast %56 : vector<1x1x4x32xf32> to vector<1x4x32xf32>
      %58 = vector.shape_cast %57 : vector<1x4x32xf32> to vector<4x32xf32>
      %c6 = arith.constant 6 : index
      %c0_45 = arith.constant 0 : index
      %c0_46 = arith.constant 0 : index
      %59 = vector.load %arg2[%c6, %c0_45, %c0_46] : memref<9x32x8xf32, #tpu.memory_space<vmem>>, vector<1x32x8xf32>
      %60 = vector.shape_cast %59 : vector<1x32x8xf32> to vector<32x8xf32>
      %cst_47 = arith.constant dense<0.000000e+00> : vector<4x8xf32>
      %61 = tpu.matmul %58, %60, %cst_47 {dimension_numbers = #tpu.dot_dimension_numbers<[1], [0], [0], [1], [0, 0, 1, 1], [], []>} : vector<4x32xf32>, vector<32x8xf32>, vector<4x8xf32> -> vector<4x8xf32>
      %62 = arith.addf %53, %61 : vector<4x8xf32>
      %c2_i32_48 = arith.constant 2 : i32
      %63 = arith.addi %arg4, %c2_i32_48 : i32
      %c0_49 = arith.constant 0 : index
      %64 = arith.index_cast %63 : i32 to index
      %c1_50 = arith.constant 1 : index
      %c0_51 = arith.constant 0 : index
      %65 = vector.load %arg1[%c0_49, %64, %c1_50, %c0_51] : memref<1x6x6x32xf32, #tpu.memory_space<vmem>>, vector<1x1x4x32xf32>
      %66 = vector.shape_cast %65 : vector<1x1x4x32xf32> to vector<1x4x32xf32>
      %67 = vector.shape_cast %66 : vector<1x4x32xf32> to vector<4x32xf32>
      %c7 = arith.constant 7 : index
      %c0_52 = arith.constant 0 : index
      %c0_53 = arith.constant 0 : index
      %68 = vector.load %arg2[%c7, %c0_52, %c0_53] : memref<9x32x8xf32, #tpu.memory_space<vmem>>, vector<1x32x8xf32>
      %69 = vector.shape_cast %68 : vector<1x32x8xf32> to vector<32x8xf32>
      %cst_54 = arith.constant dense<0.000000e+00> : vector<4x8xf32>
      %70 = tpu.matmul %67, %69, %cst_54 {dimension_numbers = #tpu.dot_dimension_numbers<[1], [0], [0], [1], [0, 0, 1, 1], [], []>} : vector<4x32xf32>, vector<32x8xf32>, vector<4x8xf32> -> vector<4x8xf32>
      %71 = arith.addf %62, %70 : vector<4x8xf32>
      %c2_i32_55 = arith.constant 2 : i32
      %72 = arith.addi %arg4, %c2_i32_55 : i32
      %c0_56 = arith.constant 0 : index
      %73 = arith.index_cast %72 : i32 to index
      %c2_57 = arith.constant 2 : index
      %c0_58 = arith.constant 0 : index
      %74 = vector.load %arg1[%c0_56, %73, %c2_57, %c0_58] : memref<1x6x6x32xf32, #tpu.memory_space<vmem>>, vector<1x1x4x32xf32>
      %75 = vector.shape_cast %74 : vector<1x1x4x32xf32> to vector<1x4x32xf32>
      %76 = vector.shape_cast %75 : vector<1x4x32xf32> to vector<4x32xf32>
      %c8 = arith.constant 8 : index
      %c0_59 = arith.constant 0 : index
      %c0_60 = arith.constant 0 : index
      %77 = vector.load %arg2[%c8, %c0_59, %c0_60] : memref<9x32x8xf32, #tpu.memory_space<vmem>>, vector<1x32x8xf32>
      %78 = vector.shape_cast %77 : vector<1x32x8xf32> to vector<32x8xf32>
      %cst_61 = arith.constant dense<0.000000e+00> : vector<4x8xf32>
      %79 = tpu.matmul %76, %78, %cst_61 {dimension_numbers = #tpu.dot_dimension_numbers<[1], [0], [0], [1], [0, 0, 1, 1], [], []>} : vector<4x32xf32>, vector<32x8xf32>, vector<4x8xf32> -> vector<4x8xf32>
      %80 = arith.addf %71, %79 : vector<4x8xf32>
      %81 = vector.shape_cast %80 : vector<4x8xf32> to vector<1x4x8xf32>
      %c0_62 = arith.constant 0 : index
      %82 = arith.index_cast %arg4 : i32 to index
      %c0_63 = arith.constant 0 : index
      %c0_64 = arith.constant 0 : index
      %83 = vector.load %arg3[%c0_62, %82, %c0_63, %c0_64] : memref<1x4x4x8xf32, #tpu.memory_space<vmem>>, vector<1x1x4x8xf32>
      %84 = vector.shape_cast %83 : vector<1x1x4x8xf32> to vector<1x4x8xf32>
      %85 = vector.shape_cast %81 : vector<1x4x8xf32> to vector<1x1x4x8xf32>
      tpu.vector_store %arg3[%c0_62, %82, %c0_63, %c0_64], %85 {strides = array<i32>} : memref<1x4x4x8xf32, #tpu.memory_space<vmem>>, vector<1x1x4x8xf32>,
    }
    %c4_i32_0 = arith.constant 4 : i32
    return
  }
  func.func @transform_0(%arg0: i32) -> (i32, i32, i32, i32) {
    %c0_i32 = arith.constant 0 : i32
    %c0_i32_0 = arith.constant 0 : i32
    %c0_i32_1 = arith.constant 0 : i32
    %c0_i32_2 = arith.constant 0 : i32
    return %arg0, %c0_i32, %c0_i32_0, %c0_i32_1 : i32, i32, i32, i32
  }
  func.func @transform_1(%arg0: i32) -> (i32, i32, i32) {
    %c0_i32 = arith.constant 0 : i32
    %c0_i32_0 = arith.constant 0 : i32
    %c0_i32_1 = arith.constant 0 : i32
    %c0_i32_2 = arith.constant 0 : i32
    return %c0_i32, %c0_i32_0, %c0_i32_1 : i32, i32, i32
  }
  func.func @transform_2(%arg0: i32) -> (i32, i32, i32, i32) {
    %c0_i32 = arith.constant 0 : i32
    %c0_i32_0 = arith.constant 0 : i32
    %c0_i32_1 = arith.constant 0 : i32
    %c0_i32_2 = arith.constant 0 : i32
    return %arg0, %c0_i32, %c0_i32_0, %c0_i32_1 : i32, i32, i32, i32
  }
}

module attributes {stable_mosaic.version = 11 : i64} {
  func.func @_fused_mm_kernel(%arg0: i32, %arg1: memref<32x32xf32, #tpu.memory_space<vmem>>, %arg2: memref<32x16xf32, #tpu.memory_space<vmem>>, %arg3: memref<1x32xf32, #tpu.memory_space<vmem>>, %arg4: memref<1x32xf32, #tpu.memory_space<vmem>>, %arg5: memref<32x16xf32, #tpu.memory_space<vmem>>) attributes {dimension_semantics = [#tpu.dimension_semantics<parallel>], iteration_bounds = array<i64: 1>, scalar_prefetch = 0 : i64, scratch_operands = 0 : i64, tpu.core_type = #tpu.core_type<tc>, window_params = [{transform_indices = @transform_0, window_bounds = array<i64: 32, 32>}, {pipeline_mode = #tpu.pipeline_mode<synchronous>, transform_indices = @transform_1, window_bounds = array<i64: 32, 16>}, {pipeline_mode = #tpu.pipeline_mode<synchronous>, transform_indices = @transform_2, window_bounds = array<i64: 1, 32>}, {pipeline_mode = #tpu.pipeline_mode<synchronous>, transform_indices = @transform_3, window_bounds = array<i64: 1, 32>}, {transform_indices = @transform_4, window_bounds = array<i64: 32, 16>}]} {
    %c0 = arith.constant 0 : index
    %c0_0 = arith.constant 0 : index
    %0 = vector.load %arg1[%c0, %c0_0] : memref<32x32xf32, #tpu.memory_space<vmem>>, vector<32x32xf32>
    %c0_1 = arith.constant 0 : index
    %c0_2 = arith.constant 0 : index
    %1 = vector.load %arg3[%c0_1, %c0_2] : memref<1x32xf32, #tpu.memory_space<vmem>>, vector<1x32xf32>
    %2 = vector.broadcast %1 : vector<1x32xf32> to vector<32x32xf32>
    %3 = arith.mulf %0, %2 : vector<32x32xf32>
    %c0_3 = arith.constant 0 : index
    %c0_4 = arith.constant 0 : index
    %4 = vector.load %arg4[%c0_3, %c0_4] : memref<1x32xf32, #tpu.memory_space<vmem>>, vector<1x32xf32>
    %5 = vector.broadcast %4 : vector<1x32xf32> to vector<32x32xf32>
    %6 = arith.addf %3, %5 : vector<32x32xf32>
    %cst = arith.constant 0.000000e+00 : f32
    %7 = vector.broadcast %cst : f32 to vector<32x32xf32>
    %8 = arith.maximumf %6, %7 : vector<32x32xf32>
    %c0_5 = arith.constant 0 : index
    %c0_6 = arith.constant 0 : index
    %9 = vector.load %arg2[%c0_5, %c0_6] : memref<32x16xf32, #tpu.memory_space<vmem>>, vector<32x16xf32>
    %cst_7 = arith.constant dense<0.000000e+00> : vector<32x16xf32>
    %10 = tpu.matmul %8, %9, %cst_7 {dimension_numbers = #tpu.dot_dimension_numbers<[1], [0], [0], [1], [0, 0, 1, 1], [], []>} : vector<32x32xf32>, vector<32x16xf32>, vector<32x16xf32> -> vector<32x16xf32>
    %c0_8 = arith.constant 0 : index
    %c0_9 = arith.constant 0 : index
    %11 = vector.load %arg5[%c0_8, %c0_9] : memref<32x16xf32, #tpu.memory_space<vmem>>, vector<32x16xf32>
    tpu.vector_store %arg5[%c0_8, %c0_9], %10 {strides = array<i32>} : memref<32x16xf32, #tpu.memory_space<vmem>>, vector<32x16xf32>,
    return
  }
  func.func @transform_0(%arg0: i32) -> (i32, i32) {
    %c0_i32 = arith.constant 0 : i32
    %c0_i32_0 = arith.constant 0 : i32
    return %arg0, %c0_i32 : i32, i32
  }
  func.func @transform_1(%arg0: i32) -> (i32, i32) {
    %c0_i32 = arith.constant 0 : i32
    %c0_i32_0 = arith.constant 0 : i32
    %c0_i32_1 = arith.constant 0 : i32
    return %c0_i32, %c0_i32_0 : i32, i32
  }
  func.func @transform_2(%arg0: i32) -> (i32, i32) {
    %c0_i32 = arith.constant 0 : i32
    %c0_i32_0 = arith.constant 0 : i32
    %c0_i32_1 = arith.constant 0 : i32
    return %c0_i32, %c0_i32_0 : i32, i32
  }
  func.func @transform_3(%arg0: i32) -> (i32, i32) {
    %c0_i32 = arith.constant 0 : i32
    %c0_i32_0 = arith.constant 0 : i32
    %c0_i32_1 = arith.constant 0 : i32
    return %c0_i32, %c0_i32_0 : i32, i32
  }
  func.func @transform_4(%arg0: i32) -> (i32, i32) {
    %c0_i32 = arith.constant 0 : i32
    %c0_i32_0 = arith.constant 0 : i32
    return %arg0, %c0_i32 : i32, i32
  }
}

module attributes {stable_mosaic.version = 11 : i64} {
  func.func @_fused_mm_kernel(%arg0: i32, %arg1: memref<32x24xf32, #tpu.memory_space<vmem>>, %arg2: memref<24x32xf32, #tpu.memory_space<vmem>>, %arg3: memref<1x24xf32, #tpu.memory_space<vmem>>, %arg4: memref<1x24xf32, #tpu.memory_space<vmem>>, %arg5: memref<1x32xf32, #tpu.memory_space<vmem>>, %arg6: memref<1x32xf32, #tpu.memory_space<vmem>>, %arg7: memref<32x32xf32, #tpu.memory_space<vmem>>) attributes {dimension_semantics = [#tpu.dimension_semantics<parallel>], iteration_bounds = array<i64: 1>, scalar_prefetch = 0 : i64, scratch_operands = 0 : i64, tpu.core_type = #tpu.core_type<tc>, window_params = [{transform_indices = @transform_0, window_bounds = array<i64: 32, 24>}, {pipeline_mode = #tpu.pipeline_mode<synchronous>, transform_indices = @transform_1, window_bounds = array<i64: 24, 32>}, {pipeline_mode = #tpu.pipeline_mode<synchronous>, transform_indices = @transform_2, window_bounds = array<i64: 1, 24>}, {pipeline_mode = #tpu.pipeline_mode<synchronous>, transform_indices = @transform_3, window_bounds = array<i64: 1, 24>}, {pipeline_mode = #tpu.pipeline_mode<synchronous>, transform_indices = @transform_4, window_bounds = array<i64: 1, 32>}, {pipeline_mode = #tpu.pipeline_mode<synchronous>, transform_indices = @transform_5, window_bounds = array<i64: 1, 32>}, {transform_indices = @transform_6, window_bounds = array<i64: 32, 32>}]} {
    %c0 = arith.constant 0 : index
    %c0_0 = arith.constant 0 : index
    %0 = vector.load %arg1[%c0, %c0_0] : memref<32x24xf32, #tpu.memory_space<vmem>>, vector<32x24xf32>
    %c0_1 = arith.constant 0 : index
    %c0_2 = arith.constant 0 : index
    %1 = vector.load %arg3[%c0_1, %c0_2] : memref<1x24xf32, #tpu.memory_space<vmem>>, vector<1x24xf32>
    %2 = vector.broadcast %1 : vector<1x24xf32> to vector<32x24xf32>
    %3 = arith.mulf %0, %2 : vector<32x24xf32>
    %c0_3 = arith.constant 0 : index
    %c0_4 = arith.constant 0 : index
    %4 = vector.load %arg4[%c0_3, %c0_4] : memref<1x24xf32, #tpu.memory_space<vmem>>, vector<1x24xf32>
    %5 = vector.broadcast %4 : vector<1x24xf32> to vector<32x24xf32>
    %6 = arith.addf %3, %5 : vector<32x24xf32>
    %cst = arith.constant 0.000000e+00 : f32
    %7 = vector.broadcast %cst : f32 to vector<32x24xf32>
    %8 = arith.maximumf %6, %7 : vector<32x24xf32>
    %c0_5 = arith.constant 0 : index
    %c0_6 = arith.constant 0 : index
    %9 = vector.load %arg2[%c0_5, %c0_6] : memref<24x32xf32, #tpu.memory_space<vmem>>, vector<24x32xf32>
    %cst_7 = arith.constant dense<0.000000e+00> : vector<32x32xf32>
    %10 = tpu.matmul %8, %9, %cst_7 {dimension_numbers = #tpu.dot_dimension_numbers<[1], [0], [0], [1], [0, 0, 1, 1], [], []>} : vector<32x24xf32>, vector<24x32xf32>, vector<32x32xf32> -> vector<32x32xf32>
    %c0_8 = arith.constant 0 : index
    %c0_9 = arith.constant 0 : index
    %11 = vector.load %arg5[%c0_8, %c0_9] : memref<1x32xf32, #tpu.memory_space<vmem>>, vector<1x32xf32>
    %12 = vector.broadcast %11 : vector<1x32xf32> to vector<32x32xf32>
    %13 = arith.mulf %10, %12 : vector<32x32xf32>
    %c0_10 = arith.constant 0 : index
    %c0_11 = arith.constant 0 : index
    %14 = vector.load %arg6[%c0_10, %c0_11] : memref<1x32xf32, #tpu.memory_space<vmem>>, vector<1x32xf32>
    %15 = vector.broadcast %14 : vector<1x32xf32> to vector<32x32xf32>
    %16 = arith.addf %13, %15 : vector<32x32xf32>
    %cst_12 = arith.constant 0.000000e+00 : f32
    %17 = vector.broadcast %cst_12 : f32 to vector<32x32xf32>
    %18 = arith.maximumf %16, %17 : vector<32x32xf32>
    %c0_13 = arith.constant 0 : index
    %c0_14 = arith.constant 0 : index
    %19 = vector.load %arg7[%c0_13, %c0_14] : memref<32x32xf32, #tpu.memory_space<vmem>>, vector<32x32xf32>
    tpu.vector_store %arg7[%c0_13, %c0_14], %18 {strides = array<i32>} : memref<32x32xf32, #tpu.memory_space<vmem>>, vector<32x32xf32>,
    return
  }
  func.func @transform_0(%arg0: i32) -> (i32, i32) {
    %c0_i32 = arith.constant 0 : i32
    %c0_i32_0 = arith.constant 0 : i32
    return %arg0, %c0_i32 : i32, i32
  }
  func.func @transform_1(%arg0: i32) -> (i32, i32) {
    %c0_i32 = arith.constant 0 : i32
    %c0_i32_0 = arith.constant 0 : i32
    %c0_i32_1 = arith.constant 0 : i32
    return %c0_i32, %c0_i32_0 : i32, i32
  }
  func.func @transform_2(%arg0: i32) -> (i32, i32) {
    %c0_i32 = arith.constant 0 : i32
    %c0_i32_0 = arith.constant 0 : i32
    %c0_i32_1 = arith.constant 0 : i32
    return %c0_i32, %c0_i32_0 : i32, i32
  }
  func.func @transform_3(%arg0: i32) -> (i32, i32) {
    %c0_i32 = arith.constant 0 : i32
    %c0_i32_0 = arith.constant 0 : i32
    %c0_i32_1 = arith.constant 0 : i32
    return %c0_i32, %c0_i32_0 : i32, i32
  }
  func.func @transform_4(%arg0: i32) -> (i32, i32) {
    %c0_i32 = arith.constant 0 : i32
    %c0_i32_0 = arith.constant 0 : i32
    %c0_i32_1 = arith.constant 0 : i32
    return %c0_i32, %c0_i32_0 : i32, i32
  }
  func.func @transform_5(%arg0: i32) -> (i32, i32) {
    %c0_i32 = arith.constant 0 : i32
    %c0_i32_0 = arith.constant 0 : i32
    %c0_i32_1 = arith.constant 0 : i32
    return %c0_i32, %c0_i32_0 : i32, i32
  }
  func.func @transform_6(%arg0: i32) -> (i32, i32) {
    %c0_i32 = arith.constant 0 : i32
    %c0_i32_0 = arith.constant 0 : i32
    return %arg0, %c0_i32 : i32, i32
  }
}

module attributes {stable_mosaic.version = 11 : i64} {
  func.func @_window_reduce_kernel(%arg0: i32, %arg1: memref<8x16xf32, #tpu.memory_space<vmem>>, %arg2: memref<8x16xf32, #tpu.memory_space<vmem>>, %arg3: memref<8x16xf32, #tpu.memory_space<vmem>>, %arg4: memref<8x16xf32, #tpu.memory_space<vmem>>, %arg5: memref<8x16xf32, #tpu.memory_space<vmem>>) attributes {dimension_semantics = [#tpu.dimension_semantics<parallel>], iteration_bounds = array<i64: 1>, scalar_prefetch = 0 : i64, scratch_operands = 0 : i64, tpu.core_type = #tpu.core_type<tc>, window_params = [{transform_indices = @transform_0, window_bounds = array<i64: 8, 16>}, {transform_indices = @transform_1, window_bounds = array<i64: 8, 16>}, {transform_indices = @transform_2, window_bounds = array<i64: 8, 16>}, {transform_indices = @transform_3, window_bounds = array<i64: 8, 16>}, {transform_indices = @transform_4, window_bounds = array<i64: 8, 16>}]} {
    %c0 = arith.constant 0 : index
    %c0_0 = arith.constant 0 : index
    %0 = vector.load %arg1[%c0, %c0_0] : memref<8x16xf32, #tpu.memory_space<vmem>>, vector<8x16xf32>
    %c0_1 = arith.constant 0 : index
    %c0_2 = arith.constant 0 : index
    %1 = vector.load %arg2[%c0_1, %c0_2] : memref<8x16xf32, #tpu.memory_space<vmem>>, vector<8x16xf32>
    %2 = arith.addf %0, %1 : vector<8x16xf32>
    %c0_3 = arith.constant 0 : index
    %c0_4 = arith.constant 0 : index
    %3 = vector.load %arg3[%c0_3, %c0_4] : memref<8x16xf32, #tpu.memory_space<vmem>>, vector<8x16xf32>
    %4 = arith.addf %2, %3 : vector<8x16xf32>
    %c0_5 = arith.constant 0 : index
    %c0_6 = arith.constant 0 : index
    %5 = vector.load %arg4[%c0_5, %c0_6] : memref<8x16xf32, #tpu.memory_space<vmem>>, vector<8x16xf32>
    %6 = arith.addf %4, %5 : vector<8x16xf32>
    %cst = arith.constant 2.500000e-01 : f32
    %7 = vector.broadcast %cst : f32 to vector<8x16xf32>
    %8 = arith.mulf %6, %7 : vector<8x16xf32>
    %c0_7 = arith.constant 0 : index
    %c0_8 = arith.constant 0 : index
    %9 = vector.load %arg5[%c0_7, %c0_8] : memref<8x16xf32, #tpu.memory_space<vmem>>, vector<8x16xf32>
    tpu.vector_store %arg5[%c0_7, %c0_8], %8 {strides = array<i32>} : memref<8x16xf32, #tpu.memory_space<vmem>>, vector<8x16xf32>,
    return
  }
  func.func @transform_0(%arg0: i32) -> (i32, i32) {
    %c0_i32 = arith.constant 0 : i32
    %c0_i32_0 = arith.constant 0 : i32
    return %arg0, %c0_i32 : i32, i32
  }
  func.func @transform_1(%arg0: i32) -> (i32, i32) {
    %c0_i32 = arith.constant 0 : i32
    %c0_i32_0 = arith.constant 0 : i32
    return %arg0, %c0_i32 : i32, i32
  }
  func.func @transform_2(%arg0: i32) -> (i32, i32) {
    %c0_i32 = arith.constant 0 : i32
    %c0_i32_0 = arith.constant 0 : i32
    return %arg0, %c0_i32 : i32, i32
  }
  func.func @transform_3(%arg0: i32) -> (i32, i32) {
    %c0_i32 = arith.constant 0 : i32
    %c0_i32_0 = arith.constant 0 : i32
    return %arg0, %c0_i32 : i32, i32
  }
  func.func @transform_4(%arg0: i32) -> (i32, i32) {
    %c0_i32 = arith.constant 0 : i32
    %c0_i32_0 = arith.constant 0 : i32
    return %arg0, %c0_i32 : i32, i32
  }
}

module attributes {stable_mosaic.version = 11 : i64} {
  func.func @_fused_mm_kernel(%arg0: i32, %arg1: memref<8x16xf32, #tpu.memory_space<vmem>>, %arg2: memref<16x32xf32, #tpu.memory_space<vmem>>, %arg3: memref<1x16xf32, #tpu.memory_space<vmem>>, %arg4: memref<1x16xf32, #tpu.memory_space<vmem>>, %arg5: memref<1x32xf32, #tpu.memory_space<vmem>>, %arg6: memref<1x32xf32, #tpu.memory_space<vmem>>, %arg7: memref<8x32xf32, #tpu.memory_space<vmem>>) attributes {dimension_semantics = [#tpu.dimension_semantics<parallel>], iteration_bounds = array<i64: 1>, scalar_prefetch = 0 : i64, scratch_operands = 0 : i64, tpu.core_type = #tpu.core_type<tc>, window_params = [{transform_indices = @transform_0, window_bounds = array<i64: 8, 16>}, {pipeline_mode = #tpu.pipeline_mode<synchronous>, transform_indices = @transform_1, window_bounds = array<i64: 16, 32>}, {pipeline_mode = #tpu.pipeline_mode<synchronous>, transform_indices = @transform_2, window_bounds = array<i64: 1, 16>}, {pipeline_mode = #tpu.pipeline_mode<synchronous>, transform_indices = @transform_3, window_bounds = array<i64: 1, 16>}, {pipeline_mode = #tpu.pipeline_mode<synchronous>, transform_indices = @transform_4, window_bounds = array<i64: 1, 32>}, {pipeline_mode = #tpu.pipeline_mode<synchronous>, transform_indices = @transform_5, window_bounds = array<i64: 1, 32>}, {transform_indices = @transform_6, window_bounds = array<i64: 8, 32>}]} {
    %c0 = arith.constant 0 : index
    %c0_0 = arith.constant 0 : index
    %0 = vector.load %arg1[%c0, %c0_0] : memref<8x16xf32, #tpu.memory_space<vmem>>, vector<8x16xf32>
    %c0_1 = arith.constant 0 : index
    %c0_2 = arith.constant 0 : index
    %1 = vector.load %arg3[%c0_1, %c0_2] : memref<1x16xf32, #tpu.memory_space<vmem>>, vector<1x16xf32>
    %2 = vector.broadcast %1 : vector<1x16xf32> to vector<8x16xf32>
    %3 = arith.mulf %0, %2 : vector<8x16xf32>
    %c0_3 = arith.constant 0 : index
    %c0_4 = arith.constant 0 : index
    %4 = vector.load %arg4[%c0_3, %c0_4] : memref<1x16xf32, #tpu.memory_space<vmem>>, vector<1x16xf32>
    %5 = vector.broadcast %4 : vector<1x16xf32> to vector<8x16xf32>
    %6 = arith.addf %3, %5 : vector<8x16xf32>
    %cst = arith.constant 0.000000e+00 : f32
    %7 = vector.broadcast %cst : f32 to vector<8x16xf32>
    %8 = arith.maximumf %6, %7 : vector<8x16xf32>
    %c0_5 = arith.constant 0 : index
    %c0_6 = arith.constant 0 : index
    %9 = vector.load %arg2[%c0_5, %c0_6] : memref<16x32xf32, #tpu.memory_space<vmem>>, vector<16x32xf32>
    %cst_7 = arith.constant dense<0.000000e+00> : vector<8x32xf32>
    %10 = tpu.matmul %8, %9, %cst_7 {dimension_numbers = #tpu.dot_dimension_numbers<[1], [0], [0], [1], [0, 0, 1, 1], [], []>} : vector<8x16xf32>, vector<16x32xf32>, vector<8x32xf32> -> vector<8x32xf32>
    %c0_8 = arith.constant 0 : index
    %c0_9 = arith.constant 0 : index
    %11 = vector.load %arg5[%c0_8, %c0_9] : memref<1x32xf32, #tpu.memory_space<vmem>>, vector<1x32xf32>
    %12 = vector.broadcast %11 : vector<1x32xf32> to vector<8x32xf32>
    %13 = arith.mulf %10, %12 : vector<8x32xf32>
    %c0_10 = arith.constant 0 : index
    %c0_11 = arith.constant 0 : index
    %14 = vector.load %arg6[%c0_10, %c0_11] : memref<1x32xf32, #tpu.memory_space<vmem>>, vector<1x32xf32>
    %15 = vector.broadcast %14 : vector<1x32xf32> to vector<8x32xf32>
    %16 = arith.addf %13, %15 : vector<8x32xf32>
    %cst_12 = arith.constant 0.000000e+00 : f32
    %17 = vector.broadcast %cst_12 : f32 to vector<8x32xf32>
    %18 = arith.maximumf %16, %17 : vector<8x32xf32>
    %c0_13 = arith.constant 0 : index
    %c0_14 = arith.constant 0 : index
    %19 = vector.load %arg7[%c0_13, %c0_14] : memref<8x32xf32, #tpu.memory_space<vmem>>, vector<8x32xf32>
    tpu.vector_store %arg7[%c0_13, %c0_14], %18 {strides = array<i32>} : memref<8x32xf32, #tpu.memory_space<vmem>>, vector<8x32xf32>,
    return
  }
  func.func @transform_0(%arg0: i32) -> (i32, i32) {
    %c0_i32 = arith.constant 0 : i32
    %c0_i32_0 = arith.constant 0 : i32
    return %arg0, %c0_i32 : i32, i32
  }
  func.func @transform_1(%arg0: i32) -> (i32, i32) {
    %c0_i32 = arith.constant 0 : i32
    %c0_i32_0 = arith.constant 0 : i32
    %c0_i32_1 = arith.constant 0 : i32
    return %c0_i32, %c0_i32_0 : i32, i32
  }
  func.func @transform_2(%arg0: i32) -> (i32, i32) {
    %c0_i32 = arith.constant 0 : i32
    %c0_i32_0 = arith.constant 0 : i32
    %c0_i32_1 = arith.constant 0 : i32
    return %c0_i32, %c0_i32_0 : i32, i32
  }
  func.func @transform_3(%arg0: i32) -> (i32, i32) {
    %c0_i32 = arith.constant 0 : i32
    %c0_i32_0 = arith.constant 0 : i32
    %c0_i32_1 = arith.constant 0 : i32
    return %c0_i32, %c0_i32_0 : i32, i32
  }
  func.func @transform_4(%arg0: i32) -> (i32, i32) {
    %c0_i32 = arith.constant 0 : i32
    %c0_i32_0 = arith.constant 0 : i32
    %c0_i32_1 = arith.constant 0 : i32
    return %c0_i32, %c0_i32_0 : i32, i32
  }
  func.func @transform_5(%arg0: i32) -> (i32, i32) {
    %c0_i32 = arith.constant 0 : i32
    %c0_i32_0 = arith.constant 0 : i32
    %c0_i32_1 = arith.constant 0 : i32
    return %c0_i32, %c0_i32_0 : i32, i32
  }
  func.func @transform_6(%arg0: i32) -> (i32, i32) {
    %c0_i32 = arith.constant 0 : i32
    %c0_i32_0 = arith.constant 0 : i32
    return %arg0, %c0_i32 : i32, i32
  }
}

module attributes {stable_mosaic.version = 11 : i64} {
  func.func @_conv3x3_kernel(%arg0: i32, %arg1: memref<1x4x4x32xf32, #tpu.memory_space<vmem>>, %arg2: memref<9x32x8xf32, #tpu.memory_space<vmem>>, %arg3: memref<1x2x2x8xf32, #tpu.memory_space<vmem>>) attributes {dimension_semantics = [#tpu.dimension_semantics<parallel>], iteration_bounds = array<i64: 2>, scalar_prefetch = 0 : i64, scratch_operands = 0 : i64, tpu.core_type = #tpu.core_type<tc>, window_params = [{transform_indices = @transform_0, window_bounds = array<i64: 1, 4, 4, 32>}, {pipeline_mode = #tpu.pipeline_mode<synchronous>, transform_indices = @transform_1, window_bounds = array<i64: 9, 32, 8>}, {transform_indices = @transform_2, window_bounds = array<i64: 1, 2, 2, 8>}]} {
    %c0_i32 = arith.constant 0 : i32
    %c2_i32 = arith.constant 2 : i32
    %0 = arith.addi %c0_i32, %c2_i32 : i32
    %c1_i32 = arith.constant 1 : i32
    scf.for %arg4 = %c0_i32 to %0 step %c1_i32  : i32 {
      %c0_i32_1 = arith.constant 0 : i32
      %1 = arith.addi %arg4, %c0_i32_1 : i32
      %c0 = arith.constant 0 : index
      %2 = arith.index_cast %1 : i32 to index
      %c0_2 = arith.constant 0 : index
      %c0_3 = arith.constant 0 : index
      %3 = vector.load %arg1[%c0, %2, %c0_2, %c0_3] : memref<1x4x4x32xf32, #tpu.memory_space<vmem>>, vector<1x1x2x32xf32>
      %4 = vector.shape_cast %3 : vector<1x1x2x32xf32> to vector<1x2x32xf32>
      %5 = vector.shape_cast %4 : vector<1x2x32xf32> to vector<2x32xf32>
      %c0_4 = arith.constant 0 : index
      %c0_5 = arith.constant 0 : index
      %c0_6 = arith.constant 0 : index
      %6 = vector.load %arg2[%c0_4, %c0_5, %c0_6] : memref<9x32x8xf32, #tpu.memory_space<vmem>>, vector<1x32x8xf32>
      %7 = vector.shape_cast %6 : vector<1x32x8xf32> to vector<32x8xf32>
      %cst = arith.constant dense<0.000000e+00> : vector<2x8xf32>
      %8 = tpu.matmul %5, %7, %cst {dimension_numbers = #tpu.dot_dimension_numbers<[1], [0], [0], [1], [0, 0, 1, 1], [], []>} : vector<2x32xf32>, vector<32x8xf32>, vector<2x8xf32> -> vector<2x8xf32>
      %c0_i32_7 = arith.constant 0 : i32
      %9 = arith.addi %arg4, %c0_i32_7 : i32
      %c0_8 = arith.constant 0 : index
      %10 = arith.index_cast %9 : i32 to index
      %c1 = arith.constant 1 : index
      %c0_9 = arith.constant 0 : index
      %11 = vector.load %arg1[%c0_8, %10, %c1, %c0_9] : memref<1x4x4x32xf32, #tpu.memory_space<vmem>>, vector<1x1x2x32xf32>
      %12 = vector.shape_cast %11 : vector<1x1x2x32xf32> to vector<1x2x32xf32>
      %13 = vector.shape_cast %12 : vector<1x2x32xf32> to vector<2x32xf32>
      %c1_10 = arith.constant 1 : index
      %c0_11 = arith.constant 0 : index
      %c0_12 = arith.constant 0 : index
      %14 = vector.load %arg2[%c1_10, %c0_11, %c0_12] : memref<9x32x8xf32, #tpu.memory_space<vmem>>, vector<1x32x8xf32>
      %15 = vector.shape_cast %14 : vector<1x32x8xf32> to vector<32x8xf32>
      %cst_13 = arith.constant dense<0.000000e+00> : vector<2x8xf32>
      %16 = tpu.matmul %13, %15, %cst_13 {dimension_numbers = #tpu.dot_dimension_numbers<[1], [0], [0], [1], [0, 0, 1, 1], [], []>} : vector<2x32xf32>, vector<32x8xf32>, vector<2x8xf32> -> vector<2x8xf32>
      %17 = arith.addf %8, %16 : vector<2x8xf32>
      %c0_i32_14 = arith.constant 0 : i32
      %18 = arith.addi %arg4, %c0_i32_14 : i32
      %c0_15 = arith.constant 0 : index
      %19 = arith.index_cast %18 : i32 to index
      %c2 = arith.constant 2 : index
      %c0_16 = arith.constant 0 : index
      %20 = vector.load %arg1[%c0_15, %19, %c2, %c0_16] : memref<1x4x4x32xf32, #tpu.memory_space<vmem>>, vector<1x1x2x32xf32>
      %21 = vector.shape_cast %20 : vector<1x1x2x32xf32> to vector<1x2x32xf32>
      %22 = vector.shape_cast %21 : vector<1x2x32xf32> to vector<2x32xf32>
      %c2_17 = arith.constant 2 : index
      %c0_18 = arith.constant 0 : index
      %c0_19 = arith.constant 0 : index
      %23 = vector.load %arg2[%c2_17, %c0_18, %c0_19] : memref<9x32x8xf32, #tpu.memory_space<vmem>>, vector<1x32x8xf32>
      %24 = vector.shape_cast %23 : vector<1x32x8xf32> to vector<32x8xf32>
      %cst_20 = arith.constant dense<0.000000e+00> : vector<2x8xf32>
      %25 = tpu.matmul %22, %24, %cst_20 {dimension_numbers = #tpu.dot_dimension_numbers<[1], [0], [0], [1], [0, 0, 1, 1], [], []>} : vector<2x32xf32>, vector<32x8xf32>, vector<2x8xf32> -> vector<2x8xf32>
      %26 = arith.addf %17, %25 : vector<2x8xf32>
      %c1_i32_21 = arith.constant 1 : i32
      %27 = arith.addi %arg4, %c1_i32_21 : i32
      %c0_22 = arith.constant 0 : index
      %28 = arith.index_cast %27 : i32 to index
      %c0_23 = arith.constant 0 : index
      %c0_24 = arith.constant 0 : index
      %29 = vector.load %arg1[%c0_22, %28, %c0_23, %c0_24] : memref<1x4x4x32xf32, #tpu.memory_space<vmem>>, vector<1x1x2x32xf32>
      %30 = vector.shape_cast %29 : vector<1x1x2x32xf32> to vector<1x2x32xf32>
      %31 = vector.shape_cast %30 : vector<1x2x32xf32> to vector<2x32xf32>
      %c3 = arith.constant 3 : index
      %c0_25 = arith.constant 0 : index
      %c0_26 = arith.constant 0 : index
      %32 = vector.load %arg2[%c3, %c0_25, %c0_26] : memref<9x32x8xf32, #tpu.memory_space<vmem>>, vector<1x32x8xf32>
      %33 = vector.shape_cast %32 : vector<1x32x8xf32> to vector<32x8xf32>
      %cst_27 = arith.constant dense<0.000000e+00> : vector<2x8xf32>
      %34 = tpu.matmul %31, %33, %cst_27 {dimension_numbers = #tpu.dot_dimension_numbers<[1], [0], [0], [1], [0, 0, 1, 1], [], []>} : vector<2x32xf32>, vector<32x8xf32>, vector<2x8xf32> -> vector<2x8xf32>
      %35 = arith.addf %26, %34 : vector<2x8xf32>
      %c1_i32_28 = arith.constant 1 : i32
      %36 = arith.addi %arg4, %c1_i32_28 : i32
      %c0_29 = arith.constant 0 : index
      %37 = arith.index_cast %36 : i32 to index
      %c1_30 = arith.constant 1 : index
      %c0_31 = arith.constant 0 : index
      %38 = vector.load %arg1[%c0_29, %37, %c1_30, %c0_31] : memref<1x4x4x32xf32, #tpu.memory_space<vmem>>, vector<1x1x2x32xf32>
      %39 = vector.shape_cast %38 : vector<1x1x2x32xf32> to vector<1x2x32xf32>
      %40 = vector.shape_cast %39 : vector<1x2x32xf32> to vector<2x32xf32>
      %c4 = arith.constant 4 : index
      %c0_32 = arith.constant 0 : index
      %c0_33 = arith.constant 0 : index
      %41 = vector.load %arg2[%c4, %c0_32, %c0_33] : memref<9x32x8xf32, #tpu.memory_space<vmem>>, vector<1x32x8xf32>
      %42 = vector.shape_cast %41 : vector<1x32x8xf32> to vector<32x8xf32>
      %cst_34 = arith.constant dense<0.000000e+00> : vector<2x8xf32>
      %43 = tpu.matmul %40, %42, %cst_34 {dimension_numbers = #tpu.dot_dimension_numbers<[1], [0], [0], [1], [0, 0, 1, 1], [], []>} : vector<2x32xf32>, vector<32x8xf32>, vector<2x8xf32> -> vector<2x8xf32>
      %44 = arith.addf %35, %43 : vector<2x8xf32>
      %c1_i32_35 = arith.constant 1 : i32
      %45 = arith.addi %arg4, %c1_i32_35 : i32
      %c0_36 = arith.constant 0 : index
      %46 = arith.index_cast %45 : i32 to index
      %c2_37 = arith.constant 2 : index
      %c0_38 = arith.constant 0 : index
      %47 = vector.load %arg1[%c0_36, %46, %c2_37, %c0_38] : memref<1x4x4x32xf32, #tpu.memory_space<vmem>>, vector<1x1x2x32xf32>
      %48 = vector.shape_cast %47 : vector<1x1x2x32xf32> to vector<1x2x32xf32>
      %49 = vector.shape_cast %48 : vector<1x2x32xf32> to vector<2x32xf32>
      %c5 = arith.constant 5 : index
      %c0_39 = arith.constant 0 : index
      %c0_40 = arith.constant 0 : index
      %50 = vector.load %arg2[%c5, %c0_39, %c0_40] : memref<9x32x8xf32, #tpu.memory_space<vmem>>, vector<1x32x8xf32>
      %51 = vector.shape_cast %50 : vector<1x32x8xf32> to vector<32x8xf32>
      %cst_41 = arith.constant dense<0.000000e+00> : vector<2x8xf32>
      %52 = tpu.matmul %49, %51, %cst_41 {dimension_numbers = #tpu.dot_dimension_numbers<[1], [0], [0], [1], [0, 0, 1, 1], [], []>} : vector<2x32xf32>, vector<32x8xf32>, vector<2x8xf32> -> vector<2x8xf32>
      %53 = arith.addf %44, %52 : vector<2x8xf32>
      %c2_i32_42 = arith.constant 2 : i32
      %54 = arith.addi %arg4, %c2_i32_42 : i32
      %c0_43 = arith.constant 0 : index
      %55 = arith.index_cast %54 : i32 to index
      %c0_44 = arith.constant 0 : index
      %c0_45 = arith.constant 0 : index
      %56 = vector.load %arg1[%c0_43, %55, %c0_44, %c0_45] : memref<1x4x4x32xf32, #tpu.memory_space<vmem>>, vector<1x1x2x32xf32>
      %57 = vector.shape_cast %56 : vector<1x1x2x32xf32> to vector<1x2x32xf32>
      %58 = vector.shape_cast %57 : vector<1x2x32xf32> to vector<2x32xf32>
      %c6 = arith.constant 6 : index
      %c0_46 = arith.constant 0 : index
      %c0_47 = arith.constant 0 : index
      %59 = vector.load %arg2[%c6, %c0_46, %c0_47] : memref<9x32x8xf32, #tpu.memory_space<vmem>>, vector<1x32x8xf32>
      %60 = vector.shape_cast %59 : vector<1x32x8xf32> to vector<32x8xf32>
      %cst_48 = arith.constant dense<0.000000e+00> : vector<2x8xf32>
      %61 = tpu.matmul %58, %60, %cst_48 {dimension_numbers = #tpu.dot_dimension_numbers<[1], [0], [0], [1], [0, 0, 1, 1], [], []>} : vector<2x32xf32>, vector<32x8xf32>, vector<2x8xf32> -> vector<2x8xf32>
      %62 = arith.addf %53, %61 : vector<2x8xf32>
      %c2_i32_49 = arith.constant 2 : i32
      %63 = arith.addi %arg4, %c2_i32_49 : i32
      %c0_50 = arith.constant 0 : index
      %64 = arith.index_cast %63 : i32 to index
      %c1_51 = arith.constant 1 : index
      %c0_52 = arith.constant 0 : index
      %65 = vector.load %arg1[%c0_50, %64, %c1_51, %c0_52] : memref<1x4x4x32xf32, #tpu.memory_space<vmem>>, vector<1x1x2x32xf32>
      %66 = vector.shape_cast %65 : vector<1x1x2x32xf32> to vector<1x2x32xf32>
      %67 = vector.shape_cast %66 : vector<1x2x32xf32> to vector<2x32xf32>
      %c7 = arith.constant 7 : index
      %c0_53 = arith.constant 0 : index
      %c0_54 = arith.constant 0 : index
      %68 = vector.load %arg2[%c7, %c0_53, %c0_54] : memref<9x32x8xf32, #tpu.memory_space<vmem>>, vector<1x32x8xf32>
      %69 = vector.shape_cast %68 : vector<1x32x8xf32> to vector<32x8xf32>
      %cst_55 = arith.constant dense<0.000000e+00> : vector<2x8xf32>
      %70 = tpu.matmul %67, %69, %cst_55 {dimension_numbers = #tpu.dot_dimension_numbers<[1], [0], [0], [1], [0, 0, 1, 1], [], []>} : vector<2x32xf32>, vector<32x8xf32>, vector<2x8xf32> -> vector<2x8xf32>
      %71 = arith.addf %62, %70 : vector<2x8xf32>
      %c2_i32_56 = arith.constant 2 : i32
      %72 = arith.addi %arg4, %c2_i32_56 : i32
      %c0_57 = arith.constant 0 : index
      %73 = arith.index_cast %72 : i32 to index
      %c2_58 = arith.constant 2 : index
      %c0_59 = arith.constant 0 : index
      %74 = vector.load %arg1[%c0_57, %73, %c2_58, %c0_59] : memref<1x4x4x32xf32, #tpu.memory_space<vmem>>, vector<1x1x2x32xf32>
      %75 = vector.shape_cast %74 : vector<1x1x2x32xf32> to vector<1x2x32xf32>
      %76 = vector.shape_cast %75 : vector<1x2x32xf32> to vector<2x32xf32>
      %c8 = arith.constant 8 : index
      %c0_60 = arith.constant 0 : index
      %c0_61 = arith.constant 0 : index
      %77 = vector.load %arg2[%c8, %c0_60, %c0_61] : memref<9x32x8xf32, #tpu.memory_space<vmem>>, vector<1x32x8xf32>
      %78 = vector.shape_cast %77 : vector<1x32x8xf32> to vector<32x8xf32>
      %cst_62 = arith.constant dense<0.000000e+00> : vector<2x8xf32>
      %79 = tpu.matmul %76, %78, %cst_62 {dimension_numbers = #tpu.dot_dimension_numbers<[1], [0], [0], [1], [0, 0, 1, 1], [], []>} : vector<2x32xf32>, vector<32x8xf32>, vector<2x8xf32> -> vector<2x8xf32>
      %80 = arith.addf %71, %79 : vector<2x8xf32>
      %81 = vector.shape_cast %80 : vector<2x8xf32> to vector<1x2x8xf32>
      %c0_63 = arith.constant 0 : index
      %82 = arith.index_cast %arg4 : i32 to index
      %c0_64 = arith.constant 0 : index
      %c0_65 = arith.constant 0 : index
      %83 = vector.load %arg3[%c0_63, %82, %c0_64, %c0_65] : memref<1x2x2x8xf32, #tpu.memory_space<vmem>>, vector<1x1x2x8xf32>
      %84 = vector.shape_cast %83 : vector<1x1x2x8xf32> to vector<1x2x8xf32>
      %85 = vector.shape_cast %81 : vector<1x2x8xf32> to vector<1x1x2x8xf32>
      tpu.vector_store %arg3[%c0_63, %82, %c0_64, %c0_65], %85 {strides = array<i32>} : memref<1x2x2x8xf32, #tpu.memory_space<vmem>>, vector<1x1x2x8xf32>,
    }
    %c2_i32_0 = arith.constant 2 : i32
    return
  }
  func.func @transform_0(%arg0: i32) -> (i32, i32, i32, i32) {
    %c0_i32 = arith.constant 0 : i32
    %c0_i32_0 = arith.constant 0 : i32
    %c0_i32_1 = arith.constant 0 : i32
    %c0_i32_2 = arith.constant 0 : i32
    return %arg0, %c0_i32, %c0_i32_0, %c0_i32_1 : i32, i32, i32, i32
  }
  func.func @transform_1(%arg0: i32) -> (i32, i32, i32) {
    %c0_i32 = arith.constant 0 : i32
    %c0_i32_0 = arith.constant 0 : i32
    %c0_i32_1 = arith.constant 0 : i32
    %c0_i32_2 = arith.constant 0 : i32
    return %c0_i32, %c0_i32_0, %c0_i32_1 : i32, i32, i32
  }
  func.func @transform_2(%arg0: i32) -> (i32, i32, i32, i32) {
    %c0_i32 = arith.constant 0 : i32
    %c0_i32_0 = arith.constant 0 : i32
    %c0_i32_1 = arith.constant 0 : i32
    %c0_i32_2 = arith.constant 0 : i32
    return %arg0, %c0_i32, %c0_i32_0, %c0_i32_1 : i32, i32, i32, i32
  }
}

module attributes {stable_mosaic.version = 11 : i64} {
  func.func @_fused_mm_kernel(%arg0: i32, %arg1: memref<8x24xf32, #tpu.memory_space<vmem>>, %arg2: memref<24x32xf32, #tpu.memory_space<vmem>>, %arg3: memref<1x24xf32, #tpu.memory_space<vmem>>, %arg4: memref<1x24xf32, #tpu.memory_space<vmem>>, %arg5: memref<1x32xf32, #tpu.memory_space<vmem>>, %arg6: memref<1x32xf32, #tpu.memory_space<vmem>>, %arg7: memref<8x32xf32, #tpu.memory_space<vmem>>) attributes {dimension_semantics = [#tpu.dimension_semantics<parallel>], iteration_bounds = array<i64: 1>, scalar_prefetch = 0 : i64, scratch_operands = 0 : i64, tpu.core_type = #tpu.core_type<tc>, window_params = [{transform_indices = @transform_0, window_bounds = array<i64: 8, 24>}, {pipeline_mode = #tpu.pipeline_mode<synchronous>, transform_indices = @transform_1, window_bounds = array<i64: 24, 32>}, {pipeline_mode = #tpu.pipeline_mode<synchronous>, transform_indices = @transform_2, window_bounds = array<i64: 1, 24>}, {pipeline_mode = #tpu.pipeline_mode<synchronous>, transform_indices = @transform_3, window_bounds = array<i64: 1, 24>}, {pipeline_mode = #tpu.pipeline_mode<synchronous>, transform_indices = @transform_4, window_bounds = array<i64: 1, 32>}, {pipeline_mode = #tpu.pipeline_mode<synchronous>, transform_indices = @transform_5, window_bounds = array<i64: 1, 32>}, {transform_indices = @transform_6, window_bounds = array<i64: 8, 32>}]} {
    %c0 = arith.constant 0 : index
    %c0_0 = arith.constant 0 : index
    %0 = vector.load %arg1[%c0, %c0_0] : memref<8x24xf32, #tpu.memory_space<vmem>>, vector<8x24xf32>
    %c0_1 = arith.constant 0 : index
    %c0_2 = arith.constant 0 : index
    %1 = vector.load %arg3[%c0_1, %c0_2] : memref<1x24xf32, #tpu.memory_space<vmem>>, vector<1x24xf32>
    %2 = vector.broadcast %1 : vector<1x24xf32> to vector<8x24xf32>
    %3 = arith.mulf %0, %2 : vector<8x24xf32>
    %c0_3 = arith.constant 0 : index
    %c0_4 = arith.constant 0 : index
    %4 = vector.load %arg4[%c0_3, %c0_4] : memref<1x24xf32, #tpu.memory_space<vmem>>, vector<1x24xf32>
    %5 = vector.broadcast %4 : vector<1x24xf32> to vector<8x24xf32>
    %6 = arith.addf %3, %5 : vector<8x24xf32>
    %cst = arith.constant 0.000000e+00 : f32
    %7 = vector.broadcast %cst : f32 to vector<8x24xf32>
    %8 = arith.maximumf %6, %7 : vector<8x24xf32>
    %c0_5 = arith.constant 0 : index
    %c0_6 = arith.constant 0 : index
    %9 = vector.load %arg2[%c0_5, %c0_6] : memref<24x32xf32, #tpu.memory_space<vmem>>, vector<24x32xf32>
    %cst_7 = arith.constant dense<0.000000e+00> : vector<8x32xf32>
    %10 = tpu.matmul %8, %9, %cst_7 {dimension_numbers = #tpu.dot_dimension_numbers<[1], [0], [0], [1], [0, 0, 1, 1], [], []>} : vector<8x24xf32>, vector<24x32xf32>, vector<8x32xf32> -> vector<8x32xf32>
    %c0_8 = arith.constant 0 : index
    %c0_9 = arith.constant 0 : index
    %11 = vector.load %arg5[%c0_8, %c0_9] : memref<1x32xf32, #tpu.memory_space<vmem>>, vector<1x32xf32>
    %12 = vector.broadcast %11 : vector<1x32xf32> to vector<8x32xf32>
    %13 = arith.mulf %10, %12 : vector<8x32xf32>
    %c0_10 = arith.constant 0 : index
    %c0_11 = arith.constant 0 : index
    %14 = vector.load %arg6[%c0_10, %c0_11] : memref<1x32xf32, #tpu.memory_space<vmem>>, vector<1x32xf32>
    %15 = vector.broadcast %14 : vector<1x32xf32> to vector<8x32xf32>
    %16 = arith.addf %13, %15 : vector<8x32xf32>
    %cst_12 = arith.constant 0.000000e+00 : f32
    %17 = vector.broadcast %cst_12 : f32 to vector<8x32xf32>
    %18 = arith.maximumf %16, %17 : vector<8x32xf32>
    %c0_13 = arith.constant 0 : index
    %c0_14 = arith.constant 0 : index
    %19 = vector.load %arg7[%c0_13, %c0_14] : memref<8x32xf32, #tpu.memory_space<vmem>>, vector<8x32xf32>
    tpu.vector_store %arg7[%c0_13, %c0_14], %18 {strides = array<i32>} : memref<8x32xf32, #tpu.memory_space<vmem>>, vector<8x32xf32>,
    return
  }
  func.func @transform_0(%arg0: i32) -> (i32, i32) {
    %c0_i32 = arith.constant 0 : i32
    %c0_i32_0 = arith.constant 0 : i32
    return %arg0, %c0_i32 : i32, i32
  }
  func.func @transform_1(%arg0: i32) -> (i32, i32) {
    %c0_i32 = arith.constant 0 : i32
    %c0_i32_0 = arith.constant 0 : i32
    %c0_i32_1 = arith.constant 0 : i32
    return %c0_i32, %c0_i32_0 : i32, i32
  }
  func.func @transform_2(%arg0: i32) -> (i32, i32) {
    %c0_i32 = arith.constant 0 : i32
    %c0_i32_0 = arith.constant 0 : i32
    %c0_i32_1 = arith.constant 0 : i32
    return %c0_i32, %c0_i32_0 : i32, i32
  }
  func.func @transform_3(%arg0: i32) -> (i32, i32) {
    %c0_i32 = arith.constant 0 : i32
    %c0_i32_0 = arith.constant 0 : i32
    %c0_i32_1 = arith.constant 0 : i32
    return %c0_i32, %c0_i32_0 : i32, i32
  }
  func.func @transform_4(%arg0: i32) -> (i32, i32) {
    %c0_i32 = arith.constant 0 : i32
    %c0_i32_0 = arith.constant 0 : i32
    %c0_i32_1 = arith.constant 0 : i32
    return %c0_i32, %c0_i32_0 : i32, i32
  }
  func.func @transform_5(%arg0: i32) -> (i32, i32) {
    %c0_i32 = arith.constant 0 : i32
    %c0_i32_0 = arith.constant 0 : i32
    %c0_i32_1 = arith.constant 0 : i32
    return %c0_i32, %c0_i32_0 : i32, i32
  }
  func.func @transform_6(%arg0: i32) -> (i32, i32) {
    %c0_i32 = arith.constant 0 : i32
    %c0_i32_0 = arith.constant 0 : i32
    return %arg0, %c0_i32 : i32, i32
  }
}

module attributes {stable_mosaic.version = 11 : i64} {
  func.func @_fused_mm_kernel(%arg0: i32, %arg1: memref<8x32xf32, #tpu.memory_space<vmem>>, %arg2: memref<32x16xf32, #tpu.memory_space<vmem>>, %arg3: memref<1x32xf32, #tpu.memory_space<vmem>>, %arg4: memref<1x32xf32, #tpu.memory_space<vmem>>, %arg5: memref<8x16xf32, #tpu.memory_space<vmem>>) attributes {dimension_semantics = [#tpu.dimension_semantics<parallel>], iteration_bounds = array<i64: 1>, scalar_prefetch = 0 : i64, scratch_operands = 0 : i64, tpu.core_type = #tpu.core_type<tc>, window_params = [{transform_indices = @transform_0, window_bounds = array<i64: 8, 32>}, {pipeline_mode = #tpu.pipeline_mode<synchronous>, transform_indices = @transform_1, window_bounds = array<i64: 32, 16>}, {pipeline_mode = #tpu.pipeline_mode<synchronous>, transform_indices = @transform_2, window_bounds = array<i64: 1, 32>}, {pipeline_mode = #tpu.pipeline_mode<synchronous>, transform_indices = @transform_3, window_bounds = array<i64: 1, 32>}, {transform_indices = @transform_4, window_bounds = array<i64: 8, 16>}]} {
    %c0 = arith.constant 0 : index
    %c0_0 = arith.constant 0 : index
    %0 = vector.load %arg1[%c0, %c0_0] : memref<8x32xf32, #tpu.memory_space<vmem>>, vector<8x32xf32>
    %c0_1 = arith.constant 0 : index
    %c0_2 = arith.constant 0 : index
    %1 = vector.load %arg3[%c0_1, %c0_2] : memref<1x32xf32, #tpu.memory_space<vmem>>, vector<1x32xf32>
    %2 = vector.broadcast %1 : vector<1x32xf32> to vector<8x32xf32>
    %3 = arith.mulf %0, %2 : vector<8x32xf32>
    %c0_3 = arith.constant 0 : index
    %c0_4 = arith.constant 0 : index
    %4 = vector.load %arg4[%c0_3, %c0_4] : memref<1x32xf32, #tpu.memory_space<vmem>>, vector<1x32xf32>
    %5 = vector.broadcast %4 : vector<1x32xf32> to vector<8x32xf32>
    %6 = arith.addf %3, %5 : vector<8x32xf32>
    %cst = arith.constant 0.000000e+00 : f32
    %7 = vector.broadcast %cst : f32 to vector<8x32xf32>
    %8 = arith.maximumf %6, %7 : vector<8x32xf32>
    %c0_5 = arith.constant 0 : index
    %c0_6 = arith.constant 0 : index
    %9 = vector.load %arg2[%c0_5, %c0_6] : memref<32x16xf32, #tpu.memory_space<vmem>>, vector<32x16xf32>
    %cst_7 = arith.constant dense<0.000000e+00> : vector<8x16xf32>
    %10 = tpu.matmul %8, %9, %cst_7 {dimension_numbers = #tpu.dot_dimension_numbers<[1], [0], [0], [1], [0, 0, 1, 1], [], []>} : vector<8x32xf32>, vector<32x16xf32>, vector<8x16xf32> -> vector<8x16xf32>
    %c0_8 = arith.constant 0 : index
    %c0_9 = arith.constant 0 : index
    %11 = vector.load %arg5[%c0_8, %c0_9] : memref<8x16xf32, #tpu.memory_space<vmem>>, vector<8x16xf32>
    tpu.vector_store %arg5[%c0_8, %c0_9], %10 {strides = array<i32>} : memref<8x16xf32, #tpu.memory_space<vmem>>, vector<8x16xf32>,
    return
  }
  func.func @transform_0(%arg0: i32) -> (i32, i32) {
    %c0_i32 = arith.constant 0 : i32
    %c0_i32_0 = arith.constant 0 : i32
    return %arg0, %c0_i32 : i32, i32
  }
  func.func @transform_1(%arg0: i32) -> (i32, i32) {
    %c0_i32 = arith.constant 0 : i32
    %c0_i32_0 = arith.constant 0 : i32
    %c0_i32_1 = arith.constant 0 : i32
    return %c0_i32, %c0_i32_0 : i32, i32
  }
  func.func @transform_2(%arg0: i32) -> (i32, i32) {
    %c0_i32 = arith.constant 0 : i32
    %c0_i32_0 = arith.constant 0 : i32
    %c0_i32_1 = arith.constant 0 : i32
    return %c0_i32, %c0_i32_0 : i32, i32
  }
  func.func @transform_3(%arg0: i32) -> (i32, i32) {
    %c0_i32 = arith.constant 0 : i32
    %c0_i32_0 = arith.constant 0 : i32
    %c0_i32_1 = arith.constant 0 : i32
    return %c0_i32, %c0_i32_0 : i32, i32
  }
  func.func @transform_4(%arg0: i32) -> (i32, i32) {
    %c0_i32 = arith.constant 0 : i32
    %c0_i32_0 = arith.constant 0 : i32
    return %arg0, %c0_i32 : i32, i32
  }
}

module attributes {stable_mosaic.version = 11 : i64} {
  func.func @_window_reduce_kernel(%arg0: i32, %arg1: memref<2x16xf32, #tpu.memory_space<vmem>>, %arg2: memref<2x16xf32, #tpu.memory_space<vmem>>, %arg3: memref<2x16xf32, #tpu.memory_space<vmem>>, %arg4: memref<2x16xf32, #tpu.memory_space<vmem>>, %arg5: memref<2x16xf32, #tpu.memory_space<vmem>>) attributes {dimension_semantics = [#tpu.dimension_semantics<parallel>], iteration_bounds = array<i64: 1>, scalar_prefetch = 0 : i64, scratch_operands = 0 : i64, tpu.core_type = #tpu.core_type<tc>, window_params = [{transform_indices = @transform_0, window_bounds = array<i64: 2, 16>}, {transform_indices = @transform_1, window_bounds = array<i64: 2, 16>}, {transform_indices = @transform_2, window_bounds = array<i64: 2, 16>}, {transform_indices = @transform_3, window_bounds = array<i64: 2, 16>}, {transform_indices = @transform_4, window_bounds = array<i64: 2, 16>}]} {
    %c0 = arith.constant 0 : index
    %c0_0 = arith.constant 0 : index
    %0 = vector.load %arg1[%c0, %c0_0] : memref<2x16xf32, #tpu.memory_space<vmem>>, vector<2x16xf32>
    %c0_1 = arith.constant 0 : index
    %c0_2 = arith.constant 0 : index
    %1 = vector.load %arg2[%c0_1, %c0_2] : memref<2x16xf32, #tpu.memory_space<vmem>>, vector<2x16xf32>
    %2 = arith.addf %0, %1 : vector<2x16xf32>
    %c0_3 = arith.constant 0 : index
    %c0_4 = arith.constant 0 : index
    %3 = vector.load %arg3[%c0_3, %c0_4] : memref<2x16xf32, #tpu.memory_space<vmem>>, vector<2x16xf32>
    %4 = arith.addf %2, %3 : vector<2x16xf32>
    %c0_5 = arith.constant 0 : index
    %c0_6 = arith.constant 0 : index
    %5 = vector.load %arg4[%c0_5, %c0_6] : memref<2x16xf32, #tpu.memory_space<vmem>>, vector<2x16xf32>
    %6 = arith.addf %4, %5 : vector<2x16xf32>
    %cst = arith.constant 2.500000e-01 : f32
    %7 = vector.broadcast %cst : f32 to vector<2x16xf32>
    %8 = arith.mulf %6, %7 : vector<2x16xf32>
    %c0_7 = arith.constant 0 : index
    %c0_8 = arith.constant 0 : index
    %9 = vector.load %arg5[%c0_7, %c0_8] : memref<2x16xf32, #tpu.memory_space<vmem>>, vector<2x16xf32>
    tpu.vector_store %arg5[%c0_7, %c0_8], %8 {strides = array<i32>} : memref<2x16xf32, #tpu.memory_space<vmem>>, vector<2x16xf32>,
    return
  }
  func.func @transform_0(%arg0: i32) -> (i32, i32) {
    %c0_i32 = arith.constant 0 : i32
    %c0_i32_0 = arith.constant 0 : i32
    return %arg0, %c0_i32 : i32, i32
  }
  func.func @transform_1(%arg0: i32) -> (i32, i32) {
    %c0_i32 = arith.constant 0 : i32
    %c0_i32_0 = arith.constant 0 : i32
    return %arg0, %c0_i32 : i32, i32
  }
  func.func @transform_2(%arg0: i32) -> (i32, i32) {
    %c0_i32 = arith.constant 0 : i32
    %c0_i32_0 = arith.constant 0 : i32
    return %arg0, %c0_i32 : i32, i32
  }
  func.func @transform_3(%arg0: i32) -> (i32, i32) {
    %c0_i32 = arith.constant 0 : i32
    %c0_i32_0 = arith.constant 0 : i32
    return %arg0, %c0_i32 : i32, i32
  }
  func.func @transform_4(%arg0: i32) -> (i32, i32) {
    %c0_i32 = arith.constant 0 : i32
    %c0_i32_0 = arith.constant 0 : i32
    return %arg0, %c0_i32 : i32, i32
  }
}

module attributes {stable_mosaic.version = 11 : i64} {
  func.func @_fused_mm_kernel(%arg0: i32, %arg1: memref<2x16xf32, #tpu.memory_space<vmem>>, %arg2: memref<16x32xf32, #tpu.memory_space<vmem>>, %arg3: memref<1x16xf32, #tpu.memory_space<vmem>>, %arg4: memref<1x16xf32, #tpu.memory_space<vmem>>, %arg5: memref<1x32xf32, #tpu.memory_space<vmem>>, %arg6: memref<1x32xf32, #tpu.memory_space<vmem>>, %arg7: memref<2x32xf32, #tpu.memory_space<vmem>>) attributes {dimension_semantics = [#tpu.dimension_semantics<parallel>], iteration_bounds = array<i64: 1>, scalar_prefetch = 0 : i64, scratch_operands = 0 : i64, tpu.core_type = #tpu.core_type<tc>, window_params = [{transform_indices = @transform_0, window_bounds = array<i64: 2, 16>}, {pipeline_mode = #tpu.pipeline_mode<synchronous>, transform_indices = @transform_1, window_bounds = array<i64: 16, 32>}, {pipeline_mode = #tpu.pipeline_mode<synchronous>, transform_indices = @transform_2, window_bounds = array<i64: 1, 16>}, {pipeline_mode = #tpu.pipeline_mode<synchronous>, transform_indices = @transform_3, window_bounds = array<i64: 1, 16>}, {pipeline_mode = #tpu.pipeline_mode<synchronous>, transform_indices = @transform_4, window_bounds = array<i64: 1, 32>}, {pipeline_mode = #tpu.pipeline_mode<synchronous>, transform_indices = @transform_5, window_bounds = array<i64: 1, 32>}, {transform_indices = @transform_6, window_bounds = array<i64: 2, 32>}]} {
    %c0 = arith.constant 0 : index
    %c0_0 = arith.constant 0 : index
    %0 = vector.load %arg1[%c0, %c0_0] : memref<2x16xf32, #tpu.memory_space<vmem>>, vector<2x16xf32>
    %c0_1 = arith.constant 0 : index
    %c0_2 = arith.constant 0 : index
    %1 = vector.load %arg3[%c0_1, %c0_2] : memref<1x16xf32, #tpu.memory_space<vmem>>, vector<1x16xf32>
    %2 = vector.broadcast %1 : vector<1x16xf32> to vector<2x16xf32>
    %3 = arith.mulf %0, %2 : vector<2x16xf32>
    %c0_3 = arith.constant 0 : index
    %c0_4 = arith.constant 0 : index
    %4 = vector.load %arg4[%c0_3, %c0_4] : memref<1x16xf32, #tpu.memory_space<vmem>>, vector<1x16xf32>
    %5 = vector.broadcast %4 : vector<1x16xf32> to vector<2x16xf32>
    %6 = arith.addf %3, %5 : vector<2x16xf32>
    %cst = arith.constant 0.000000e+00 : f32
    %7 = vector.broadcast %cst : f32 to vector<2x16xf32>
    %8 = arith.maximumf %6, %7 : vector<2x16xf32>
    %c0_5 = arith.constant 0 : index
    %c0_6 = arith.constant 0 : index
    %9 = vector.load %arg2[%c0_5, %c0_6] : memref<16x32xf32, #tpu.memory_space<vmem>>, vector<16x32xf32>
    %cst_7 = arith.constant dense<0.000000e+00> : vector<2x32xf32>
    %10 = tpu.matmul %8, %9, %cst_7 {dimension_numbers = #tpu.dot_dimension_numbers<[1], [0], [0], [1], [0, 0, 1, 1], [], []>} : vector<2x16xf32>, vector<16x32xf32>, vector<2x32xf32> -> vector<2x32xf32>
    %c0_8 = arith.constant 0 : index
    %c0_9 = arith.constant 0 : index
    %11 = vector.load %arg5[%c0_8, %c0_9] : memref<1x32xf32, #tpu.memory_space<vmem>>, vector<1x32xf32>
    %12 = vector.broadcast %11 : vector<1x32xf32> to vector<2x32xf32>
    %13 = arith.mulf %10, %12 : vector<2x32xf32>
    %c0_10 = arith.constant 0 : index
    %c0_11 = arith.constant 0 : index
    %14 = vector.load %arg6[%c0_10, %c0_11] : memref<1x32xf32, #tpu.memory_space<vmem>>, vector<1x32xf32>
    %15 = vector.broadcast %14 : vector<1x32xf32> to vector<2x32xf32>
    %16 = arith.addf %13, %15 : vector<2x32xf32>
    %cst_12 = arith.constant 0.000000e+00 : f32
    %17 = vector.broadcast %cst_12 : f32 to vector<2x32xf32>
    %18 = arith.maximumf %16, %17 : vector<2x32xf32>
    %c0_13 = arith.constant 0 : index
    %c0_14 = arith.constant 0 : index
    %19 = vector.load %arg7[%c0_13, %c0_14] : memref<2x32xf32, #tpu.memory_space<vmem>>, vector<2x32xf32>
    tpu.vector_store %arg7[%c0_13, %c0_14], %18 {strides = array<i32>} : memref<2x32xf32, #tpu.memory_space<vmem>>, vector<2x32xf32>,
    return
  }
  func.func @transform_0(%arg0: i32) -> (i32, i32) {
    %c0_i32 = arith.constant 0 : i32
    %c0_i32_0 = arith.constant 0 : i32
    return %arg0, %c0_i32 : i32, i32
  }
  func.func @transform_1(%arg0: i32) -> (i32, i32) {
    %c0_i32 = arith.constant 0 : i32
    %c0_i32_0 = arith.constant 0 : i32
    %c0_i32_1 = arith.constant 0 : i32
    return %c0_i32, %c0_i32_0 : i32, i32
  }
  func.func @transform_2(%arg0: i32) -> (i32, i32) {
    %c0_i32 = arith.constant 0 : i32
    %c0_i32_0 = arith.constant 0 : i32
    %c0_i32_1 = arith.constant 0 : i32
    return %c0_i32, %c0_i32_0 : i32, i32
  }
  func.func @transform_3(%arg0: i32) -> (i32, i32) {
    %c0_i32 = arith.constant 0 : i32
    %c0_i32_0 = arith.constant 0 : i32
    %c0_i32_1 = arith.constant 0 : i32
    return %c0_i32, %c0_i32_0 : i32, i32
  }
  func.func @transform_4(%arg0: i32) -> (i32, i32) {
    %c0_i32 = arith.constant 0 : i32
    %c0_i32_0 = arith.constant 0 : i32
    %c0_i32_1 = arith.constant 0 : i32
    return %c0_i32, %c0_i32_0 : i32, i32
  }
  func.func @transform_5(%arg0: i32) -> (i32, i32) {
    %c0_i32 = arith.constant 0 : i32
    %c0_i32_0 = arith.constant 0 : i32
    %c0_i32_1 = arith.constant 0 : i32
    return %c0_i32, %c0_i32_0 : i32, i32
  }
  func.func @transform_6(%arg0: i32) -> (i32, i32) {
    %c0_i32 = arith.constant 0 : i32
    %c0_i32_0 = arith.constant 0 : i32
    return %arg0, %c0_i32 : i32, i32
  }
}

module attributes {stable_mosaic.version = 11 : i64} {
  func.func @_conv3x3_kernel(%arg0: i32, %arg1: memref<1x3x3x32xf32, #tpu.memory_space<vmem>>, %arg2: memref<9x32x8xf32, #tpu.memory_space<vmem>>, %arg3: memref<1x1x1x8xf32, #tpu.memory_space<vmem>>) attributes {dimension_semantics = [#tpu.dimension_semantics<parallel>], iteration_bounds = array<i64: 2>, scalar_prefetch = 0 : i64, scratch_operands = 0 : i64, tpu.core_type = #tpu.core_type<tc>, window_params = [{transform_indices = @transform_0, window_bounds = array<i64: 1, 3, 3, 32>}, {pipeline_mode = #tpu.pipeline_mode<synchronous>, transform_indices = @transform_1, window_bounds = array<i64: 9, 32, 8>}, {transform_indices = @transform_2, window_bounds = array<i64: 1, 1, 1, 8>}]} {
    %c0_i32 = arith.constant 0 : i32
    %c0_i32_0 = arith.constant 0 : i32
    %0 = arith.addi %c0_i32, %c0_i32_0 : i32
    %c0 = arith.constant 0 : index
    %1 = arith.index_cast %0 : i32 to index
    %c0_1 = arith.constant 0 : index
    %c0_2 = arith.constant 0 : index
    %2 = vector.load %arg1[%c0, %1, %c0_1, %c0_2] : memref<1x3x3x32xf32, #tpu.memory_space<vmem>>, vector<1x1x1x32xf32>
    %3 = vector.shape_cast %2 : vector<1x1x1x32xf32> to vector<1x1x32xf32>
    %4 = vector.shape_cast %3 : vector<1x1x32xf32> to vector<1x32xf32>
    %c0_3 = arith.constant 0 : index
    %c0_4 = arith.constant 0 : index
    %c0_5 = arith.constant 0 : index
    %5 = vector.load %arg2[%c0_3, %c0_4, %c0_5] : memref<9x32x8xf32, #tpu.memory_space<vmem>>, vector<1x32x8xf32>
    %6 = vector.shape_cast %5 : vector<1x32x8xf32> to vector<32x8xf32>
    %cst = arith.constant dense<0.000000e+00> : vector<1x8xf32>
    %7 = tpu.matmul %4, %6, %cst {dimension_numbers = #tpu.dot_dimension_numbers<[1], [0], [0], [1], [0, 0, 1, 1], [], []>} : vector<1x32xf32>, vector<32x8xf32>, vector<1x8xf32> -> vector<1x8xf32>
    %c0_i32_6 = arith.constant 0 : i32
    %8 = arith.addi %c0_i32, %c0_i32_6 : i32
    %c0_7 = arith.constant 0 : index
    %9 = arith.index_cast %8 : i32 to index
    %c1 = arith.constant 1 : index
    %c0_8 = arith.constant 0 : index
    %10 = vector.load %arg1[%c0_7, %9, %c1, %c0_8] : memref<1x3x3x32xf32, #tpu.memory_space<vmem>>, vector<1x1x1x32xf32>
    %11 = vector.shape_cast %10 : vector<1x1x1x32xf32> to vector<1x1x32xf32>
    %12 = vector.shape_cast %11 : vector<1x1x32xf32> to vector<1x32xf32>
    %c1_9 = arith.constant 1 : index
    %c0_10 = arith.constant 0 : index
    %c0_11 = arith.constant 0 : index
    %13 = vector.load %arg2[%c1_9, %c0_10, %c0_11] : memref<9x32x8xf32, #tpu.memory_space<vmem>>, vector<1x32x8xf32>
    %14 = vector.shape_cast %13 : vector<1x32x8xf32> to vector<32x8xf32>
    %cst_12 = arith.constant dense<0.000000e+00> : vector<1x8xf32>
    %15 = tpu.matmul %12, %14, %cst_12 {dimension_numbers = #tpu.dot_dimension_numbers<[1], [0], [0], [1], [0, 0, 1, 1], [], []>} : vector<1x32xf32>, vector<32x8xf32>, vector<1x8xf32> -> vector<1x8xf32>
    %16 = arith.addf %7, %15 : vector<1x8xf32>
    %c0_i32_13 = arith.constant 0 : i32
    %17 = arith.addi %c0_i32, %c0_i32_13 : i32
    %c0_14 = arith.constant 0 : index
    %18 = arith.index_cast %17 : i32 to index
    %c2 = arith.constant 2 : index
    %c0_15 = arith.constant 0 : index
    %19 = vector.load %arg1[%c0_14, %18, %c2, %c0_15] : memref<1x3x3x32xf32, #tpu.memory_space<vmem>>, vector<1x1x1x32xf32>
    %20 = vector.shape_cast %19 : vector<1x1x1x32xf32> to vector<1x1x32xf32>
    %21 = vector.shape_cast %20 : vector<1x1x32xf32> to vector<1x32xf32>
    %c2_16 = arith.constant 2 : index
    %c0_17 = arith.constant 0 : index
    %c0_18 = arith.constant 0 : index
    %22 = vector.load %arg2[%c2_16, %c0_17, %c0_18] : memref<9x32x8xf32, #tpu.memory_space<vmem>>, vector<1x32x8xf32>
    %23 = vector.shape_cast %22 : vector<1x32x8xf32> to vector<32x8xf32>
    %cst_19 = arith.constant dense<0.000000e+00> : vector<1x8xf32>
    %24 = tpu.matmul %21, %23, %cst_19 {dimension_numbers = #tpu.dot_dimension_numbers<[1], [0], [0], [1], [0, 0, 1, 1], [], []>} : vector<1x32xf32>, vector<32x8xf32>, vector<1x8xf32> -> vector<1x8xf32>
    %25 = arith.addf %16, %24 : vector<1x8xf32>
    %c1_i32 = arith.constant 1 : i32
    %26 = arith.addi %c0_i32, %c1_i32 : i32
    %c0_20 = arith.constant 0 : index
    %27 = arith.index_cast %26 : i32 to index
    %c0_21 = arith.constant 0 : index
    %c0_22 = arith.constant 0 : index
    %28 = vector.load %arg1[%c0_20, %27, %c0_21, %c0_22] : memref<1x3x3x32xf32, #tpu.memory_space<vmem>>, vector<1x1x1x32xf32>
    %29 = vector.shape_cast %28 : vector<1x1x1x32xf32> to vector<1x1x32xf32>
    %30 = vector.shape_cast %29 : vector<1x1x32xf32> to vector<1x32xf32>
    %c3 = arith.constant 3 : index
    %c0_23 = arith.constant 0 : index
    %c0_24 = arith.constant 0 : index
    %31 = vector.load %arg2[%c3, %c0_23, %c0_24] : memref<9x32x8xf32, #tpu.memory_space<vmem>>, vector<1x32x8xf32>
    %32 = vector.shape_cast %31 : vector<1x32x8xf32> to vector<32x8xf32>
    %cst_25 = arith.constant dense<0.000000e+00> : vector<1x8xf32>
    %33 = tpu.matmul %30, %32, %cst_25 {dimension_numbers = #tpu.dot_dimension_numbers<[1], [0], [0], [1], [0, 0, 1, 1], [], []>} : vector<1x32xf32>, vector<32x8xf32>, vector<1x8xf32> -> vector<1x8xf32>
    %34 = arith.addf %25, %33 : vector<1x8xf32>
    %c1_i32_26 = arith.constant 1 : i32
    %35 = arith.addi %c0_i32, %c1_i32_26 : i32
    %c0_27 = arith.constant 0 : index
    %36 = arith.index_cast %35 : i32 to index
    %c1_28 = arith.constant 1 : index
    %c0_29 = arith.constant 0 : index
    %37 = vector.load %arg1[%c0_27, %36, %c1_28, %c0_29] : memref<1x3x3x32xf32, #tpu.memory_space<vmem>>, vector<1x1x1x32xf32>
    %38 = vector.shape_cast %37 : vector<1x1x1x32xf32> to vector<1x1x32xf32>
    %39 = vector.shape_cast %38 : vector<1x1x32xf32> to vector<1x32xf32>
    %c4 = arith.constant 4 : index
    %c0_30 = arith.constant 0 : index
    %c0_31 = arith.constant 0 : index
    %40 = vector.load %arg2[%c4, %c0_30, %c0_31] : memref<9x32x8xf32, #tpu.memory_space<vmem>>, vector<1x32x8xf32>
    %41 = vector.shape_cast %40 : vector<1x32x8xf32> to vector<32x8xf32>
    %cst_32 = arith.constant dense<0.000000e+00> : vector<1x8xf32>
    %42 = tpu.matmul %39, %41, %cst_32 {dimension_numbers = #tpu.dot_dimension_numbers<[1], [0], [0], [1], [0, 0, 1, 1], [], []>} : vector<1x32xf32>, vector<32x8xf32>, vector<1x8xf32> -> vector<1x8xf32>
    %43 = arith.addf %34, %42 : vector<1x8xf32>
    %c1_i32_33 = arith.constant 1 : i32
    %44 = arith.addi %c0_i32, %c1_i32_33 : i32
    %c0_34 = arith.constant 0 : index
    %45 = arith.index_cast %44 : i32 to index
    %c2_35 = arith.constant 2 : index
    %c0_36 = arith.constant 0 : index
    %46 = vector.load %arg1[%c0_34, %45, %c2_35, %c0_36] : memref<1x3x3x32xf32, #tpu.memory_space<vmem>>, vector<1x1x1x32xf32>
    %47 = vector.shape_cast %46 : vector<1x1x1x32xf32> to vector<1x1x32xf32>
    %48 = vector.shape_cast %47 : vector<1x1x32xf32> to vector<1x32xf32>
    %c5 = arith.constant 5 : index
    %c0_37 = arith.constant 0 : index
    %c0_38 = arith.constant 0 : index
    %49 = vector.load %arg2[%c5, %c0_37, %c0_38] : memref<9x32x8xf32, #tpu.memory_space<vmem>>, vector<1x32x8xf32>
    %50 = vector.shape_cast %49 : vector<1x32x8xf32> to vector<32x8xf32>
    %cst_39 = arith.constant dense<0.000000e+00> : vector<1x8xf32>
    %51 = tpu.matmul %48, %50, %cst_39 {dimension_numbers = #tpu.dot_dimension_numbers<[1], [0], [0], [1], [0, 0, 1, 1], [], []>} : vector<1x32xf32>, vector<32x8xf32>, vector<1x8xf32> -> vector<1x8xf32>
    %52 = arith.addf %43, %51 : vector<1x8xf32>
    %c2_i32 = arith.constant 2 : i32
    %53 = arith.addi %c0_i32, %c2_i32 : i32
    %c0_40 = arith.constant 0 : index
    %54 = arith.index_cast %53 : i32 to index
    %c0_41 = arith.constant 0 : index
    %c0_42 = arith.constant 0 : index
    %55 = vector.load %arg1[%c0_40, %54, %c0_41, %c0_42] : memref<1x3x3x32xf32, #tpu.memory_space<vmem>>, vector<1x1x1x32xf32>
    %56 = vector.shape_cast %55 : vector<1x1x1x32xf32> to vector<1x1x32xf32>
    %57 = vector.shape_cast %56 : vector<1x1x32xf32> to vector<1x32xf32>
    %c6 = arith.constant 6 : index
    %c0_43 = arith.constant 0 : index
    %c0_44 = arith.constant 0 : index
    %58 = vector.load %arg2[%c6, %c0_43, %c0_44] : memref<9x32x8xf32, #tpu.memory_space<vmem>>, vector<1x32x8xf32>
    %59 = vector.shape_cast %58 : vector<1x32x8xf32> to vector<32x8xf32>
    %cst_45 = arith.constant dense<0.000000e+00> : vector<1x8xf32>
    %60 = tpu.matmul %57, %59, %cst_45 {dimension_numbers = #tpu.dot_dimension_numbers<[1], [0], [0], [1], [0, 0, 1, 1], [], []>} : vector<1x32xf32>, vector<32x8xf32>, vector<1x8xf32> -> vector<1x8xf32>
    %61 = arith.addf %52, %60 : vector<1x8xf32>
    %c2_i32_46 = arith.constant 2 : i32
    %62 = arith.addi %c0_i32, %c2_i32_46 : i32
    %c0_47 = arith.constant 0 : index
    %63 = arith.index_cast %62 : i32 to index
    %c1_48 = arith.constant 1 : index
    %c0_49 = arith.constant 0 : index
    %64 = vector.load %arg1[%c0_47, %63, %c1_48, %c0_49] : memref<1x3x3x32xf32, #tpu.memory_space<vmem>>, vector<1x1x1x32xf32>
    %65 = vector.shape_cast %64 : vector<1x1x1x32xf32> to vector<1x1x32xf32>
    %66 = vector.shape_cast %65 : vector<1x1x32xf32> to vector<1x32xf32>
    %c7 = arith.constant 7 : index
    %c0_50 = arith.constant 0 : index
    %c0_51 = arith.constant 0 : index
    %67 = vector.load %arg2[%c7, %c0_50, %c0_51] : memref<9x32x8xf32, #tpu.memory_space<vmem>>, vector<1x32x8xf32>
    %68 = vector.shape_cast %67 : vector<1x32x8xf32> to vector<32x8xf32>
    %cst_52 = arith.constant dense<0.000000e+00> : vector<1x8xf32>
    %69 = tpu.matmul %66, %68, %cst_52 {dimension_numbers = #tpu.dot_dimension_numbers<[1], [0], [0], [1], [0, 0, 1, 1], [], []>} : vector<1x32xf32>, vector<32x8xf32>, vector<1x8xf32> -> vector<1x8xf32>
    %70 = arith.addf %61, %69 : vector<1x8xf32>
    %c2_i32_53 = arith.constant 2 : i32
    %71 = arith.addi %c0_i32, %c2_i32_53 : i32
    %c0_54 = arith.constant 0 : index
    %72 = arith.index_cast %71 : i32 to index
    %c2_55 = arith.constant 2 : index
    %c0_56 = arith.constant 0 : index
    %73 = vector.load %arg1[%c0_54, %72, %c2_55, %c0_56] : memref<1x3x3x32xf32, #tpu.memory_space<vmem>>, vector<1x1x1x32xf32>
    %74 = vector.shape_cast %73 : vector<1x1x1x32xf32> to vector<1x1x32xf32>
    %75 = vector.shape_cast %74 : vector<1x1x32xf32> to vector<1x32xf32>
    %c8 = arith.constant 8 : index
    %c0_57 = arith.constant 0 : index
    %c0_58 = arith.constant 0 : index
    %76 = vector.load %arg2[%c8, %c0_57, %c0_58] : memref<9x32x8xf32, #tpu.memory_space<vmem>>, vector<1x32x8xf32>
    %77 = vector.shape_cast %76 : vector<1x32x8xf32> to vector<32x8xf32>
    %cst_59 = arith.constant dense<0.000000e+00> : vector<1x8xf32>
    %78 = tpu.matmul %75, %77, %cst_59 {dimension_numbers = #tpu.dot_dimension_numbers<[1], [0], [0], [1], [0, 0, 1, 1], [], []>} : vector<1x32xf32>, vector<32x8xf32>, vector<1x8xf32> -> vector<1x8xf32>
    %79 = arith.addf %70, %78 : vector<1x8xf32>
    %80 = vector.shape_cast %79 : vector<1x8xf32> to vector<1x1x8xf32>
    %c0_60 = arith.constant 0 : index
    %81 = arith.index_cast %c0_i32 : i32 to index
    %c0_61 = arith.constant 0 : index
    %c0_62 = arith.constant 0 : index
    %82 = vector.load %arg3[%c0_60, %81, %c0_61, %c0_62] : memref<1x1x1x8xf32, #tpu.memory_space<vmem>>, vector<1x1x1x8xf32>
    %83 = vector.shape_cast %82 : vector<1x1x1x8xf32> to vector<1x1x8xf32>
    %84 = vector.shape_cast %80 : vector<1x1x8xf32> to vector<1x1x1x8xf32>
    tpu.vector_store %arg3[%c0_60, %81, %c0_61, %c0_62], %84 {strides = array<i32>} : memref<1x1x1x8xf32, #tpu.memory_space<vmem>>, vector<1x1x1x8xf32>,
    %c1_i32_63 = arith.constant 1 : i32
    return
  }
  func.func @transform_0(%arg0: i32) -> (i32, i32, i32, i32) {
    %c0_i32 = arith.constant 0 : i32
    %c0_i32_0 = arith.constant 0 : i32
    %c0_i32_1 = arith.constant 0 : i32
    %c0_i32_2 = arith.constant 0 : i32
    return %arg0, %c0_i32, %c0_i32_0, %c0_i32_1 : i32, i32, i32, i32
  }
  func.func @transform_1(%arg0: i32) -> (i32, i32, i32) {
    %c0_i32 = arith.constant 0 : i32
    %c0_i32_0 = arith.constant 0 : i32
    %c0_i32_1 = arith.constant 0 : i32
    %c0_i32_2 = arith.constant 0 : i32
    return %c0_i32, %c0_i32_0, %c0_i32_1 : i32, i32, i32
  }
  func.func @transform_2(%arg0: i32) -> (i32, i32, i32, i32) {
    %c0_i32 = arith.constant 0 : i32
    %c0_i32_0 = arith.constant 0 : i32
    %c0_i32_1 = arith.constant 0 : i32
    %c0_i32_2 = arith.constant 0 : i32
    return %arg0, %c0_i32, %c0_i32_0, %c0_i32_1 : i32, i32, i32, i32
  }
}

module attributes {stable_mosaic.version = 11 : i64} {
  func.func @_fused_mm_kernel(%arg0: i32, %arg1: memref<2x24xf32, #tpu.memory_space<vmem>>, %arg2: memref<24x32xf32, #tpu.memory_space<vmem>>, %arg3: memref<1x24xf32, #tpu.memory_space<vmem>>, %arg4: memref<1x24xf32, #tpu.memory_space<vmem>>, %arg5: memref<1x32xf32, #tpu.memory_space<vmem>>, %arg6: memref<1x32xf32, #tpu.memory_space<vmem>>, %arg7: memref<2x32xf32, #tpu.memory_space<vmem>>) attributes {dimension_semantics = [#tpu.dimension_semantics<parallel>], iteration_bounds = array<i64: 1>, scalar_prefetch = 0 : i64, scratch_operands = 0 : i64, tpu.core_type = #tpu.core_type<tc>, window_params = [{transform_indices = @transform_0, window_bounds = array<i64: 2, 24>}, {pipeline_mode = #tpu.pipeline_mode<synchronous>, transform_indices = @transform_1, window_bounds = array<i64: 24, 32>}, {pipeline_mode = #tpu.pipeline_mode<synchronous>, transform_indices = @transform_2, window_bounds = array<i64: 1, 24>}, {pipeline_mode = #tpu.pipeline_mode<synchronous>, transform_indices = @transform_3, window_bounds = array<i64: 1, 24>}, {pipeline_mode = #tpu.pipeline_mode<synchronous>, transform_indices = @transform_4, window_bounds = array<i64: 1, 32>}, {pipeline_mode = #tpu.pipeline_mode<synchronous>, transform_indices = @transform_5, window_bounds = array<i64: 1, 32>}, {transform_indices = @transform_6, window_bounds = array<i64: 2, 32>}]} {
    %c0 = arith.constant 0 : index
    %c0_0 = arith.constant 0 : index
    %0 = vector.load %arg1[%c0, %c0_0] : memref<2x24xf32, #tpu.memory_space<vmem>>, vector<2x24xf32>
    %c0_1 = arith.constant 0 : index
    %c0_2 = arith.constant 0 : index
    %1 = vector.load %arg3[%c0_1, %c0_2] : memref<1x24xf32, #tpu.memory_space<vmem>>, vector<1x24xf32>
    %2 = vector.broadcast %1 : vector<1x24xf32> to vector<2x24xf32>
    %3 = arith.mulf %0, %2 : vector<2x24xf32>
    %c0_3 = arith.constant 0 : index
    %c0_4 = arith.constant 0 : index
    %4 = vector.load %arg4[%c0_3, %c0_4] : memref<1x24xf32, #tpu.memory_space<vmem>>, vector<1x24xf32>
    %5 = vector.broadcast %4 : vector<1x24xf32> to vector<2x24xf32>
    %6 = arith.addf %3, %5 : vector<2x24xf32>
    %cst = arith.constant 0.000000e+00 : f32
    %7 = vector.broadcast %cst : f32 to vector<2x24xf32>
    %8 = arith.maximumf %6, %7 : vector<2x24xf32>
    %c0_5 = arith.constant 0 : index
    %c0_6 = arith.constant 0 : index
    %9 = vector.load %arg2[%c0_5, %c0_6] : memref<24x32xf32, #tpu.memory_space<vmem>>, vector<24x32xf32>
    %cst_7 = arith.constant dense<0.000000e+00> : vector<2x32xf32>
    %10 = tpu.matmul %8, %9, %cst_7 {dimension_numbers = #tpu.dot_dimension_numbers<[1], [0], [0], [1], [0, 0, 1, 1], [], []>} : vector<2x24xf32>, vector<24x32xf32>, vector<2x32xf32> -> vector<2x32xf32>
    %c0_8 = arith.constant 0 : index
    %c0_9 = arith.constant 0 : index
    %11 = vector.load %arg5[%c0_8, %c0_9] : memref<1x32xf32, #tpu.memory_space<vmem>>, vector<1x32xf32>
    %12 = vector.broadcast %11 : vector<1x32xf32> to vector<2x32xf32>
    %13 = arith.mulf %10, %12 : vector<2x32xf32>
    %c0_10 = arith.constant 0 : index
    %c0_11 = arith.constant 0 : index
    %14 = vector.load %arg6[%c0_10, %c0_11] : memref<1x32xf32, #tpu.memory_space<vmem>>, vector<1x32xf32>
    %15 = vector.broadcast %14 : vector<1x32xf32> to vector<2x32xf32>
    %16 = arith.addf %13, %15 : vector<2x32xf32>
    %cst_12 = arith.constant 0.000000e+00 : f32
    %17 = vector.broadcast %cst_12 : f32 to vector<2x32xf32>
    %18 = arith.maximumf %16, %17 : vector<2x32xf32>
    %c0_13 = arith.constant 0 : index
    %c0_14 = arith.constant 0 : index
    %19 = vector.load %arg7[%c0_13, %c0_14] : memref<2x32xf32, #tpu.memory_space<vmem>>, vector<2x32xf32>
    tpu.vector_store %arg7[%c0_13, %c0_14], %18 {strides = array<i32>} : memref<2x32xf32, #tpu.memory_space<vmem>>, vector<2x32xf32>,
    return
  }
  func.func @transform_0(%arg0: i32) -> (i32, i32) {
    %c0_i32 = arith.constant 0 : i32
    %c0_i32_0 = arith.constant 0 : i32
    return %arg0, %c0_i32 : i32, i32
  }
  func.func @transform_1(%arg0: i32) -> (i32, i32) {
    %c0_i32 = arith.constant 0 : i32
    %c0_i32_0 = arith.constant 0 : i32
    %c0_i32_1 = arith.constant 0 : i32
    return %c0_i32, %c0_i32_0 : i32, i32
  }
  func.func @transform_2(%arg0: i32) -> (i32, i32) {
    %c0_i32 = arith.constant 0 : i32
    %c0_i32_0 = arith.constant 0 : i32
    %c0_i32_1 = arith.constant 0 : i32
    return %c0_i32, %c0_i32_0 : i32, i32
  }
  func.func @transform_3(%arg0: i32) -> (i32, i32) {
    %c0_i32 = arith.constant 0 : i32
    %c0_i32_0 = arith.constant 0 : i32
    %c0_i32_1 = arith.constant 0 : i32
    return %c0_i32, %c0_i32_0 : i32, i32
  }
  func.func @transform_4(%arg0: i32) -> (i32, i32) {
    %c0_i32 = arith.constant 0 : i32
    %c0_i32_0 = arith.constant 0 : i32
    %c0_i32_1 = arith.constant 0 : i32
    return %c0_i32, %c0_i32_0 : i32, i32
  }
  func.func @transform_5(%arg0: i32) -> (i32, i32) {
    %c0_i32 = arith.constant 0 : i32
    %c0_i32_0 = arith.constant 0 : i32
    %c0_i32_1 = arith.constant 0 : i32
    return %c0_i32, %c0_i32_0 : i32, i32
  }
  func.func @transform_6(%arg0: i32) -> (i32, i32) {
    %c0_i32 = arith.constant 0 : i32
    %c0_i32_0 = arith.constant 0 : i32
    return %arg0, %c0_i32 : i32, i32
  }
}

module attributes {stable_mosaic.version = 11 : i64} {
  func.func @_fc_kernel(%arg0: i32, %arg1: memref<2x512xf32, #tpu.memory_space<vmem>>, %arg2: memref<512x2xf32, #tpu.memory_space<vmem>>, %arg3: memref<1x512xf32, #tpu.memory_space<vmem>>, %arg4: memref<1x512xf32, #tpu.memory_space<vmem>>, %arg5: memref<1x2xf32, #tpu.memory_space<vmem>>, %arg6: memref<2x2xf32, #tpu.memory_space<vmem>>, %arg7: memref<2x2xf32, #tpu.memory_space<vmem>>) attributes {dimension_semantics = [#tpu.dimension_semantics<arbitrary>], iteration_bounds = array<i64: 1>, scalar_prefetch = 0 : i64, scratch_operands = 1 : i64, tpu.core_type = #tpu.core_type<tc>, window_params = [{transform_indices = @transform_0, window_bounds = array<i64: 2, 512>}, {transform_indices = @transform_1, window_bounds = array<i64: 512, 2>}, {transform_indices = @transform_2, window_bounds = array<i64: 1, 512>}, {transform_indices = @transform_3, window_bounds = array<i64: 1, 512>}, {pipeline_mode = #tpu.pipeline_mode<synchronous>, transform_indices = @transform_4, window_bounds = array<i64: 1, 2>}, {pipeline_mode = #tpu.pipeline_mode<synchronous>, transform_indices = @transform_5, window_bounds = array<i64: 2, 2>}]} {
    %c0_i32 = arith.constant 0 : i32
    %0 = arith.cmpi eq, %arg0, %c0_i32 : i32
    %1 = arith.extui %0 : i1 to i32
    %c0_i32_0 = arith.constant 0 : i32
    %2 = arith.cmpi ne, %1, %c0_i32_0 : i32
    scf.if %2 {
      %cst_14 = arith.constant 0.000000e+00 : f32
      %18 = vector.broadcast %cst_14 : f32 to vector<2x2xf32>
      %c0_15 = arith.constant 0 : index
      %c0_16 = arith.constant 0 : index
      %19 = vector.load %arg7[%c0_15, %c0_16] : memref<2x2xf32, #tpu.memory_space<vmem>>, vector<2x2xf32>
      tpu.vector_store %arg7[%c0_15, %c0_16], %18 {strides = array<i32>} : memref<2x2xf32, #tpu.memory_space<vmem>>, vector<2x2xf32>,
    } else {
    }
    %c0 = arith.constant 0 : index
    %c0_1 = arith.constant 0 : index
    %3 = vector.load %arg1[%c0, %c0_1] : memref<2x512xf32, #tpu.memory_space<vmem>>, vector<2x512xf32>
    %c0_2 = arith.constant 0 : index
    %c0_3 = arith.constant 0 : index
    %4 = vector.load %arg3[%c0_2, %c0_3] : memref<1x512xf32, #tpu.memory_space<vmem>>, vector<1x512xf32>
    %5 = vector.broadcast %4 : vector<1x512xf32> to vector<2x512xf32>
    %6 = arith.mulf %3, %5 : vector<2x512xf32>
    %c0_4 = arith.constant 0 : index
    %c0_5 = arith.constant 0 : index
    %7 = vector.load %arg4[%c0_4, %c0_5] : memref<1x512xf32, #tpu.memory_space<vmem>>, vector<1x512xf32>
    %8 = vector.broadcast %7 : vector<1x512xf32> to vector<2x512xf32>
    %9 = arith.addf %6, %8 : vector<2x512xf32>
    %c0_6 = arith.constant 0 : index
    %c0_7 = arith.constant 0 : index
    %10 = vector.load %arg7[%c0_6, %c0_7] : memref<2x2xf32, #tpu.memory_space<vmem>>, vector<2x2xf32>
    %c0_8 = arith.constant 0 : index
    %c0_9 = arith.constant 0 : index
    %11 = vector.load %arg2[%c0_8, %c0_9] : memref<512x2xf32, #tpu.memory_space<vmem>>, vector<512x2xf32>
    %cst = arith.constant dense<0.000000e+00> : vector<2x2xf32>
    %12 = tpu.matmul %9, %11, %cst {dimension_numbers = #tpu.dot_dimension_numbers<[1], [0], [0], [1], [0, 0, 1, 1], [], []>} : vector<2x512xf32>, vector<512x2xf32>, vector<2x2xf32> -> vector<2x2xf32>
    %13 = arith.addf %10, %12 : vector<2x2xf32>
    %c0_10 = arith.constant 0 : index
    %c0_11 = arith.constant 0 : index
    %14 = vector.load %arg7[%c0_10, %c0_11] : memref<2x2xf32, #tpu.memory_space<vmem>>, vector<2x2xf32>
    tpu.vector_store %arg7[%c0_10, %c0_11], %13 {strides = array<i32>} : memref<2x2xf32, #tpu.memory_space<vmem>>, vector<2x2xf32>,
    %c0_i32_12 = arith.constant 0 : i32
    %15 = arith.cmpi eq, %arg0, %c0_i32_12 : i32
    %16 = arith.extui %15 : i1 to i32
    %c0_i32_13 = arith.constant 0 : i32
    %17 = arith.cmpi ne, %16, %c0_i32_13 : i32
    scf.if %17 {
      %c0_14 = arith.constant 0 : index
      %c0_15 = arith.constant 0 : index
      %18 = vector.load %arg7[%c0_14, %c0_15] : memref<2x2xf32, #tpu.memory_space<vmem>>, vector<2x2xf32>
      %c0_16 = arith.constant 0 : index
      %c0_17 = arith.constant 0 : index
      %19 = vector.load %arg5[%c0_16, %c0_17] : memref<1x2xf32, #tpu.memory_space<vmem>>, vector<1x2xf32>
      %20 = vector.broadcast %19 : vector<1x2xf32> to vector<2x2xf32>
      %21 = arith.addf %18, %20 : vector<2x2xf32>
      %c0_18 = arith.constant 0 : index
      %c0_19 = arith.constant 0 : index
      %22 = vector.load %arg6[%c0_18, %c0_19] : memref<2x2xf32, #tpu.memory_space<vmem>>, vector<2x2xf32>
      tpu.vector_store %arg6[%c0_18, %c0_19], %21 {strides = array<i32>} : memref<2x2xf32, #tpu.memory_space<vmem>>, vector<2x2xf32>,
    } else {
    }
    return
  }
  func.func @transform_0(%arg0: i32) -> (i32, i32) {
    %c0_i32 = arith.constant 0 : i32
    %c0_i32_0 = arith.constant 0 : i32
    return %c0_i32, %arg0 : i32, i32
  }
  func.func @transform_1(%arg0: i32) -> (i32, i32) {
    %c0_i32 = arith.constant 0 : i32
    %c0_i32_0 = arith.constant 0 : i32
    return %arg0, %c0_i32 : i32, i32
  }
  func.func @transform_2(%arg0: i32) -> (i32, i32) {
    %c0_i32 = arith.constant 0 : i32
    %c0_i32_0 = arith.constant 0 : i32
    return %c0_i32, %arg0 : i32, i32
  }
  func.func @transform_3(%arg0: i32) -> (i32, i32) {
    %c0_i32 = arith.constant 0 : i32
    %c0_i32_0 = arith.constant 0 : i32
    return %c0_i32, %arg0 : i32, i32
  }
  func.func @transform_4(%arg0: i32) -> (i32, i32) {
    %c0_i32 = arith.constant 0 : i32
    %c0_i32_0 = arith.constant 0 : i32
    %c0_i32_1 = arith.constant 0 : i32
    return %c0_i32, %c0_i32_0 : i32, i32
  }
  func.func @transform_5(%arg0: i32) -> (i32, i32) {
    %c0_i32 = arith.constant 0 : i32
    %c0_i32_0 = arith.constant 0 : i32
    %c0_i32_1 = arith.constant 0 : i32
    return %c0_i32, %c0_i32_0 : i32, i32
  }
}

</mosaic_0001>

<llo_original>
// kernel: multi_mri_fc_layers_forward.265
$region0: #{multi_mri_fc_layers_forward.265}
  #allocation0 [shape = 'u32[]', space=smem, size = 0x4, offset = 0x4, fixed_abs, tag = 'smem constant byte address 0x4 - core index']
  #allocation1 [shape = 'u32[144,128]{1,0:T(1,128)}', space=vmem, size = 0x12000, scoped, tag = 'internal scratch']
  %s0 = inlined_call_operand.vmem [shape: f32[512,49], index: 0, kind: input, shape index: {}]
  %s1 = inlined_call_operand.vmem [shape: f32[49,16], index: 1, kind: input, shape index: {}]
  %s2 = inlined_call_operand.vmem [shape: f32[1,16], index: 2, kind: input, shape index: {}]
  %s3 = inlined_call_operand.vmem [shape: f32[1,16], index: 3, kind: input, shape index: {}]
  %s4 = inlined_call_operand.vmem [shape: f32[512,16], index: 4, kind: output, shape index: {}]
  %s5 = sld [smem:[#allocation0]]
  $region49: #{multi_mri_fc_layers_forward.265} parent=0
    _
  %s7 = ssub.s32 1, %s5
  %s8 = scalar_select 0, %s7, %s5
  loop: start=0, step=1, limit=4
  $region2: #{multi_mri_fc_layers_forward.265} parent=0 // loop_pre_header
    _
  $region3: #{multi_mri_fc_layers_forward.265} parent=0 // loop_header
    %s10 = sphi 0, %s14
    %p11 = scmp.ge.s32.totalorder %s10, 4
    %s20 = sphi 0, %s22
    %s23 = sphi 0, %s20
    %s24 = sphi 0, %s23
    %s40 = sphi 0, %s24
    %s44 = sphi 0, %s44
    %s46 = sphi 0, %s44
    %s47 = sphi 0, %s46
    %s61 = sphi 0, %s47
    %s65 = sphi 0, %s65
    %s67 = sphi 0, %s65
    %s68 = sphi 0, %s67
    %s82 = sphi 0, %s68
    %s86 = sphi 0, %s86
    %s88 = sphi 0, %s86
    %s89 = sphi 0, %s88
    %s103 = sphi 0, %s89
    %s109 = sphi 0, %s111
    %s112 = sphi 0, %s109
    %s113 = sphi 0, %s112
    %s129 = sphi 0, %s113
  $region4: #{multi_mri_fc_layers_forward.265} parent=0 // loop_header_branch
    %13 = sbr.rel (%p11) target = $region8
  $region5: #{multi_mri_fc_layers_forward.265} parent=0 // loop_body
    %s15 = ssub.s32 %s10, 1
    %s16 = ssub.s32 %s10, 2
    %s17 = sadd.s32 %s10, 1
    %s18 = ssub.s32 %s10, %s17
    %p19 = scmp.eq.s32.totalorder %s18, 0
    %s21 = sadd.s32 %s20, 1
    %s22 = scalar_select %p19, %s20, %s21
    %p25 = pneg %p19
    %p26 = scmp.eq.s32.totalorder %s10, 1
    %p27 = por %p25, %p26
    %p28 = scmp.ne.s32.totalorder %s20, %s23
    %p29 = scmp.eq.s32.totalorder %s10, 0
    %p30 = por %p28, %p29
    %p31 = scmp.ne.s32.totalorder %s20, %s23
    %p32 = scmp.eq.s32.totalorder %s15, 1
    %p33 = por %p31, %p32
    %p34 = scmp.ne.s32.totalorder %s23, %s24
    %p35 = scmp.eq.s32.totalorder %s15, 0
    %p36 = por %p34, %p35
    %p37 = scmp.ne.s32.totalorder %s23, %s24
    %p38 = scmp.eq.s32.totalorder %s16, 1
    %p39 = por %p37, %p38
    %p41 = scmp.ne.s32.totalorder %s24, %s40
    %p42 = scmp.eq.s32.totalorder %s16, 0
    %p43 = por %p41, %p42
    %s45 = sadd.s32 %s44, 1
    %p48 = scmp.eq.s32.totalorder %s10, 1
    %p49 = scmp.ne.s32.totalorder %s44, %s46
    %p50 = scmp.eq.s32.totalorder %s10, 0
    %p51 = por %p49, %p50
    %p52 = scmp.ne.s32.totalorder %s44, %s46
    %p53 = scmp.eq.s32.totalorder %s15, 1
    %p54 = por %p52, %p53
    %p55 = scmp.ne.s32.totalorder %s46, %s47
    %p56 = scmp.eq.s32.totalorder %s15, 0
    %p57 = por %p55, %p56
    %p58 = scmp.ne.s32.totalorder %s46, %s47
    %p59 = scmp.eq.s32.totalorder %s16, 1
    %p60 = por %p58, %p59
    %p62 = scmp.ne.s32.totalorder %s47, %s61
    %p63 = scmp.eq.s32.totalorder %s16, 0
    %p64 = por %p62, %p63
    %s66 = sadd.s32 %s65, 1
    %p69 = scmp.eq.s32.totalorder %s10, 1
    %p70 = scmp.ne.s32.totalorder %s65, %s67
    %p71 = scmp.eq.s32.totalorder %s10, 0
    %p72 = por %p70, %p71
    %p73 = scmp.ne.s32.totalorder %s65, %s67
    %p74 = scmp.eq.s32.totalorder %s15, 1
    %p75 = por %p73, %p74
    %p76 = scmp.ne.s32.totalorder %s67, %s68
    %p77 = scmp.eq.s32.totalorder %s15, 0
    %p78 = por %p76, %p77
    %p79 = scmp.ne.s32.totalorder %s67, %s68
    %p80 = scmp.eq.s32.totalorder %s16, 1
    %p81 = por %p79, %p80
    %p83 = scmp.ne.s32.totalorder %s68, %s82
    %p84 = scmp.eq.s32.totalorder %s16, 0
    %p85 = por %p83, %p84
    %s87 = sadd.s32 %s86, 1
    %p90 = scmp.eq.s32.totalorder %s10, 1
    %p91 = scmp.ne.s32.totalorder %s86, %s88
    %p92 = scmp.eq.s32.totalorder %s10, 0
    %p93 = por %p91, %p92
    %p94 = scmp.ne.s32.totalorder %s86, %s88
    %p95 = scmp.eq.s32.totalorder %s15, 1
    %p96 = por %p94, %p95
    %p97 = scmp.ne.s32.totalorder %s88, %s89
    %p98 = scmp.eq.s32.totalorder %s15, 0
    %p99 = por %p97, %p98
    %p100 = scmp.ne.s32.totalorder %s88, %s89
    %p101 = scmp.eq.s32.totalorder %s16, 1
    %p102 = por %p100, %p101
    %p104 = scmp.ne.s32.totalorder %s89, %s103
    %p105 = scmp.eq.s32.totalorder %s16, 0
    %p106 = por %p104, %p105
    %s107 = ssub.s32 %s10, %s17
    %p108 = scmp.eq.s32.totalorder %s107, 0
    %s110 = sadd.s32 %s109, 1
    %s111 = scalar_select %p108, %s109, %s110
    %p114 = pneg %p108
    %p115 = scmp.eq.s32.totalorder %s10, 1
    %p116 = por %p114, %p115
    %p117 = scmp.ne.s32.totalorder %s109, %s112
    %p118 = scmp.eq.s32.totalorder %s10, 0
    %p119 = por %p117, %p118
    %p120 = scmp.ne.s32.totalorder %s109, %s112
    %p121 = scmp.eq.s32.totalorder %s15, 1
    %p122 = por %p120, %p121
    %p123 = scmp.ne.s32.totalorder %s112, %s113
    %p124 = scmp.eq.s32.totalorder %s15, 0
    %p125 = por %p123, %p124
    %p126 = scmp.ne.s32.totalorder %s112, %s113
    %p127 = scmp.eq.s32.totalorder %s16, 1
    %p128 = por %p126, %p127
    %p130 = scmp.ne.s32.totalorder %s113, %s129
    %p131 = scmp.eq.s32.totalorder %s16, 0
    %p132 = por %p130, %p131
    %p133 = scmp.le.s32.totalorder 1, %s10
    %p134 = scmp.lt.s32.totalorder %s10, 3
    %p135 = pnand %p133, %p134
    %p136 = pneg %p135
    // Predicated region
    $region9: #{multi_mri_fc_layers_forward.265} parent=5 // pred_check
      _
    $region10: #{multi_mri_fc_layers_forward.265} parent=5 // pred_check_branch
      %138 = sbr.rel (%p135) target = $region12
    $region11: #{multi_mri_fc_layers_forward.265} parent=5 // pred_region
      %s139 = ssub.s32 %s10, 1
      // Predicated region
      $region13: #{multi_mri_fc_layers_forward.265} parent=11 // pred_check
        %p140 = pneg %p57
      $region14: #{multi_mri_fc_layers_forward.265} parent=11 // pred_check_branch
        %142 = sbr.rel (%p140) target = $region16
      $region15: #{multi_mri_fc_layers_forward.265} parent=11 // pred_region
        _
      $region16: #{multi_mri_fc_layers_forward.265} parent=11 // pred_fallthru
        _
      // Predicated region
      $region17: #{multi_mri_fc_layers_forward.265} parent=11 // pred_check
        %p143 = pneg %p78
      $region18: #{multi_mri_fc_layers_forward.265} parent=11 // pred_check_branch
        %145 = sbr.rel (%p143) target = $region20
      $region19: #{multi_mri_fc_layers_forward.265} parent=11 // pred_region
        _
      $region20: #{multi_mri_fc_layers_forward.265} parent=11 // pred_fallthru
        _
      // Predicated region
      $region21: #{multi_mri_fc_layers_forward.265} parent=11 // pred_check
        %p146 = pneg %p99
      $region22: #{multi_mri_fc_layers_forward.265} parent=11 // pred_check_branch
        %148 = sbr.rel (%p146) target = $region24
      $region23: #{multi_mri_fc_layers_forward.265} parent=11 // pred_region
        _
      $region24: #{multi_mri_fc_layers_forward.265} parent=11 // pred_fallthru
        _
    $region12: #{multi_mri_fc_layers_forward.265} parent=5 // pred_fallthru
      _
    %p149 = scmp.lt.s32.totalorder %s10, 2
    // Predicated region
    $region25: #{multi_mri_fc_layers_forward.265} parent=5 // pred_check
      %p150 = pneg %p149
    $region26: #{multi_mri_fc_layers_forward.265} parent=5 // pred_check_branch
      %152 = sbr.rel (%p150) target = $region28
    $region27: #{multi_mri_fc_layers_forward.265} parent=5 // pred_region
      // Predicated region
      $region29: #{multi_mri_fc_layers_forward.265} parent=27 // pred_check
        %p153 = pneg %p30
      $region30: #{multi_mri_fc_layers_forward.265} parent=27 // pred_check_branch
        %155 = sbr.rel (%p153) target = $region32
      $region31: #{multi_mri_fc_layers_forward.265} parent=27 // pred_region
        %s156 = smul.u32 32, %s10
        %p157 = scmp.lt.s32.totalorder %s156, 63
        %s158 = scalar_select %p157, %s156, 63
        %s159 = smul.addr %s158, 8
        %s160 = scalar_lea.vmem %s0, %s159
        %s161 = smul.u32 32, %s10
      $region32: #{multi_mri_fc_layers_forward.265} parent=27 // pred_fallthru
        _
    $region28: #{multi_mri_fc_layers_forward.265} parent=5 // pred_fallthru
      _
    %p162 = scmp.le.s32.totalorder 1, %s10
    %p163 = scmp.lt.s32.totalorder %s10, 3
    %p164 = pnand %p162, %p163
    %p165 = pneg %p164
    // Predicated region
    $region33: #{multi_mri_fc_layers_forward.265} parent=5 // pred_check
      _
    $region34: #{multi_mri_fc_layers_forward.265} parent=5 // pred_check_branch
      %167 = sbr.rel (%p164) target = $region36
    $region35: #{multi_mri_fc_layers_forward.265} parent=5 // pred_region
      %s168 = ssub.s32 %s10, 1
      %s169 = smul.u32 32, %s15
      %p170 = scmp.lt.s32.totalorder %s169, 63
      %s171 = scalar_select %p170, %s169, 63
      %s172 = smul.addr %s171, 8
      %s173 = scalar_lea.vmem %s0, %s172
      %p174 = pneg %p36
      %p175 = pneg %p33
      %p176 = pneg %p57
      %p177 = pneg %p54
      %p178 = pneg %p78
      %p179 = pneg %p75
      %p180 = pneg %p99
      %p181 = pneg %p96
      %p182 = pneg %p125
      %p183 = pneg %p122
      %s184 = smul.u32 32, %s15
      %p185 = scmp.lt.s32.totalorder %s184, 63
      %s186 = scalar_select %p185, %s184, 63
      %s187 = smul.addr %s186, 8
      %s188 = scalar_lea.vmem %s4, %s187
      %s189 = smul.u32 32, %s15
      %p190 = scmp.lt.s32.totalorder %s189, 63
      %s191 = scalar_select %p190, %s189, 63
      %s192 = smul.addr %s191, 8
      %s193 = scalar_lea.vmem %s0, %s192
      %s194 = smul.u32 32, %s15
      %s195 = smul.u32 32, %s15
      %p196 = scmp.lt.s32.totalorder %s195, 63
      %s197 = scalar_select %p196, %s195, 63
      %s198 = smul.addr %s197, 8
      %s199 = scalar_lea.vmem %s4, %s198
      %s200 = smul.u32 32, %s15
      %v201 = vld [vmem:[%s193] sm:$0xff]
      %v202 = vld [vmem:[%s193 + $0x8] sm:$0xff]
      %v203 = vld [vmem:[%s193 + $0x10] sm:$0xff]
      %v204 = vld [vmem:[%s193 + $0x18] sm:$0xff]
      %v205 = vld [vmem:[%s193 + $0x20] sm:$0xff]
      %v206 = vld [vmem:[%s193 + $0x28] sm:$0xff]
      %v207 = vld [vmem:[%s193 + $0x30] sm:$0xff]
      %v208 = vld [vmem:[%s193 + $0x38] sm:$0xff]
      %v209 = vld [vmem:[%s193 + $0x40] sm:$0xff]
      %v210 = vld [vmem:[%s193 + $0x48] sm:$0xff]
      %v211 = vld [vmem:[%s193 + $0x50] sm:$0xff]
      %v212 = vld [vmem:[%s193 + $0x58] sm:$0xff]
      %v213 = vld [vmem:[%s193 + $0x60] sm:$0xff]
      %v214 = vld [vmem:[%s193 + $0x68] sm:$0xff]
      %v215 = vld [vmem:[%s193 + $0x70] sm:$0xff]
      %v216 = vld [vmem:[%s193 + $0x78] sm:$0xff]
      %v217 = vld [vmem:[%s193 + $0x80] sm:$0xff]
      %v218 = vld [vmem:[%s193 + $0x88] sm:$0xff]
      %v219 = vld [vmem:[%s193 + $0x90] sm:$0xff]
      %v220 = vld [vmem:[%s193 + $0x98] sm:$0xff]
      %v221 = vld [vmem:[%s193 + $0xa0] sm:$0xff]
      %v222 = vld [vmem:[%s193 + $0xa8] sm:$0xff]
      %v223 = vld [vmem:[%s193 + $0xb0] sm:$0xff]
      %v224 = vld [vmem:[%s193 + $0xb8] sm:$0xff]
      %v225 = vld [vmem:[%s193 + $0xc0] sm:$0xff]
      %v226 = vld [vmem:[%s193 + $0xc8] sm:$0xff]
      %v227 = vld [vmem:[%s193 + $0xd0] sm:$0xff]
      %v228 = vld [vmem:[%s193 + $0xd8] sm:$0xff]
      %v229 = vld [vmem:[%s193 + $0xe0] sm:$0xff]
      %v230 = vld [vmem:[%s193 + $0xe8] sm:$0xff]
      %v231 = vld [vmem:[%s193 + $0xf0] sm:$0xff]
      %v232 = vld [vmem:[%s193 + $0xf8] sm:$0xff]
      %v233 = vld [vmem:[%s1] sm:$0xff]
      %v234 = vld [vmem:[%s1 + $0x8] sm:$0xff]
      %v235 = vld [vmem:[%s1 + $0x10] sm:$0xff]
      %v236 = vld [vmem:[%s1 + $0x18] sm:$0xff]
      %v237 = vld [vmem:[%s1 + $0x20] sm:$0xff]
      %v238 = vld [vmem:[%s1 + $0x28] sm:$0xff]
      %v239 = vld [vmem:[%s1 + $0x30] sm:$0x1]
      %vm240 = vcmask 400384
      %v242 = vsel %vm240, %v201, 0
      %v245 = vsel %vm240, %v202, 0
      %v248 = vsel %vm240, %v203, 0
      %v251 = vsel %vm240, %v204, 0
      %v254 = vsel %vm240, %v205, 0
      %v257 = vsel %vm240, %v206, 0
      %v260 = vsel %vm240, %v207, 0
      %v263 = vsel %vm240, %v208, 0
      %v266 = vsel %vm240, %v209, 0
      %v269 = vsel %vm240, %v210, 0
      %v272 = vsel %vm240, %v211, 0
      %v275 = vsel %vm240, %v212, 0
      %v278 = vsel %vm240, %v213, 0
      %v281 = vsel %vm240, %v214, 0
      %v284 = vsel %vm240, %v215, 0
      %v287 = vsel %vm240, %v216, 0
      %v290 = vsel %vm240, %v217, 0
      %v293 = vsel %vm240, %v218, 0
      %v296 = vsel %vm240, %v219, 0
      %v299 = vsel %vm240, %v220, 0
      %v302 = vsel %vm240, %v221, 0
      %v305 = vsel %vm240, %v222, 0
      %v308 = vsel %vm240, %v223, 0
      %v311 = vsel %vm240, %v224, 0
      %v314 = vsel %vm240, %v225, 0
      %v317 = vsel %vm240, %v226, 0
      %v320 = vsel %vm240, %v227, 0
      %v323 = vsel %vm240, %v228, 0
      %v326 = vsel %vm240, %v229, 0
      %v329 = vsel %vm240, %v230, 0
      %v332 = vsel %vm240, %v231, 0
      %v335 = vsel %vm240, %v232, 0
      %vm337 = vcmask 1040384
      %v339 = vsel %vm337, %v239, 0
      %341 = vmatprep.subr.mxu0 0.0
      %342 = vmatpush1.msra.mxu0 %v233
      %343 = vmatprep.subr.mxu0 0.0
      %344 = vmatpush1.msra.mxu0 %v234
      %345 = vmatprep.subr.mxu0 0.0
      %346 = vmatpush1.msra.mxu0 %v235
      %347 = vmatprep.subr.mxu0 0.0
      %348 = vmatpush1.msra.mxu0 %v236
      %349 = vmatprep.subr.mxu0 0.0
      %350 = vmatpush1.msra.mxu0 %v237
      %351 = vmatprep.subr.mxu0 0.0
      %352 = vmatpush1.msra.mxu0 %v238
      %353 = vmatprep.subr.mxu0 0.0
      %354 = vmatpush1.msra.mxu0 %v339
      %355 = vmatprep.subr.mxu0 0.0
      %356 = vmatpush1.msra.mxu0 0.0
      %357 = vmatprep.subr.mxu0 0.0
      %358 = vmatpush1.msra.mxu0 0.0
      %359 = vmatprep.subr.mxu0 0.0
      %360 = vmatpush1.msra.mxu0 0.0
      %361 = vmatprep.subr.mxu0 0.0
      %362 = vmatpush1.msra.mxu0 0.0
      %363 = vmatprep.subr.mxu0 0.0
      %364 = vmatpush1.msra.mxu0 0.0
      %365 = vmatprep.subr.mxu0 0.0
      %366 = vmatpush1.msra.mxu0 0.0
      %367 = vmatprep.subr.mxu0 0.0
      %368 = vmatpush1.msra.mxu0 0.0
      %369 = vmatprep.subr.mxu0 0.0
      %370 = vmatpush1.msra.mxu0 0.0
      %371 = vmatprep.subr.mxu0 0.0
      %372 = vmatpush1.msra.mxu0 0.0
      %373 = vmatprep.subr.mxu0 0.0
      %374 = vmatpush1.msra.mxu0 0.0
      %375 = vmatprep.subr.mxu0 0.0
      %376 = vmatpush1.msra.mxu0 0.0
      %377 = vmatprep.subr.mxu0 0.0
      %378 = vmatpush1.msra.mxu0 0.0
      %379 = vmatprep.subr.mxu0 0.0
      %380 = vmatpush1.msra.mxu0 0.0
      %381 = vmatprep.subr.mxu0 0.0
      %382 = vmatpush1.msra.mxu0 0.0
      %383 = vmatprep.subr.mxu0 0.0
      %384 = vmatpush1.msra.mxu0 0.0
      %385 = vmatprep.subr.mxu0 0.0
      %386 = vmatpush1.msra.mxu0 0.0
      %387 = vmatprep.subr.mxu0 0.0
      %388 = vmatpush1.msra.mxu0 0.0
      %389 = vmatprep.subr.mxu0 0.0
      %390 = vmatpush1.msra.mxu0 0.0
      %391 = vmatprep.subr.mxu0 0.0
      %392 = vmatpush1.msra.mxu0 0.0
      %393 = vmatprep.subr.mxu0 0.0
      %394 = vmatpush1.msra.mxu0 0.0
      %395 = vmatprep.subr.mxu0 0.0
      %396 = vmatpush1.msra.mxu0 0.0
      %397 = vmatprep.subr.mxu0 0.0
      %398 = vmatpush1.msra.mxu0 0.0
      %399 = vmatprep.subr.mxu0 0.0
      %400 = vmatpush1.msra.mxu0 0.0
      %401 = vmatprep.subr.mxu0 0.0
      %402 = vmatpush1.msra.mxu0 0.0
      %403 = vmatprep.subr.mxu0 0.0
      %404 = vmatpush1.msra.mxu0 0.0
      %405 = vmatprep.mubr.f32.mxu0 0.0
      %406 = vmatmul.mubr.f32.gmra.mrb[0].mxu0 %v242
      %v407 = vpop.f32.mrb[0].mxu0
      %v408 = vadd.f32 0.0, %v407
      %v409 = vpop.f32.mrb[0].mxu0
      %410 = vmatprep.mubr.f32.mxu0 0.0
      %411 = vmatmul.mubr.f32.gmra.mrb[0].mxu0 %v245
      %v412 = vpop.f32.mrb[0].mxu0
      %v413 = vadd.f32 0.0, %v412
      %v414 = vpop.f32.mrb[0].mxu0
      %415 = vmatprep.mubr.f32.mxu0 0.0
      %416 = vmatmul.mubr.f32.gmra.mrb[0].mxu0 %v248
      %v417 = vpop.f32.mrb[0].mxu0
      %v418 = vadd.f32 0.0, %v417
      %v419 = vpop.f32.mrb[0].mxu0
      %420 = vmatprep.mubr.f32.mxu0 0.0
      %421 = vmatmul.mubr.f32.gmra.mrb[0].mxu0 %v251
      %v422 = vpop.f32.mrb[0].mxu0
      %v423 = vadd.f32 0.0, %v422
      %v424 = vpop.f32.mrb[0].mxu0
      %425 = vmatprep.mubr.f32.mxu0 0.0
      %426 = vmatmul.mubr.f32.gmra.mrb[0].mxu0 %v254
      %v427 = vpop.f32.mrb[0].mxu0
      %v428 = vadd.f32 0.0, %v427
      %v429 = vpop.f32.mrb[0].mxu0
      %430 = vmatprep.mubr.f32.mxu0 0.0
      %431 = vmatmul.mubr.f32.gmra.mrb[0].mxu0 %v257
      %v432 = vpop.f32.mrb[0].mxu0
      %v433 = vadd.f32 0.0, %v432
      %v434 = vpop.f32.mrb[0].mxu0
      %435 = vmatprep.mubr.f32.mxu0 0.0
      %436 = vmatmul.mubr.f32.gmra.mrb[0].mxu0 %v260
      %v437 = vpop.f32.mrb[0].mxu0
      %v438 = vadd.f32 0.0, %v437
      %v439 = vpop.f32.mrb[0].mxu0
      %440 = vmatprep.mubr.f32.mxu0 0.0
      %441 = vmatmul.mubr.f32.gmra.mrb[0].mxu0 %v263
      %v442 = vpop.f32.mrb[0].mxu0
      %v443 = vadd.f32 0.0, %v442
      %v444 = vpop.f32.mrb[0].mxu0
      %445 = vmatprep.mubr.f32.mxu0 0.0
      %446 = vmatmul.mubr.f32.gmra.mrb[0].mxu0 %v266
      %v447 = vpop.f32.mrb[0].mxu0
      %v448 = vadd.f32 0.0, %v447
      %v449 = vpop.f32.mrb[0].mxu0
      %450 = vmatprep.mubr.f32.mxu0 0.0
      %451 = vmatmul.mubr.f32.gmra.mrb[0].mxu0 %v269
      %v452 = vpop.f32.mrb[0].mxu0
      %v453 = vadd.f32 0.0, %v452
      %v454 = vpop.f32.mrb[0].mxu0
      %455 = vmatprep.mubr.f32.mxu0 0.0
      %456 = vmatmul.mubr.f32.gmra.mrb[0].mxu0 %v272
      %v457 = vpop.f32.mrb[0].mxu0
      %v458 = vadd.f32 0.0, %v457
      %v459 = vpop.f32.mrb[0].mxu0
      %460 = vmatprep.mubr.f32.mxu0 0.0
      %461 = vmatmul.mubr.f32.gmra.mrb[0].mxu0 %v275
      %v462 = vpop.f32.mrb[0].mxu0
      %v463 = vadd.f32 0.0, %v462
      %v464 = vpop.f32.mrb[0].mxu0
      %465 = vmatprep.mubr.f32.mxu0 0.0
      %466 = vmatmul.mubr.f32.gmra.mrb[0].mxu0 %v278
      %v467 = vpop.f32.mrb[0].mxu0
      %v468 = vadd.f32 0.0, %v467
      %v469 = vpop.f32.mrb[0].mxu0
      %470 = vmatprep.mubr.f32.mxu0 0.0
      %471 = vmatmul.mubr.f32.gmra.mrb[0].mxu0 %v281
      %v472 = vpop.f32.mrb[0].mxu0
      %v473 = vadd.f32 0.0, %v472
      %v474 = vpop.f32.mrb[0].mxu0
      %475 = vmatprep.mubr.f32.mxu0 0.0
      %476 = vmatmul.mubr.f32.gmra.mrb[0].mxu0 %v284
      %v477 = vpop.f32.mrb[0].mxu0
      %v478 = vadd.f32 0.0, %v477
      %v479 = vpop.f32.mrb[0].mxu0
      %480 = vmatprep.mubr.f32.mxu0 0.0
      %481 = vmatmul.mubr.f32.gmra.mrb[0].mxu0 %v287
      %v482 = vpop.f32.mrb[0].mxu0
      %v483 = vadd.f32 0.0, %v482
      %v484 = vpop.f32.mrb[0].mxu0
      %485 = vmatprep.mubr.f32.mxu0 0.0
      %486 = vmatmul.mubr.f32.gmra.mrb[0].mxu0 %v290
      %v487 = vpop.f32.mrb[0].mxu0
      %v488 = vadd.f32 0.0, %v487
      %v489 = vpop.f32.mrb[0].mxu0
      %490 = vmatprep.mubr.f32.mxu0 0.0
      %491 = vmatmul.mubr.f32.gmra.mrb[0].mxu0 %v293
      %v492 = vpop.f32.mrb[0].mxu0
      %v493 = vadd.f32 0.0, %v492
      %v494 = vpop.f32.mrb[0].mxu0
      %495 = vmatprep.mubr.f32.mxu0 0.0
      %496 = vmatmul.mubr.f32.gmra.mrb[0].mxu0 %v296
      %v497 = vpop.f32.mrb[0].mxu0
      %v498 = vadd.f32 0.0, %v497
      %v499 = vpop.f32.mrb[0].mxu0
      %500 = vmatprep.mubr.f32.mxu0 0.0
      %501 = vmatmul.mubr.f32.gmra.mrb[0].mxu0 %v299
      %v502 = vpop.f32.mrb[0].mxu0
      %v503 = vadd.f32 0.0, %v502
      %v504 = vpop.f32.mrb[0].mxu0
      %505 = vmatprep.mubr.f32.mxu0 0.0
      %506 = vmatmul.mubr.f32.gmra.mrb[0].mxu0 %v302
      %v507 = vpop.f32.mrb[0].mxu0
      %v508 = vadd.f32 0.0, %v507
      %v509 = vpop.f32.mrb[0].mxu0
      %510 = vmatprep.mubr.f32.mxu0 0.0
      %511 = vmatmul.mubr.f32.gmra.mrb[0].mxu0 %v305
      %v512 = vpop.f32.mrb[0].mxu0
      %v513 = vadd.f32 0.0, %v512
      %v514 = vpop.f32.mrb[0].mxu0
      %515 = vmatprep.mubr.f32.mxu0 0.0
      %516 = vmatmul.mubr.f32.gmra.mrb[0].mxu0 %v308
      %v517 = vpop.f32.mrb[0].mxu0
      %v518 = vadd.f32 0.0, %v517
      %v519 = vpop.f32.mrb[0].mxu0
      %520 = vmatprep.mubr.f32.mxu0 0.0
      %521 = vmatmul.mubr.f32.gmra.mrb[0].mxu0 %v311
      %v522 = vpop.f32.mrb[0].mxu0
      %v523 = vadd.f32 0.0, %v522
      %v524 = vpop.f32.mrb[0].mxu0
      %525 = vmatprep.mubr.f32.mxu0 0.0
      %526 = vmatmul.mubr.f32.gmra.mrb[0].mxu0 %v314
      %v527 = vpop.f32.mrb[0].mxu0
      %v528 = vadd.f32 0.0, %v527
      %v529 = vpop.f32.mrb[0].mxu0
      %530 = vmatprep.mubr.f32.mxu0 0.0
      %531 = vmatmul.mubr.f32.gmra.mrb[0].mxu0 %v317
      %v532 = vpop.f32.mrb[0].mxu0
      %v533 = vadd.f32 0.0, %v532
      %v534 = vpop.f32.mrb[0].mxu0
      %535 = vmatprep.mubr.f32.mxu0 0.0
      %536 = vmatmul.mubr.f32.gmra.mrb[0].mxu0 %v320
      %v537 = vpop.f32.mrb[0].mxu0
      %v538 = vadd.f32 0.0, %v537
      %v539 = vpop.f32.mrb[0].mxu0
      %540 = vmatprep.mubr.f32.mxu0 0.0
      %541 = vmatmul.mubr.f32.gmra.mrb[0].mxu0 %v323
      %v542 = vpop.f32.mrb[0].mxu0
      %v543 = vadd.f32 0.0, %v542
      %v544 = vpop.f32.mrb[0].mxu0
      %545 = vmatprep.mubr.f32.mxu0 0.0
      %546 = vmatmul.mubr.f32.gmra.mrb[0].mxu0 %v326
      %v547 = vpop.f32.mrb[0].mxu0
      %v548 = vadd.f32 0.0, %v547
      %v549 = vpop.f32.mrb[0].mxu0
      %550 = vmatprep.mubr.f32.mxu0 0.0
      %551 = vmatmul.mubr.f32.gmra.mrb[0].mxu0 %v329
      %v552 = vpop.f32.mrb[0].mxu0
      %v553 = vadd.f32 0.0, %v552
      %v554 = vpop.f32.mrb[0].mxu0
      %555 = vmatprep.mubr.f32.mxu0 0.0
      %556 = vmatmul.mubr.f32.gmra.mrb[0].mxu0 %v332
      %v557 = vpop.f32.mrb[0].mxu0
      %v558 = vadd.f32 0.0, %v557
      %v559 = vpop.f32.mrb[0].mxu0
      %560 = vmatprep.mubr.f32.mxu0 0.0
      %561 = vmatmul.mubr.f32.gmra.mrb[0].mxu0 %v335
      %v562 = vpop.f32.mrb[0].mxu0
      %v563 = vadd.f32 0.0, %v562
      %v564 = vpop.f32.mrb[0].mxu0
      %565 = vdwg.mxu0
      %v566 = vld [vmem:[%s2] sm:$0x1]
      %v568 = vlaneseq
      %v569 = vshrl.u32 %v568, 7
      %v570 = vsub.s32 0, %v569
      %v571 = vrot.slane %v566, %v570
      %v573 = vmul.f32 %v408, %v571
      %v574 = vmul.f32 %v413, %v571
      %v575 = vmul.f32 %v418, %v571
      %v576 = vmul.f32 %v423, %v571
      %v577 = vmul.f32 %v428, %v571
      %v578 = vmul.f32 %v433, %v571
      %v579 = vmul.f32 %v438, %v571
      %v580 = vmul.f32 %v443, %v571
      %v581 = vmul.f32 %v448, %v571
      %v582 = vmul.f32 %v453, %v571
      %v583 = vmul.f32 %v458, %v571
      %v584 = vmul.f32 %v463, %v571
      %v585 = vmul.f32 %v468, %v571
      %v586 = vmul.f32 %v473, %v571
      %v587 = vmul.f32 %v478, %v571
      %v588 = vmul.f32 %v483, %v571
      %v589 = vmul.f32 %v488, %v571
      %v590 = vmul.f32 %v493, %v571
      %v591 = vmul.f32 %v498, %v571
      %v592 = vmul.f32 %v503, %v571
      %v593 = vmul.f32 %v508, %v571
      %v594 = vmul.f32 %v513, %v571
      %v595 = vmul.f32 %v518, %v571
      %v596 = vmul.f32 %v523, %v571
      %v597 = vmul.f32 %v528, %v571
      %v598 = vmul.f32 %v533, %v571
      %v599 = vmul.f32 %v538, %v571
      %v600 = vmul.f32 %v543, %v571
      %v601 = vmul.f32 %v548, %v571
      %v602 = vmul.f32 %v553, %v571
      %v603 = vmul.f32 %v558, %v571
      %v604 = vmul.f32 %v563, %v571
      %v605 = vld [vmem:[%s3] sm:$0x1]
      %v607 = vlaneseq
      %v608 = vshrl.u32 %v607, 7
      %v609 = vsub.s32 0, %v608
      %v610 = vrot.slane %v605, %v609
      %v612 = vadd.f32 %v573, %v610
      %v613 = vadd.f32 %v574, %v610
      %v614 = vadd.f32 %v575, %v610
      %v615 = vadd.f32 %v576, %v610
      %v616 = vadd.f32 %v577, %v610
      %v617 = vadd.f32 %v578, %v610
      %v618 = vadd.f32 %v579, %v610
      %v619 = vadd.f32 %v580, %v610
      %v620 = vadd.f32 %v581, %v610
      %v621 = vadd.f32 %v582, %v610
      %v622 = vadd.f32 %v583, %v610
      %v623 = vadd.f32 %v584, %v610
      %v624 = vadd.f32 %v585, %v610
      %v625 = vadd.f32 %v586, %v610
      %v626 = vadd.f32 %v587, %v610
      %v627 = vadd.f32 %v588, %v610
      %v628 = vadd.f32 %v589, %v610
      %v629 = vadd.f32 %v590, %v610
      %v630 = vadd.f32 %v591, %v610
      %v631 = vadd.f32 %v592, %v610
      %v632 = vadd.f32 %v593, %v610
      %v633 = vadd.f32 %v594, %v610
      %v634 = vadd.f32 %v595, %v610
      %v635 = vadd.f32 %v596, %v610
      %v636 = vadd.f32 %v597, %v610
      %v637 = vadd.f32 %v598, %v610
      %v638 = vadd.f32 %v599, %v610
      %v639 = vadd.f32 %v600, %v610
      %v640 = vadd.f32 %v601, %v610
      %v641 = vadd.f32 %v602, %v610
      %v642 = vadd.f32 %v603, %v610
      %v643 = vadd.f32 %v604, %v610
      %v644 = vmax.f32 %v612, 0.0
      %v645 = vmax.f32 %v613, 0.0
      %v646 = vmax.f32 %v614, 0.0
      %v647 = vmax.f32 %v615, 0.0
      %v648 = vmax.f32 %v616, 0.0
      %v649 = vmax.f32 %v617, 0.0
      %v650 = vmax.f32 %v618, 0.0
      %v651 = vmax.f32 %v619, 0.0
      %v652 = vmax.f32 %v620, 0.0
      %v653 = vmax.f32 %v621, 0.0
      %v654 = vmax.f32 %v622, 0.0
      %v655 = vmax.f32 %v623, 0.0
      %v656 = vmax.f32 %v624, 0.0
      %v657 = vmax.f32 %v625, 0.0
      %v658 = vmax.f32 %v626, 0.0
      %v659 = vmax.f32 %v627, 0.0
      %v660 = vmax.f32 %v628, 0.0
      %v661 = vmax.f32 %v629, 0.0
      %v662 = vmax.f32 %v630, 0.0
      %v663 = vmax.f32 %v631, 0.0
      %v664 = vmax.f32 %v632, 0.0
      %v665 = vmax.f32 %v633, 0.0
      %v666 = vmax.f32 %v634, 0.0
      %v667 = vmax.f32 %v635, 0.0
      %v668 = vmax.f32 %v636, 0.0
      %v669 = vmax.f32 %v637, 0.0
      %v670 = vmax.f32 %v638, 0.0
      %v671 = vmax.f32 %v639, 0.0
      %v672 = vmax.f32 %v640, 0.0
      %v673 = vmax.f32 %v641, 0.0
      %v674 = vmax.f32 %v642, 0.0
      %v675 = vmax.f32 %v643, 0.0
      %vm676 = vcmask 130048
      %677 = vst.msk [vmem:[%s199] sm:$0xff] %vm676, %v644
      %678 = vst.msk [vmem:[%s199 + $0x8] sm:$0xff] %vm676, %v645
      %679 = vst.msk [vmem:[%s199 + $0x10] sm:$0xff] %vm676, %v646
      %680 = vst.msk [vmem:[%s199 + $0x18] sm:$0xff] %vm676, %v647
      %681 = vst.msk [vmem:[%s199 + $0x20] sm:$0xff] %vm676, %v648
      %682 = vst.msk [vmem:[%s199 + $0x28] sm:$0xff] %vm676, %v649
      %683 = vst.msk [vmem:[%s199 + $0x30] sm:$0xff] %vm676, %v650
      %684 = vst.msk [vmem:[%s199 + $0x38] sm:$0xff] %vm676, %v651
      %685 = vst.msk [vmem:[%s199 + $0x40] sm:$0xff] %vm676, %v652
      %686 = vst.msk [vmem:[%s199 + $0x48] sm:$0xff] %vm676, %v653
      %687 = vst.msk [vmem:[%s199 + $0x50] sm:$0xff] %vm676, %v654
      %688 = vst.msk [vmem:[%s199 + $0x58] sm:$0xff] %vm676, %v655
      %689 = vst.msk [vmem:[%s199 + $0x60] sm:$0xff] %vm676, %v656
      %690 = vst.msk [vmem:[%s199 + $0x68] sm:$0xff] %vm676, %v657
      %691 = vst.msk [vmem:[%s199 + $0x70] sm:$0xff] %vm676, %v658
      %692 = vst.msk [vmem:[%s199 + $0x78] sm:$0xff] %vm676, %v659
      %693 = vst.msk [vmem:[%s199 + $0x80] sm:$0xff] %vm676, %v660
      %694 = vst.msk [vmem:[%s199 + $0x88] sm:$0xff] %vm676, %v661
      %695 = vst.msk [vmem:[%s199 + $0x90] sm:$0xff] %vm676, %v662
      %696 = vst.msk [vmem:[%s199 + $0x98] sm:$0xff] %vm676, %v663
      %697 = vst.msk [vmem:[%s199 + $0xa0] sm:$0xff] %vm676, %v664
      %698 = vst.msk [vmem:[%s199 + $0xa8] sm:$0xff] %vm676, %v665
      %699 = vst.msk [vmem:[%s199 + $0xb0] sm:$0xff] %vm676, %v666
      %700 = vst.msk [vmem:[%s199 + $0xb8] sm:$0xff] %vm676, %v667
      %701 = vst.msk [vmem:[%s199 + $0xc0] sm:$0xff] %vm676, %v668
      %702 = vst.msk [vmem:[%s199 + $0xc8] sm:$0xff] %vm676, %v669
      %703 = vst.msk [vmem:[%s199 + $0xd0] sm:$0xff] %vm676, %v670
      %704 = vst.msk [vmem:[%s199 + $0xd8] sm:$0xff] %vm676, %v671
      %705 = vst.msk [vmem:[%s199 + $0xe0] sm:$0xff] %vm676, %v672
      %706 = vst.msk [vmem:[%s199 + $0xe8] sm:$0xff] %vm676, %v673
      %707 = vst.msk [vmem:[%s199 + $0xf0] sm:$0xff] %vm676, %v674
      %708 = vst.msk [vmem:[%s199 + $0xf8] sm:$0xff] %vm676, %v675
      %s709 = smul.u32 32, %s15
      %p710 = scmp.lt.s32.totalorder %s709, 63
      %s711 = scalar_select %p710, %s709, 63
      %s712 = smul.addr %s711, 8
      %s713 = scalar_lea.vmem %s4, %s712
      // Predicated region
      $region37: #{multi_mri_fc_layers_forward.265} parent=35 // pred_check
        %p714 = pneg %p122
      $region38: #{multi_mri_fc_layers_forward.265} parent=35 // pred_check_branch
        %716 = sbr.rel (%p714) target = $region40
      $region39: #{multi_mri_fc_layers_forward.265} parent=35 // pred_region
        %s717 = smul.u32 32, %s15
      $region40: #{multi_mri_fc_layers_forward.265} parent=35 // pred_fallthru
        _
    $region36: #{multi_mri_fc_layers_forward.265} parent=5 // pred_fallthru
      _
    %p718 = scmp.le.s32.totalorder 2, %s10
    // Predicated region
    $region41: #{multi_mri_fc_layers_forward.265} parent=5 // pred_check
      %p719 = pneg %p718
    $region42: #{multi_mri_fc_layers_forward.265} parent=5 // pred_check_branch
      %721 = sbr.rel (%p719) target = $region44
    $region43: #{multi_mri_fc_layers_forward.265} parent=5 // pred_region
      %s722 = ssub.s32 %s10, 2
      // Predicated region
      $region45: #{multi_mri_fc_layers_forward.265} parent=43 // pred_check
        %p723 = pneg %p128
      $region46: #{multi_mri_fc_layers_forward.265} parent=43 // pred_check_branch
        %725 = sbr.rel (%p723) target = $region48
      $region47: #{multi_mri_fc_layers_forward.265} parent=43 // pred_region
        %s726 = smul.u32 32, %s16
        %p727 = scmp.lt.s32.totalorder %s726, 63
        %s728 = scalar_select %p727, %s726, 63
        %s729 = smul.addr %s728, 8
        %s730 = scalar_lea.vmem %s4, %s729
      $region48: #{multi_mri_fc_layers_forward.265} parent=43 // pred_fallthru
        _
    $region44: #{multi_mri_fc_layers_forward.265} parent=5 // pred_fallthru
      _
  $region6: #{multi_mri_fc_layers_forward.265} parent=0 // loop_footer
    %s14 = sadd.s32 1, %s10
  $region7: #{multi_mri_fc_layers_forward.265} parent=0 // loop_footer_branch
    %9 = sbr.rel target = $region3
  $region8: #{multi_mri_fc_layers_forward.265} parent=0 // loop_exit
    _

// kernel: multi_mri_fc_layers_forward.267
$region0: #{multi_mri_fc_layers_forward.267}
  #allocation0 [shape = 'u32[]', space=smem, size = 0x4, offset = 0x4, fixed_abs, tag = 'smem constant byte address 0x4 - core index']
  #allocation1 [shape = 'u32[144,128]{1,0:T(1,128)}', space=vmem, size = 0x12000, scoped, tag = 'internal scratch']
  %s0 = inlined_call_operand.vmem [shape: f32[128,16], index: 0, kind: input, shape index: {}]
  %s1 = inlined_call_operand.vmem [shape: f32[16,32], index: 1, kind: input, shape index: {}]
  %s2 = inlined_call_operand.vmem [shape: f32[1,16], index: 2, kind: input, shape index: {}]
  %s3 = inlined_call_operand.vmem [shape: f32[1,16], index: 3, kind: input, shape index: {}]
  %s4 = inlined_call_operand.vmem [shape: f32[1,32], index: 4, kind: input, shape index: {}]
  %s5 = inlined_call_operand.vmem [shape: f32[1,32], index: 5, kind: input, shape index: {}]
  %s6 = inlined_call_operand.vmem [shape: f32[128,32], index: 6, kind: output, shape index: {}]
  %s7 = sld [smem:[#allocation0]]
  $region34: #{multi_mri_fc_layers_forward.267} parent=0
    _
  %s9 = ssub.s32 1, %s7
  %s10 = scalar_select 0, %s9, %s7
  // Predicated region
  $region2: #{multi_mri_fc_layers_forward.267} parent=0 // pred_check
    _
  $region3: #{multi_mri_fc_layers_forward.267} parent=0 // pred_check_branch
    %12 = sbr.rel (0) target = $region5
  $region4: #{multi_mri_fc_layers_forward.267} parent=0 // pred_region
    _
  $region5: #{multi_mri_fc_layers_forward.267} parent=0 // pred_fallthru
    _
  // Predicated region
  $region6: #{multi_mri_fc_layers_forward.267} parent=0 // pred_check
    _
  $region7: #{multi_mri_fc_layers_forward.267} parent=0 // pred_check_branch
    %14 = sbr.rel (0) target = $region9
  $region8: #{multi_mri_fc_layers_forward.267} parent=0 // pred_region
    _
  $region9: #{multi_mri_fc_layers_forward.267} parent=0 // pred_fallthru
    _
  // Predicated region
  $region10: #{multi_mri_fc_layers_forward.267} parent=0 // pred_check
    _
  $region11: #{multi_mri_fc_layers_forward.267} parent=0 // pred_check_branch
    %16 = sbr.rel (0) target = $region13
  $region12: #{multi_mri_fc_layers_forward.267} parent=0 // pred_region
    _
  $region13: #{multi_mri_fc_layers_forward.267} parent=0 // pred_fallthru
    _
  // Predicated region
  $region14: #{multi_mri_fc_layers_forward.267} parent=0 // pred_check
    _
  $region15: #{multi_mri_fc_layers_forward.267} parent=0 // pred_check_branch
    %18 = sbr.rel (0) target = $region17
  $region16: #{multi_mri_fc_layers_forward.267} parent=0 // pred_region
    _
  $region17: #{multi_mri_fc_layers_forward.267} parent=0 // pred_fallthru
    _
  // Predicated region
  $region18: #{multi_mri_fc_layers_forward.267} parent=0 // pred_check
    _
  $region19: #{multi_mri_fc_layers_forward.267} parent=0 // pred_check_branch
    %20 = sbr.rel (0) target = $region21
  $region20: #{multi_mri_fc_layers_forward.267} parent=0 // pred_region
    _
  $region21: #{multi_mri_fc_layers_forward.267} parent=0 // pred_fallthru
    _
  // Predicated region
  $region22: #{multi_mri_fc_layers_forward.267} parent=0 // pred_check
    _
  $region23: #{multi_mri_fc_layers_forward.267} parent=0 // pred_check_branch
    %22 = sbr.rel (0) target = $region25
  $region24: #{multi_mri_fc_layers_forward.267} parent=0 // pred_region
    _
  $region25: #{multi_mri_fc_layers_forward.267} parent=0 // pred_fallthru
    _
  %v23 = vld [vmem:[%s0] sm:$0xff]
  %v24 = vld [vmem:[%s0 + $0x8] sm:$0xff]
  %v25 = vld [vmem:[%s0 + $0x10] sm:$0xff]
  %v26 = vld [vmem:[%s0 + $0x18] sm:$0xff]
  %v27 = vld [vmem:[%s0 + $0x20] sm:$0xff]
  %v28 = vld [vmem:[%s0 + $0x28] sm:$0xff]
  %v29 = vld [vmem:[%s0 + $0x30] sm:$0xff]
  %v30 = vld [vmem:[%s0 + $0x38] sm:$0xff]
  %v31 = vld [vmem:[%s0 + $0x40] sm:$0xff]
  %v32 = vld [vmem:[%s0 + $0x48] sm:$0xff]
  %v33 = vld [vmem:[%s0 + $0x50] sm:$0xff]
  %v34 = vld [vmem:[%s0 + $0x58] sm:$0xff]
  %v35 = vld [vmem:[%s0 + $0x60] sm:$0xff]
  %v36 = vld [vmem:[%s0 + $0x68] sm:$0xff]
  %v37 = vld [vmem:[%s0 + $0x70] sm:$0xff]
  %v38 = vld [vmem:[%s0 + $0x78] sm:$0xff]
  %v39 = vld [vmem:[%s2] sm:$0x1]
  %v41 = vlaneseq
  %v42 = vshrl.u32 %v41, 7
  %v43 = vsub.s32 0, %v42
  %v44 = vrot.slane %v39, %v43
  %v46 = vmul.f32 %v23, %v44
  %v47 = vmul.f32 %v24, %v44
  %v48 = vmul.f32 %v25, %v44
  %v49 = vmul.f32 %v26, %v44
  %v50 = vmul.f32 %v27, %v44
  %v51 = vmul.f32 %v28, %v44
  %v52 = vmul.f32 %v29, %v44
  %v53 = vmul.f32 %v30, %v44
  %v54 = vmul.f32 %v31, %v44
  %v55 = vmul.f32 %v32, %v44
  %v56 = vmul.f32 %v33, %v44
  %v57 = vmul.f32 %v34, %v44
  %v58 = vmul.f32 %v35, %v44
  %v59 = vmul.f32 %v36, %v44
  %v60 = vmul.f32 %v37, %v44
  %v61 = vmul.f32 %v38, %v44
  %v62 = vld [vmem:[%s3] sm:$0x1]
  %v64 = vlaneseq
  %v65 = vshrl.u32 %v64, 7
  %v66 = vsub.s32 0, %v65
  %v67 = vrot.slane %v62, %v66
  %v69 = vadd.f32 %v46, %v67
  %v70 = vadd.f32 %v47, %v67
  %v71 = vadd.f32 %v48, %v67
  %v72 = vadd.f32 %v49, %v67
  %v73 = vadd.f32 %v50, %v67
  %v74 = vadd.f32 %v51, %v67
  %v75 = vadd.f32 %v52, %v67
  %v76 = vadd.f32 %v53, %v67
  %v77 = vadd.f32 %v54, %v67
  %v78 = vadd.f32 %v55, %v67
  %v79 = vadd.f32 %v56, %v67
  %v80 = vadd.f32 %v57, %v67
  %v81 = vadd.f32 %v58, %v67
  %v82 = vadd.f32 %v59, %v67
  %v83 = vadd.f32 %v60, %v67
  %v84 = vadd.f32 %v61, %v67
  %v85 = vmax.f32 %v69, 0.0
  %v86 = vmax.f32 %v70, 0.0
  %v87 = vmax.f32 %v71, 0.0
  %v88 = vmax.f32 %v72, 0.0
  %v89 = vmax.f32 %v73, 0.0
  %v90 = vmax.f32 %v74, 0.0
  %v91 = vmax.f32 %v75, 0.0
  %v92 = vmax.f32 %v76, 0.0
  %v93 = vmax.f32 %v77, 0.0
  %v94 = vmax.f32 %v78, 0.0
  %v95 = vmax.f32 %v79, 0.0
  %v96 = vmax.f32 %v80, 0.0
  %v97 = vmax.f32 %v81, 0.0
  %v98 = vmax.f32 %v82, 0.0
  %v99 = vmax.f32 %v83, 0.0
  %v100 = vmax.f32 %v84, 0.0
  %v101 = vld [vmem:[%s1] sm:$0xff]
  %v102 = vld [vmem:[%s1 + $0x8] sm:$0xff]
  %vm103 = vcmask 130048
  %v105 = vsel %vm103, %v85, 0
  %v108 = vsel %vm103, %v86, 0
  %v111 = vsel %vm103, %v87, 0
  %v114 = vsel %vm103, %v88, 0
  %v117 = vsel %vm103, %v89, 0
  %v120 = vsel %vm103, %v90, 0
  %v123 = vsel %vm103, %v91, 0
  %v126 = vsel %vm103, %v92, 0
  %v129 = vsel %vm103, %v93, 0
  %v132 = vsel %vm103, %v94, 0
  %v135 = vsel %vm103, %v95, 0
  %v138 = vsel %vm103, %v96, 0
  %v141 = vsel %vm103, %v97, 0
  %v144 = vsel %vm103, %v98, 0
  %v147 = vsel %vm103, %v99, 0
  %v150 = vsel %vm103, %v100, 0
  %152 = vmatprep.subr.mxu0 0.0
  %153 = vmatpush1.msra.mxu0 %v101
  %154 = vmatprep.subr.mxu0 0.0
  %155 = vmatpush1.msra.mxu0 %v102
  %156 = vmatprep.subr.mxu0 0.0
  %157 = vmatpush1.msra.mxu0 0.0
  %158 = vmatprep.subr.mxu0 0.0
  %159 = vmatpush1.msra.mxu0 0.0
  %160 = vmatprep.subr.mxu0 0.0
  %161 = vmatpush1.msra.mxu0 0.0
  %162 = vmatprep.subr.mxu0 0.0
  %163 = vmatpush1.msra.mxu0 0.0
  %164 = vmatprep.subr.mxu0 0.0
  %165 = vmatpush1.msra.mxu0 0.0
  %166 = vmatprep.subr.mxu0 0.0
  %167 = vmatpush1.msra.mxu0 0.0
  %168 = vmatprep.subr.mxu0 0.0
  %169 = vmatpush1.msra.mxu0 0.0
  %170 = vmatprep.subr.mxu0 0.0
  %171 = vmatpush1.msra.mxu0 0.0
  %172 = vmatprep.subr.mxu0 0.0
  %173 = vmatpush1.msra.mxu0 0.0
  %174 = vmatprep.subr.mxu0 0.0
  %175 = vmatpush1.msra.mxu0 0.0
  %176 = vmatprep.subr.mxu0 0.0
  %177 = vmatpush1.msra.mxu0 0.0
  %178 = vmatprep.subr.mxu0 0.0
  %179 = vmatpush1.msra.mxu0 0.0
  %180 = vmatprep.subr.mxu0 0.0
  %181 = vmatpush1.msra.mxu0 0.0
  %182 = vmatprep.subr.mxu0 0.0
  %183 = vmatpush1.msra.mxu0 0.0
  %184 = vmatprep.subr.mxu0 0.0
  %185 = vmatpush1.msra.mxu0 0.0
  %186 = vmatprep.subr.mxu0 0.0
  %187 = vmatpush1.msra.mxu0 0.0
  %188 = vmatprep.subr.mxu0 0.0
  %189 = vmatpush1.msra.mxu0 0.0
  %190 = vmatprep.subr.mxu0 0.0
  %191 = vmatpush1.msra.mxu0 0.0
  %192 = vmatprep.subr.mxu0 0.0
  %193 = vmatpush1.msra.mxu0 0.0
  %194 = vmatprep.subr.mxu0 0.0
  %195 = vmatpush1.msra.mxu0 0.0
  %196 = vmatprep.subr.mxu0 0.0
  %197 = vmatpush1.msra.mxu0 0.0
  %198 = vmatprep.subr.mxu0 0.0
  %199 = vmatpush1.msra.mxu0 0.0
  %200 = vmatprep.subr.mxu0 0.0
  %201 = vmatpush1.msra.mxu0 0.0
  %202 = vmatprep.subr.mxu0 0.0
  %203 = vmatpush1.msra.mxu0 0.0
  %204 = vmatprep.subr.mxu0 0.0
  %205 = vmatpush1.msra.mxu0 0.0
  %206 = vmatprep.subr.mxu0 0.0
  %207 = vmatpush1.msra.mxu0 0.0
  %208 = vmatprep.subr.mxu0 0.0
  %209 = vmatpush1.msra.mxu0 0.0
  %210 = vmatprep.subr.mxu0 0.0
  %211 = vmatpush1.msra.mxu0 0.0
  %212 = vmatprep.subr.mxu0 0.0
  %213 = vmatpush1.msra.mxu0 0.0
  %214 = vmatprep.subr.mxu0 0.0
  %215 = vmatpush1.msra.mxu0 0.0
  %216 = vmatprep.mubr.f32.mxu0 0.0
  %217 = vmatmul.mubr.f32.gmra.mrb[0].mxu0 %v105
  %v218 = vpop.f32.mrb[0].mxu0
  %v219 = vadd.f32 0.0, %v218
  %v220 = vpop.f32.mrb[0].mxu0
  %221 = vmatprep.mubr.f32.mxu0 0.0
  %222 = vmatmul.mubr.f32.gmra.mrb[0].mxu0 %v108
  %v223 = vpop.f32.mrb[0].mxu0
  %v224 = vadd.f32 0.0, %v223
  %v225 = vpop.f32.mrb[0].mxu0
  %226 = vmatprep.mubr.f32.mxu0 0.0
  %227 = vmatmul.mubr.f32.gmra.mrb[0].mxu0 %v111
  %v228 = vpop.f32.mrb[0].mxu0
  %v229 = vadd.f32 0.0, %v228
  %v230 = vpop.f32.mrb[0].mxu0
  %231 = vmatprep.mubr.f32.mxu0 0.0
  %232 = vmatmul.mubr.f32.gmra.mrb[0].mxu0 %v114
  %v233 = vpop.f32.mrb[0].mxu0
  %v234 = vadd.f32 0.0, %v233
  %v235 = vpop.f32.mrb[0].mxu0
  %236 = vmatprep.mubr.f32.mxu0 0.0
  %237 = vmatmul.mubr.f32.gmra.mrb[0].mxu0 %v117
  %v238 = vpop.f32.mrb[0].mxu0
  %v239 = vadd.f32 0.0, %v238
  %v240 = vpop.f32.mrb[0].mxu0
  %241 = vmatprep.mubr.f32.mxu0 0.0
  %242 = vmatmul.mubr.f32.gmra.mrb[0].mxu0 %v120
  %v243 = vpop.f32.mrb[0].mxu0
  %v244 = vadd.f32 0.0, %v243
  %v245 = vpop.f32.mrb[0].mxu0
  %246 = vmatprep.mubr.f32.mxu0 0.0
  %247 = vmatmul.mubr.f32.gmra.mrb[0].mxu0 %v123
  %v248 = vpop.f32.mrb[0].mxu0
  %v249 = vadd.f32 0.0, %v248
  %v250 = vpop.f32.mrb[0].mxu0
  %251 = vmatprep.mubr.f32.mxu0 0.0
  %252 = vmatmul.mubr.f32.gmra.mrb[0].mxu0 %v126
  %v253 = vpop.f32.mrb[0].mxu0
  %v254 = vadd.f32 0.0, %v253
  %v255 = vpop.f32.mrb[0].mxu0
  %256 = vmatprep.mubr.f32.mxu0 0.0
  %257 = vmatmul.mubr.f32.gmra.mrb[0].mxu0 %v129
  %v258 = vpop.f32.mrb[0].mxu0
  %v259 = vadd.f32 0.0, %v258
  %v260 = vpop.f32.mrb[0].mxu0
  %261 = vmatprep.mubr.f32.mxu0 0.0
  %262 = vmatmul.mubr.f32.gmra.mrb[0].mxu0 %v132
  %v263 = vpop.f32.mrb[0].mxu0
  %v264 = vadd.f32 0.0, %v263
  %v265 = vpop.f32.mrb[0].mxu0
  %266 = vmatprep.mubr.f32.mxu0 0.0
  %267 = vmatmul.mubr.f32.gmra.mrb[0].mxu0 %v135
  %v268 = vpop.f32.mrb[0].mxu0
  %v269 = vadd.f32 0.0, %v268
  %v270 = vpop.f32.mrb[0].mxu0
  %271 = vmatprep.mubr.f32.mxu0 0.0
  %272 = vmatmul.mubr.f32.gmra.mrb[0].mxu0 %v138
  %v273 = vpop.f32.mrb[0].mxu0
  %v274 = vadd.f32 0.0, %v273
  %v275 = vpop.f32.mrb[0].mxu0
  %276 = vmatprep.mubr.f32.mxu0 0.0
  %277 = vmatmul.mubr.f32.gmra.mrb[0].mxu0 %v141
  %v278 = vpop.f32.mrb[0].mxu0
  %v279 = vadd.f32 0.0, %v278
  %v280 = vpop.f32.mrb[0].mxu0
  %281 = vmatprep.mubr.f32.mxu0 0.0
  %282 = vmatmul.mubr.f32.gmra.mrb[0].mxu0 %v144
  %v283 = vpop.f32.mrb[0].mxu0
  %v284 = vadd.f32 0.0, %v283
  %v285 = vpop.f32.mrb[0].mxu0
  %286 = vmatprep.mubr.f32.mxu0 0.0
  %287 = vmatmul.mubr.f32.gmra.mrb[0].mxu0 %v147
  %v288 = vpop.f32.mrb[0].mxu0
  %v289 = vadd.f32 0.0, %v288
  %v290 = vpop.f32.mrb[0].mxu0
  %291 = vmatprep.mubr.f32.mxu0 0.0
  %292 = vmatmul.mubr.f32.gmra.mrb[0].mxu0 %v150
  %v293 = vpop.f32.mrb[0].mxu0
  %v294 = vadd.f32 0.0, %v293
  %v295 = vpop.f32.mrb[0].mxu0
  %296 = vdwg.mxu0
  %v297 = vld [vmem:[%s4] sm:$0x1]
  %v299 = vlaneseq
  %v300 = vshrl.u32 %v299, 7
  %v301 = vsub.s32 0, %v300
  %v302 = vrot.slane %v297, %v301
  %v304 = vmul.f32 %v219, %v302
  %v305 = vmul.f32 %v224, %v302
  %v306 = vmul.f32 %v229, %v302
  %v307 = vmul.f32 %v234, %v302
  %v308 = vmul.f32 %v239, %v302
  %v309 = vmul.f32 %v244, %v302
  %v310 = vmul.f32 %v249, %v302
  %v311 = vmul.f32 %v254, %v302
  %v312 = vmul.f32 %v259, %v302
  %v313 = vmul.f32 %v264, %v302
  %v314 = vmul.f32 %v269, %v302
  %v315 = vmul.f32 %v274, %v302
  %v316 = vmul.f32 %v279, %v302
  %v317 = vmul.f32 %v284, %v302
  %v318 = vmul.f32 %v289, %v302
  %v319 = vmul.f32 %v294, %v302
  %v320 = vld [vmem:[%s5] sm:$0x1]
  %v322 = vlaneseq
  %v323 = vshrl.u32 %v322, 7
  %v324 = vsub.s32 0, %v323
  %v325 = vrot.slane %v320, %v324
  %v327 = vadd.f32 %v304, %v325
  %v328 = vadd.f32 %v305, %v325
  %v329 = vadd.f32 %v306, %v325
  %v330 = vadd.f32 %v307, %v325
  %v331 = vadd.f32 %v308, %v325
  %v332 = vadd.f32 %v309, %v325
  %v333 = vadd.f32 %v310, %v325
  %v334 = vadd.f32 %v311, %v325
  %v335 = vadd.f32 %v312, %v325
  %v336 = vadd.f32 %v313, %v325
  %v337 = vadd.f32 %v314, %v325
  %v338 = vadd.f32 %v315, %v325
  %v339 = vadd.f32 %v316, %v325
  %v340 = vadd.f32 %v317, %v325
  %v341 = vadd.f32 %v318, %v325
  %v342 = vadd.f32 %v319, %v325
  %v343 = vmax.f32 %v327, 0.0
  %v344 = vmax.f32 %v328, 0.0
  %v345 = vmax.f32 %v329, 0.0
  %v346 = vmax.f32 %v330, 0.0
  %v347 = vmax.f32 %v331, 0.0
  %v348 = vmax.f32 %v332, 0.0
  %v349 = vmax.f32 %v333, 0.0
  %v350 = vmax.f32 %v334, 0.0
  %v351 = vmax.f32 %v335, 0.0
  %v352 = vmax.f32 %v336, 0.0
  %v353 = vmax.f32 %v337, 0.0
  %v354 = vmax.f32 %v338, 0.0
  %v355 = vmax.f32 %v339, 0.0
  %v356 = vmax.f32 %v340, 0.0
  %v357 = vmax.f32 %v341, 0.0
  %v358 = vmax.f32 %v342, 0.0
  %vm359 = vcmask 261120
  %360 = vst.msk [vmem:[%s6] sm:$0xff] %vm359, %v343
  %361 = vst.msk [vmem:[%s6 + $0x8] sm:$0xff] %vm359, %v344
  %362 = vst.msk [vmem:[%s6 + $0x10] sm:$0xff] %vm359, %v345
  %363 = vst.msk [vmem:[%s6 + $0x18] sm:$0xff] %vm359, %v346
  %364 = vst.msk [vmem:[%s6 + $0x20] sm:$0xff] %vm359, %v347
  %365 = vst.msk [vmem:[%s6 + $0x28] sm:$0xff] %vm359, %v348
  %366 = vst.msk [vmem:[%s6 + $0x30] sm:$0xff] %vm359, %v349
  %367 = vst.msk [vmem:[%s6 + $0x38] sm:$0xff] %vm359, %v350
  %368 = vst.msk [vmem:[%s6 + $0x40] sm:$0xff] %vm359, %v351
  %369 = vst.msk [vmem:[%s6 + $0x48] sm:$0xff] %vm359, %v352
  %370 = vst.msk [vmem:[%s6 + $0x50] sm:$0xff] %vm359, %v353
  %371 = vst.msk [vmem:[%s6 + $0x58] sm:$0xff] %vm359, %v354
  %372 = vst.msk [vmem:[%s6 + $0x60] sm:$0xff] %vm359, %v355
  %373 = vst.msk [vmem:[%s6 + $0x68] sm:$0xff] %vm359, %v356
  %374 = vst.msk [vmem:[%s6 + $0x70] sm:$0xff] %vm359, %v357
  %375 = vst.msk [vmem:[%s6 + $0x78] sm:$0xff] %vm359, %v358
  // Predicated region
  $region26: #{multi_mri_fc_layers_forward.267} parent=0 // pred_check
    _
  $region27: #{multi_mri_fc_layers_forward.267} parent=0 // pred_check_branch
    %377 = sbr.rel (0) target = $region29
  $region28: #{multi_mri_fc_layers_forward.267} parent=0 // pred_region
    _
  $region29: #{multi_mri_fc_layers_forward.267} parent=0 // pred_fallthru
    _
  // Predicated region
  $region30: #{multi_mri_fc_layers_forward.267} parent=0 // pred_check
    _
  $region31: #{multi_mri_fc_layers_forward.267} parent=0 // pred_check_branch
    %379 = sbr.rel (0) target = $region33
  $region32: #{multi_mri_fc_layers_forward.267} parent=0 // pred_region
    _
  $region33: #{multi_mri_fc_layers_forward.267} parent=0 // pred_fallthru
    _

// kernel: multi_mri_fc_layers_forward.266
$region0: #{multi_mri_fc_layers_forward.266}
  #allocation0 [shape = 'u32[]', space=smem, size = 0x4, offset = 0x4, fixed_abs, tag = 'smem constant byte address 0x4 - core index']
  #allocation1 [shape = 'u32[144,128]{1,0:T(1,128)}', space=vmem, size = 0x12000, scoped, tag = 'internal scratch']
  %s0 = inlined_call_operand.vmem [shape: f32[128,16], index: 0, kind: input, shape index: {}]
  %s1 = inlined_call_operand.vmem [shape: f32[128,16], index: 1, kind: input, shape index: {}]
  %s2 = inlined_call_operand.vmem [shape: f32[128,16], index: 2, kind: input, shape index: {}]
  %s3 = inlined_call_operand.vmem [shape: f32[128,16], index: 3, kind: input, shape index: {}]
  %s4 = inlined_call_operand.vmem [shape: f32[128,16], index: 4, kind: input, shape index: {}]
  %s5 = inlined_call_operand.vmem [shape: f32[128,16], index: 5, kind: input, shape index: {}]
  %s6 = inlined_call_operand.vmem [shape: f32[128,16], index: 6, kind: input, shape index: {}]
  %s7 = inlined_call_operand.vmem [shape: f32[128,16], index: 7, kind: input, shape index: {}]
  %s8 = inlined_call_operand.vmem [shape: f32[128,16], index: 8, kind: input, shape index: {}]
  %s9 = inlined_call_operand.vmem [shape: f32[128,16], index: 9, kind: output, shape index: {}]
  %s10 = sld [smem:[#allocation0]]
  $region46: #{multi_mri_fc_layers_forward.266} parent=0
    _
  %s12 = ssub.s32 1, %s10
  %s13 = scalar_select 0, %s12, %s10
  // Predicated region
  $region2: #{multi_mri_fc_layers_forward.266} parent=0 // pred_check
    _
  $region3: #{multi_mri_fc_layers_forward.266} parent=0 // pred_check_branch
    %15 = sbr.rel (0) target = $region5
  $region4: #{multi_mri_fc_layers_forward.266} parent=0 // pred_region
    _
  $region5: #{multi_mri_fc_layers_forward.266} parent=0 // pred_fallthru
    _
  // Predicated region
  $region6: #{multi_mri_fc_layers_forward.266} parent=0 // pred_check
    _
  $region7: #{multi_mri_fc_layers_forward.266} parent=0 // pred_check_branch
    %17 = sbr.rel (0) target = $region9
  $region8: #{multi_mri_fc_layers_forward.266} parent=0 // pred_region
    _
  $region9: #{multi_mri_fc_layers_forward.266} parent=0 // pred_fallthru
    _
  // Predicated region
  $region10: #{multi_mri_fc_layers_forward.266} parent=0 // pred_check
    _
  $region11: #{multi_mri_fc_layers_forward.266} parent=0 // pred_check_branch
    %19 = sbr.rel (0) target = $region13
  $region12: #{multi_mri_fc_layers_forward.266} parent=0 // pred_region
    _
  $region13: #{multi_mri_fc_layers_forward.266} parent=0 // pred_fallthru
    _
  // Predicated region
  $region14: #{multi_mri_fc_layers_forward.266} parent=0 // pred_check
    _
  $region15: #{multi_mri_fc_layers_forward.266} parent=0 // pred_check_branch
    %21 = sbr.rel (0) target = $region17
  $region16: #{multi_mri_fc_layers_forward.266} parent=0 // pred_region
    _
  $region17: #{multi_mri_fc_layers_forward.266} parent=0 // pred_fallthru
    _
  // Predicated region
  $region18: #{multi_mri_fc_layers_forward.266} parent=0 // pred_check
    _
  $region19: #{multi_mri_fc_layers_forward.266} parent=0 // pred_check_branch
    %23 = sbr.rel (0) target = $region21
  $region20: #{multi_mri_fc_layers_forward.266} parent=0 // pred_region
    _
  $region21: #{multi_mri_fc_layers_forward.266} parent=0 // pred_fallthru
    _
  // Predicated region
  $region22: #{multi_mri_fc_layers_forward.266} parent=0 // pred_check
    _
  $region23: #{multi_mri_fc_layers_forward.266} parent=0 // pred_check_branch
    %25 = sbr.rel (0) target = $region25
  $region24: #{multi_mri_fc_layers_forward.266} parent=0 // pred_region
    _
  $region25: #{multi_mri_fc_layers_forward.266} parent=0 // pred_fallthru
    _
  // Predicated region
  $region26: #{multi_mri_fc_layers_forward.266} parent=0 // pred_check
    _
  $region27: #{multi_mri_fc_layers_forward.266} parent=0 // pred_check_branch
    %27 = sbr.rel (0) target = $region29
  $region28: #{multi_mri_fc_layers_forward.266} parent=0 // pred_region
    _
  $region29: #{multi_mri_fc_layers_forward.266} parent=0 // pred_fallthru
    _
  // Predicated region
  $region30: #{multi_mri_fc_layers_forward.266} parent=0 // pred_check
    _
  $region31: #{multi_mri_fc_layers_forward.266} parent=0 // pred_check_branch
    %29 = sbr.rel (0) target = $region33
  $region32: #{multi_mri_fc_layers_forward.266} parent=0 // pred_region
    _
  $region33: #{multi_mri_fc_layers_forward.266} parent=0 // pred_fallthru
    _
  // Predicated region
  $region34: #{multi_mri_fc_layers_forward.266} parent=0 // pred_check
    _
  $region35: #{multi_mri_fc_layers_forward.266} parent=0 // pred_check_branch
    %31 = sbr.rel (0) target = $region37
  $region36: #{multi_mri_fc_layers_forward.266} parent=0 // pred_region
    _
  $region37: #{multi_mri_fc_layers_forward.266} parent=0 // pred_fallthru
    _
  %v32 = vld [vmem:[%s0] sm:$0xff]
  %v33 = vld [vmem:[%s0 + $0x8] sm:$0xff]
  %v34 = vld [vmem:[%s0 + $0x10] sm:$0xff]
  %v35 = vld [vmem:[%s0 + $0x18] sm:$0xff]
  %v36 = vld [vmem:[%s0 + $0x20] sm:$0xff]
  %v37 = vld [vmem:[%s0 + $0x28] sm:$0xff]
  %v38 = vld [vmem:[%s0 + $0x30] sm:$0xff]
  %v39 = vld [vmem:[%s0 + $0x38] sm:$0xff]
  %v40 = vld [vmem:[%s0 + $0x40] sm:$0xff]
  %v41 = vld [vmem:[%s0 + $0x48] sm:$0xff]
  %v42 = vld [vmem:[%s0 + $0x50] sm:$0xff]
  %v43 = vld [vmem:[%s0 + $0x58] sm:$0xff]
  %v44 = vld [vmem:[%s0 + $0x60] sm:$0xff]
  %v45 = vld [vmem:[%s0 + $0x68] sm:$0xff]
  %v46 = vld [vmem:[%s0 + $0x70] sm:$0xff]
  %v47 = vld [vmem:[%s0 + $0x78] sm:$0xff]
  %v48 = vld [vmem:[%s1] sm:$0xff]
  %v49 = vld [vmem:[%s1 + $0x8] sm:$0xff]
  %v50 = vld [vmem:[%s1 + $0x10] sm:$0xff]
  %v51 = vld [vmem:[%s1 + $0x18] sm:$0xff]
  %v52 = vld [vmem:[%s1 + $0x20] sm:$0xff]
  %v53 = vld [vmem:[%s1 + $0x28] sm:$0xff]
  %v54 = vld [vmem:[%s1 + $0x30] sm:$0xff]
  %v55 = vld [vmem:[%s1 + $0x38] sm:$0xff]
  %v56 = vld [vmem:[%s1 + $0x40] sm:$0xff]
  %v57 = vld [vmem:[%s1 + $0x48] sm:$0xff]
  %v58 = vld [vmem:[%s1 + $0x50] sm:$0xff]
  %v59 = vld [vmem:[%s1 + $0x58] sm:$0xff]
  %v60 = vld [vmem:[%s1 + $0x60] sm:$0xff]
  %v61 = vld [vmem:[%s1 + $0x68] sm:$0xff]
  %v62 = vld [vmem:[%s1 + $0x70] sm:$0xff]
  %v63 = vld [vmem:[%s1 + $0x78] sm:$0xff]
  %v64 = vmax.f32 %v32, %v48
  %v65 = vmax.f32 %v33, %v49
  %v66 = vmax.f32 %v34, %v50
  %v67 = vmax.f32 %v35, %v51
  %v68 = vmax.f32 %v36, %v52
  %v69 = vmax.f32 %v37, %v53
  %v70 = vmax.f32 %v38, %v54
  %v71 = vmax.f32 %v39, %v55
  %v72 = vmax.f32 %v40, %v56
  %v73 = vmax.f32 %v41, %v57
  %v74 = vmax.f32 %v42, %v58
  %v75 = vmax.f32 %v43, %v59
  %v76 = vmax.f32 %v44, %v60
  %v77 = vmax.f32 %v45, %v61
  %v78 = vmax.f32 %v46, %v62
  %v79 = vmax.f32 %v47, %v63
  %v80 = vld [vmem:[%s2] sm:$0xff]
  %v81 = vld [vmem:[%s2 + $0x8] sm:$0xff]
  %v82 = vld [vmem:[%s2 + $0x10] sm:$0xff]
  %v83 = vld [vmem:[%s2 + $0x18] sm:$0xff]
  %v84 = vld [vmem:[%s2 + $0x20] sm:$0xff]
  %v85 = vld [vmem:[%s2 + $0x28] sm:$0xff]
  %v86 = vld [vmem:[%s2 + $0x30] sm:$0xff]
  %v87 = vld [vmem:[%s2 + $0x38] sm:$0xff]
  %v88 = vld [vmem:[%s2 + $0x40] sm:$0xff]
  %v89 = vld [vmem:[%s2 + $0x48] sm:$0xff]
  %v90 = vld [vmem:[%s2 + $0x50] sm:$0xff]
  %v91 = vld [vmem:[%s2 + $0x58] sm:$0xff]
  %v92 = vld [vmem:[%s2 + $0x60] sm:$0xff]
  %v93 = vld [vmem:[%s2 + $0x68] sm:$0xff]
  %v94 = vld [vmem:[%s2 + $0x70] sm:$0xff]
  %v95 = vld [vmem:[%s2 + $0x78] sm:$0xff]
  %v96 = vmax.f32 %v64, %v80
  %v97 = vmax.f32 %v65, %v81
  %v98 = vmax.f32 %v66, %v82
  %v99 = vmax.f32 %v67, %v83
  %v100 = vmax.f32 %v68, %v84
  %v101 = vmax.f32 %v69, %v85
  %v102 = vmax.f32 %v70, %v86
  %v103 = vmax.f32 %v71, %v87
  %v104 = vmax.f32 %v72, %v88
  %v105 = vmax.f32 %v73, %v89
  %v106 = vmax.f32 %v74, %v90
  %v107 = vmax.f32 %v75, %v91
  %v108 = vmax.f32 %v76, %v92
  %v109 = vmax.f32 %v77, %v93
  %v110 = vmax.f32 %v78, %v94
  %v111 = vmax.f32 %v79, %v95
  %v112 = vld [vmem:[%s3] sm:$0xff]
  %v113 = vld [vmem:[%s3 + $0x8] sm:$0xff]
  %v114 = vld [vmem:[%s3 + $0x10] sm:$0xff]
  %v115 = vld [vmem:[%s3 + $0x18] sm:$0xff]
  %v116 = vld [vmem:[%s3 + $0x20] sm:$0xff]
  %v117 = vld [vmem:[%s3 + $0x28] sm:$0xff]
  %v118 = vld [vmem:[%s3 + $0x30] sm:$0xff]
  %v119 = vld [vmem:[%s3 + $0x38] sm:$0xff]
  %v120 = vld [vmem:[%s3 + $0x40] sm:$0xff]
  %v121 = vld [vmem:[%s3 + $0x48] sm:$0xff]
  %v122 = vld [vmem:[%s3 + $0x50] sm:$0xff]
  %v123 = vld [vmem:[%s3 + $0x58] sm:$0xff]
  %v124 = vld [vmem:[%s3 + $0x60] sm:$0xff]
  %v125 = vld [vmem:[%s3 + $0x68] sm:$0xff]
  %v126 = vld [vmem:[%s3 + $0x70] sm:$0xff]
  %v127 = vld [vmem:[%s3 + $0x78] sm:$0xff]
  %v128 = vmax.f32 %v96, %v112
  %v129 = vmax.f32 %v97, %v113
  %v130 = vmax.f32 %v98, %v114
  %v131 = vmax.f32 %v99, %v115
  %v132 = vmax.f32 %v100, %v116
  %v133 = vmax.f32 %v101, %v117
  %v134 = vmax.f32 %v102, %v118
  %v135 = vmax.f32 %v103, %v119
  %v136 = vmax.f32 %v104, %v120
  %v137 = vmax.f32 %v105, %v121
  %v138 = vmax.f32 %v106, %v122
  %v139 = vmax.f32 %v107, %v123
  %v140 = vmax.f32 %v108, %v124
  %v141 = vmax.f32 %v109, %v125
  %v142 = vmax.f32 %v110, %v126
  %v143 = vmax.f32 %v111, %v127
  %v144 = vld [vmem:[%s4] sm:$0xff]
  %v145 = vld [vmem:[%s4 + $0x8] sm:$0xff]
  %v146 = vld [vmem:[%s4 + $0x10] sm:$0xff]
  %v147 = vld [vmem:[%s4 + $0x18] sm:$0xff]
  %v148 = vld [vmem:[%s4 + $0x20] sm:$0xff]
  %v149 = vld [vmem:[%s4 + $0x28] sm:$0xff]
  %v150 = vld [vmem:[%s4 + $0x30] sm:$0xff]
  %v151 = vld [vmem:[%s4 + $0x38] sm:$0xff]
  %v152 = vld [vmem:[%s4 + $0x40] sm:$0xff]
  %v153 = vld [vmem:[%s4 + $0x48] sm:$0xff]
  %v154 = vld [vmem:[%s4 + $0x50] sm:$0xff]
  %v155 = vld [vmem:[%s4 + $0x58] sm:$0xff]
  %v156 = vld [vmem:[%s4 + $0x60] sm:$0xff]
  %v157 = vld [vmem:[%s4 + $0x68] sm:$0xff]
  %v158 = vld [vmem:[%s4 + $0x70] sm:$0xff]
  %v159 = vld [vmem:[%s4 + $0x78] sm:$0xff]
  %v160 = vmax.f32 %v128, %v144
  %v161 = vmax.f32 %v129, %v145
  %v162 = vmax.f32 %v130, %v146
  %v163 = vmax.f32 %v131, %v147
  %v164 = vmax.f32 %v132, %v148
  %v165 = vmax.f32 %v133, %v149
  %v166 = vmax.f32 %v134, %v150
  %v167 = vmax.f32 %v135, %v151
  %v168 = vmax.f32 %v136, %v152
  %v169 = vmax.f32 %v137, %v153
  %v170 = vmax.f32 %v138, %v154
  %v171 = vmax.f32 %v139, %v155
  %v172 = vmax.f32 %v140, %v156
  %v173 = vmax.f32 %v141, %v157
  %v174 = vmax.f32 %v142, %v158
  %v175 = vmax.f32 %v143, %v159
  %v176 = vld [vmem:[%s5] sm:$0xff]
  %v177 = vld [vmem:[%s5 + $0x8] sm:$0xff]
  %v178 = vld [vmem:[%s5 + $0x10] sm:$0xff]
  %v179 = vld [vmem:[%s5 + $0x18] sm:$0xff]
  %v180 = vld [vmem:[%s5 + $0x20] sm:$0xff]
  %v181 = vld [vmem:[%s5 + $0x28] sm:$0xff]
  %v182 = vld [vmem:[%s5 + $0x30] sm:$0xff]
  %v183 = vld [vmem:[%s5 + $0x38] sm:$0xff]
  %v184 = vld [vmem:[%s5 + $0x40] sm:$0xff]
  %v185 = vld [vmem:[%s5 + $0x48] sm:$0xff]
  %v186 = vld [vmem:[%s5 + $0x50] sm:$0xff]
  %v187 = vld [vmem:[%s5 + $0x58] sm:$0xff]
  %v188 = vld [vmem:[%s5 + $0x60] sm:$0xff]
  %v189 = vld [vmem:[%s5 + $0x68] sm:$0xff]
  %v190 = vld [vmem:[%s5 + $0x70] sm:$0xff]
  %v191 = vld [vmem:[%s5 + $0x78] sm:$0xff]
  %v192 = vmax.f32 %v160, %v176
  %v193 = vmax.f32 %v161, %v177
  %v194 = vmax.f32 %v162, %v178
  %v195 = vmax.f32 %v163, %v179
  %v196 = vmax.f32 %v164, %v180
  %v197 = vmax.f32 %v165, %v181
  %v198 = vmax.f32 %v166, %v182
  %v199 = vmax.f32 %v167, %v183
  %v200 = vmax.f32 %v168, %v184
  %v201 = vmax.f32 %v169, %v185
  %v202 = vmax.f32 %v170, %v186
  %v203 = vmax.f32 %v171, %v187
  %v204 = vmax.f32 %v172, %v188
  %v205 = vmax.f32 %v173, %v189
  %v206 = vmax.f32 %v174, %v190
  %v207 = vmax.f32 %v175, %v191
  %v208 = vld [vmem:[%s6] sm:$0xff]
  %v209 = vld [vmem:[%s6 + $0x8] sm:$0xff]
  %v210 = vld [vmem:[%s6 + $0x10] sm:$0xff]
  %v211 = vld [vmem:[%s6 + $0x18] sm:$0xff]
  %v212 = vld [vmem:[%s6 + $0x20] sm:$0xff]
  %v213 = vld [vmem:[%s6 + $0x28] sm:$0xff]
  %v214 = vld [vmem:[%s6 + $0x30] sm:$0xff]
  %v215 = vld [vmem:[%s6 + $0x38] sm:$0xff]
  %v216 = vld [vmem:[%s6 + $0x40] sm:$0xff]
  %v217 = vld [vmem:[%s6 + $0x48] sm:$0xff]
  %v218 = vld [vmem:[%s6 + $0x50] sm:$0xff]
  %v219 = vld [vmem:[%s6 + $0x58] sm:$0xff]
  %v220 = vld [vmem:[%s6 + $0x60] sm:$0xff]
  %v221 = vld [vmem:[%s6 + $0x68] sm:$0xff]
  %v222 = vld [vmem:[%s6 + $0x70] sm:$0xff]
  %v223 = vld [vmem:[%s6 + $0x78] sm:$0xff]
  %v224 = vmax.f32 %v192, %v208
  %v225 = vmax.f32 %v193, %v209
  %v226 = vmax.f32 %v194, %v210
  %v227 = vmax.f32 %v195, %v211
  %v228 = vmax.f32 %v196, %v212
  %v229 = vmax.f32 %v197, %v213
  %v230 = vmax.f32 %v198, %v214
  %v231 = vmax.f32 %v199, %v215
  %v232 = vmax.f32 %v200, %v216
  %v233 = vmax.f32 %v201, %v217
  %v234 = vmax.f32 %v202, %v218
  %v235 = vmax.f32 %v203, %v219
  %v236 = vmax.f32 %v204, %v220
  %v237 = vmax.f32 %v205, %v221
  %v238 = vmax.f32 %v206, %v222
  %v239 = vmax.f32 %v207, %v223
  %v240 = vld [vmem:[%s7] sm:$0xff]
  %v241 = vld [vmem:[%s7 + $0x8] sm:$0xff]
  %v242 = vld [vmem:[%s7 + $0x10] sm:$0xff]
  %v243 = vld [vmem:[%s7 + $0x18] sm:$0xff]
  %v244 = vld [vmem:[%s7 + $0x20] sm:$0xff]
  %v245 = vld [vmem:[%s7 + $0x28] sm:$0xff]
  %v246 = vld [vmem:[%s7 + $0x30] sm:$0xff]
  %v247 = vld [vmem:[%s7 + $0x38] sm:$0xff]
  %v248 = vld [vmem:[%s7 + $0x40] sm:$0xff]
  %v249 = vld [vmem:[%s7 + $0x48] sm:$0xff]
  %v250 = vld [vmem:[%s7 + $0x50] sm:$0xff]
  %v251 = vld [vmem:[%s7 + $0x58] sm:$0xff]
  %v252 = vld [vmem:[%s7 + $0x60] sm:$0xff]
  %v253 = vld [vmem:[%s7 + $0x68] sm:$0xff]
  %v254 = vld [vmem:[%s7 + $0x70] sm:$0xff]
  %v255 = vld [vmem:[%s7 + $0x78] sm:$0xff]
  %v256 = vmax.f32 %v224, %v240
  %v257 = vmax.f32 %v225, %v241
  %v258 = vmax.f32 %v226, %v242
  %v259 = vmax.f32 %v227, %v243
  %v260 = vmax.f32 %v228, %v244
  %v261 = vmax.f32 %v229, %v245
  %v262 = vmax.f32 %v230, %v246
  %v263 = vmax.f32 %v231, %v247
  %v264 = vmax.f32 %v232, %v248
  %v265 = vmax.f32 %v233, %v249
  %v266 = vmax.f32 %v234, %v250
  %v267 = vmax.f32 %v235, %v251
  %v268 = vmax.f32 %v236, %v252
  %v269 = vmax.f32 %v237, %v253
  %v270 = vmax.f32 %v238, %v254
  %v271 = vmax.f32 %v239, %v255
  %v272 = vld [vmem:[%s8] sm:$0xff]
  %v273 = vld [vmem:[%s8 + $0x8] sm:$0xff]
  %v274 = vld [vmem:[%s8 + $0x10] sm:$0xff]
  %v275 = vld [vmem:[%s8 + $0x18] sm:$0xff]
  %v276 = vld [vmem:[%s8 + $0x20] sm:$0xff]
  %v277 = vld [vmem:[%s8 + $0x28] sm:$0xff]
  %v278 = vld [vmem:[%s8 + $0x30] sm:$0xff]
  %v279 = vld [vmem:[%s8 + $0x38] sm:$0xff]
  %v280 = vld [vmem:[%s8 + $0x40] sm:$0xff]
  %v281 = vld [vmem:[%s8 + $0x48] sm:$0xff]
  %v282 = vld [vmem:[%s8 + $0x50] sm:$0xff]
  %v283 = vld [vmem:[%s8 + $0x58] sm:$0xff]
  %v284 = vld [vmem:[%s8 + $0x60] sm:$0xff]
  %v285 = vld [vmem:[%s8 + $0x68] sm:$0xff]
  %v286 = vld [vmem:[%s8 + $0x70] sm:$0xff]
  %v287 = vld [vmem:[%s8 + $0x78] sm:$0xff]
  %v288 = vmax.f32 %v256, %v272
  %v289 = vmax.f32 %v257, %v273
  %v290 = vmax.f32 %v258, %v274
  %v291 = vmax.f32 %v259, %v275
  %v292 = vmax.f32 %v260, %v276
  %v293 = vmax.f32 %v261, %v277
  %v294 = vmax.f32 %v262, %v278
  %v295 = vmax.f32 %v263, %v279
  %v296 = vmax.f32 %v264, %v280
  %v297 = vmax.f32 %v265, %v281
  %v298 = vmax.f32 %v266, %v282
  %v299 = vmax.f32 %v267, %v283
  %v300 = vmax.f32 %v268, %v284
  %v301 = vmax.f32 %v269, %v285
  %v302 = vmax.f32 %v270, %v286
  %v303 = vmax.f32 %v271, %v287
  %vm304 = vcmask 130048
  %305 = vst.msk [vmem:[%s9] sm:$0xff] %vm304, %v288
  %306 = vst.msk [vmem:[%s9 + $0x8] sm:$0xff] %vm304, %v289
  %307 = vst.msk [vmem:[%s9 + $0x10] sm:$0xff] %vm304, %v290
  %308 = vst.msk [vmem:[%s9 + $0x18] sm:$0xff] %vm304, %v291
  %309 = vst.msk [vmem:[%s9 + $0x20] sm:$0xff] %vm304, %v292
  %310 = vst.msk [vmem:[%s9 + $0x28] sm:$0xff] %vm304, %v293
  %311 = vst.msk [vmem:[%s9 + $0x30] sm:$0xff] %vm304, %v294
  %312 = vst.msk [vmem:[%s9 + $0x38] sm:$0xff] %vm304, %v295
  %313 = vst.msk [vmem:[%s9 + $0x40] sm:$0xff] %vm304, %v296
  %314 = vst.msk [vmem:[%s9 + $0x48] sm:$0xff] %vm304, %v297
  %315 = vst.msk [vmem:[%s9 + $0x50] sm:$0xff] %vm304, %v298
  %316 = vst.msk [vmem:[%s9 + $0x58] sm:$0xff] %vm304, %v299
  %317 = vst.msk [vmem:[%s9 + $0x60] sm:$0xff] %vm304, %v300
  %318 = vst.msk [vmem:[%s9 + $0x68] sm:$0xff] %vm304, %v301
  %319 = vst.msk [vmem:[%s9 + $0x70] sm:$0xff] %vm304, %v302
  %320 = vst.msk [vmem:[%s9 + $0x78] sm:$0xff] %vm304, %v303
  // Predicated region
  $region38: #{multi_mri_fc_layers_forward.266} parent=0 // pred_check
    _
  $region39: #{multi_mri_fc_layers_forward.266} parent=0 // pred_check_branch
    %322 = sbr.rel (0) target = $region41
  $region40: #{multi_mri_fc_layers_forward.266} parent=0 // pred_region
    _
  $region41: #{multi_mri_fc_layers_forward.266} parent=0 // pred_fallthru
    _
  // Predicated region
  $region42: #{multi_mri_fc_layers_forward.266} parent=0 // pred_check
    _
  $region43: #{multi_mri_fc_layers_forward.266} parent=0 // pred_check_branch
    %324 = sbr.rel (0) target = $region45
  $region44: #{multi_mri_fc_layers_forward.266} parent=0 // pred_region
    _
  $region45: #{multi_mri_fc_layers_forward.266} parent=0 // pred_fallthru
    _

// kernel: multi_mri_fc_layers_forward.268
$region0: #{multi_mri_fc_layers_forward.268}
  #allocation0 [shape = 'u32[]', space=smem, size = 0x4, offset = 0x4, fixed_abs, tag = 'smem constant byte address 0x4 - core index']
  #allocation1 [shape = 'u32[144,128]{1,0:T(1,128)}', space=vmem, size = 0x12000, scoped, tag = 'internal scratch']
  %s0 = inlined_call_operand.vmem [shape: f32[2,10,10,32], index: 0, kind: input, shape index: {}]
  %s1 = inlined_call_operand.vmem [shape: f32[9,32,8], index: 1, kind: input, shape index: {}]
  %s2 = inlined_call_operand.vmem [shape: f32[2,8,8,8], index: 2, kind: output, shape index: {}]
  %s3 = sld [smem:[#allocation0]]
  $region48: #{multi_mri_fc_layers_forward.268} parent=0
    _
  %s5 = ssub.s32 1, %s3
  %s6 = scalar_select 0, %s5, %s3
  loop: start=0, step=1, limit=4
  $region2: #{multi_mri_fc_layers_forward.268} parent=0 // loop_pre_header
    _
  $region3: #{multi_mri_fc_layers_forward.268} parent=0 // loop_header
    %s8 = sphi 0, %s12
    %p9 = scmp.ge.s32.totalorder %s8, 4
    %s18 = sphi 0, %s20
    %s21 = sphi 0, %s18
    %s22 = sphi 0, %s21
    %s38 = sphi 0, %s22
    %s42 = sphi 0, %s42
    %s44 = sphi 0, %s42
    %s45 = sphi 0, %s44
    %s59 = sphi 0, %s45
    %s65 = sphi 0, %s67
    %s68 = sphi 0, %s65
    %s69 = sphi 0, %s68
    %s85 = sphi 0, %s69
  $region4: #{multi_mri_fc_layers_forward.268} parent=0 // loop_header_branch
    %11 = sbr.rel (%p9) target = $region8
  $region5: #{multi_mri_fc_layers_forward.268} parent=0 // loop_body
    %s13 = ssub.s32 %s8, 1
    %s14 = ssub.s32 %s8, 2
    %s15 = sadd.s32 %s8, 1
    %s16 = ssub.s32 %s8, %s15
    %p17 = scmp.eq.s32.totalorder %s16, 0
    %s19 = sadd.s32 %s18, 1
    %s20 = scalar_select %p17, %s18, %s19
    %p23 = pneg %p17
    %p24 = scmp.eq.s32.totalorder %s8, 1
    %p25 = por %p23, %p24
    %p26 = scmp.ne.s32.totalorder %s18, %s21
    %p27 = scmp.eq.s32.totalorder %s8, 0
    %p28 = por %p26, %p27
    %p29 = scmp.ne.s32.totalorder %s18, %s21
    %p30 = scmp.eq.s32.totalorder %s13, 1
    %p31 = por %p29, %p30
    %p32 = scmp.ne.s32.totalorder %s21, %s22
    %p33 = scmp.eq.s32.totalorder %s13, 0
    %p34 = por %p32, %p33
    %p35 = scmp.ne.s32.totalorder %s21, %s22
    %p36 = scmp.eq.s32.totalorder %s14, 1
    %p37 = por %p35, %p36
    %p39 = scmp.ne.s32.totalorder %s22, %s38
    %p40 = scmp.eq.s32.totalorder %s14, 0
    %p41 = por %p39, %p40
    %s43 = sadd.s32 %s42, 1
    %p46 = scmp.eq.s32.totalorder %s8, 1
    %p47 = scmp.ne.s32.totalorder %s42, %s44
    %p48 = scmp.eq.s32.totalorder %s8, 0
    %p49 = por %p47, %p48
    %p50 = scmp.ne.s32.totalorder %s42, %s44
    %p51 = scmp.eq.s32.totalorder %s13, 1
    %p52 = por %p50, %p51
    %p53 = scmp.ne.s32.totalorder %s44, %s45
    %p54 = scmp.eq.s32.totalorder %s13, 0
    %p55 = por %p53, %p54
    %p56 = scmp.ne.s32.totalorder %s44, %s45
    %p57 = scmp.eq.s32.totalorder %s14, 1
    %p58 = por %p56, %p57
    %p60 = scmp.ne.s32.totalorder %s45, %s59
    %p61 = scmp.eq.s32.totalorder %s14, 0
    %p62 = por %p60, %p61
    %s63 = ssub.s32 %s8, %s15
    %p64 = scmp.eq.s32.totalorder %s63, 0
    %s66 = sadd.s32 %s65, 1
    %s67 = scalar_select %p64, %s65, %s66
    %p70 = pneg %p64
    %p71 = scmp.eq.s32.totalorder %s8, 1
    %p72 = por %p70, %p71
    %p73 = scmp.ne.s32.totalorder %s65, %s68
    %p74 = scmp.eq.s32.totalorder %s8, 0
    %p75 = por %p73, %p74
    %p76 = scmp.ne.s32.totalorder %s65, %s68
    %p77 = scmp.eq.s32.totalorder %s13, 1
    %p78 = por %p76, %p77
    %p79 = scmp.ne.s32.totalorder %s68, %s69
    %p80 = scmp.eq.s32.totalorder %s13, 0
    %p81 = por %p79, %p80
    %p82 = scmp.ne.s32.totalorder %s68, %s69
    %p83 = scmp.eq.s32.totalorder %s14, 1
    %p84 = por %p82, %p83
    %p86 = scmp.ne.s32.totalorder %s69, %s85
    %p87 = scmp.eq.s32.totalorder %s14, 0
    %p88 = por %p86, %p87
    %p89 = scmp.le.s32.totalorder 1, %s8
    %p90 = scmp.lt.s32.totalorder %s8, 3
    %p91 = pnand %p89, %p90
    %p92 = pneg %p91
    // Predicated region
    $region9: #{multi_mri_fc_layers_forward.268} parent=5 // pred_check
      _
    $region10: #{multi_mri_fc_layers_forward.268} parent=5 // pred_check_branch
      %94 = sbr.rel (%p91) target = $region12
    $region11: #{multi_mri_fc_layers_forward.268} parent=5 // pred_region
      %s95 = ssub.s32 %s8, 1
      // Predicated region
      $region13: #{multi_mri_fc_layers_forward.268} parent=11 // pred_check
        %p96 = pneg %p55
      $region14: #{multi_mri_fc_layers_forward.268} parent=11 // pred_check_branch
        %98 = sbr.rel (%p96) target = $region16
      $region15: #{multi_mri_fc_layers_forward.268} parent=11 // pred_region
        _
      $region16: #{multi_mri_fc_layers_forward.268} parent=11 // pred_fallthru
        _
    $region12: #{multi_mri_fc_layers_forward.268} parent=5 // pred_fallthru
      _
    %p99 = scmp.lt.s32.totalorder %s8, 2
    // Predicated region
    $region17: #{multi_mri_fc_layers_forward.268} parent=5 // pred_check
      %p100 = pneg %p99
    $region18: #{multi_mri_fc_layers_forward.268} parent=5 // pred_check_branch
      %102 = sbr.rel (%p100) target = $region20
    $region19: #{multi_mri_fc_layers_forward.268} parent=5 // pred_region
      // Predicated region
      $region21: #{multi_mri_fc_layers_forward.268} parent=19 // pred_check
        %p103 = pneg %p28
      $region22: #{multi_mri_fc_layers_forward.268} parent=19 // pred_check_branch
        %105 = sbr.rel (%p103) target = $region24
      $region23: #{multi_mri_fc_layers_forward.268} parent=19 // pred_region
        %p106 = scmp.lt.s32.totalorder %s8, 1
        %s107 = scalar_select %p106, %s8, 1
        %s108 = smul.addr %s107, 20
        %s109 = smul.addr %s108, 8
        %s110 = scalar_lea.vmem %s0, %s109
      $region24: #{multi_mri_fc_layers_forward.268} parent=19 // pred_fallthru
        _
    $region20: #{multi_mri_fc_layers_forward.268} parent=5 // pred_fallthru
      _
    %p111 = scmp.le.s32.totalorder 1, %s8
    %p112 = scmp.lt.s32.totalorder %s8, 3
    %p113 = pnand %p111, %p112
    %p114 = pneg %p113
    // Predicated region
    $region25: #{multi_mri_fc_layers_forward.268} parent=5 // pred_check
      _
    $region26: #{multi_mri_fc_layers_forward.268} parent=5 // pred_check_branch
      %116 = sbr.rel (%p113) target = $region28
    $region27: #{multi_mri_fc_layers_forward.268} parent=5 // pred_region
      %s117 = ssub.s32 %s8, 1
      %p118 = scmp.lt.s32.totalorder %s13, 1
      %s119 = scalar_select %p118, %s13, 1
      %s120 = smul.addr %s119, 20
      %s121 = smul.addr %s120, 8
      %s122 = scalar_lea.vmem %s0, %s121
      %p123 = pneg %p34
      %p124 = pneg %p31
      %p125 = pneg %p55
      %p126 = pneg %p52
      %p127 = pneg %p81
      %p128 = pneg %p78
      %p129 = scmp.lt.s32.totalorder %s13, 1
      %s130 = scalar_select %p129, %s13, 1
      %s131 = smul.addr %s130, 8
      %s132 = smul.addr %s131, 8
      %s133 = scalar_lea.vmem %s2, %s132
      %p134 = scmp.lt.s32.totalorder %s13, 1
      %s135 = scalar_select %p134, %s13, 1
      %s136 = smul.addr %s135, 20
      %s137 = smul.addr %s136, 8
      %s138 = scalar_lea.vmem %s0, %s137
      %p139 = scmp.lt.s32.totalorder %s13, 1
      %s140 = scalar_select %p139, %s13, 1
      %s141 = smul.addr %s140, 8
      %s142 = smul.addr %s141, 8
      %s143 = scalar_lea.vmem %s2, %s142
      loop: start=0, step=1, limit=8
      $region29: #{multi_mri_fc_layers_forward.268} parent=27 // loop_pre_header
        _
      $region30: #{multi_mri_fc_layers_forward.268} parent=27 // loop_header
        %s145 = sphi 0, %s149
        %p146 = scmp.ge.s32.totalorder %s145, 8
      $region31: #{multi_mri_fc_layers_forward.268} parent=27 // loop_header_branch
        %148 = sbr.rel (%p146) target = $region35
      $region32: #{multi_mri_fc_layers_forward.268} parent=27 // loop_body
        %s150 = smul.u32 %s145, 16
        %s151 = scalar_lea.vmem %s138, %s150
        %v152 = vld [vmem:[%s151] sm:$0xff]
        %v153 = vld [vmem:[%s1] sm:$0xff]
        %v154 = vld [vmem:[%s1 + $0x8] sm:$0xff]
        %v155 = vld [vmem:[%s1 + $0x10] sm:$0xff]
        %v156 = vld [vmem:[%s1 + $0x18] sm:$0xff]
        %v157 = vld [vmem:[%s151 + $0x1] sm:$0xff]
        %s158 = scalar_lea.vmem %s1, 32
        %v159 = vld [vmem:[%s158] sm:$0xff]
        %v160 = vld [vmem:[%s158 + $0x8] sm:$0xff]
        %v161 = vld [vmem:[%s158 + $0x10] sm:$0xff]
        %v162 = vld [vmem:[%s158 + $0x18] sm:$0xff]
        %vm163 = vcmask 261120
        %v165 = vsel %vm163, %v157, 0
        %167 = vmatprep.subr.mxu0 0.0
        %168 = vmatpush1.msra.mxu0 %v159
        %169 = vmatprep.subr.mxu0 0.0
        %170 = vmatpush1.msra.mxu0 %v160
        %171 = vmatprep.subr.mxu0 0.0
        %172 = vmatpush1.msra.mxu0 %v161
        %173 = vmatprep.subr.mxu0 0.0
        %174 = vmatpush1.msra.mxu0 %v162
        %175 = vmatprep.subr.mxu0 0.0
        %176 = vmatpush1.msra.mxu0 0.0
        %177 = vmatprep.subr.mxu0 0.0
        %178 = vmatpush1.msra.mxu0 0.0
        %179 = vmatprep.subr.mxu0 0.0
        %180 = vmatpush1.msra.mxu0 0.0
        %181 = vmatprep.subr.mxu0 0.0
        %182 = vmatpush1.msra.mxu0 0.0
        %183 = vmatprep.subr.mxu0 0.0
        %184 = vmatpush1.msra.mxu0 0.0
        %185 = vmatprep.subr.mxu0 0.0
        %186 = vmatpush1.msra.mxu0 0.0
        %187 = vmatprep.subr.mxu0 0.0
        %188 = vmatpush1.msra.mxu0 0.0
        %189 = vmatprep.subr.mxu0 0.0
        %190 = vmatpush1.msra.mxu0 0.0
        %191 = vmatprep.subr.mxu0 0.0
        %192 = vmatpush1.msra.mxu0 0.0
        %193 = vmatprep.subr.mxu0 0.0
        %194 = vmatpush1.msra.mxu0 0.0
        %195 = vmatprep.subr.mxu0 0.0
        %196 = vmatpush1.msra.mxu0 0.0
        %197 = vmatprep.subr.mxu0 0.0
        %198 = vmatpush1.msra.mxu0 0.0
        %199 = vmatprep.subr.mxu0 0.0
        %200 = vmatpush1.msra.mxu0 0.0
        %201 = vmatprep.subr.mxu0 0.0
        %202 = vmatpush1.msra.mxu0 0.0
        %203 = vmatprep.subr.mxu0 0.0
        %204 = vmatpush1.msra.mxu0 0.0
        %205 = vmatprep.subr.mxu0 0.0
        %206 = vmatpush1.msra.mxu0 0.0
        %207 = vmatprep.subr.mxu0 0.0
        %208 = vmatpush1.msra.mxu0 0.0
        %209 = vmatprep.subr.mxu0 0.0
        %210 = vmatpush1.msra.mxu0 0.0
        %211 = vmatprep.subr.mxu0 0.0
        %212 = vmatpush1.msra.mxu0 0.0
        %213 = vmatprep.subr.mxu0 0.0
        %214 = vmatpush1.msra.mxu0 0.0
        %215 = vmatprep.subr.mxu0 0.0
        %216 = vmatpush1.msra.mxu0 0.0
        %217 = vmatprep.subr.mxu0 0.0
        %218 = vmatpush1.msra.mxu0 0.0
        %219 = vmatprep.subr.mxu0 0.0
        %220 = vmatpush1.msra.mxu0 0.0
        %221 = vmatprep.subr.mxu0 0.0
        %222 = vmatpush1.msra.mxu0 0.0
        %223 = vmatprep.subr.mxu0 0.0
        %224 = vmatpush1.msra.mxu0 0.0
        %225 = vmatprep.subr.mxu0 0.0
        %226 = vmatpush1.msra.mxu0 0.0
        %227 = vmatprep.subr.mxu0 0.0
        %228 = vmatpush1.msra.mxu0 0.0
        %229 = vmatprep.subr.mxu0 0.0
        %230 = vmatpush1.msra.mxu0 0.0
        %231 = vmatprep.mubr.f32.mxu0 0.0
        %232 = vmatmul.mubr.f32.gmra.mrb[0].mxu0 %v165
        %v233 = vpop.f32.mrb[0].mxu0
        %v234 = vadd.f32 0.0, %v233
        %v235 = vpop.f32.mrb[0].mxu0
        %236 = vdwg.mxu0
        %v238 = vsel %vm163, %v152, 0
        %240 = vmatprep.subr.mxu0 0.0
        %241 = vmatpush1.msra.mxu0 %v153
        %242 = vmatprep.subr.mxu0 0.0
        %243 = vmatpush1.msra.mxu0 %v154
        %244 = vmatprep.subr.mxu0 0.0
        %245 = vmatpush1.msra.mxu0 %v155
        %246 = vmatprep.subr.mxu0 0.0
        %247 = vmatpush1.msra.mxu0 %v156
        %248 = vmatprep.subr.mxu0 0.0
        %249 = vmatpush1.msra.mxu0 0.0
        %250 = vmatprep.subr.mxu0 0.0
        %251 = vmatpush1.msra.mxu0 0.0
        %252 = vmatprep.subr.mxu0 0.0
        %253 = vmatpush1.msra.mxu0 0.0
        %254 = vmatprep.subr.mxu0 0.0
        %255 = vmatpush1.msra.mxu0 0.0
        %256 = vmatprep.subr.mxu0 0.0
        %257 = vmatpush1.msra.mxu0 0.0
        %258 = vmatprep.subr.mxu0 0.0
        %259 = vmatpush1.msra.mxu0 0.0
        %260 = vmatprep.subr.mxu0 0.0
        %261 = vmatpush1.msra.mxu0 0.0
        %262 = vmatprep.subr.mxu0 0.0
        %263 = vmatpush1.msra.mxu0 0.0
        %264 = vmatprep.subr.mxu0 0.0
        %265 = vmatpush1.msra.mxu0 0.0
        %266 = vmatprep.subr.mxu0 0.0
        %267 = vmatpush1.msra.mxu0 0.0
        %268 = vmatprep.subr.mxu0 0.0
        %269 = vmatpush1.msra.mxu0 0.0
        %270 = vmatprep.subr.mxu0 0.0
        %271 = vmatpush1.msra.mxu0 0.0
        %272 = vmatprep.subr.mxu0 0.0
        %273 = vmatpush1.msra.mxu0 0.0
        %274 = vmatprep.subr.mxu0 0.0
        %275 = vmatpush1.msra.mxu0 0.0
        %276 = vmatprep.subr.mxu0 0.0
        %277 = vmatpush1.msra.mxu0 0.0
        %278 = vmatprep.subr.mxu0 0.0
        %279 = vmatpush1.msra.mxu0 0.0
        %280 = vmatprep.subr.mxu0 0.0
        %281 = vmatpush1.msra.mxu0 0.0
        %282 = vmatprep.subr.mxu0 0.0
        %283 = vmatpush1.msra.mxu0 0.0
        %284 = vmatprep.subr.mxu0 0.0
        %285 = vmatpush1.msra.mxu0 0.0
        %286 = vmatprep.subr.mxu0 0.0
        %287 = vmatpush1.msra.mxu0 0.0
        %288 = vmatprep.subr.mxu0 0.0
        %289 = vmatpush1.msra.mxu0 0.0
        %290 = vmatprep.subr.mxu0 0.0
        %291 = vmatpush1.msra.mxu0 0.0
        %292 = vmatprep.subr.mxu0 0.0
        %293 = vmatpush1.msra.mxu0 0.0
        %294 = vmatprep.subr.mxu0 0.0
        %295 = vmatpush1.msra.mxu0 0.0
        %296 = vmatprep.subr.mxu0 0.0
        %297 = vmatpush1.msra.mxu0 0.0
        %298 = vmatprep.subr.mxu0 0.0
        %299 = vmatpush1.msra.mxu0 0.0
        %300 = vmatprep.subr.mxu0 0.0
        %301 = vmatpush1.msra.mxu0 0.0
        %302 = vmatprep.subr.mxu0 0.0
        %303 = vmatpush1.msra.mxu0 0.0
        %304 = vmatprep.mubr.f32.mxu0 0.0
        %305 = vmatmul.mubr.f32.gmra.mrb[0].mxu0 %v238
        %v306 = vpop.f32.mrb[0].mxu0
        %v307 = vadd.f32 %v234, %v306
        %v308 = vpop.f32.mrb[0].mxu0
        %309 = vdwg.mxu0
        %v310 = vld [vmem:[%s151 + $0x2] sm:$0xff]
        %s311 = scalar_lea.vmem %s1, 64
        %v312 = vld [vmem:[%s311] sm:$0xff]
        %v313 = vld [vmem:[%s311 + $0x8] sm:$0xff]
        %v314 = vld [vmem:[%s311 + $0x10] sm:$0xff]
        %v315 = vld [vmem:[%s311 + $0x18] sm:$0xff]
        %v317 = vsel %vm163, %v310, 0
        %319 = vmatprep.subr.mxu0 0.0
        %320 = vmatpush1.msra.mxu0 %v312
        %321 = vmatprep.subr.mxu0 0.0
        %322 = vmatpush1.msra.mxu0 %v313
        %323 = vmatprep.subr.mxu0 0.0
        %324 = vmatpush1.msra.mxu0 %v314
        %325 = vmatprep.subr.mxu0 0.0
        %326 = vmatpush1.msra.mxu0 %v315
        %327 = vmatprep.subr.mxu0 0.0
        %328 = vmatpush1.msra.mxu0 0.0
        %329 = vmatprep.subr.mxu0 0.0
        %330 = vmatpush1.msra.mxu0 0.0
        %331 = vmatprep.subr.mxu0 0.0
        %332 = vmatpush1.msra.mxu0 0.0
        %333 = vmatprep.subr.mxu0 0.0
        %334 = vmatpush1.msra.mxu0 0.0
        %335 = vmatprep.subr.mxu0 0.0
        %336 = vmatpush1.msra.mxu0 0.0
        %337 = vmatprep.subr.mxu0 0.0
        %338 = vmatpush1.msra.mxu0 0.0
        %339 = vmatprep.subr.mxu0 0.0
        %340 = vmatpush1.msra.mxu0 0.0
        %341 = vmatprep.subr.mxu0 0.0
        %342 = vmatpush1.msra.mxu0 0.0
        %343 = vmatprep.subr.mxu0 0.0
        %344 = vmatpush1.msra.mxu0 0.0
        %345 = vmatprep.subr.mxu0 0.0
        %346 = vmatpush1.msra.mxu0 0.0
        %347 = vmatprep.subr.mxu0 0.0
        %348 = vmatpush1.msra.mxu0 0.0
        %349 = vmatprep.subr.mxu0 0.0
        %350 = vmatpush1.msra.mxu0 0.0
        %351 = vmatprep.subr.mxu0 0.0
        %352 = vmatpush1.msra.mxu0 0.0
        %353 = vmatprep.subr.mxu0 0.0
        %354 = vmatpush1.msra.mxu0 0.0
        %355 = vmatprep.subr.mxu0 0.0
        %356 = vmatpush1.msra.mxu0 0.0
        %357 = vmatprep.subr.mxu0 0.0
        %358 = vmatpush1.msra.mxu0 0.0
        %359 = vmatprep.subr.mxu0 0.0
        %360 = vmatpush1.msra.mxu0 0.0
        %361 = vmatprep.subr.mxu0 0.0
        %362 = vmatpush1.msra.mxu0 0.0
        %363 = vmatprep.subr.mxu0 0.0
        %364 = vmatpush1.msra.mxu0 0.0
        %365 = vmatprep.subr.mxu0 0.0
        %366 = vmatpush1.msra.mxu0 0.0
        %367 = vmatprep.subr.mxu0 0.0
        %368 = vmatpush1.msra.mxu0 0.0
        %369 = vmatprep.subr.mxu0 0.0
        %370 = vmatpush1.msra.mxu0 0.0
        %371 = vmatprep.subr.mxu0 0.0
        %372 = vmatpush1.msra.mxu0 0.0
        %373 = vmatprep.subr.mxu0 0.0
        %374 = vmatpush1.msra.mxu0 0.0
        %375 = vmatprep.subr.mxu0 0.0
        %376 = vmatpush1.msra.mxu0 0.0
        %377 = vmatprep.subr.mxu0 0.0
        %378 = vmatpush1.msra.mxu0 0.0
        %379 = vmatprep.subr.mxu0 0.0
        %380 = vmatpush1.msra.mxu0 0.0
        %381 = vmatprep.subr.mxu0 0.0
        %382 = vmatpush1.msra.mxu0 0.0
        %383 = vmatprep.mubr.f32.mxu0 0.0
        %384 = vmatmul.mubr.f32.gmra.mrb[0].mxu0 %v317
        %v385 = vpop.f32.mrb[0].mxu0
        %v386 = vadd.f32 0.0, %v385
        %v387 = vpop.f32.mrb[0].mxu0
        %388 = vdwg.mxu0
        %v389 = vadd.f32 %v307, %v386
        %s390 = sadd.s32 %s145, 1
        %s391 = smul.u32 %s390, 16
        %s392 = scalar_lea.vmem %s138, %s391
        %v393 = vld [vmem:[%s392] sm:$0xff]
        %s394 = scalar_lea.vmem %s1, 96
        %v395 = vld [vmem:[%s394] sm:$0xff]
        %v396 = vld [vmem:[%s394 + $0x8] sm:$0xff]
        %v397 = vld [vmem:[%s394 + $0x10] sm:$0xff]
        %v398 = vld [vmem:[%s394 + $0x18] sm:$0xff]
        %v400 = vsel %vm163, %v393, 0
        %402 = vmatprep.subr.mxu0 0.0
        %403 = vmatpush1.msra.mxu0 %v395
        %404 = vmatprep.subr.mxu0 0.0
        %405 = vmatpush1.msra.mxu0 %v396
        %406 = vmatprep.subr.mxu0 0.0
        %407 = vmatpush1.msra.mxu0 %v397
        %408 = vmatprep.subr.mxu0 0.0
        %409 = vmatpush1.msra.mxu0 %v398
        %410 = vmatprep.subr.mxu0 0.0
        %411 = vmatpush1.msra.mxu0 0.0
        %412 = vmatprep.subr.mxu0 0.0
        %413 = vmatpush1.msra.mxu0 0.0
        %414 = vmatprep.subr.mxu0 0.0
        %415 = vmatpush1.msra.mxu0 0.0
        %416 = vmatprep.subr.mxu0 0.0
        %417 = vmatpush1.msra.mxu0 0.0
        %418 = vmatprep.subr.mxu0 0.0
        %419 = vmatpush1.msra.mxu0 0.0
        %420 = vmatprep.subr.mxu0 0.0
        %421 = vmatpush1.msra.mxu0 0.0
        %422 = vmatprep.subr.mxu0 0.0
        %423 = vmatpush1.msra.mxu0 0.0
        %424 = vmatprep.subr.mxu0 0.0
        %425 = vmatpush1.msra.mxu0 0.0
        %426 = vmatprep.subr.mxu0 0.0
        %427 = vmatpush1.msra.mxu0 0.0
        %428 = vmatprep.subr.mxu0 0.0
        %429 = vmatpush1.msra.mxu0 0.0
        %430 = vmatprep.subr.mxu0 0.0
        %431 = vmatpush1.msra.mxu0 0.0
        %432 = vmatprep.subr.mxu0 0.0
        %433 = vmatpush1.msra.mxu0 0.0
        %434 = vmatprep.subr.mxu0 0.0
        %435 = vmatpush1.msra.mxu0 0.0
        %436 = vmatprep.subr.mxu0 0.0
        %437 = vmatpush1.msra.mxu0 0.0
        %438 = vmatprep.subr.mxu0 0.0
        %439 = vmatpush1.msra.mxu0 0.0
        %440 = vmatprep.subr.mxu0 0.0
        %441 = vmatpush1.msra.mxu0 0.0
        %442 = vmatprep.subr.mxu0 0.0
        %443 = vmatpush1.msra.mxu0 0.0
        %444 = vmatprep.subr.mxu0 0.0
        %445 = vmatpush1.msra.mxu0 0.0
        %446 = vmatprep.subr.mxu0 0.0
        %447 = vmatpush1.msra.mxu0 0.0
        %448 = vmatprep.subr.mxu0 0.0
        %449 = vmatpush1.msra.mxu0 0.0
        %450 = vmatprep.subr.mxu0 0.0
        %451 = vmatpush1.msra.mxu0 0.0
        %452 = vmatprep.subr.mxu0 0.0
        %453 = vmatpush1.msra.mxu0 0.0
        %454 = vmatprep.subr.mxu0 0.0
        %455 = vmatpush1.msra.mxu0 0.0
        %456 = vmatprep.subr.mxu0 0.0
        %457 = vmatpush1.msra.mxu0 0.0
        %458 = vmatprep.subr.mxu0 0.0
        %459 = vmatpush1.msra.mxu0 0.0
        %460 = vmatprep.subr.mxu0 0.0
        %461 = vmatpush1.msra.mxu0 0.0
        %462 = vmatprep.subr.mxu0 0.0
        %463 = vmatpush1.msra.mxu0 0.0
        %464 = vmatprep.subr.mxu0 0.0
        %465 = vmatpush1.msra.mxu0 0.0
        %466 = vmatprep.mubr.f32.mxu0 0.0
        %467 = vmatmul.mubr.f32.gmra.mrb[0].mxu0 %v400
        %v468 = vpop.f32.mrb[0].mxu0
        %v469 = vadd.f32 0.0, %v468
        %v470 = vpop.f32.mrb[0].mxu0
        %471 = vdwg.mxu0
        %v472 = vadd.f32 %v389, %v469
        %v473 = vld [vmem:[%s392 + $0x1] sm:$0xff]
        %s474 = scalar_lea.vmem %s1, 128
        %v475 = vld [vmem:[%s474] sm:$0xff]
        %v476 = vld [vmem:[%s474 + $0x8] sm:$0xff]
        %v477 = vld [vmem:[%s474 + $0x10] sm:$0xff]
        %v478 = vld [vmem:[%s474 + $0x18] sm:$0xff]
        %v480 = vsel %vm163, %v473, 0
        %482 = vmatprep.subr.mxu0 0.0
        %483 = vmatpush1.msra.mxu0 %v475
        %484 = vmatprep.subr.mxu0 0.0
        %485 = vmatpush1.msra.mxu0 %v476
        %486 = vmatprep.subr.mxu0 0.0
        %487 = vmatpush1.msra.mxu0 %v477
        %488 = vmatprep.subr.mxu0 0.0
        %489 = vmatpush1.msra.mxu0 %v478
        %490 = vmatprep.subr.mxu0 0.0
        %491 = vmatpush1.msra.mxu0 0.0
        %492 = vmatprep.subr.mxu0 0.0
        %493 = vmatpush1.msra.mxu0 0.0
        %494 = vmatprep.subr.mxu0 0.0
        %495 = vmatpush1.msra.mxu0 0.0
        %496 = vmatprep.subr.mxu0 0.0
        %497 = vmatpush1.msra.mxu0 0.0
        %498 = vmatprep.subr.mxu0 0.0
        %499 = vmatpush1.msra.mxu0 0.0
        %500 = vmatprep.subr.mxu0 0.0
        %501 = vmatpush1.msra.mxu0 0.0
        %502 = vmatprep.subr.mxu0 0.0
        %503 = vmatpush1.msra.mxu0 0.0
        %504 = vmatprep.subr.mxu0 0.0
        %505 = vmatpush1.msra.mxu0 0.0
        %506 = vmatprep.subr.mxu0 0.0
        %507 = vmatpush1.msra.mxu0 0.0
        %508 = vmatprep.subr.mxu0 0.0
        %509 = vmatpush1.msra.mxu0 0.0
        %510 = vmatprep.subr.mxu0 0.0
        %511 = vmatpush1.msra.mxu0 0.0
        %512 = vmatprep.subr.mxu0 0.0
        %513 = vmatpush1.msra.mxu0 0.0
        %514 = vmatprep.subr.mxu0 0.0
        %515 = vmatpush1.msra.mxu0 0.0
        %516 = vmatprep.subr.mxu0 0.0
        %517 = vmatpush1.msra.mxu0 0.0
        %518 = vmatprep.subr.mxu0 0.0
        %519 = vmatpush1.msra.mxu0 0.0
        %520 = vmatprep.subr.mxu0 0.0
        %521 = vmatpush1.msra.mxu0 0.0
        %522 = vmatprep.subr.mxu0 0.0
        %523 = vmatpush1.msra.mxu0 0.0
        %524 = vmatprep.subr.mxu0 0.0
        %525 = vmatpush1.msra.mxu0 0.0
        %526 = vmatprep.subr.mxu0 0.0
        %527 = vmatpush1.msra.mxu0 0.0
        %528 = vmatprep.subr.mxu0 0.0
        %529 = vmatpush1.msra.mxu0 0.0
        %530 = vmatprep.subr.mxu0 0.0
        %531 = vmatpush1.msra.mxu0 0.0
        %532 = vmatprep.subr.mxu0 0.0
        %533 = vmatpush1.msra.mxu0 0.0
        %534 = vmatprep.subr.mxu0 0.0
        %535 = vmatpush1.msra.mxu0 0.0
        %536 = vmatprep.subr.mxu0 0.0
        %537 = vmatpush1.msra.mxu0 0.0
        %538 = vmatprep.subr.mxu0 0.0
        %539 = vmatpush1.msra.mxu0 0.0
        %540 = vmatprep.subr.mxu0 0.0
        %541 = vmatpush1.msra.mxu0 0.0
        %542 = vmatprep.subr.mxu0 0.0
        %543 = vmatpush1.msra.mxu0 0.0
        %544 = vmatprep.subr.mxu0 0.0
        %545 = vmatpush1.msra.mxu0 0.0
        %546 = vmatprep.mubr.f32.mxu0 0.0
        %547 = vmatmul.mubr.f32.gmra.mrb[0].mxu0 %v480
        %v548 = vpop.f32.mrb[0].mxu0
        %v549 = vadd.f32 0.0, %v548
        %v550 = vpop.f32.mrb[0].mxu0
        %551 = vdwg.mxu0
        %v552 = vadd.f32 %v472, %v549
        %v553 = vld [vmem:[%s392 + $0x2] sm:$0xff]
        %s554 = scalar_lea.vmem %s1, 160
        %v555 = vld [vmem:[%s554] sm:$0xff]
        %v556 = vld [vmem:[%s554 + $0x8] sm:$0xff]
        %v557 = vld [vmem:[%s554 + $0x10] sm:$0xff]
        %v558 = vld [vmem:[%s554 + $0x18] sm:$0xff]
        %v560 = vsel %vm163, %v553, 0
        %562 = vmatprep.subr.mxu0 0.0
        %563 = vmatpush1.msra.mxu0 %v555
        %564 = vmatprep.subr.mxu0 0.0
        %565 = vmatpush1.msra.mxu0 %v556
        %566 = vmatprep.subr.mxu0 0.0
        %567 = vmatpush1.msra.mxu0 %v557
        %568 = vmatprep.subr.mxu0 0.0
        %569 = vmatpush1.msra.mxu0 %v558
        %570 = vmatprep.subr.mxu0 0.0
        %571 = vmatpush1.msra.mxu0 0.0
        %572 = vmatprep.subr.mxu0 0.0
        %573 = vmatpush1.msra.mxu0 0.0
        %574 = vmatprep.subr.mxu0 0.0
        %575 = vmatpush1.msra.mxu0 0.0
        %576 = vmatprep.subr.mxu0 0.0
        %577 = vmatpush1.msra.mxu0 0.0
        %578 = vmatprep.subr.mxu0 0.0
        %579 = vmatpush1.msra.mxu0 0.0
        %580 = vmatprep.subr.mxu0 0.0
        %581 = vmatpush1.msra.mxu0 0.0
        %582 = vmatprep.subr.mxu0 0.0
        %583 = vmatpush1.msra.mxu0 0.0
        %584 = vmatprep.subr.mxu0 0.0
        %585 = vmatpush1.msra.mxu0 0.0
        %586 = vmatprep.subr.mxu0 0.0
        %587 = vmatpush1.msra.mxu0 0.0
        %588 = vmatprep.subr.mxu0 0.0
        %589 = vmatpush1.msra.mxu0 0.0
        %590 = vmatprep.subr.mxu0 0.0
        %591 = vmatpush1.msra.mxu0 0.0
        %592 = vmatprep.subr.mxu0 0.0
        %593 = vmatpush1.msra.mxu0 0.0
        %594 = vmatprep.subr.mxu0 0.0
        %595 = vmatpush1.msra.mxu0 0.0
        %596 = vmatprep.subr.mxu0 0.0
        %597 = vmatpush1.msra.mxu0 0.0
        %598 = vmatprep.subr.mxu0 0.0
        %599 = vmatpush1.msra.mxu0 0.0
        %600 = vmatprep.subr.mxu0 0.0
        %601 = vmatpush1.msra.mxu0 0.0
        %602 = vmatprep.subr.mxu0 0.0
        %603 = vmatpush1.msra.mxu0 0.0
        %604 = vmatprep.subr.mxu0 0.0
        %605 = vmatpush1.msra.mxu0 0.0
        %606 = vmatprep.subr.mxu0 0.0
        %607 = vmatpush1.msra.mxu0 0.0
        %608 = vmatprep.subr.mxu0 0.0
        %609 = vmatpush1.msra.mxu0 0.0
        %610 = vmatprep.subr.mxu0 0.0
        %611 = vmatpush1.msra.mxu0 0.0
        %612 = vmatprep.subr.mxu0 0.0
        %613 = vmatpush1.msra.mxu0 0.0
        %614 = vmatprep.subr.mxu0 0.0
        %615 = vmatpush1.msra.mxu0 0.0
        %616 = vmatprep.subr.mxu0 0.0
        %617 = vmatpush1.msra.mxu0 0.0
        %618 = vmatprep.subr.mxu0 0.0
        %619 = vmatpush1.msra.mxu0 0.0
        %620 = vmatprep.subr.mxu0 0.0
        %621 = vmatpush1.msra.mxu0 0.0
        %622 = vmatprep.subr.mxu0 0.0
        %623 = vmatpush1.msra.mxu0 0.0
        %624 = vmatprep.subr.mxu0 0.0
        %625 = vmatpush1.msra.mxu0 0.0
        %626 = vmatprep.mubr.f32.mxu0 0.0
        %627 = vmatmul.mubr.f32.gmra.mrb[0].mxu0 %v560
        %v628 = vpop.f32.mrb[0].mxu0
        %v629 = vadd.f32 0.0, %v628
        %v630 = vpop.f32.mrb[0].mxu0
        %631 = vdwg.mxu0
        %v632 = vadd.f32 %v552, %v629
        %s633 = sadd.s32 %s145, 2
        %s634 = smul.u32 %s633, 16
        %s635 = scalar_lea.vmem %s138, %s634
        %v636 = vld [vmem:[%s635] sm:$0xff]
        %s637 = scalar_lea.vmem %s1, 192
        %v638 = vld [vmem:[%s637] sm:$0xff]
        %v639 = vld [vmem:[%s637 + $0x8] sm:$0xff]
        %v640 = vld [vmem:[%s637 + $0x10] sm:$0xff]
        %v641 = vld [vmem:[%s637 + $0x18] sm:$0xff]
        %v643 = vsel %vm163, %v636, 0
        %645 = vmatprep.subr.mxu0 0.0
        %646 = vmatpush1.msra.mxu0 %v638
        %647 = vmatprep.subr.mxu0 0.0
        %648 = vmatpush1.msra.mxu0 %v639
        %649 = vmatprep.subr.mxu0 0.0
        %650 = vmatpush1.msra.mxu0 %v640
        %651 = vmatprep.subr.mxu0 0.0
        %652 = vmatpush1.msra.mxu0 %v641
        %653 = vmatprep.subr.mxu0 0.0
        %654 = vmatpush1.msra.mxu0 0.0
        %655 = vmatprep.subr.mxu0 0.0
        %656 = vmatpush1.msra.mxu0 0.0
        %657 = vmatprep.subr.mxu0 0.0
        %658 = vmatpush1.msra.mxu0 0.0
        %659 = vmatprep.subr.mxu0 0.0
        %660 = vmatpush1.msra.mxu0 0.0
        %661 = vmatprep.subr.mxu0 0.0
        %662 = vmatpush1.msra.mxu0 0.0
        %663 = vmatprep.subr.mxu0 0.0
        %664 = vmatpush1.msra.mxu0 0.0
        %665 = vmatprep.subr.mxu0 0.0
        %666 = vmatpush1.msra.mxu0 0.0
        %667 = vmatprep.subr.mxu0 0.0
        %668 = vmatpush1.msra.mxu0 0.0
        %669 = vmatprep.subr.mxu0 0.0
        %670 = vmatpush1.msra.mxu0 0.0
        %671 = vmatprep.subr.mxu0 0.0
        %672 = vmatpush1.msra.mxu0 0.0
        %673 = vmatprep.subr.mxu0 0.0
        %674 = vmatpush1.msra.mxu0 0.0
        %675 = vmatprep.subr.mxu0 0.0
        %676 = vmatpush1.msra.mxu0 0.0
        %677 = vmatprep.subr.mxu0 0.0
        %678 = vmatpush1.msra.mxu0 0.0
        %679 = vmatprep.subr.mxu0 0.0
        %680 = vmatpush1.msra.mxu0 0.0
        %681 = vmatprep.subr.mxu0 0.0
        %682 = vmatpush1.msra.mxu0 0.0
        %683 = vmatprep.subr.mxu0 0.0
        %684 = vmatpush1.msra.mxu0 0.0
        %685 = vmatprep.subr.mxu0 0.0
        %686 = vmatpush1.msra.mxu0 0.0
        %687 = vmatprep.subr.mxu0 0.0
        %688 = vmatpush1.msra.mxu0 0.0
        %689 = vmatprep.subr.mxu0 0.0
        %690 = vmatpush1.msra.mxu0 0.0
        %691 = vmatprep.subr.mxu0 0.0
        %692 = vmatpush1.msra.mxu0 0.0
        %693 = vmatprep.subr.mxu0 0.0
        %694 = vmatpush1.msra.mxu0 0.0
        %695 = vmatprep.subr.mxu0 0.0
        %696 = vmatpush1.msra.mxu0 0.0
        %697 = vmatprep.subr.mxu0 0.0
        %698 = vmatpush1.msra.mxu0 0.0
        %699 = vmatprep.subr.mxu0 0.0
        %700 = vmatpush1.msra.mxu0 0.0
        %701 = vmatprep.subr.mxu0 0.0
        %702 = vmatpush1.msra.mxu0 0.0
        %703 = vmatprep.subr.mxu0 0.0
        %704 = vmatpush1.msra.mxu0 0.0
        %705 = vmatprep.subr.mxu0 0.0
        %706 = vmatpush1.msra.mxu0 0.0
        %707 = vmatprep.subr.mxu0 0.0
        %708 = vmatpush1.msra.mxu0 0.0
        %709 = vmatprep.mubr.f32.mxu0 0.0
        %710 = vmatmul.mubr.f32.gmra.mrb[0].mxu0 %v643
        %v711 = vpop.f32.mrb[0].mxu0
        %v712 = vadd.f32 0.0, %v711
        %v713 = vpop.f32.mrb[0].mxu0
        %714 = vdwg.mxu0
        %v715 = vadd.f32 %v632, %v712
        %v716 = vld [vmem:[%s635 + $0x1] sm:$0xff]
        %s717 = scalar_lea.vmem %s1, 224
        %v718 = vld [vmem:[%s717] sm:$0xff]
        %v719 = vld [vmem:[%s717 + $0x8] sm:$0xff]
        %v720 = vld [vmem:[%s717 + $0x10] sm:$0xff]
        %v721 = vld [vmem:[%s717 + $0x18] sm:$0xff]
        %v723 = vsel %vm163, %v716, 0
        %725 = vmatprep.subr.mxu0 0.0
        %726 = vmatpush1.msra.mxu0 %v718
        %727 = vmatprep.subr.mxu0 0.0
        %728 = vmatpush1.msra.mxu0 %v719
        %729 = vmatprep.subr.mxu0 0.0
        %730 = vmatpush1.msra.mxu0 %v720
        %731 = vmatprep.subr.mxu0 0.0
        %732 = vmatpush1.msra.mxu0 %v721
        %733 = vmatprep.subr.mxu0 0.0
        %734 = vmatpush1.msra.mxu0 0.0
        %735 = vmatprep.subr.mxu0 0.0
        %736 = vmatpush1.msra.mxu0 0.0
        %737 = vmatprep.subr.mxu0 0.0
        %738 = vmatpush1.msra.mxu0 0.0
        %739 = vmatprep.subr.mxu0 0.0
        %740 = vmatpush1.msra.mxu0 0.0
        %741 = vmatprep.subr.mxu0 0.0
        %742 = vmatpush1.msra.mxu0 0.0
        %743 = vmatprep.subr.mxu0 0.0
        %744 = vmatpush1.msra.mxu0 0.0
        %745 = vmatprep.subr.mxu0 0.0
        %746 = vmatpush1.msra.mxu0 0.0
        %747 = vmatprep.subr.mxu0 0.0
        %748 = vmatpush1.msra.mxu0 0.0
        %749 = vmatprep.subr.mxu0 0.0
        %750 = vmatpush1.msra.mxu0 0.0
        %751 = vmatprep.subr.mxu0 0.0
        %752 = vmatpush1.msra.mxu0 0.0
        %753 = vmatprep.subr.mxu0 0.0
        %754 = vmatpush1.msra.mxu0 0.0
        %755 = vmatprep.subr.mxu0 0.0
        %756 = vmatpush1.msra.mxu0 0.0
        %757 = vmatprep.subr.mxu0 0.0
        %758 = vmatpush1.msra.mxu0 0.0
        %759 = vmatprep.subr.mxu0 0.0
        %760 = vmatpush1.msra.mxu0 0.0
        %761 = vmatprep.subr.mxu0 0.0
        %762 = vmatpush1.msra.mxu0 0.0
        %763 = vmatprep.subr.mxu0 0.0
        %764 = vmatpush1.msra.mxu0 0.0
        %765 = vmatprep.subr.mxu0 0.0
        %766 = vmatpush1.msra.mxu0 0.0
        %767 = vmatprep.subr.mxu0 0.0
        %768 = vmatpush1.msra.mxu0 0.0
        %769 = vmatprep.subr.mxu0 0.0
        %770 = vmatpush1.msra.mxu0 0.0
        %771 = vmatprep.subr.mxu0 0.0
        %772 = vmatpush1.msra.mxu0 0.0
        %773 = vmatprep.subr.mxu0 0.0
        %774 = vmatpush1.msra.mxu0 0.0
        %775 = vmatprep.subr.mxu0 0.0
        %776 = vmatpush1.msra.mxu0 0.0
        %777 = vmatprep.subr.mxu0 0.0
        %778 = vmatpush1.msra.mxu0 0.0
        %779 = vmatprep.subr.mxu0 0.0
        %780 = vmatpush1.msra.mxu0 0.0
        %781 = vmatprep.subr.mxu0 0.0
        %782 = vmatpush1.msra.mxu0 0.0
        %783 = vmatprep.subr.mxu0 0.0
        %784 = vmatpush1.msra.mxu0 0.0
        %785 = vmatprep.subr.mxu0 0.0
        %786 = vmatpush1.msra.mxu0 0.0
        %787 = vmatprep.subr.mxu0 0.0
        %788 = vmatpush1.msra.mxu0 0.0
        %789 = vmatprep.mubr.f32.mxu0 0.0
        %790 = vmatmul.mubr.f32.gmra.mrb[0].mxu0 %v723
        %v791 = vpop.f32.mrb[0].mxu0
        %v792 = vadd.f32 0.0, %v791
        %v793 = vpop.f32.mrb[0].mxu0
        %794 = vdwg.mxu0
        %v795 = vadd.f32 %v715, %v792
        %v796 = vld [vmem:[%s635 + $0x2] sm:$0xff]
        %s797 = scalar_lea.vmem %s1, 256
        %v798 = vld [vmem:[%s797] sm:$0xff]
        %v799 = vld [vmem:[%s797 + $0x8] sm:$0xff]
        %v800 = vld [vmem:[%s797 + $0x10] sm:$0xff]
        %v801 = vld [vmem:[%s797 + $0x18] sm:$0xff]
        %v803 = vsel %vm163, %v796, 0
        %805 = vmatprep.subr.mxu0 0.0
        %806 = vmatpush1.msra.mxu0 %v798
        %807 = vmatprep.subr.mxu0 0.0
        %808 = vmatpush1.msra.mxu0 %v799
        %809 = vmatprep.subr.mxu0 0.0
        %810 = vmatpush1.msra.mxu0 %v800
        %811 = vmatprep.subr.mxu0 0.0
        %812 = vmatpush1.msra.mxu0 %v801
        %813 = vmatprep.subr.mxu0 0.0
        %814 = vmatpush1.msra.mxu0 0.0
        %815 = vmatprep.subr.mxu0 0.0
        %816 = vmatpush1.msra.mxu0 0.0
        %817 = vmatprep.subr.mxu0 0.0
        %818 = vmatpush1.msra.mxu0 0.0
        %819 = vmatprep.subr.mxu0 0.0
        %820 = vmatpush1.msra.mxu0 0.0
        %821 = vmatprep.subr.mxu0 0.0
        %822 = vmatpush1.msra.mxu0 0.0
        %823 = vmatprep.subr.mxu0 0.0
        %824 = vmatpush1.msra.mxu0 0.0
        %825 = vmatprep.subr.mxu0 0.0
        %826 = vmatpush1.msra.mxu0 0.0
        %827 = vmatprep.subr.mxu0 0.0
        %828 = vmatpush1.msra.mxu0 0.0
        %829 = vmatprep.subr.mxu0 0.0
        %830 = vmatpush1.msra.mxu0 0.0
        %831 = vmatprep.subr.mxu0 0.0
        %832 = vmatpush1.msra.mxu0 0.0
        %833 = vmatprep.subr.mxu0 0.0
        %834 = vmatpush1.msra.mxu0 0.0
        %835 = vmatprep.subr.mxu0 0.0
        %836 = vmatpush1.msra.mxu0 0.0
        %837 = vmatprep.subr.mxu0 0.0
        %838 = vmatpush1.msra.mxu0 0.0
        %839 = vmatprep.subr.mxu0 0.0
        %840 = vmatpush1.msra.mxu0 0.0
        %841 = vmatprep.subr.mxu0 0.0
        %842 = vmatpush1.msra.mxu0 0.0
        %843 = vmatprep.subr.mxu0 0.0
        %844 = vmatpush1.msra.mxu0 0.0
        %845 = vmatprep.subr.mxu0 0.0
        %846 = vmatpush1.msra.mxu0 0.0
        %847 = vmatprep.subr.mxu0 0.0
        %848 = vmatpush1.msra.mxu0 0.0
        %849 = vmatprep.subr.mxu0 0.0
        %850 = vmatpush1.msra.mxu0 0.0
        %851 = vmatprep.subr.mxu0 0.0
        %852 = vmatpush1.msra.mxu0 0.0
        %853 = vmatprep.subr.mxu0 0.0
        %854 = vmatpush1.msra.mxu0 0.0
        %855 = vmatprep.subr.mxu0 0.0
        %856 = vmatpush1.msra.mxu0 0.0
        %857 = vmatprep.subr.mxu0 0.0
        %858 = vmatpush1.msra.mxu0 0.0
        %859 = vmatprep.subr.mxu0 0.0
        %860 = vmatpush1.msra.mxu0 0.0
        %861 = vmatprep.subr.mxu0 0.0
        %862 = vmatpush1.msra.mxu0 0.0
        %863 = vmatprep.subr.mxu0 0.0
        %864 = vmatpush1.msra.mxu0 0.0
        %865 = vmatprep.subr.mxu0 0.0
        %866 = vmatpush1.msra.mxu0 0.0
        %867 = vmatprep.subr.mxu0 0.0
        %868 = vmatpush1.msra.mxu0 0.0
        %869 = vmatprep.mubr.f32.mxu0 0.0
        %870 = vmatmul.mubr.f32.gmra.mrb[0].mxu0 %v803
        %v871 = vpop.f32.mrb[0].mxu0
        %v872 = vadd.f32 0.0, %v871
        %v873 = vpop.f32.mrb[0].mxu0
        %874 = vdwg.mxu0
        %v875 = vadd.f32 %v795, %v872
        %s876 = smul.u32 %s145, 8
        %s877 = scalar_lea.vmem %s143, %s876
        %vm878 = vcmask 64512
        %879 = vst.msk [vmem:[%s877] sm:$0xff] %vm878, %v875
      $region33: #{multi_mri_fc_layers_forward.268} parent=27 // loop_footer
        %s149 = sadd.s32 1, %s145
      $region34: #{multi_mri_fc_layers_forward.268} parent=27 // loop_footer_branch
        %144 = sbr.rel target = $region30
      $region35: #{multi_mri_fc_layers_forward.268} parent=27 // loop_exit
        _
      %p880 = scmp.lt.s32.totalorder %s13, 1
      %s881 = scalar_select %p880, %s13, 1
      %s882 = smul.addr %s881, 8
      %s883 = smul.addr %s882, 8
      %s884 = scalar_lea.vmem %s2, %s883
      // Predicated region
      $region36: #{multi_mri_fc_layers_forward.268} parent=27 // pred_check
        %p885 = pneg %p78
      $region37: #{multi_mri_fc_layers_forward.268} parent=27 // pred_check_branch
        %887 = sbr.rel (%p885) target = $region39
      $region38: #{multi_mri_fc_layers_forward.268} parent=27 // pred_region
        _
      $region39: #{multi_mri_fc_layers_forward.268} parent=27 // pred_fallthru
        _
    $region28: #{multi_mri_fc_layers_forward.268} parent=5 // pred_fallthru
      _
    %p888 = scmp.le.s32.totalorder 2, %s8
    // Predicated region
    $region40: #{multi_mri_fc_layers_forward.268} parent=5 // pred_check
      %p889 = pneg %p888
    $region41: #{multi_mri_fc_layers_forward.268} parent=5 // pred_check_branch
      %891 = sbr.rel (%p889) target = $region43
    $region42: #{multi_mri_fc_layers_forward.268} parent=5 // pred_region
      %s892 = ssub.s32 %s8, 2
      // Predicated region
      $region44: #{multi_mri_fc_layers_forward.268} parent=42 // pred_check
        %p893 = pneg %p84
      $region45: #{multi_mri_fc_layers_forward.268} parent=42 // pred_check_branch
        %895 = sbr.rel (%p893) target = $region47
      $region46: #{multi_mri_fc_layers_forward.268} parent=42 // pred_region
        %p896 = scmp.lt.s32.totalorder %s14, 1
        %s897 = scalar_select %p896, %s14, 1
        %s898 = smul.addr %s897, 8
        %s899 = smul.addr %s898, 8
        %s900 = scalar_lea.vmem %s2, %s899
      $region47: #{multi_mri_fc_layers_forward.268} parent=42 // pred_fallthru
        _
    $region43: #{multi_mri_fc_layers_forward.268} parent=5 // pred_fallthru
      _
  $region6: #{multi_mri_fc_layers_forward.268} parent=0 // loop_footer
    %s12 = sadd.s32 1, %s8
  $region7: #{multi_mri_fc_layers_forward.268} parent=0 // loop_footer_branch
    %7 = sbr.rel target = $region3
  $region8: #{multi_mri_fc_layers_forward.268} parent=0 // loop_exit
    _

// kernel: multi_mri_fc_layers_forward.269
$region0: #{multi_mri_fc_layers_forward.269}
  #allocation0 [shape = 'u32[]', space=smem, size = 0x4, offset = 0x4, fixed_abs, tag = 'smem constant byte address 0x4 - core index']
  #allocation1 [shape = 'u32[144,128]{1,0:T(1,128)}', space=vmem, size = 0x12000, scoped, tag = 'internal scratch']
  %s0 = inlined_call_operand.vmem [shape: f32[128,24], index: 0, kind: input, shape index: {}]
  %s1 = inlined_call_operand.vmem [shape: f32[24,32], index: 1, kind: input, shape index: {}]
  %s2 = inlined_call_operand.vmem [shape: f32[1,24], index: 2, kind: input, shape index: {}]
  %s3 = inlined_call_operand.vmem [shape: f32[1,24], index: 3, kind: input, shape index: {}]
  %s4 = inlined_call_operand.vmem [shape: f32[1,32], index: 4, kind: input, shape index: {}]
  %s5 = inlined_call_operand.vmem [shape: f32[1,32], index: 5, kind: input, shape index: {}]
  %s6 = inlined_call_operand.vmem [shape: f32[128,32], index: 6, kind: output, shape index: {}]
  %s7 = sld [smem:[#allocation0]]
  $region34: #{multi_mri_fc_layers_forward.269} parent=0
    _
  %s9 = ssub.s32 1, %s7
  %s10 = scalar_select 0, %s9, %s7
  // Predicated region
  $region2: #{multi_mri_fc_layers_forward.269} parent=0 // pred_check
    _
  $region3: #{multi_mri_fc_layers_forward.269} parent=0 // pred_check_branch
    %12 = sbr.rel (0) target = $region5
  $region4: #{multi_mri_fc_layers_forward.269} parent=0 // pred_region
    _
  $region5: #{multi_mri_fc_layers_forward.269} parent=0 // pred_fallthru
    _
  // Predicated region
  $region6: #{multi_mri_fc_layers_forward.269} parent=0 // pred_check
    _
  $region7: #{multi_mri_fc_layers_forward.269} parent=0 // pred_check_branch
    %14 = sbr.rel (0) target = $region9
  $region8: #{multi_mri_fc_layers_forward.269} parent=0 // pred_region
    _
  $region9: #{multi_mri_fc_layers_forward.269} parent=0 // pred_fallthru
    _
  // Predicated region
  $region10: #{multi_mri_fc_layers_forward.269} parent=0 // pred_check
    _
  $region11: #{multi_mri_fc_layers_forward.269} parent=0 // pred_check_branch
    %16 = sbr.rel (0) target = $region13
  $region12: #{multi_mri_fc_layers_forward.269} parent=0 // pred_region
    _
  $region13: #{multi_mri_fc_layers_forward.269} parent=0 // pred_fallthru
    _
  // Predicated region
  $region14: #{multi_mri_fc_layers_forward.269} parent=0 // pred_check
    _
  $region15: #{multi_mri_fc_layers_forward.269} parent=0 // pred_check_branch
    %18 = sbr.rel (0) target = $region17
  $region16: #{multi_mri_fc_layers_forward.269} parent=0 // pred_region
    _
  $region17: #{multi_mri_fc_layers_forward.269} parent=0 // pred_fallthru
    _
  // Predicated region
  $region18: #{multi_mri_fc_layers_forward.269} parent=0 // pred_check
    _
  $region19: #{multi_mri_fc_layers_forward.269} parent=0 // pred_check_branch
    %20 = sbr.rel (0) target = $region21
  $region20: #{multi_mri_fc_layers_forward.269} parent=0 // pred_region
    _
  $region21: #{multi_mri_fc_layers_forward.269} parent=0 // pred_fallthru
    _
  // Predicated region
  $region22: #{multi_mri_fc_layers_forward.269} parent=0 // pred_check
    _
  $region23: #{multi_mri_fc_layers_forward.269} parent=0 // pred_check_branch
    %22 = sbr.rel (0) target = $region25
  $region24: #{multi_mri_fc_layers_forward.269} parent=0 // pred_region
    _
  $region25: #{multi_mri_fc_layers_forward.269} parent=0 // pred_fallthru
    _
  %v23 = vld [vmem:[%s0] sm:$0xff]
  %v24 = vld [vmem:[%s0 + $0x8] sm:$0xff]
  %v25 = vld [vmem:[%s0 + $0x10] sm:$0xff]
  %v26 = vld [vmem:[%s0 + $0x18] sm:$0xff]
  %v27 = vld [vmem:[%s0 + $0x20] sm:$0xff]
  %v28 = vld [vmem:[%s0 + $0x28] sm:$0xff]
  %v29 = vld [vmem:[%s0 + $0x30] sm:$0xff]
  %v30 = vld [vmem:[%s0 + $0x38] sm:$0xff]
  %v31 = vld [vmem:[%s0 + $0x40] sm:$0xff]
  %v32 = vld [vmem:[%s0 + $0x48] sm:$0xff]
  %v33 = vld [vmem:[%s0 + $0x50] sm:$0xff]
  %v34 = vld [vmem:[%s0 + $0x58] sm:$0xff]
  %v35 = vld [vmem:[%s0 + $0x60] sm:$0xff]
  %v36 = vld [vmem:[%s0 + $0x68] sm:$0xff]
  %v37 = vld [vmem:[%s0 + $0x70] sm:$0xff]
  %v38 = vld [vmem:[%s0 + $0x78] sm:$0xff]
  %v39 = vld [vmem:[%s2] sm:$0x1]
  %v41 = vlaneseq
  %v42 = vshrl.u32 %v41, 7
  %v43 = vsub.s32 0, %v42
  %v44 = vrot.slane %v39, %v43
  %v46 = vmul.f32 %v23, %v44
  %v47 = vmul.f32 %v24, %v44
  %v48 = vmul.f32 %v25, %v44
  %v49 = vmul.f32 %v26, %v44
  %v50 = vmul.f32 %v27, %v44
  %v51 = vmul.f32 %v28, %v44
  %v52 = vmul.f32 %v29, %v44
  %v53 = vmul.f32 %v30, %v44
  %v54 = vmul.f32 %v31, %v44
  %v55 = vmul.f32 %v32, %v44
  %v56 = vmul.f32 %v33, %v44
  %v57 = vmul.f32 %v34, %v44
  %v58 = vmul.f32 %v35, %v44
  %v59 = vmul.f32 %v36, %v44
  %v60 = vmul.f32 %v37, %v44
  %v61 = vmul.f32 %v38, %v44
  %v62 = vld [vmem:[%s3] sm:$0x1]
  %v64 = vlaneseq
  %v65 = vshrl.u32 %v64, 7
  %v66 = vsub.s32 0, %v65
  %v67 = vrot.slane %v62, %v66
  %v69 = vadd.f32 %v46, %v67
  %v70 = vadd.f32 %v47, %v67
  %v71 = vadd.f32 %v48, %v67
  %v72 = vadd.f32 %v49, %v67
  %v73 = vadd.f32 %v50, %v67
  %v74 = vadd.f32 %v51, %v67
  %v75 = vadd.f32 %v52, %v67
  %v76 = vadd.f32 %v53, %v67
  %v77 = vadd.f32 %v54, %v67
  %v78 = vadd.f32 %v55, %v67
  %v79 = vadd.f32 %v56, %v67
  %v80 = vadd.f32 %v57, %v67
  %v81 = vadd.f32 %v58, %v67
  %v82 = vadd.f32 %v59, %v67
  %v83 = vadd.f32 %v60, %v67
  %v84 = vadd.f32 %v61, %v67
  %v85 = vmax.f32 %v69, 0.0
  %v86 = vmax.f32 %v70, 0.0
  %v87 = vmax.f32 %v71, 0.0
  %v88 = vmax.f32 %v72, 0.0
  %v89 = vmax.f32 %v73, 0.0
  %v90 = vmax.f32 %v74, 0.0
  %v91 = vmax.f32 %v75, 0.0
  %v92 = vmax.f32 %v76, 0.0
  %v93 = vmax.f32 %v77, 0.0
  %v94 = vmax.f32 %v78, 0.0
  %v95 = vmax.f32 %v79, 0.0
  %v96 = vmax.f32 %v80, 0.0
  %v97 = vmax.f32 %v81, 0.0
  %v98 = vmax.f32 %v82, 0.0
  %v99 = vmax.f32 %v83, 0.0
  %v100 = vmax.f32 %v84, 0.0
  %v101 = vld [vmem:[%s1] sm:$0xff]
  %v102 = vld [vmem:[%s1 + $0x8] sm:$0xff]
  %v103 = vld [vmem:[%s1 + $0x10] sm:$0xff]
  %vm104 = vcmask 195584
  %v106 = vsel %vm104, %v85, 0
  %v109 = vsel %vm104, %v86, 0
  %v112 = vsel %vm104, %v87, 0
  %v115 = vsel %vm104, %v88, 0
  %v118 = vsel %vm104, %v89, 0
  %v121 = vsel %vm104, %v90, 0
  %v124 = vsel %vm104, %v91, 0
  %v127 = vsel %vm104, %v92, 0
  %v130 = vsel %vm104, %v93, 0
  %v133 = vsel %vm104, %v94, 0
  %v136 = vsel %vm104, %v95, 0
  %v139 = vsel %vm104, %v96, 0
  %v142 = vsel %vm104, %v97, 0
  %v145 = vsel %vm104, %v98, 0
  %v148 = vsel %vm104, %v99, 0
  %v151 = vsel %vm104, %v100, 0
  %153 = vmatprep.subr.mxu0 0.0
  %154 = vmatpush1.msra.mxu0 %v101
  %155 = vmatprep.subr.mxu0 0.0
  %156 = vmatpush1.msra.mxu0 %v102
  %157 = vmatprep.subr.mxu0 0.0
  %158 = vmatpush1.msra.mxu0 %v103
  %159 = vmatprep.subr.mxu0 0.0
  %160 = vmatpush1.msra.mxu0 0.0
  %161 = vmatprep.subr.mxu0 0.0
  %162 = vmatpush1.msra.mxu0 0.0
  %163 = vmatprep.subr.mxu0 0.0
  %164 = vmatpush1.msra.mxu0 0.0
  %165 = vmatprep.subr.mxu0 0.0
  %166 = vmatpush1.msra.mxu0 0.0
  %167 = vmatprep.subr.mxu0 0.0
  %168 = vmatpush1.msra.mxu0 0.0
  %169 = vmatprep.subr.mxu0 0.0
  %170 = vmatpush1.msra.mxu0 0.0
  %171 = vmatprep.subr.mxu0 0.0
  %172 = vmatpush1.msra.mxu0 0.0
  %173 = vmatprep.subr.mxu0 0.0
  %174 = vmatpush1.msra.mxu0 0.0
  %175 = vmatprep.subr.mxu0 0.0
  %176 = vmatpush1.msra.mxu0 0.0
  %177 = vmatprep.subr.mxu0 0.0
  %178 = vmatpush1.msra.mxu0 0.0
  %179 = vmatprep.subr.mxu0 0.0
  %180 = vmatpush1.msra.mxu0 0.0
  %181 = vmatprep.subr.mxu0 0.0
  %182 = vmatpush1.msra.mxu0 0.0
  %183 = vmatprep.subr.mxu0 0.0
  %184 = vmatpush1.msra.mxu0 0.0
  %185 = vmatprep.subr.mxu0 0.0
  %186 = vmatpush1.msra.mxu0 0.0
  %187 = vmatprep.subr.mxu0 0.0
  %188 = vmatpush1.msra.mxu0 0.0
  %189 = vmatprep.subr.mxu0 0.0
  %190 = vmatpush1.msra.mxu0 0.0
  %191 = vmatprep.subr.mxu0 0.0
  %192 = vmatpush1.msra.mxu0 0.0
  %193 = vmatprep.subr.mxu0 0.0
  %194 = vmatpush1.msra.mxu0 0.0
  %195 = vmatprep.subr.mxu0 0.0
  %196 = vmatpush1.msra.mxu0 0.0
  %197 = vmatprep.subr.mxu0 0.0
  %198 = vmatpush1.msra.mxu0 0.0
  %199 = vmatprep.subr.mxu0 0.0
  %200 = vmatpush1.msra.mxu0 0.0
  %201 = vmatprep.subr.mxu0 0.0
  %202 = vmatpush1.msra.mxu0 0.0
  %203 = vmatprep.subr.mxu0 0.0
  %204 = vmatpush1.msra.mxu0 0.0
  %205 = vmatprep.subr.mxu0 0.0
  %206 = vmatpush1.msra.mxu0 0.0
  %207 = vmatprep.subr.mxu0 0.0
  %208 = vmatpush1.msra.mxu0 0.0
  %209 = vmatprep.subr.mxu0 0.0
  %210 = vmatpush1.msra.mxu0 0.0
  %211 = vmatprep.subr.mxu0 0.0
  %212 = vmatpush1.msra.mxu0 0.0
  %213 = vmatprep.subr.mxu0 0.0
  %214 = vmatpush1.msra.mxu0 0.0
  %215 = vmatprep.subr.mxu0 0.0
  %216 = vmatpush1.msra.mxu0 0.0
  %217 = vmatprep.mubr.f32.mxu0 0.0
  %218 = vmatmul.mubr.f32.gmra.mrb[0].mxu0 %v106
  %v219 = vpop.f32.mrb[0].mxu0
  %v220 = vadd.f32 0.0, %v219
  %v221 = vpop.f32.mrb[0].mxu0
  %222 = vmatprep.mubr.f32.mxu0 0.0
  %223 = vmatmul.mubr.f32.gmra.mrb[0].mxu0 %v109
  %v224 = vpop.f32.mrb[0].mxu0
  %v225 = vadd.f32 0.0, %v224
  %v226 = vpop.f32.mrb[0].mxu0
  %227 = vmatprep.mubr.f32.mxu0 0.0
  %228 = vmatmul.mubr.f32.gmra.mrb[0].mxu0 %v112
  %v229 = vpop.f32.mrb[0].mxu0
  %v230 = vadd.f32 0.0, %v229
  %v231 = vpop.f32.mrb[0].mxu0
  %232 = vmatprep.mubr.f32.mxu0 0.0
  %233 = vmatmul.mubr.f32.gmra.mrb[0].mxu0 %v115
  %v234 = vpop.f32.mrb[0].mxu0
  %v235 = vadd.f32 0.0, %v234
  %v236 = vpop.f32.mrb[0].mxu0
  %237 = vmatprep.mubr.f32.mxu0 0.0
  %238 = vmatmul.mubr.f32.gmra.mrb[0].mxu0 %v118
  %v239 = vpop.f32.mrb[0].mxu0
  %v240 = vadd.f32 0.0, %v239
  %v241 = vpop.f32.mrb[0].mxu0
  %242 = vmatprep.mubr.f32.mxu0 0.0
  %243 = vmatmul.mubr.f32.gmra.mrb[0].mxu0 %v121
  %v244 = vpop.f32.mrb[0].mxu0
  %v245 = vadd.f32 0.0, %v244
  %v246 = vpop.f32.mrb[0].mxu0
  %247 = vmatprep.mubr.f32.mxu0 0.0
  %248 = vmatmul.mubr.f32.gmra.mrb[0].mxu0 %v124
  %v249 = vpop.f32.mrb[0].mxu0
  %v250 = vadd.f32 0.0, %v249
  %v251 = vpop.f32.mrb[0].mxu0
  %252 = vmatprep.mubr.f32.mxu0 0.0
  %253 = vmatmul.mubr.f32.gmra.mrb[0].mxu0 %v127
  %v254 = vpop.f32.mrb[0].mxu0
  %v255 = vadd.f32 0.0, %v254
  %v256 = vpop.f32.mrb[0].mxu0
  %257 = vmatprep.mubr.f32.mxu0 0.0
  %258 = vmatmul.mubr.f32.gmra.mrb[0].mxu0 %v130
  %v259 = vpop.f32.mrb[0].mxu0
  %v260 = vadd.f32 0.0, %v259
  %v261 = vpop.f32.mrb[0].mxu0
  %262 = vmatprep.mubr.f32.mxu0 0.0
  %263 = vmatmul.mubr.f32.gmra.mrb[0].mxu0 %v133
  %v264 = vpop.f32.mrb[0].mxu0
  %v265 = vadd.f32 0.0, %v264
  %v266 = vpop.f32.mrb[0].mxu0
  %267 = vmatprep.mubr.f32.mxu0 0.0
  %268 = vmatmul.mubr.f32.gmra.mrb[0].mxu0 %v136
  %v269 = vpop.f32.mrb[0].mxu0
  %v270 = vadd.f32 0.0, %v269
  %v271 = vpop.f32.mrb[0].mxu0
  %272 = vmatprep.mubr.f32.mxu0 0.0
  %273 = vmatmul.mubr.f32.gmra.mrb[0].mxu0 %v139
  %v274 = vpop.f32.mrb[0].mxu0
  %v275 = vadd.f32 0.0, %v274
  %v276 = vpop.f32.mrb[0].mxu0
  %277 = vmatprep.mubr.f32.mxu0 0.0
  %278 = vmatmul.mubr.f32.gmra.mrb[0].mxu0 %v142
  %v279 = vpop.f32.mrb[0].mxu0
  %v280 = vadd.f32 0.0, %v279
  %v281 = vpop.f32.mrb[0].mxu0
  %282 = vmatprep.mubr.f32.mxu0 0.0
  %283 = vmatmul.mubr.f32.gmra.mrb[0].mxu0 %v145
  %v284 = vpop.f32.mrb[0].mxu0
  %v285 = vadd.f32 0.0, %v284
  %v286 = vpop.f32.mrb[0].mxu0
  %287 = vmatprep.mubr.f32.mxu0 0.0
  %288 = vmatmul.mubr.f32.gmra.mrb[0].mxu0 %v148
  %v289 = vpop.f32.mrb[0].mxu0
  %v290 = vadd.f32 0.0, %v289
  %v291 = vpop.f32.mrb[0].mxu0
  %292 = vmatprep.mubr.f32.mxu0 0.0
  %293 = vmatmul.mubr.f32.gmra.mrb[0].mxu0 %v151
  %v294 = vpop.f32.mrb[0].mxu0
  %v295 = vadd.f32 0.0, %v294
  %v296 = vpop.f32.mrb[0].mxu0
  %297 = vdwg.mxu0
  %v298 = vld [vmem:[%s4] sm:$0x1]
  %v300 = vlaneseq
  %v301 = vshrl.u32 %v300, 7
  %v302 = vsub.s32 0, %v301
  %v303 = vrot.slane %v298, %v302
  %v305 = vmul.f32 %v220, %v303
  %v306 = vmul.f32 %v225, %v303
  %v307 = vmul.f32 %v230, %v303
  %v308 = vmul.f32 %v235, %v303
  %v309 = vmul.f32 %v240, %v303
  %v310 = vmul.f32 %v245, %v303
  %v311 = vmul.f32 %v250, %v303
  %v312 = vmul.f32 %v255, %v303
  %v313 = vmul.f32 %v260, %v303
  %v314 = vmul.f32 %v265, %v303
  %v315 = vmul.f32 %v270, %v303
  %v316 = vmul.f32 %v275, %v303
  %v317 = vmul.f32 %v280, %v303
  %v318 = vmul.f32 %v285, %v303
  %v319 = vmul.f32 %v290, %v303
  %v320 = vmul.f32 %v295, %v303
  %v321 = vld [vmem:[%s5] sm:$0x1]
  %v323 = vlaneseq
  %v324 = vshrl.u32 %v323, 7
  %v325 = vsub.s32 0, %v324
  %v326 = vrot.slane %v321, %v325
  %v328 = vadd.f32 %v305, %v326
  %v329 = vadd.f32 %v306, %v326
  %v330 = vadd.f32 %v307, %v326
  %v331 = vadd.f32 %v308, %v326
  %v332 = vadd.f32 %v309, %v326
  %v333 = vadd.f32 %v310, %v326
  %v334 = vadd.f32 %v311, %v326
  %v335 = vadd.f32 %v312, %v326
  %v336 = vadd.f32 %v313, %v326
  %v337 = vadd.f32 %v314, %v326
  %v338 = vadd.f32 %v315, %v326
  %v339 = vadd.f32 %v316, %v326
  %v340 = vadd.f32 %v317, %v326
  %v341 = vadd.f32 %v318, %v326
  %v342 = vadd.f32 %v319, %v326
  %v343 = vadd.f32 %v320, %v326
  %v344 = vmax.f32 %v328, 0.0
  %v345 = vmax.f32 %v329, 0.0
  %v346 = vmax.f32 %v330, 0.0
  %v347 = vmax.f32 %v331, 0.0
  %v348 = vmax.f32 %v332, 0.0
  %v349 = vmax.f32 %v333, 0.0
  %v350 = vmax.f32 %v334, 0.0
  %v351 = vmax.f32 %v335, 0.0
  %v352 = vmax.f32 %v336, 0.0
  %v353 = vmax.f32 %v337, 0.0
  %v354 = vmax.f32 %v338, 0.0
  %v355 = vmax.f32 %v339, 0.0
  %v356 = vmax.f32 %v340, 0.0
  %v357 = vmax.f32 %v341, 0.0
  %v358 = vmax.f32 %v342, 0.0
  %v359 = vmax.f32 %v343, 0.0
  %vm360 = vcmask 261120
  %361 = vst.msk [vmem:[%s6] sm:$0xff] %vm360, %v344
  %362 = vst.msk [vmem:[%s6 + $0x8] sm:$0xff] %vm360, %v345
  %363 = vst.msk [vmem:[%s6 + $0x10] sm:$0xff] %vm360, %v346
  %364 = vst.msk [vmem:[%s6 + $0x18] sm:$0xff] %vm360, %v347
  %365 = vst.msk [vmem:[%s6 + $0x20] sm:$0xff] %vm360, %v348
  %366 = vst.msk [vmem:[%s6 + $0x28] sm:$0xff] %vm360, %v349
  %367 = vst.msk [vmem:[%s6 + $0x30] sm:$0xff] %vm360, %v350
  %368 = vst.msk [vmem:[%s6 + $0x38] sm:$0xff] %vm360, %v351
  %369 = vst.msk [vmem:[%s6 + $0x40] sm:$0xff] %vm360, %v352
  %370 = vst.msk [vmem:[%s6 + $0x48] sm:$0xff] %vm360, %v353
  %371 = vst.msk [vmem:[%s6 + $0x50] sm:$0xff] %vm360, %v354
  %372 = vst.msk [vmem:[%s6 + $0x58] sm:$0xff] %vm360, %v355
  %373 = vst.msk [vmem:[%s6 + $0x60] sm:$0xff] %vm360, %v356
  %374 = vst.msk [vmem:[%s6 + $0x68] sm:$0xff] %vm360, %v357
  %375 = vst.msk [vmem:[%s6 + $0x70] sm:$0xff] %vm360, %v358
  %376 = vst.msk [vmem:[%s6 + $0x78] sm:$0xff] %vm360, %v359
  // Predicated region
  $region26: #{multi_mri_fc_layers_forward.269} parent=0 // pred_check
    _
  $region27: #{multi_mri_fc_layers_forward.269} parent=0 // pred_check_branch
    %378 = sbr.rel (0) target = $region29
  $region28: #{multi_mri_fc_layers_forward.269} parent=0 // pred_region
    _
  $region29: #{multi_mri_fc_layers_forward.269} parent=0 // pred_fallthru
    _
  // Predicated region
  $region30: #{multi_mri_fc_layers_forward.269} parent=0 // pred_check
    _
  $region31: #{multi_mri_fc_layers_forward.269} parent=0 // pred_check_branch
    %380 = sbr.rel (0) target = $region33
  $region32: #{multi_mri_fc_layers_forward.269} parent=0 // pred_region
    _
  $region33: #{multi_mri_fc_layers_forward.269} parent=0 // pred_fallthru
    _

// kernel: multi_mri_fc_layers_forward.271
$region0: #{multi_mri_fc_layers_forward.271}
  #allocation0 [shape = 'u32[]', space=smem, size = 0x4, offset = 0x4, fixed_abs, tag = 'smem constant byte address 0x4 - core index']
  #allocation1 [shape = 'u32[144,128]{1,0:T(1,128)}', space=vmem, size = 0x12000, scoped, tag = 'internal scratch']
  %s0 = inlined_call_operand.vmem [shape: f32[128,32], index: 0, kind: input, shape index: {}]
  %s1 = inlined_call_operand.vmem [shape: f32[32,16], index: 1, kind: input, shape index: {}]
  %s2 = inlined_call_operand.vmem [shape: f32[1,32], index: 2, kind: input, shape index: {}]
  %s3 = inlined_call_operand.vmem [shape: f32[1,32], index: 3, kind: input, shape index: {}]
  %s4 = inlined_call_operand.vmem [shape: f32[128,16], index: 4, kind: output, shape index: {}]
  %s5 = sld [smem:[#allocation0]]
  $region26: #{multi_mri_fc_layers_forward.271} parent=0
    _
  %s7 = ssub.s32 1, %s5
  %s8 = scalar_select 0, %s7, %s5
  // Predicated region
  $region2: #{multi_mri_fc_layers_forward.271} parent=0 // pred_check
    _
  $region3: #{multi_mri_fc_layers_forward.271} parent=0 // pred_check_branch
    %10 = sbr.rel (0) target = $region5
  $region4: #{multi_mri_fc_layers_forward.271} parent=0 // pred_region
    _
  $region5: #{multi_mri_fc_layers_forward.271} parent=0 // pred_fallthru
    _
  // Predicated region
  $region6: #{multi_mri_fc_layers_forward.271} parent=0 // pred_check
    _
  $region7: #{multi_mri_fc_layers_forward.271} parent=0 // pred_check_branch
    %12 = sbr.rel (0) target = $region9
  $region8: #{multi_mri_fc_layers_forward.271} parent=0 // pred_region
    _
  $region9: #{multi_mri_fc_layers_forward.271} parent=0 // pred_fallthru
    _
  // Predicated region
  $region10: #{multi_mri_fc_layers_forward.271} parent=0 // pred_check
    _
  $region11: #{multi_mri_fc_layers_forward.271} parent=0 // pred_check_branch
    %14 = sbr.rel (0) target = $region13
  $region12: #{multi_mri_fc_layers_forward.271} parent=0 // pred_region
    _
  $region13: #{multi_mri_fc_layers_forward.271} parent=0 // pred_fallthru
    _
  // Predicated region
  $region14: #{multi_mri_fc_layers_forward.271} parent=0 // pred_check
    _
  $region15: #{multi_mri_fc_layers_forward.271} parent=0 // pred_check_branch
    %16 = sbr.rel (0) target = $region17
  $region16: #{multi_mri_fc_layers_forward.271} parent=0 // pred_region
    _
  $region17: #{multi_mri_fc_layers_forward.271} parent=0 // pred_fallthru
    _
  %v17 = vld [vmem:[%s0] sm:$0xff]
  %v18 = vld [vmem:[%s0 + $0x8] sm:$0xff]
  %v19 = vld [vmem:[%s0 + $0x10] sm:$0xff]
  %v20 = vld [vmem:[%s0 + $0x18] sm:$0xff]
  %v21 = vld [vmem:[%s0 + $0x20] sm:$0xff]
  %v22 = vld [vmem:[%s0 + $0x28] sm:$0xff]
  %v23 = vld [vmem:[%s0 + $0x30] sm:$0xff]
  %v24 = vld [vmem:[%s0 + $0x38] sm:$0xff]
  %v25 = vld [vmem:[%s0 + $0x40] sm:$0xff]
  %v26 = vld [vmem:[%s0 + $0x48] sm:$0xff]
  %v27 = vld [vmem:[%s0 + $0x50] sm:$0xff]
  %v28 = vld [vmem:[%s0 + $0x58] sm:$0xff]
  %v29 = vld [vmem:[%s0 + $0x60] sm:$0xff]
  %v30 = vld [vmem:[%s0 + $0x68] sm:$0xff]
  %v31 = vld [vmem:[%s0 + $0x70] sm:$0xff]
  %v32 = vld [vmem:[%s0 + $0x78] sm:$0xff]
  %v33 = vld [vmem:[%s2] sm:$0x1]
  %v35 = vlaneseq
  %v36 = vshrl.u32 %v35, 7
  %v37 = vsub.s32 0, %v36
  %v38 = vrot.slane %v33, %v37
  %v40 = vmul.f32 %v17, %v38
  %v41 = vmul.f32 %v18, %v38
  %v42 = vmul.f32 %v19, %v38
  %v43 = vmul.f32 %v20, %v38
  %v44 = vmul.f32 %v21, %v38
  %v45 = vmul.f32 %v22, %v38
  %v46 = vmul.f32 %v23, %v38
  %v47 = vmul.f32 %v24, %v38
  %v48 = vmul.f32 %v25, %v38
  %v49 = vmul.f32 %v26, %v38
  %v50 = vmul.f32 %v27, %v38
  %v51 = vmul.f32 %v28, %v38
  %v52 = vmul.f32 %v29, %v38
  %v53 = vmul.f32 %v30, %v38
  %v54 = vmul.f32 %v31, %v38
  %v55 = vmul.f32 %v32, %v38
  %v56 = vld [vmem:[%s3] sm:$0x1]
  %v58 = vlaneseq
  %v59 = vshrl.u32 %v58, 7
  %v60 = vsub.s32 0, %v59
  %v61 = vrot.slane %v56, %v60
  %v63 = vadd.f32 %v40, %v61
  %v64 = vadd.f32 %v41, %v61
  %v65 = vadd.f32 %v42, %v61
  %v66 = vadd.f32 %v43, %v61
  %v67 = vadd.f32 %v44, %v61
  %v68 = vadd.f32 %v45, %v61
  %v69 = vadd.f32 %v46, %v61
  %v70 = vadd.f32 %v47, %v61
  %v71 = vadd.f32 %v48, %v61
  %v72 = vadd.f32 %v49, %v61
  %v73 = vadd.f32 %v50, %v61
  %v74 = vadd.f32 %v51, %v61
  %v75 = vadd.f32 %v52, %v61
  %v76 = vadd.f32 %v53, %v61
  %v77 = vadd.f32 %v54, %v61
  %v78 = vadd.f32 %v55, %v61
  %v79 = vmax.f32 %v63, 0.0
  %v80 = vmax.f32 %v64, 0.0
  %v81 = vmax.f32 %v65, 0.0
  %v82 = vmax.f32 %v66, 0.0
  %v83 = vmax.f32 %v67, 0.0
  %v84 = vmax.f32 %v68, 0.0
  %v85 = vmax.f32 %v69, 0.0
  %v86 = vmax.f32 %v70, 0.0
  %v87 = vmax.f32 %v71, 0.0
  %v88 = vmax.f32 %v72, 0.0
  %v89 = vmax.f32 %v73, 0.0
  %v90 = vmax.f32 %v74, 0.0
  %v91 = vmax.f32 %v75, 0.0
  %v92 = vmax.f32 %v76, 0.0
  %v93 = vmax.f32 %v77, 0.0
  %v94 = vmax.f32 %v78, 0.0
  %v95 = vld [vmem:[%s1] sm:$0xff]
  %v96 = vld [vmem:[%s1 + $0x8] sm:$0xff]
  %v97 = vld [vmem:[%s1 + $0x10] sm:$0xff]
  %v98 = vld [vmem:[%s1 + $0x18] sm:$0xff]
  %vm99 = vcmask 261120
  %v101 = vsel %vm99, %v79, 0
  %v104 = vsel %vm99, %v80, 0
  %v107 = vsel %vm99, %v81, 0
  %v110 = vsel %vm99, %v82, 0
  %v113 = vsel %vm99, %v83, 0
  %v116 = vsel %vm99, %v84, 0
  %v119 = vsel %vm99, %v85, 0
  %v122 = vsel %vm99, %v86, 0
  %v125 = vsel %vm99, %v87, 0
  %v128 = vsel %vm99, %v88, 0
  %v131 = vsel %vm99, %v89, 0
  %v134 = vsel %vm99, %v90, 0
  %v137 = vsel %vm99, %v91, 0
  %v140 = vsel %vm99, %v92, 0
  %v143 = vsel %vm99, %v93, 0
  %v146 = vsel %vm99, %v94, 0
  %148 = vmatprep.subr.mxu0 0.0
  %149 = vmatpush1.msra.mxu0 %v95
  %150 = vmatprep.subr.mxu0 0.0
  %151 = vmatpush1.msra.mxu0 %v96
  %152 = vmatprep.subr.mxu0 0.0
  %153 = vmatpush1.msra.mxu0 %v97
  %154 = vmatprep.subr.mxu0 0.0
  %155 = vmatpush1.msra.mxu0 %v98
  %156 = vmatprep.subr.mxu0 0.0
  %157 = vmatpush1.msra.mxu0 0.0
  %158 = vmatprep.subr.mxu0 0.0
  %159 = vmatpush1.msra.mxu0 0.0
  %160 = vmatprep.subr.mxu0 0.0
  %161 = vmatpush1.msra.mxu0 0.0
  %162 = vmatprep.subr.mxu0 0.0
  %163 = vmatpush1.msra.mxu0 0.0
  %164 = vmatprep.subr.mxu0 0.0
  %165 = vmatpush1.msra.mxu0 0.0
  %166 = vmatprep.subr.mxu0 0.0
  %167 = vmatpush1.msra.mxu0 0.0
  %168 = vmatprep.subr.mxu0 0.0
  %169 = vmatpush1.msra.mxu0 0.0
  %170 = vmatprep.subr.mxu0 0.0
  %171 = vmatpush1.msra.mxu0 0.0
  %172 = vmatprep.subr.mxu0 0.0
  %173 = vmatpush1.msra.mxu0 0.0
  %174 = vmatprep.subr.mxu0 0.0
  %175 = vmatpush1.msra.mxu0 0.0
  %176 = vmatprep.subr.mxu0 0.0
  %177 = vmatpush1.msra.mxu0 0.0
  %178 = vmatprep.subr.mxu0 0.0
  %179 = vmatpush1.msra.mxu0 0.0
  %180 = vmatprep.subr.mxu0 0.0
  %181 = vmatpush1.msra.mxu0 0.0
  %182 = vmatprep.subr.mxu0 0.0
  %183 = vmatpush1.msra.mxu0 0.0
  %184 = vmatprep.subr.mxu0 0.0
  %185 = vmatpush1.msra.mxu0 0.0
  %186 = vmatprep.subr.mxu0 0.0
  %187 = vmatpush1.msra.mxu0 0.0
  %188 = vmatprep.subr.mxu0 0.0
  %189 = vmatpush1.msra.mxu0 0.0
  %190 = vmatprep.subr.mxu0 0.0
  %191 = vmatpush1.msra.mxu0 0.0
  %192 = vmatprep.subr.mxu0 0.0
  %193 = vmatpush1.msra.mxu0 0.0
  %194 = vmatprep.subr.mxu0 0.0
  %195 = vmatpush1.msra.mxu0 0.0
  %196 = vmatprep.subr.mxu0 0.0
  %197 = vmatpush1.msra.mxu0 0.0
  %198 = vmatprep.subr.mxu0 0.0
  %199 = vmatpush1.msra.mxu0 0.0
  %200 = vmatprep.subr.mxu0 0.0
  %201 = vmatpush1.msra.mxu0 0.0
  %202 = vmatprep.subr.mxu0 0.0
  %203 = vmatpush1.msra.mxu0 0.0
  %204 = vmatprep.subr.mxu0 0.0
  %205 = vmatpush1.msra.mxu0 0.0
  %206 = vmatprep.subr.mxu0 0.0
  %207 = vmatpush1.msra.mxu0 0.0
  %208 = vmatprep.subr.mxu0 0.0
  %209 = vmatpush1.msra.mxu0 0.0
  %210 = vmatprep.subr.mxu0 0.0
  %211 = vmatpush1.msra.mxu0 0.0
  %212 = vmatprep.mubr.f32.mxu0 0.0
  %213 = vmatmul.mubr.f32.gmra.mrb[0].mxu0 %v101
  %v214 = vpop.f32.mrb[0].mxu0
  %v215 = vadd.f32 0.0, %v214
  %v216 = vpop.f32.mrb[0].mxu0
  %217 = vmatprep.mubr.f32.mxu0 0.0
  %218 = vmatmul.mubr.f32.gmra.mrb[0].mxu0 %v104
  %v219 = vpop.f32.mrb[0].mxu0
  %v220 = vadd.f32 0.0, %v219
  %v221 = vpop.f32.mrb[0].mxu0
  %222 = vmatprep.mubr.f32.mxu0 0.0
  %223 = vmatmul.mubr.f32.gmra.mrb[0].mxu0 %v107
  %v224 = vpop.f32.mrb[0].mxu0
  %v225 = vadd.f32 0.0, %v224
  %v226 = vpop.f32.mrb[0].mxu0
  %227 = vmatprep.mubr.f32.mxu0 0.0
  %228 = vmatmul.mubr.f32.gmra.mrb[0].mxu0 %v110
  %v229 = vpop.f32.mrb[0].mxu0
  %v230 = vadd.f32 0.0, %v229
  %v231 = vpop.f32.mrb[0].mxu0
  %232 = vmatprep.mubr.f32.mxu0 0.0
  %233 = vmatmul.mubr.f32.gmra.mrb[0].mxu0 %v113
  %v234 = vpop.f32.mrb[0].mxu0
  %v235 = vadd.f32 0.0, %v234
  %v236 = vpop.f32.mrb[0].mxu0
  %237 = vmatprep.mubr.f32.mxu0 0.0
  %238 = vmatmul.mubr.f32.gmra.mrb[0].mxu0 %v116
  %v239 = vpop.f32.mrb[0].mxu0
  %v240 = vadd.f32 0.0, %v239
  %v241 = vpop.f32.mrb[0].mxu0
  %242 = vmatprep.mubr.f32.mxu0 0.0
  %243 = vmatmul.mubr.f32.gmra.mrb[0].mxu0 %v119
  %v244 = vpop.f32.mrb[0].mxu0
  %v245 = vadd.f32 0.0, %v244
  %v246 = vpop.f32.mrb[0].mxu0
  %247 = vmatprep.mubr.f32.mxu0 0.0
  %248 = vmatmul.mubr.f32.gmra.mrb[0].mxu0 %v122
  %v249 = vpop.f32.mrb[0].mxu0
  %v250 = vadd.f32 0.0, %v249
  %v251 = vpop.f32.mrb[0].mxu0
  %252 = vmatprep.mubr.f32.mxu0 0.0
  %253 = vmatmul.mubr.f32.gmra.mrb[0].mxu0 %v125
  %v254 = vpop.f32.mrb[0].mxu0
  %v255 = vadd.f32 0.0, %v254
  %v256 = vpop.f32.mrb[0].mxu0
  %257 = vmatprep.mubr.f32.mxu0 0.0
  %258 = vmatmul.mubr.f32.gmra.mrb[0].mxu0 %v128
  %v259 = vpop.f32.mrb[0].mxu0
  %v260 = vadd.f32 0.0, %v259
  %v261 = vpop.f32.mrb[0].mxu0
  %262 = vmatprep.mubr.f32.mxu0 0.0
  %263 = vmatmul.mubr.f32.gmra.mrb[0].mxu0 %v131
  %v264 = vpop.f32.mrb[0].mxu0
  %v265 = vadd.f32 0.0, %v264
  %v266 = vpop.f32.mrb[0].mxu0
  %267 = vmatprep.mubr.f32.mxu0 0.0
  %268 = vmatmul.mubr.f32.gmra.mrb[0].mxu0 %v134
  %v269 = vpop.f32.mrb[0].mxu0
  %v270 = vadd.f32 0.0, %v269
  %v271 = vpop.f32.mrb[0].mxu0
  %272 = vmatprep.mubr.f32.mxu0 0.0
  %273 = vmatmul.mubr.f32.gmra.mrb[0].mxu0 %v137
  %v274 = vpop.f32.mrb[0].mxu0
  %v275 = vadd.f32 0.0, %v274
  %v276 = vpop.f32.mrb[0].mxu0
  %277 = vmatprep.mubr.f32.mxu0 0.0
  %278 = vmatmul.mubr.f32.gmra.mrb[0].mxu0 %v140
  %v279 = vpop.f32.mrb[0].mxu0
  %v280 = vadd.f32 0.0, %v279
  %v281 = vpop.f32.mrb[0].mxu0
  %282 = vmatprep.mubr.f32.mxu0 0.0
  %283 = vmatmul.mubr.f32.gmra.mrb[0].mxu0 %v143
  %v284 = vpop.f32.mrb[0].mxu0
  %v285 = vadd.f32 0.0, %v284
  %v286 = vpop.f32.mrb[0].mxu0
  %287 = vmatprep.mubr.f32.mxu0 0.0
  %288 = vmatmul.mubr.f32.gmra.mrb[0].mxu0 %v146
  %v289 = vpop.f32.mrb[0].mxu0
  %v290 = vadd.f32 0.0, %v289
  %v291 = vpop.f32.mrb[0].mxu0
  %292 = vdwg.mxu0
  %vm293 = vcmask 130048
  %294 = vst.msk [vmem:[%s4] sm:$0xff] %vm293, %v215
  %295 = vst.msk [vmem:[%s4 + $0x8] sm:$0xff] %vm293, %v220
  %296 = vst.msk [vmem:[%s4 + $0x10] sm:$0xff] %vm293, %v225
  %297 = vst.msk [vmem:[%s4 + $0x18] sm:$0xff] %vm293, %v230
  %298 = vst.msk [vmem:[%s4 + $0x20] sm:$0xff] %vm293, %v235
  %299 = vst.msk [vmem:[%s4 + $0x28] sm:$0xff] %vm293, %v240
  %300 = vst.msk [vmem:[%s4 + $0x30] sm:$0xff] %vm293, %v245
  %301 = vst.msk [vmem:[%s4 + $0x38] sm:$0xff] %vm293, %v250
  %302 = vst.msk [vmem:[%s4 + $0x40] sm:$0xff] %vm293, %v255
  %303 = vst.msk [vmem:[%s4 + $0x48] sm:$0xff] %vm293, %v260
  %304 = vst.msk [vmem:[%s4 + $0x50] sm:$0xff] %vm293, %v265
  %305 = vst.msk [vmem:[%s4 + $0x58] sm:$0xff] %vm293, %v270
  %306 = vst.msk [vmem:[%s4 + $0x60] sm:$0xff] %vm293, %v275
  %307 = vst.msk [vmem:[%s4 + $0x68] sm:$0xff] %vm293, %v280
  %308 = vst.msk [vmem:[%s4 + $0x70] sm:$0xff] %vm293, %v285
  %309 = vst.msk [vmem:[%s4 + $0x78] sm:$0xff] %vm293, %v290
  // Predicated region
  $region18: #{multi_mri_fc_layers_forward.271} parent=0 // pred_check
    _
  $region19: #{multi_mri_fc_layers_forward.271} parent=0 // pred_check_branch
    %311 = sbr.rel (0) target = $region21
  $region20: #{multi_mri_fc_layers_forward.271} parent=0 // pred_region
    _
  $region21: #{multi_mri_fc_layers_forward.271} parent=0 // pred_fallthru
    _
  // Predicated region
  $region22: #{multi_mri_fc_layers_forward.271} parent=0 // pred_check
    _
  $region23: #{multi_mri_fc_layers_forward.271} parent=0 // pred_check_branch
    %313 = sbr.rel (0) target = $region25
  $region24: #{multi_mri_fc_layers_forward.271} parent=0 // pred_region
    _
  $region25: #{multi_mri_fc_layers_forward.271} parent=0 // pred_fallthru
    _

// kernel: multi_mri_fc_layers_forward.272
$region0: #{multi_mri_fc_layers_forward.272}
  #allocation0 [shape = 'u32[]', space=smem, size = 0x4, offset = 0x4, fixed_abs, tag = 'smem constant byte address 0x4 - core index']
  #allocation1 [shape = 'u32[144,128]{1,0:T(1,128)}', space=vmem, size = 0x12000, scoped, tag = 'internal scratch']
  %s0 = inlined_call_operand.vmem [shape: f32[32,16], index: 0, kind: input, shape index: {}]
  %s1 = inlined_call_operand.vmem [shape: f32[32,16], index: 1, kind: input, shape index: {}]
  %s2 = inlined_call_operand.vmem [shape: f32[32,16], index: 2, kind: input, shape index: {}]
  %s3 = inlined_call_operand.vmem [shape: f32[32,16], index: 3, kind: input, shape index: {}]
  %s4 = inlined_call_operand.vmem [shape: f32[32,16], index: 4, kind: output, shape index: {}]
  %s5 = sld [smem:[#allocation0]]
  $region26: #{multi_mri_fc_layers_forward.272} parent=0
    _
  %s7 = ssub.s32 1, %s5
  %s8 = scalar_select 0, %s7, %s5
  // Predicated region
  $region2: #{multi_mri_fc_layers_forward.272} parent=0 // pred_check
    _
  $region3: #{multi_mri_fc_layers_forward.272} parent=0 // pred_check_branch
    %10 = sbr.rel (0) target = $region5
  $region4: #{multi_mri_fc_layers_forward.272} parent=0 // pred_region
    _
  $region5: #{multi_mri_fc_layers_forward.272} parent=0 // pred_fallthru
    _
  // Predicated region
  $region6: #{multi_mri_fc_layers_forward.272} parent=0 // pred_check
    _
  $region7: #{multi_mri_fc_layers_forward.272} parent=0 // pred_check_branch
    %12 = sbr.rel (0) target = $region9
  $region8: #{multi_mri_fc_layers_forward.272} parent=0 // pred_region
    _
  $region9: #{multi_mri_fc_layers_forward.272} parent=0 // pred_fallthru
    _
  // Predicated region
  $region10: #{multi_mri_fc_layers_forward.272} parent=0 // pred_check
    _
  $region11: #{multi_mri_fc_layers_forward.272} parent=0 // pred_check_branch
    %14 = sbr.rel (0) target = $region13
  $region12: #{multi_mri_fc_layers_forward.272} parent=0 // pred_region
    _
  $region13: #{multi_mri_fc_layers_forward.272} parent=0 // pred_fallthru
    _
  // Predicated region
  $region14: #{multi_mri_fc_layers_forward.272} parent=0 // pred_check
    _
  $region15: #{multi_mri_fc_layers_forward.272} parent=0 // pred_check_branch
    %16 = sbr.rel (0) target = $region17
  $region16: #{multi_mri_fc_layers_forward.272} parent=0 // pred_region
    _
  $region17: #{multi_mri_fc_layers_forward.272} parent=0 // pred_fallthru
    _
  %v17 = vld [vmem:[%s0] sm:$0xff]
  %v18 = vld [vmem:[%s0 + $0x8] sm:$0xff]
  %v19 = vld [vmem:[%s0 + $0x10] sm:$0xff]
  %v20 = vld [vmem:[%s0 + $0x18] sm:$0xff]
  %v21 = vld [vmem:[%s1] sm:$0xff]
  %v22 = vld [vmem:[%s1 + $0x8] sm:$0xff]
  %v23 = vld [vmem:[%s1 + $0x10] sm:$0xff]
  %v24 = vld [vmem:[%s1 + $0x18] sm:$0xff]
  %v25 = vadd.f32 %v17, %v21
  %v26 = vadd.f32 %v18, %v22
  %v27 = vadd.f32 %v19, %v23
  %v28 = vadd.f32 %v20, %v24
  %v29 = vld [vmem:[%s2] sm:$0xff]
  %v30 = vld [vmem:[%s2 + $0x8] sm:$0xff]
  %v31 = vld [vmem:[%s2 + $0x10] sm:$0xff]
  %v32 = vld [vmem:[%s2 + $0x18] sm:$0xff]
  %v33 = vadd.f32 %v25, %v29
  %v34 = vadd.f32 %v26, %v30
  %v35 = vadd.f32 %v27, %v31
  %v36 = vadd.f32 %v28, %v32
  %v37 = vld [vmem:[%s3] sm:$0xff]
  %v38 = vld [vmem:[%s3 + $0x8] sm:$0xff]
  %v39 = vld [vmem:[%s3 + $0x10] sm:$0xff]
  %v40 = vld [vmem:[%s3 + $0x18] sm:$0xff]
  %v41 = vadd.f32 %v33, %v37
  %v42 = vadd.f32 %v34, %v38
  %v43 = vadd.f32 %v35, %v39
  %v44 = vadd.f32 %v36, %v40
  %v45 = vmul.f32 %v41, 0.25
  %v46 = vmul.f32 %v42, 0.25
  %v47 = vmul.f32 %v43, 0.25
  %v48 = vmul.f32 %v44, 0.25
  %vm49 = vcmask 130048
  %50 = vst.msk [vmem:[%s4] sm:$0xff] %vm49, %v45
  %51 = vst.msk [vmem:[%s4 + $0x8] sm:$0xff] %vm49, %v46
  %52 = vst.msk [vmem:[%s4 + $0x10] sm:$0xff] %vm49, %v47
  %53 = vst.msk [vmem:[%s4 + $0x18] sm:$0xff] %vm49, %v48
  // Predicated region
  $region18: #{multi_mri_fc_layers_forward.272} parent=0 // pred_check
    _
  $region19: #{multi_mri_fc_layers_forward.272} parent=0 // pred_check_branch
    %55 = sbr.rel (0) target = $region21
  $region20: #{multi_mri_fc_layers_forward.272} parent=0 // pred_region
    _
  $region21: #{multi_mri_fc_layers_forward.272} parent=0 // pred_fallthru
    _
  // Predicated region
  $region22: #{multi_mri_fc_layers_forward.272} parent=0 // pred_check
    _
  $region23: #{multi_mri_fc_layers_forward.272} parent=0 // pred_check_branch
    %57 = sbr.rel (0) target = $region25
  $region24: #{multi_mri_fc_layers_forward.272} parent=0 // pred_region
    _
  $region25: #{multi_mri_fc_layers_forward.272} parent=0 // pred_fallthru
    _

// kernel: multi_mri_fc_layers_forward.273
$region0: #{multi_mri_fc_layers_forward.273}
  #allocation0 [shape = 'u32[]', space=smem, size = 0x4, offset = 0x4, fixed_abs, tag = 'smem constant byte address 0x4 - core index']
  #allocation1 [shape = 'u32[144,128]{1,0:T(1,128)}', space=vmem, size = 0x12000, scoped, tag = 'internal scratch']
  %s0 = inlined_call_operand.vmem [shape: f32[32,16], index: 0, kind: input, shape index: {}]
  %s1 = inlined_call_operand.vmem [shape: f32[16,32], index: 1, kind: input, shape index: {}]
  %s2 = inlined_call_operand.vmem [shape: f32[1,16], index: 2, kind: input, shape index: {}]
  %s3 = inlined_call_operand.vmem [shape: f32[1,16], index: 3, kind: input, shape index: {}]
  %s4 = inlined_call_operand.vmem [shape: f32[1,32], index: 4, kind: input, shape index: {}]
  %s5 = inlined_call_operand.vmem [shape: f32[1,32], index: 5, kind: input, shape index: {}]
  %s6 = inlined_call_operand.vmem [shape: f32[32,32], index: 6, kind: output, shape index: {}]
  %s7 = sld [smem:[#allocation0]]
  $region34: #{multi_mri_fc_layers_forward.273} parent=0
    _
  %s9 = ssub.s32 1, %s7
  %s10 = scalar_select 0, %s9, %s7
  // Predicated region
  $region2: #{multi_mri_fc_layers_forward.273} parent=0 // pred_check
    _
  $region3: #{multi_mri_fc_layers_forward.273} parent=0 // pred_check_branch
    %12 = sbr.rel (0) target = $region5
  $region4: #{multi_mri_fc_layers_forward.273} parent=0 // pred_region
    _
  $region5: #{multi_mri_fc_layers_forward.273} parent=0 // pred_fallthru
    _
  // Predicated region
  $region6: #{multi_mri_fc_layers_forward.273} parent=0 // pred_check
    _
  $region7: #{multi_mri_fc_layers_forward.273} parent=0 // pred_check_branch
    %14 = sbr.rel (0) target = $region9
  $region8: #{multi_mri_fc_layers_forward.273} parent=0 // pred_region
    _
  $region9: #{multi_mri_fc_layers_forward.273} parent=0 // pred_fallthru
    _
  // Predicated region
  $region10: #{multi_mri_fc_layers_forward.273} parent=0 // pred_check
    _
  $region11: #{multi_mri_fc_layers_forward.273} parent=0 // pred_check_branch
    %16 = sbr.rel (0) target = $region13
  $region12: #{multi_mri_fc_layers_forward.273} parent=0 // pred_region
    _
  $region13: #{multi_mri_fc_layers_forward.273} parent=0 // pred_fallthru
    _
  // Predicated region
  $region14: #{multi_mri_fc_layers_forward.273} parent=0 // pred_check
    _
  $region15: #{multi_mri_fc_layers_forward.273} parent=0 // pred_check_branch
    %18 = sbr.rel (0) target = $region17
  $region16: #{multi_mri_fc_layers_forward.273} parent=0 // pred_region
    _
  $region17: #{multi_mri_fc_layers_forward.273} parent=0 // pred_fallthru
    _
  // Predicated region
  $region18: #{multi_mri_fc_layers_forward.273} parent=0 // pred_check
    _
  $region19: #{multi_mri_fc_layers_forward.273} parent=0 // pred_check_branch
    %20 = sbr.rel (0) target = $region21
  $region20: #{multi_mri_fc_layers_forward.273} parent=0 // pred_region
    _
  $region21: #{multi_mri_fc_layers_forward.273} parent=0 // pred_fallthru
    _
  // Predicated region
  $region22: #{multi_mri_fc_layers_forward.273} parent=0 // pred_check
    _
  $region23: #{multi_mri_fc_layers_forward.273} parent=0 // pred_check_branch
    %22 = sbr.rel (0) target = $region25
  $region24: #{multi_mri_fc_layers_forward.273} parent=0 // pred_region
    _
  $region25: #{multi_mri_fc_layers_forward.273} parent=0 // pred_fallthru
    _
  %v23 = vld [vmem:[%s0] sm:$0xff]
  %v24 = vld [vmem:[%s0 + $0x8] sm:$0xff]
  %v25 = vld [vmem:[%s0 + $0x10] sm:$0xff]
  %v26 = vld [vmem:[%s0 + $0x18] sm:$0xff]
  %v27 = vld [vmem:[%s2] sm:$0x1]
  %v29 = vlaneseq
  %v30 = vshrl.u32 %v29, 7
  %v31 = vsub.s32 0, %v30
  %v32 = vrot.slane %v27, %v31
  %v34 = vmul.f32 %v23, %v32
  %v35 = vmul.f32 %v24, %v32
  %v36 = vmul.f32 %v25, %v32
  %v37 = vmul.f32 %v26, %v32
  %v38 = vld [vmem:[%s3] sm:$0x1]
  %v40 = vlaneseq
  %v41 = vshrl.u32 %v40, 7
  %v42 = vsub.s32 0, %v41
  %v43 = vrot.slane %v38, %v42
  %v45 = vadd.f32 %v34, %v43
  %v46 = vadd.f32 %v35, %v43
  %v47 = vadd.f32 %v36, %v43
  %v48 = vadd.f32 %v37, %v43
  %v49 = vmax.f32 %v45, 0.0
  %v50 = vmax.f32 %v46, 0.0
  %v51 = vmax.f32 %v47, 0.0
  %v52 = vmax.f32 %v48, 0.0
  %v53 = vld [vmem:[%s1] sm:$0xff]
  %v54 = vld [vmem:[%s1 + $0x8] sm:$0xff]
  %vm55 = vcmask 130048
  %v57 = vsel %vm55, %v49, 0
  %v60 = vsel %vm55, %v50, 0
  %v63 = vsel %vm55, %v51, 0
  %v66 = vsel %vm55, %v52, 0
  %68 = vmatprep.subr.mxu0 0.0
  %69 = vmatpush1.msra.mxu0 %v53
  %70 = vmatprep.subr.mxu0 0.0
  %71 = vmatpush1.msra.mxu0 %v54
  %72 = vmatprep.subr.mxu0 0.0
  %73 = vmatpush1.msra.mxu0 0.0
  %74 = vmatprep.subr.mxu0 0.0
  %75 = vmatpush1.msra.mxu0 0.0
  %76 = vmatprep.subr.mxu0 0.0
  %77 = vmatpush1.msra.mxu0 0.0
  %78 = vmatprep.subr.mxu0 0.0
  %79 = vmatpush1.msra.mxu0 0.0
  %80 = vmatprep.subr.mxu0 0.0
  %81 = vmatpush1.msra.mxu0 0.0
  %82 = vmatprep.subr.mxu0 0.0
  %83 = vmatpush1.msra.mxu0 0.0
  %84 = vmatprep.subr.mxu0 0.0
  %85 = vmatpush1.msra.mxu0 0.0
  %86 = vmatprep.subr.mxu0 0.0
  %87 = vmatpush1.msra.mxu0 0.0
  %88 = vmatprep.subr.mxu0 0.0
  %89 = vmatpush1.msra.mxu0 0.0
  %90 = vmatprep.subr.mxu0 0.0
  %91 = vmatpush1.msra.mxu0 0.0
  %92 = vmatprep.subr.mxu0 0.0
  %93 = vmatpush1.msra.mxu0 0.0
  %94 = vmatprep.subr.mxu0 0.0
  %95 = vmatpush1.msra.mxu0 0.0
  %96 = vmatprep.subr.mxu0 0.0
  %97 = vmatpush1.msra.mxu0 0.0
  %98 = vmatprep.subr.mxu0 0.0
  %99 = vmatpush1.msra.mxu0 0.0
  %100 = vmatprep.subr.mxu0 0.0
  %101 = vmatpush1.msra.mxu0 0.0
  %102 = vmatprep.subr.mxu0 0.0
  %103 = vmatpush1.msra.mxu0 0.0
  %104 = vmatprep.subr.mxu0 0.0
  %105 = vmatpush1.msra.mxu0 0.0
  %106 = vmatprep.subr.mxu0 0.0
  %107 = vmatpush1.msra.mxu0 0.0
  %108 = vmatprep.subr.mxu0 0.0
  %109 = vmatpush1.msra.mxu0 0.0
  %110 = vmatprep.subr.mxu0 0.0
  %111 = vmatpush1.msra.mxu0 0.0
  %112 = vmatprep.subr.mxu0 0.0
  %113 = vmatpush1.msra.mxu0 0.0
  %114 = vmatprep.subr.mxu0 0.0
  %115 = vmatpush1.msra.mxu0 0.0
  %116 = vmatprep.subr.mxu0 0.0
  %117 = vmatpush1.msra.mxu0 0.0
  %118 = vmatprep.subr.mxu0 0.0
  %119 = vmatpush1.msra.mxu0 0.0
  %120 = vmatprep.subr.mxu0 0.0
  %121 = vmatpush1.msra.mxu0 0.0
  %122 = vmatprep.subr.mxu0 0.0
  %123 = vmatpush1.msra.mxu0 0.0
  %124 = vmatprep.subr.mxu0 0.0
  %125 = vmatpush1.msra.mxu0 0.0
  %126 = vmatprep.subr.mxu0 0.0
  %127 = vmatpush1.msra.mxu0 0.0
  %128 = vmatprep.subr.mxu0 0.0
  %129 = vmatpush1.msra.mxu0 0.0
  %130 = vmatprep.subr.mxu0 0.0
  %131 = vmatpush1.msra.mxu0 0.0
  %132 = vmatprep.mubr.f32.mxu0 0.0
  %133 = vmatmul.mubr.f32.gmra.mrb[0].mxu0 %v57
  %v134 = vpop.f32.mrb[0].mxu0
  %v135 = vadd.f32 0.0, %v134
  %v136 = vpop.f32.mrb[0].mxu0
  %137 = vmatprep.mubr.f32.mxu0 0.0
  %138 = vmatmul.mubr.f32.gmra.mrb[0].mxu0 %v60
  %v139 = vpop.f32.mrb[0].mxu0
  %v140 = vadd.f32 0.0, %v139
  %v141 = vpop.f32.mrb[0].mxu0
  %142 = vmatprep.mubr.f32.mxu0 0.0
  %143 = vmatmul.mubr.f32.gmra.mrb[0].mxu0 %v63
  %v144 = vpop.f32.mrb[0].mxu0
  %v145 = vadd.f32 0.0, %v144
  %v146 = vpop.f32.mrb[0].mxu0
  %147 = vmatprep.mubr.f32.mxu0 0.0
  %148 = vmatmul.mubr.f32.gmra.mrb[0].mxu0 %v66
  %v149 = vpop.f32.mrb[0].mxu0
  %v150 = vadd.f32 0.0, %v149
  %v151 = vpop.f32.mrb[0].mxu0
  %152 = vdwg.mxu0
  %v153 = vld [vmem:[%s4] sm:$0x1]
  %v155 = vlaneseq
  %v156 = vshrl.u32 %v155, 7
  %v157 = vsub.s32 0, %v156
  %v158 = vrot.slane %v153, %v157
  %v160 = vmul.f32 %v135, %v158
  %v161 = vmul.f32 %v140, %v158
  %v162 = vmul.f32 %v145, %v158
  %v163 = vmul.f32 %v150, %v158
  %v164 = vld [vmem:[%s5] sm:$0x1]
  %v166 = vlaneseq
  %v167 = vshrl.u32 %v166, 7
  %v168 = vsub.s32 0, %v167
  %v169 = vrot.slane %v164, %v168
  %v171 = vadd.f32 %v160, %v169
  %v172 = vadd.f32 %v161, %v169
  %v173 = vadd.f32 %v162, %v169
  %v174 = vadd.f32 %v163, %v169
  %v175 = vmax.f32 %v171, 0.0
  %v176 = vmax.f32 %v172, 0.0
  %v177 = vmax.f32 %v173, 0.0
  %v178 = vmax.f32 %v174, 0.0
  %vm179 = vcmask 261120
  %180 = vst.msk [vmem:[%s6] sm:$0xff] %vm179, %v175
  %181 = vst.msk [vmem:[%s6 + $0x8] sm:$0xff] %vm179, %v176
  %182 = vst.msk [vmem:[%s6 + $0x10] sm:$0xff] %vm179, %v177
  %183 = vst.msk [vmem:[%s6 + $0x18] sm:$0xff] %vm179, %v178
  // Predicated region
  $region26: #{multi_mri_fc_layers_forward.273} parent=0 // pred_check
    _
  $region27: #{multi_mri_fc_layers_forward.273} parent=0 // pred_check_branch
    %185 = sbr.rel (0) target = $region29
  $region28: #{multi_mri_fc_layers_forward.273} parent=0 // pred_region
    _
  $region29: #{multi_mri_fc_layers_forward.273} parent=0 // pred_fallthru
    _
  // Predicated region
  $region30: #{multi_mri_fc_layers_forward.273} parent=0 // pred_check
    _
  $region31: #{multi_mri_fc_layers_forward.273} parent=0 // pred_check_branch
    %187 = sbr.rel (0) target = $region33
  $region32: #{multi_mri_fc_layers_forward.273} parent=0 // pred_region
    _
  $region33: #{multi_mri_fc_layers_forward.273} parent=0 // pred_fallthru
    _

// kernel: multi_mri_fc_layers_forward.277
$region0: #{multi_mri_fc_layers_forward.277}
  #allocation0 [shape = 'u32[]', space=smem, size = 0x4, offset = 0x4, fixed_abs, tag = 'smem constant byte address 0x4 - core index']
  #allocation1 [shape = 'u32[144,128]{1,0:T(1,128)}', space=vmem, size = 0x12000, scoped, tag = 'internal scratch']
  %s0 = inlined_call_operand.vmem [shape: f32[32,32], index: 0, kind: input, shape index: {}]
  %s1 = inlined_call_operand.vmem [shape: f32[32,16], index: 1, kind: input, shape index: {}]
  %s2 = inlined_call_operand.vmem [shape: f32[1,32], index: 2, kind: input, shape index: {}]
  %s3 = inlined_call_operand.vmem [shape: f32[1,32], index: 3, kind: input, shape index: {}]
  %s4 = inlined_call_operand.vmem [shape: f32[32,16], index: 4, kind: output, shape index: {}]
  %s5 = sld [smem:[#allocation0]]
  $region26: #{multi_mri_fc_layers_forward.277} parent=0
    _
  %s7 = ssub.s32 1, %s5
  %s8 = scalar_select 0, %s7, %s5
  // Predicated region
  $region2: #{multi_mri_fc_layers_forward.277} parent=0 // pred_check
    _
  $region3: #{multi_mri_fc_layers_forward.277} parent=0 // pred_check_branch
    %10 = sbr.rel (0) target = $region5
  $region4: #{multi_mri_fc_layers_forward.277} parent=0 // pred_region
    _
  $region5: #{multi_mri_fc_layers_forward.277} parent=0 // pred_fallthru
    _
  // Predicated region
  $region6: #{multi_mri_fc_layers_forward.277} parent=0 // pred_check
    _
  $region7: #{multi_mri_fc_layers_forward.277} parent=0 // pred_check_branch
    %12 = sbr.rel (0) target = $region9
  $region8: #{multi_mri_fc_layers_forward.277} parent=0 // pred_region
    _
  $region9: #{multi_mri_fc_layers_forward.277} parent=0 // pred_fallthru
    _
  // Predicated region
  $region10: #{multi_mri_fc_layers_forward.277} parent=0 // pred_check
    _
  $region11: #{multi_mri_fc_layers_forward.277} parent=0 // pred_check_branch
    %14 = sbr.rel (0) target = $region13
  $region12: #{multi_mri_fc_layers_forward.277} parent=0 // pred_region
    _
  $region13: #{multi_mri_fc_layers_forward.277} parent=0 // pred_fallthru
    _
  // Predicated region
  $region14: #{multi_mri_fc_layers_forward.277} parent=0 // pred_check
    _
  $region15: #{multi_mri_fc_layers_forward.277} parent=0 // pred_check_branch
    %16 = sbr.rel (0) target = $region17
  $region16: #{multi_mri_fc_layers_forward.277} parent=0 // pred_region
    _
  $region17: #{multi_mri_fc_layers_forward.277} parent=0 // pred_fallthru
    _
  %v17 = vld [vmem:[%s0] sm:$0xff]
  %v18 = vld [vmem:[%s0 + $0x8] sm:$0xff]
  %v19 = vld [vmem:[%s0 + $0x10] sm:$0xff]
  %v20 = vld [vmem:[%s0 + $0x18] sm:$0xff]
  %v21 = vld [vmem:[%s2] sm:$0x1]
  %v23 = vlaneseq
  %v24 = vshrl.u32 %v23, 7
  %v25 = vsub.s32 0, %v24
  %v26 = vrot.slane %v21, %v25
  %v28 = vmul.f32 %v17, %v26
  %v29 = vmul.f32 %v18, %v26
  %v30 = vmul.f32 %v19, %v26
  %v31 = vmul.f32 %v20, %v26
  %v32 = vld [vmem:[%s3] sm:$0x1]
  %v34 = vlaneseq
  %v35 = vshrl.u32 %v34, 7
  %v36 = vsub.s32 0, %v35
  %v37 = vrot.slane %v32, %v36
  %v39 = vadd.f32 %v28, %v37
  %v40 = vadd.f32 %v29, %v37
  %v41 = vadd.f32 %v30, %v37
  %v42 = vadd.f32 %v31, %v37
  %v43 = vmax.f32 %v39, 0.0
  %v44 = vmax.f32 %v40, 0.0
  %v45 = vmax.f32 %v41, 0.0
  %v46 = vmax.f32 %v42, 0.0
  %v47 = vld [vmem:[%s1] sm:$0xff]
  %v48 = vld [vmem:[%s1 + $0x8] sm:$0xff]
  %v49 = vld [vmem:[%s1 + $0x10] sm:$0xff]
  %v50 = vld [vmem:[%s1 + $0x18] sm:$0xff]
  %vm51 = vcmask 261120
  %v53 = vsel %vm51, %v43, 0
  %v56 = vsel %vm51, %v44, 0
  %v59 = vsel %vm51, %v45, 0
  %v62 = vsel %vm51, %v46, 0
  %64 = vmatprep.subr.mxu0 0.0
  %65 = vmatpush1.msra.mxu0 %v47
  %66 = vmatprep.subr.mxu0 0.0
  %67 = vmatpush1.msra.mxu0 %v48
  %68 = vmatprep.subr.mxu0 0.0
  %69 = vmatpush1.msra.mxu0 %v49
  %70 = vmatprep.subr.mxu0 0.0
  %71 = vmatpush1.msra.mxu0 %v50
  %72 = vmatprep.subr.mxu0 0.0
  %73 = vmatpush1.msra.mxu0 0.0
  %74 = vmatprep.subr.mxu0 0.0
  %75 = vmatpush1.msra.mxu0 0.0
  %76 = vmatprep.subr.mxu0 0.0
  %77 = vmatpush1.msra.mxu0 0.0
  %78 = vmatprep.subr.mxu0 0.0
  %79 = vmatpush1.msra.mxu0 0.0
  %80 = vmatprep.subr.mxu0 0.0
  %81 = vmatpush1.msra.mxu0 0.0
  %82 = vmatprep.subr.mxu0 0.0
  %83 = vmatpush1.msra.mxu0 0.0
  %84 = vmatprep.subr.mxu0 0.0
  %85 = vmatpush1.msra.mxu0 0.0
  %86 = vmatprep.subr.mxu0 0.0
  %87 = vmatpush1.msra.mxu0 0.0
  %88 = vmatprep.subr.mxu0 0.0
  %89 = vmatpush1.msra.mxu0 0.0
  %90 = vmatprep.subr.mxu0 0.0
  %91 = vmatpush1.msra.mxu0 0.0
  %92 = vmatprep.subr.mxu0 0.0
  %93 = vmatpush1.msra.mxu0 0.0
  %94 = vmatprep.subr.mxu0 0.0
  %95 = vmatpush1.msra.mxu0 0.0
  %96 = vmatprep.subr.mxu0 0.0
  %97 = vmatpush1.msra.mxu0 0.0
  %98 = vmatprep.subr.mxu0 0.0
  %99 = vmatpush1.msra.mxu0 0.0
  %100 = vmatprep.subr.mxu0 0.0
  %101 = vmatpush1.msra.mxu0 0.0
  %102 = vmatprep.subr.mxu0 0.0
  %103 = vmatpush1.msra.mxu0 0.0
  %104 = vmatprep.subr.mxu0 0.0
  %105 = vmatpush1.msra.mxu0 0.0
  %106 = vmatprep.subr.mxu0 0.0
  %107 = vmatpush1.msra.mxu0 0.0
  %108 = vmatprep.subr.mxu0 0.0
  %109 = vmatpush1.msra.mxu0 0.0
  %110 = vmatprep.subr.mxu0 0.0
  %111 = vmatpush1.msra.mxu0 0.0
  %112 = vmatprep.subr.mxu0 0.0
  %113 = vmatpush1.msra.mxu0 0.0
  %114 = vmatprep.subr.mxu0 0.0
  %115 = vmatpush1.msra.mxu0 0.0
  %116 = vmatprep.subr.mxu0 0.0
  %117 = vmatpush1.msra.mxu0 0.0
  %118 = vmatprep.subr.mxu0 0.0
  %119 = vmatpush1.msra.mxu0 0.0
  %120 = vmatprep.subr.mxu0 0.0
  %121 = vmatpush1.msra.mxu0 0.0
  %122 = vmatprep.subr.mxu0 0.0
  %123 = vmatpush1.msra.mxu0 0.0
  %124 = vmatprep.subr.mxu0 0.0
  %125 = vmatpush1.msra.mxu0 0.0
  %126 = vmatprep.subr.mxu0 0.0
  %127 = vmatpush1.msra.mxu0 0.0
  %128 = vmatprep.mubr.f32.mxu0 0.0
  %129 = vmatmul.mubr.f32.gmra.mrb[0].mxu0 %v53
  %v130 = vpop.f32.mrb[0].mxu0
  %v131 = vadd.f32 0.0, %v130
  %v132 = vpop.f32.mrb[0].mxu0
  %133 = vmatprep.mubr.f32.mxu0 0.0
  %134 = vmatmul.mubr.f32.gmra.mrb[0].mxu0 %v56
  %v135 = vpop.f32.mrb[0].mxu0
  %v136 = vadd.f32 0.0, %v135
  %v137 = vpop.f32.mrb[0].mxu0
  %138 = vmatprep.mubr.f32.mxu0 0.0
  %139 = vmatmul.mubr.f32.gmra.mrb[0].mxu0 %v59
  %v140 = vpop.f32.mrb[0].mxu0
  %v141 = vadd.f32 0.0, %v140
  %v142 = vpop.f32.mrb[0].mxu0
  %143 = vmatprep.mubr.f32.mxu0 0.0
  %144 = vmatmul.mubr.f32.gmra.mrb[0].mxu0 %v62
  %v145 = vpop.f32.mrb[0].mxu0
  %v146 = vadd.f32 0.0, %v145
  %v147 = vpop.f32.mrb[0].mxu0
  %148 = vdwg.mxu0
  %vm149 = vcmask 130048
  %150 = vst.msk [vmem:[%s4] sm:$0xff] %vm149, %v131
  %151 = vst.msk [vmem:[%s4 + $0x8] sm:$0xff] %vm149, %v136
  %152 = vst.msk [vmem:[%s4 + $0x10] sm:$0xff] %vm149, %v141
  %153 = vst.msk [vmem:[%s4 + $0x18] sm:$0xff] %vm149, %v146
  // Predicated region
  $region18: #{multi_mri_fc_layers_forward.277} parent=0 // pred_check
    _
  $region19: #{multi_mri_fc_layers_forward.277} parent=0 // pred_check_branch
    %155 = sbr.rel (0) target = $region21
  $region20: #{multi_mri_fc_layers_forward.277} parent=0 // pred_region
    _
  $region21: #{multi_mri_fc_layers_forward.277} parent=0 // pred_fallthru
    _
  // Predicated region
  $region22: #{multi_mri_fc_layers_forward.277} parent=0 // pred_check
    _
  $region23: #{multi_mri_fc_layers_forward.277} parent=0 // pred_check_branch
    %157 = sbr.rel (0) target = $region25
  $region24: #{multi_mri_fc_layers_forward.277} parent=0 // pred_region
    _
  $region25: #{multi_mri_fc_layers_forward.277} parent=0 // pred_fallthru
    _

// kernel: multi_mri_fc_layers_forward.274
$region0: #{multi_mri_fc_layers_forward.274}
  #allocation0 [shape = 'u32[]', space=smem, size = 0x4, offset = 0x4, fixed_abs, tag = 'smem constant byte address 0x4 - core index']
  #allocation1 [shape = 'u32[144,128]{1,0:T(1,128)}', space=vmem, size = 0x12000, scoped, tag = 'internal scratch']
  %s0 = inlined_call_operand.vmem [shape: f32[2,6,6,32], index: 0, kind: input, shape index: {}]
  %s1 = inlined_call_operand.vmem [shape: f32[9,32,8], index: 1, kind: input, shape index: {}]
  %s2 = inlined_call_operand.vmem [shape: f32[2,4,4,8], index: 2, kind: output, shape index: {}]
  %s3 = sld [smem:[#allocation0]]
  $region48: #{multi_mri_fc_layers_forward.274} parent=0
    _
  %s5 = ssub.s32 1, %s3
  %s6 = scalar_select 0, %s5, %s3
  loop: start=0, step=1, limit=4
  $region2: #{multi_mri_fc_layers_forward.274} parent=0 // loop_pre_header
    _
  $region3: #{multi_mri_fc_layers_forward.274} parent=0 // loop_header
    %s8 = sphi 0, %s12
    %p9 = scmp.ge.s32.totalorder %s8, 4
    %s18 = sphi 0, %s20
    %s21 = sphi 0, %s18
    %s22 = sphi 0, %s21
    %s38 = sphi 0, %s22
    %s42 = sphi 0, %s42
    %s44 = sphi 0, %s42
    %s45 = sphi 0, %s44
    %s59 = sphi 0, %s45
    %s65 = sphi 0, %s67
    %s68 = sphi 0, %s65
    %s69 = sphi 0, %s68
    %s85 = sphi 0, %s69
  $region4: #{multi_mri_fc_layers_forward.274} parent=0 // loop_header_branch
    %11 = sbr.rel (%p9) target = $region8
  $region5: #{multi_mri_fc_layers_forward.274} parent=0 // loop_body
    %s13 = ssub.s32 %s8, 1
    %s14 = ssub.s32 %s8, 2
    %s15 = sadd.s32 %s8, 1
    %s16 = ssub.s32 %s8, %s15
    %p17 = scmp.eq.s32.totalorder %s16, 0
    %s19 = sadd.s32 %s18, 1
    %s20 = scalar_select %p17, %s18, %s19
    %p23 = pneg %p17
    %p24 = scmp.eq.s32.totalorder %s8, 1
    %p25 = por %p23, %p24
    %p26 = scmp.ne.s32.totalorder %s18, %s21
    %p27 = scmp.eq.s32.totalorder %s8, 0
    %p28 = por %p26, %p27
    %p29 = scmp.ne.s32.totalorder %s18, %s21
    %p30 = scmp.eq.s32.totalorder %s13, 1
    %p31 = por %p29, %p30
    %p32 = scmp.ne.s32.totalorder %s21, %s22
    %p33 = scmp.eq.s32.totalorder %s13, 0
    %p34 = por %p32, %p33
    %p35 = scmp.ne.s32.totalorder %s21, %s22
    %p36 = scmp.eq.s32.totalorder %s14, 1
    %p37 = por %p35, %p36
    %p39 = scmp.ne.s32.totalorder %s22, %s38
    %p40 = scmp.eq.s32.totalorder %s14, 0
    %p41 = por %p39, %p40
    %s43 = sadd.s32 %s42, 1
    %p46 = scmp.eq.s32.totalorder %s8, 1
    %p47 = scmp.ne.s32.totalorder %s42, %s44
    %p48 = scmp.eq.s32.totalorder %s8, 0
    %p49 = por %p47, %p48
    %p50 = scmp.ne.s32.totalorder %s42, %s44
    %p51 = scmp.eq.s32.totalorder %s13, 1
    %p52 = por %p50, %p51
    %p53 = scmp.ne.s32.totalorder %s44, %s45
    %p54 = scmp.eq.s32.totalorder %s13, 0
    %p55 = por %p53, %p54
    %p56 = scmp.ne.s32.totalorder %s44, %s45
    %p57 = scmp.eq.s32.totalorder %s14, 1
    %p58 = por %p56, %p57
    %p60 = scmp.ne.s32.totalorder %s45, %s59
    %p61 = scmp.eq.s32.totalorder %s14, 0
    %p62 = por %p60, %p61
    %s63 = ssub.s32 %s8, %s15
    %p64 = scmp.eq.s32.totalorder %s63, 0
    %s66 = sadd.s32 %s65, 1
    %s67 = scalar_select %p64, %s65, %s66
    %p70 = pneg %p64
    %p71 = scmp.eq.s32.totalorder %s8, 1
    %p72 = por %p70, %p71
    %p73 = scmp.ne.s32.totalorder %s65, %s68
    %p74 = scmp.eq.s32.totalorder %s8, 0
    %p75 = por %p73, %p74
    %p76 = scmp.ne.s32.totalorder %s65, %s68
    %p77 = scmp.eq.s32.totalorder %s13, 1
    %p78 = por %p76, %p77
    %p79 = scmp.ne.s32.totalorder %s68, %s69
    %p80 = scmp.eq.s32.totalorder %s13, 0
    %p81 = por %p79, %p80
    %p82 = scmp.ne.s32.totalorder %s68, %s69
    %p83 = scmp.eq.s32.totalorder %s14, 1
    %p84 = por %p82, %p83
    %p86 = scmp.ne.s32.totalorder %s69, %s85
    %p87 = scmp.eq.s32.totalorder %s14, 0
    %p88 = por %p86, %p87
    %p89 = scmp.le.s32.totalorder 1, %s8
    %p90 = scmp.lt.s32.totalorder %s8, 3
    %p91 = pnand %p89, %p90
    %p92 = pneg %p91
    // Predicated region
    $region9: #{multi_mri_fc_layers_forward.274} parent=5 // pred_check
      _
    $region10: #{multi_mri_fc_layers_forward.274} parent=5 // pred_check_branch
      %94 = sbr.rel (%p91) target = $region12
    $region11: #{multi_mri_fc_layers_forward.274} parent=5 // pred_region
      %s95 = ssub.s32 %s8, 1
      // Predicated region
      $region13: #{multi_mri_fc_layers_forward.274} parent=11 // pred_check
        %p96 = pneg %p55
      $region14: #{multi_mri_fc_layers_forward.274} parent=11 // pred_check_branch
        %98 = sbr.rel (%p96) target = $region16
      $region15: #{multi_mri_fc_layers_forward.274} parent=11 // pred_region
        _
      $region16: #{multi_mri_fc_layers_forward.274} parent=11 // pred_fallthru
        _
    $region12: #{multi_mri_fc_layers_forward.274} parent=5 // pred_fallthru
      _
    %p99 = scmp.lt.s32.totalorder %s8, 2
    // Predicated region
    $region17: #{multi_mri_fc_layers_forward.274} parent=5 // pred_check
      %p100 = pneg %p99
    $region18: #{multi_mri_fc_layers_forward.274} parent=5 // pred_check_branch
      %102 = sbr.rel (%p100) target = $region20
    $region19: #{multi_mri_fc_layers_forward.274} parent=5 // pred_region
      // Predicated region
      $region21: #{multi_mri_fc_layers_forward.274} parent=19 // pred_check
        %p103 = pneg %p28
      $region22: #{multi_mri_fc_layers_forward.274} parent=19 // pred_check_branch
        %105 = sbr.rel (%p103) target = $region24
      $region23: #{multi_mri_fc_layers_forward.274} parent=19 // pred_region
        %p106 = scmp.lt.s32.totalorder %s8, 1
        %s107 = scalar_select %p106, %s8, 1
        %s108 = smul.addr %s107, 6
        %s109 = smul.addr %s108, 8
        %s110 = scalar_lea.vmem %s0, %s109
      $region24: #{multi_mri_fc_layers_forward.274} parent=19 // pred_fallthru
        _
    $region20: #{multi_mri_fc_layers_forward.274} parent=5 // pred_fallthru
      _
    %p111 = scmp.le.s32.totalorder 1, %s8
    %p112 = scmp.lt.s32.totalorder %s8, 3
    %p113 = pnand %p111, %p112
    %p114 = pneg %p113
    // Predicated region
    $region25: #{multi_mri_fc_layers_forward.274} parent=5 // pred_check
      _
    $region26: #{multi_mri_fc_layers_forward.274} parent=5 // pred_check_branch
      %116 = sbr.rel (%p113) target = $region28
    $region27: #{multi_mri_fc_layers_forward.274} parent=5 // pred_region
      %s117 = ssub.s32 %s8, 1
      %p118 = scmp.lt.s32.totalorder %s13, 1
      %s119 = scalar_select %p118, %s13, 1
      %s120 = smul.addr %s119, 6
      %s121 = smul.addr %s120, 8
      %s122 = scalar_lea.vmem %s0, %s121
      %p123 = pneg %p34
      %p124 = pneg %p31
      %p125 = pneg %p55
      %p126 = pneg %p52
      %p127 = pneg %p81
      %p128 = pneg %p78
      %p129 = scmp.lt.s32.totalorder %s13, 1
      %s130 = scalar_select %p129, %s13, 1
      %s131 = smul.addr %s130, 4
      %s132 = smul.addr %s131, 4
      %s133 = scalar_lea.vmem %s2, %s132
      %p134 = scmp.lt.s32.totalorder %s13, 1
      %s135 = scalar_select %p134, %s13, 1
      %s136 = smul.addr %s135, 6
      %s137 = smul.addr %s136, 8
      %s138 = scalar_lea.vmem %s0, %s137
      %p139 = scmp.lt.s32.totalorder %s13, 1
      %s140 = scalar_select %p139, %s13, 1
      %s141 = smul.addr %s140, 4
      %s142 = smul.addr %s141, 4
      %s143 = scalar_lea.vmem %s2, %s142
      loop: start=0, step=1, limit=4
      $region29: #{multi_mri_fc_layers_forward.274} parent=27 // loop_pre_header
        _
      $region30: #{multi_mri_fc_layers_forward.274} parent=27 // loop_header
        %s145 = sphi 0, %s149
        %p146 = scmp.ge.s32.totalorder %s145, 4
      $region31: #{multi_mri_fc_layers_forward.274} parent=27 // loop_header_branch
        %148 = sbr.rel (%p146) target = $region35
      $region32: #{multi_mri_fc_layers_forward.274} parent=27 // loop_body
        %s150 = smul.u32 %s145, 8
        %s151 = scalar_lea.vmem %s138, %s150
        %v152 = vld [vmem:[%s151] sm:$0xf]
        %v153 = vld [vmem:[%s1] sm:$0xff]
        %v154 = vld [vmem:[%s1 + $0x8] sm:$0xff]
        %v155 = vld [vmem:[%s1 + $0x10] sm:$0xff]
        %v156 = vld [vmem:[%s1 + $0x18] sm:$0xff]
        %v157 = vld [vmem:[%s151 + $0x1] sm:$0xf]
        %s158 = scalar_lea.vmem %s1, 32
        %v159 = vld [vmem:[%s158] sm:$0xff]
        %v160 = vld [vmem:[%s158 + $0x8] sm:$0xff]
        %v161 = vld [vmem:[%s158 + $0x10] sm:$0xff]
        %v162 = vld [vmem:[%s158 + $0x18] sm:$0xff]
        %vm163 = vcmask 261120
        %v165 = vsel %vm163, %v157, 0
        %167 = vmatprep.subr.mxu0 0.0
        %168 = vmatpush1.msra.mxu0 %v159
        %169 = vmatprep.subr.mxu0 0.0
        %170 = vmatpush1.msra.mxu0 %v160
        %171 = vmatprep.subr.mxu0 0.0
        %172 = vmatpush1.msra.mxu0 %v161
        %173 = vmatprep.subr.mxu0 0.0
        %174 = vmatpush1.msra.mxu0 %v162
        %175 = vmatprep.subr.mxu0 0.0
        %176 = vmatpush1.msra.mxu0 0.0
        %177 = vmatprep.subr.mxu0 0.0
        %178 = vmatpush1.msra.mxu0 0.0
        %179 = vmatprep.subr.mxu0 0.0
        %180 = vmatpush1.msra.mxu0 0.0
        %181 = vmatprep.subr.mxu0 0.0
        %182 = vmatpush1.msra.mxu0 0.0
        %183 = vmatprep.subr.mxu0 0.0
        %184 = vmatpush1.msra.mxu0 0.0
        %185 = vmatprep.subr.mxu0 0.0
        %186 = vmatpush1.msra.mxu0 0.0
        %187 = vmatprep.subr.mxu0 0.0
        %188 = vmatpush1.msra.mxu0 0.0
        %189 = vmatprep.subr.mxu0 0.0
        %190 = vmatpush1.msra.mxu0 0.0
        %191 = vmatprep.subr.mxu0 0.0
        %192 = vmatpush1.msra.mxu0 0.0
        %193 = vmatprep.subr.mxu0 0.0
        %194 = vmatpush1.msra.mxu0 0.0
        %195 = vmatprep.subr.mxu0 0.0
        %196 = vmatpush1.msra.mxu0 0.0
        %197 = vmatprep.subr.mxu0 0.0
        %198 = vmatpush1.msra.mxu0 0.0
        %199 = vmatprep.subr.mxu0 0.0
        %200 = vmatpush1.msra.mxu0 0.0
        %201 = vmatprep.subr.mxu0 0.0
        %202 = vmatpush1.msra.mxu0 0.0
        %203 = vmatprep.subr.mxu0 0.0
        %204 = vmatpush1.msra.mxu0 0.0
        %205 = vmatprep.subr.mxu0 0.0
        %206 = vmatpush1.msra.mxu0 0.0
        %207 = vmatprep.subr.mxu0 0.0
        %208 = vmatpush1.msra.mxu0 0.0
        %209 = vmatprep.subr.mxu0 0.0
        %210 = vmatpush1.msra.mxu0 0.0
        %211 = vmatprep.subr.mxu0 0.0
        %212 = vmatpush1.msra.mxu0 0.0
        %213 = vmatprep.subr.mxu0 0.0
        %214 = vmatpush1.msra.mxu0 0.0
        %215 = vmatprep.subr.mxu0 0.0
        %216 = vmatpush1.msra.mxu0 0.0
        %217 = vmatprep.subr.mxu0 0.0
        %218 = vmatpush1.msra.mxu0 0.0
        %219 = vmatprep.subr.mxu0 0.0
        %220 = vmatpush1.msra.mxu0 0.0
        %221 = vmatprep.subr.mxu0 0.0
        %222 = vmatpush1.msra.mxu0 0.0
        %223 = vmatprep.subr.mxu0 0.0
        %224 = vmatpush1.msra.mxu0 0.0
        %225 = vmatprep.subr.mxu0 0.0
        %226 = vmatpush1.msra.mxu0 0.0
        %227 = vmatprep.subr.mxu0 0.0
        %228 = vmatpush1.msra.mxu0 0.0
        %229 = vmatprep.subr.mxu0 0.0
        %230 = vmatpush1.msra.mxu0 0.0
        %231 = vmatprep.mubr.f32.mxu0 0.0
        %232 = vmatmul.mubr.f32.gmra.mrb[0].mxu0 %v165
        %v233 = vpop.f32.mrb[0].mxu0
        %v234 = vadd.f32 0.0, %v233
        %v235 = vpop.f32.mrb[0].mxu0
        %236 = vdwg.mxu0
        %v238 = vsel %vm163, %v152, 0
        %240 = vmatprep.subr.mxu0 0.0
        %241 = vmatpush1.msra.mxu0 %v153
        %242 = vmatprep.subr.mxu0 0.0
        %243 = vmatpush1.msra.mxu0 %v154
        %244 = vmatprep.subr.mxu0 0.0
        %245 = vmatpush1.msra.mxu0 %v155
        %246 = vmatprep.subr.mxu0 0.0
        %247 = vmatpush1.msra.mxu0 %v156
        %248 = vmatprep.subr.mxu0 0.0
        %249 = vmatpush1.msra.mxu0 0.0
        %250 = vmatprep.subr.mxu0 0.0
        %251 = vmatpush1.msra.mxu0 0.0
        %252 = vmatprep.subr.mxu0 0.0
        %253 = vmatpush1.msra.mxu0 0.0
        %254 = vmatprep.subr.mxu0 0.0
        %255 = vmatpush1.msra.mxu0 0.0
        %256 = vmatprep.subr.mxu0 0.0
        %257 = vmatpush1.msra.mxu0 0.0
        %258 = vmatprep.subr.mxu0 0.0
        %259 = vmatpush1.msra.mxu0 0.0
        %260 = vmatprep.subr.mxu0 0.0
        %261 = vmatpush1.msra.mxu0 0.0
        %262 = vmatprep.subr.mxu0 0.0
        %263 = vmatpush1.msra.mxu0 0.0
        %264 = vmatprep.subr.mxu0 0.0
        %265 = vmatpush1.msra.mxu0 0.0
        %266 = vmatprep.subr.mxu0 0.0
        %267 = vmatpush1.msra.mxu0 0.0
        %268 = vmatprep.subr.mxu0 0.0
        %269 = vmatpush1.msra.mxu0 0.0
        %270 = vmatprep.subr.mxu0 0.0
        %271 = vmatpush1.msra.mxu0 0.0
        %272 = vmatprep.subr.mxu0 0.0
        %273 = vmatpush1.msra.mxu0 0.0
        %274 = vmatprep.subr.mxu0 0.0
        %275 = vmatpush1.msra.mxu0 0.0
        %276 = vmatprep.subr.mxu0 0.0
        %277 = vmatpush1.msra.mxu0 0.0
        %278 = vmatprep.subr.mxu0 0.0
        %279 = vmatpush1.msra.mxu0 0.0
        %280 = vmatprep.subr.mxu0 0.0
        %281 = vmatpush1.msra.mxu0 0.0
        %282 = vmatprep.subr.mxu0 0.0
        %283 = vmatpush1.msra.mxu0 0.0
        %284 = vmatprep.subr.mxu0 0.0
        %285 = vmatpush1.msra.mxu0 0.0
        %286 = vmatprep.subr.mxu0 0.0
        %287 = vmatpush1.msra.mxu0 0.0
        %288 = vmatprep.subr.mxu0 0.0
        %289 = vmatpush1.msra.mxu0 0.0
        %290 = vmatprep.subr.mxu0 0.0
        %291 = vmatpush1.msra.mxu0 0.0
        %292 = vmatprep.subr.mxu0 0.0
        %293 = vmatpush1.msra.mxu0 0.0
        %294 = vmatprep.subr.mxu0 0.0
        %295 = vmatpush1.msra.mxu0 0.0
        %296 = vmatprep.subr.mxu0 0.0
        %297 = vmatpush1.msra.mxu0 0.0
        %298 = vmatprep.subr.mxu0 0.0
        %299 = vmatpush1.msra.mxu0 0.0
        %300 = vmatprep.subr.mxu0 0.0
        %301 = vmatpush1.msra.mxu0 0.0
        %302 = vmatprep.subr.mxu0 0.0
        %303 = vmatpush1.msra.mxu0 0.0
        %304 = vmatprep.mubr.f32.mxu0 0.0
        %305 = vmatmul.mubr.f32.gmra.mrb[0].mxu0 %v238
        %v306 = vpop.f32.mrb[0].mxu0
        %v307 = vadd.f32 %v234, %v306
        %v308 = vpop.f32.mrb[0].mxu0
        %309 = vdwg.mxu0
        %v310 = vld [vmem:[%s151 + $0x2] sm:$0xf]
        %s311 = scalar_lea.vmem %s1, 64
        %v312 = vld [vmem:[%s311] sm:$0xff]
        %v313 = vld [vmem:[%s311 + $0x8] sm:$0xff]
        %v314 = vld [vmem:[%s311 + $0x10] sm:$0xff]
        %v315 = vld [vmem:[%s311 + $0x18] sm:$0xff]
        %v317 = vsel %vm163, %v310, 0
        %319 = vmatprep.subr.mxu0 0.0
        %320 = vmatpush1.msra.mxu0 %v312
        %321 = vmatprep.subr.mxu0 0.0
        %322 = vmatpush1.msra.mxu0 %v313
        %323 = vmatprep.subr.mxu0 0.0
        %324 = vmatpush1.msra.mxu0 %v314
        %325 = vmatprep.subr.mxu0 0.0
        %326 = vmatpush1.msra.mxu0 %v315
        %327 = vmatprep.subr.mxu0 0.0
        %328 = vmatpush1.msra.mxu0 0.0
        %329 = vmatprep.subr.mxu0 0.0
        %330 = vmatpush1.msra.mxu0 0.0
        %331 = vmatprep.subr.mxu0 0.0
        %332 = vmatpush1.msra.mxu0 0.0
        %333 = vmatprep.subr.mxu0 0.0
        %334 = vmatpush1.msra.mxu0 0.0
        %335 = vmatprep.subr.mxu0 0.0
        %336 = vmatpush1.msra.mxu0 0.0
        %337 = vmatprep.subr.mxu0 0.0
        %338 = vmatpush1.msra.mxu0 0.0
        %339 = vmatprep.subr.mxu0 0.0
        %340 = vmatpush1.msra.mxu0 0.0
        %341 = vmatprep.subr.mxu0 0.0
        %342 = vmatpush1.msra.mxu0 0.0
        %343 = vmatprep.subr.mxu0 0.0
        %344 = vmatpush1.msra.mxu0 0.0
        %345 = vmatprep.subr.mxu0 0.0
        %346 = vmatpush1.msra.mxu0 0.0
        %347 = vmatprep.subr.mxu0 0.0
        %348 = vmatpush1.msra.mxu0 0.0
        %349 = vmatprep.subr.mxu0 0.0
        %350 = vmatpush1.msra.mxu0 0.0
        %351 = vmatprep.subr.mxu0 0.0
        %352 = vmatpush1.msra.mxu0 0.0
        %353 = vmatprep.subr.mxu0 0.0
        %354 = vmatpush1.msra.mxu0 0.0
        %355 = vmatprep.subr.mxu0 0.0
        %356 = vmatpush1.msra.mxu0 0.0
        %357 = vmatprep.subr.mxu0 0.0
        %358 = vmatpush1.msra.mxu0 0.0
        %359 = vmatprep.subr.mxu0 0.0
        %360 = vmatpush1.msra.mxu0 0.0
        %361 = vmatprep.subr.mxu0 0.0
        %362 = vmatpush1.msra.mxu0 0.0
        %363 = vmatprep.subr.mxu0 0.0
        %364 = vmatpush1.msra.mxu0 0.0
        %365 = vmatprep.subr.mxu0 0.0
        %366 = vmatpush1.msra.mxu0 0.0
        %367 = vmatprep.subr.mxu0 0.0
        %368 = vmatpush1.msra.mxu0 0.0
        %369 = vmatprep.subr.mxu0 0.0
        %370 = vmatpush1.msra.mxu0 0.0
        %371 = vmatprep.subr.mxu0 0.0
        %372 = vmatpush1.msra.mxu0 0.0
        %373 = vmatprep.subr.mxu0 0.0
        %374 = vmatpush1.msra.mxu0 0.0
        %375 = vmatprep.subr.mxu0 0.0
        %376 = vmatpush1.msra.mxu0 0.0
        %377 = vmatprep.subr.mxu0 0.0
        %378 = vmatpush1.msra.mxu0 0.0
        %379 = vmatprep.subr.mxu0 0.0
        %380 = vmatpush1.msra.mxu0 0.0
        %381 = vmatprep.subr.mxu0 0.0
        %382 = vmatpush1.msra.mxu0 0.0
        %383 = vmatprep.mubr.f32.mxu0 0.0
        %384 = vmatmul.mubr.f32.gmra.mrb[0].mxu0 %v317
        %v385 = vpop.f32.mrb[0].mxu0
        %v386 = vadd.f32 0.0, %v385
        %v387 = vpop.f32.mrb[0].mxu0
        %388 = vdwg.mxu0
        %v389 = vadd.f32 %v307, %v386
        %s390 = sadd.s32 %s145, 1
        %s391 = smul.u32 %s390, 8
        %s392 = scalar_lea.vmem %s138, %s391
        %v393 = vld [vmem:[%s392] sm:$0xf]
        %s394 = scalar_lea.vmem %s1, 96
        %v395 = vld [vmem:[%s394] sm:$0xff]
        %v396 = vld [vmem:[%s394 + $0x8] sm:$0xff]
        %v397 = vld [vmem:[%s394 + $0x10] sm:$0xff]
        %v398 = vld [vmem:[%s394 + $0x18] sm:$0xff]
        %v400 = vsel %vm163, %v393, 0
        %402 = vmatprep.subr.mxu0 0.0
        %403 = vmatpush1.msra.mxu0 %v395
        %404 = vmatprep.subr.mxu0 0.0
        %405 = vmatpush1.msra.mxu0 %v396
        %406 = vmatprep.subr.mxu0 0.0
        %407 = vmatpush1.msra.mxu0 %v397
        %408 = vmatprep.subr.mxu0 0.0
        %409 = vmatpush1.msra.mxu0 %v398
        %410 = vmatprep.subr.mxu0 0.0
        %411 = vmatpush1.msra.mxu0 0.0
        %412 = vmatprep.subr.mxu0 0.0
        %413 = vmatpush1.msra.mxu0 0.0
        %414 = vmatprep.subr.mxu0 0.0
        %415 = vmatpush1.msra.mxu0 0.0
        %416 = vmatprep.subr.mxu0 0.0
        %417 = vmatpush1.msra.mxu0 0.0
        %418 = vmatprep.subr.mxu0 0.0
        %419 = vmatpush1.msra.mxu0 0.0
        %420 = vmatprep.subr.mxu0 0.0
        %421 = vmatpush1.msra.mxu0 0.0
        %422 = vmatprep.subr.mxu0 0.0
        %423 = vmatpush1.msra.mxu0 0.0
        %424 = vmatprep.subr.mxu0 0.0
        %425 = vmatpush1.msra.mxu0 0.0
        %426 = vmatprep.subr.mxu0 0.0
        %427 = vmatpush1.msra.mxu0 0.0
        %428 = vmatprep.subr.mxu0 0.0
        %429 = vmatpush1.msra.mxu0 0.0
        %430 = vmatprep.subr.mxu0 0.0
        %431 = vmatpush1.msra.mxu0 0.0
        %432 = vmatprep.subr.mxu0 0.0
        %433 = vmatpush1.msra.mxu0 0.0
        %434 = vmatprep.subr.mxu0 0.0
        %435 = vmatpush1.msra.mxu0 0.0
        %436 = vmatprep.subr.mxu0 0.0
        %437 = vmatpush1.msra.mxu0 0.0
        %438 = vmatprep.subr.mxu0 0.0
        %439 = vmatpush1.msra.mxu0 0.0
        %440 = vmatprep.subr.mxu0 0.0
        %441 = vmatpush1.msra.mxu0 0.0
        %442 = vmatprep.subr.mxu0 0.0
        %443 = vmatpush1.msra.mxu0 0.0
        %444 = vmatprep.subr.mxu0 0.0
        %445 = vmatpush1.msra.mxu0 0.0
        %446 = vmatprep.subr.mxu0 0.0
        %447 = vmatpush1.msra.mxu0 0.0
        %448 = vmatprep.subr.mxu0 0.0
        %449 = vmatpush1.msra.mxu0 0.0
        %450 = vmatprep.subr.mxu0 0.0
        %451 = vmatpush1.msra.mxu0 0.0
        %452 = vmatprep.subr.mxu0 0.0
        %453 = vmatpush1.msra.mxu0 0.0
        %454 = vmatprep.subr.mxu0 0.0
        %455 = vmatpush1.msra.mxu0 0.0
        %456 = vmatprep.subr.mxu0 0.0
        %457 = vmatpush1.msra.mxu0 0.0
        %458 = vmatprep.subr.mxu0 0.0
        %459 = vmatpush1.msra.mxu0 0.0
        %460 = vmatprep.subr.mxu0 0.0
        %461 = vmatpush1.msra.mxu0 0.0
        %462 = vmatprep.subr.mxu0 0.0
        %463 = vmatpush1.msra.mxu0 0.0
        %464 = vmatprep.subr.mxu0 0.0
        %465 = vmatpush1.msra.mxu0 0.0
        %466 = vmatprep.mubr.f32.mxu0 0.0
        %467 = vmatmul.mubr.f32.gmra.mrb[0].mxu0 %v400
        %v468 = vpop.f32.mrb[0].mxu0
        %v469 = vadd.f32 0.0, %v468
        %v470 = vpop.f32.mrb[0].mxu0
        %471 = vdwg.mxu0
        %v472 = vadd.f32 %v389, %v469
        %v473 = vld [vmem:[%s392 + $0x1] sm:$0xf]
        %s474 = scalar_lea.vmem %s1, 128
        %v475 = vld [vmem:[%s474] sm:$0xff]
        %v476 = vld [vmem:[%s474 + $0x8] sm:$0xff]
        %v477 = vld [vmem:[%s474 + $0x10] sm:$0xff]
        %v478 = vld [vmem:[%s474 + $0x18] sm:$0xff]
        %v480 = vsel %vm163, %v473, 0
        %482 = vmatprep.subr.mxu0 0.0
        %483 = vmatpush1.msra.mxu0 %v475
        %484 = vmatprep.subr.mxu0 0.0
        %485 = vmatpush1.msra.mxu0 %v476
        %486 = vmatprep.subr.mxu0 0.0
        %487 = vmatpush1.msra.mxu0 %v477
        %488 = vmatprep.subr.mxu0 0.0
        %489 = vmatpush1.msra.mxu0 %v478
        %490 = vmatprep.subr.mxu0 0.0
        %491 = vmatpush1.msra.mxu0 0.0
        %492 = vmatprep.subr.mxu0 0.0
        %493 = vmatpush1.msra.mxu0 0.0
        %494 = vmatprep.subr.mxu0 0.0
        %495 = vmatpush1.msra.mxu0 0.0
        %496 = vmatprep.subr.mxu0 0.0
        %497 = vmatpush1.msra.mxu0 0.0
        %498 = vmatprep.subr.mxu0 0.0
        %499 = vmatpush1.msra.mxu0 0.0
        %500 = vmatprep.subr.mxu0 0.0
        %501 = vmatpush1.msra.mxu0 0.0
        %502 = vmatprep.subr.mxu0 0.0
        %503 = vmatpush1.msra.mxu0 0.0
        %504 = vmatprep.subr.mxu0 0.0
        %505 = vmatpush1.msra.mxu0 0.0
        %506 = vmatprep.subr.mxu0 0.0
        %507 = vmatpush1.msra.mxu0 0.0
        %508 = vmatprep.subr.mxu0 0.0
        %509 = vmatpush1.msra.mxu0 0.0
        %510 = vmatprep.subr.mxu0 0.0
        %511 = vmatpush1.msra.mxu0 0.0
        %512 = vmatprep.subr.mxu0 0.0
        %513 = vmatpush1.msra.mxu0 0.0
        %514 = vmatprep.subr.mxu0 0.0
        %515 = vmatpush1.msra.mxu0 0.0
        %516 = vmatprep.subr.mxu0 0.0
        %517 = vmatpush1.msra.mxu0 0.0
        %518 = vmatprep.subr.mxu0 0.0
        %519 = vmatpush1.msra.mxu0 0.0
        %520 = vmatprep.subr.mxu0 0.0
        %521 = vmatpush1.msra.mxu0 0.0
        %522 = vmatprep.subr.mxu0 0.0
        %523 = vmatpush1.msra.mxu0 0.0
        %524 = vmatprep.subr.mxu0 0.0
        %525 = vmatpush1.msra.mxu0 0.0
        %526 = vmatprep.subr.mxu0 0.0
        %527 = vmatpush1.msra.mxu0 0.0
        %528 = vmatprep.subr.mxu0 0.0
        %529 = vmatpush1.msra.mxu0 0.0
        %530 = vmatprep.subr.mxu0 0.0
        %531 = vmatpush1.msra.mxu0 0.0
        %532 = vmatprep.subr.mxu0 0.0
        %533 = vmatpush1.msra.mxu0 0.0
        %534 = vmatprep.subr.mxu0 0.0
        %535 = vmatpush1.msra.mxu0 0.0
        %536 = vmatprep.subr.mxu0 0.0
        %537 = vmatpush1.msra.mxu0 0.0
        %538 = vmatprep.subr.mxu0 0.0
        %539 = vmatpush1.msra.mxu0 0.0
        %540 = vmatprep.subr.mxu0 0.0
        %541 = vmatpush1.msra.mxu0 0.0
        %542 = vmatprep.subr.mxu0 0.0
        %543 = vmatpush1.msra.mxu0 0.0
        %544 = vmatprep.subr.mxu0 0.0
        %545 = vmatpush1.msra.mxu0 0.0
        %546 = vmatprep.mubr.f32.mxu0 0.0
        %547 = vmatmul.mubr.f32.gmra.mrb[0].mxu0 %v480
        %v548 = vpop.f32.mrb[0].mxu0
        %v549 = vadd.f32 0.0, %v548
        %v550 = vpop.f32.mrb[0].mxu0
        %551 = vdwg.mxu0
        %v552 = vadd.f32 %v472, %v549
        %v553 = vld [vmem:[%s392 + $0x2] sm:$0xf]
        %s554 = scalar_lea.vmem %s1, 160
        %v555 = vld [vmem:[%s554] sm:$0xff]
        %v556 = vld [vmem:[%s554 + $0x8] sm:$0xff]
        %v557 = vld [vmem:[%s554 + $0x10] sm:$0xff]
        %v558 = vld [vmem:[%s554 + $0x18] sm:$0xff]
        %v560 = vsel %vm163, %v553, 0
        %562 = vmatprep.subr.mxu0 0.0
        %563 = vmatpush1.msra.mxu0 %v555
        %564 = vmatprep.subr.mxu0 0.0
        %565 = vmatpush1.msra.mxu0 %v556
        %566 = vmatprep.subr.mxu0 0.0
        %567 = vmatpush1.msra.mxu0 %v557
        %568 = vmatprep.subr.mxu0 0.0
        %569 = vmatpush1.msra.mxu0 %v558
        %570 = vmatprep.subr.mxu0 0.0
        %571 = vmatpush1.msra.mxu0 0.0
        %572 = vmatprep.subr.mxu0 0.0
        %573 = vmatpush1.msra.mxu0 0.0
        %574 = vmatprep.subr.mxu0 0.0
        %575 = vmatpush1.msra.mxu0 0.0
        %576 = vmatprep.subr.mxu0 0.0
        %577 = vmatpush1.msra.mxu0 0.0
        %578 = vmatprep.subr.mxu0 0.0
        %579 = vmatpush1.msra.mxu0 0.0
        %580 = vmatprep.subr.mxu0 0.0
        %581 = vmatpush1.msra.mxu0 0.0
        %582 = vmatprep.subr.mxu0 0.0
        %583 = vmatpush1.msra.mxu0 0.0
        %584 = vmatprep.subr.mxu0 0.0
        %585 = vmatpush1.msra.mxu0 0.0
        %586 = vmatprep.subr.mxu0 0.0
        %587 = vmatpush1.msra.mxu0 0.0
        %588 = vmatprep.subr.mxu0 0.0
        %589 = vmatpush1.msra.mxu0 0.0
        %590 = vmatprep.subr.mxu0 0.0
        %591 = vmatpush1.msra.mxu0 0.0
        %592 = vmatprep.subr.mxu0 0.0
        %593 = vmatpush1.msra.mxu0 0.0
        %594 = vmatprep.subr.mxu0 0.0
        %595 = vmatpush1.msra.mxu0 0.0
        %596 = vmatprep.subr.mxu0 0.0
        %597 = vmatpush1.msra.mxu0 0.0
        %598 = vmatprep.subr.mxu0 0.0
        %599 = vmatpush1.msra.mxu0 0.0
        %600 = vmatprep.subr.mxu0 0.0
        %601 = vmatpush1.msra.mxu0 0.0
        %602 = vmatprep.subr.mxu0 0.0
        %603 = vmatpush1.msra.mxu0 0.0
        %604 = vmatprep.subr.mxu0 0.0
        %605 = vmatpush1.msra.mxu0 0.0
        %606 = vmatprep.subr.mxu0 0.0
        %607 = vmatpush1.msra.mxu0 0.0
        %608 = vmatprep.subr.mxu0 0.0
        %609 = vmatpush1.msra.mxu0 0.0
        %610 = vmatprep.subr.mxu0 0.0
        %611 = vmatpush1.msra.mxu0 0.0
        %612 = vmatprep.subr.mxu0 0.0
        %613 = vmatpush1.msra.mxu0 0.0
        %614 = vmatprep.subr.mxu0 0.0
        %615 = vmatpush1.msra.mxu0 0.0
        %616 = vmatprep.subr.mxu0 0.0
        %617 = vmatpush1.msra.mxu0 0.0
        %618 = vmatprep.subr.mxu0 0.0
        %619 = vmatpush1.msra.mxu0 0.0
        %620 = vmatprep.subr.mxu0 0.0
        %621 = vmatpush1.msra.mxu0 0.0
        %622 = vmatprep.subr.mxu0 0.0
        %623 = vmatpush1.msra.mxu0 0.0
        %624 = vmatprep.subr.mxu0 0.0
        %625 = vmatpush1.msra.mxu0 0.0
        %626 = vmatprep.mubr.f32.mxu0 0.0
        %627 = vmatmul.mubr.f32.gmra.mrb[0].mxu0 %v560
        %v628 = vpop.f32.mrb[0].mxu0
        %v629 = vadd.f32 0.0, %v628
        %v630 = vpop.f32.mrb[0].mxu0
        %631 = vdwg.mxu0
        %v632 = vadd.f32 %v552, %v629
        %s633 = sadd.s32 %s145, 2
        %s634 = smul.u32 %s633, 8
        %s635 = scalar_lea.vmem %s138, %s634
        %v636 = vld [vmem:[%s635] sm:$0xf]
        %s637 = scalar_lea.vmem %s1, 192
        %v638 = vld [vmem:[%s637] sm:$0xff]
        %v639 = vld [vmem:[%s637 + $0x8] sm:$0xff]
        %v640 = vld [vmem:[%s637 + $0x10] sm:$0xff]
        %v641 = vld [vmem:[%s637 + $0x18] sm:$0xff]
        %v643 = vsel %vm163, %v636, 0
        %645 = vmatprep.subr.mxu0 0.0
        %646 = vmatpush1.msra.mxu0 %v638
        %647 = vmatprep.subr.mxu0 0.0
        %648 = vmatpush1.msra.mxu0 %v639
        %649 = vmatprep.subr.mxu0 0.0
        %650 = vmatpush1.msra.mxu0 %v640
        %651 = vmatprep.subr.mxu0 0.0
        %652 = vmatpush1.msra.mxu0 %v641
        %653 = vmatprep.subr.mxu0 0.0
        %654 = vmatpush1.msra.mxu0 0.0
        %655 = vmatprep.subr.mxu0 0.0
        %656 = vmatpush1.msra.mxu0 0.0
        %657 = vmatprep.subr.mxu0 0.0
        %658 = vmatpush1.msra.mxu0 0.0
        %659 = vmatprep.subr.mxu0 0.0
        %660 = vmatpush1.msra.mxu0 0.0
        %661 = vmatprep.subr.mxu0 0.0
        %662 = vmatpush1.msra.mxu0 0.0
        %663 = vmatprep.subr.mxu0 0.0
        %664 = vmatpush1.msra.mxu0 0.0
        %665 = vmatprep.subr.mxu0 0.0
        %666 = vmatpush1.msra.mxu0 0.0
        %667 = vmatprep.subr.mxu0 0.0
        %668 = vmatpush1.msra.mxu0 0.0
        %669 = vmatprep.subr.mxu0 0.0
        %670 = vmatpush1.msra.mxu0 0.0
        %671 = vmatprep.subr.mxu0 0.0
        %672 = vmatpush1.msra.mxu0 0.0
        %673 = vmatprep.subr.mxu0 0.0
        %674 = vmatpush1.msra.mxu0 0.0
        %675 = vmatprep.subr.mxu0 0.0
        %676 = vmatpush1.msra.mxu0 0.0
        %677 = vmatprep.subr.mxu0 0.0
        %678 = vmatpush1.msra.mxu0 0.0
        %679 = vmatprep.subr.mxu0 0.0
        %680 = vmatpush1.msra.mxu0 0.0
        %681 = vmatprep.subr.mxu0 0.0
        %682 = vmatpush1.msra.mxu0 0.0
        %683 = vmatprep.subr.mxu0 0.0
        %684 = vmatpush1.msra.mxu0 0.0
        %685 = vmatprep.subr.mxu0 0.0
        %686 = vmatpush1.msra.mxu0 0.0
        %687 = vmatprep.subr.mxu0 0.0
        %688 = vmatpush1.msra.mxu0 0.0
        %689 = vmatprep.subr.mxu0 0.0
        %690 = vmatpush1.msra.mxu0 0.0
        %691 = vmatprep.subr.mxu0 0.0
        %692 = vmatpush1.msra.mxu0 0.0
        %693 = vmatprep.subr.mxu0 0.0
        %694 = vmatpush1.msra.mxu0 0.0
        %695 = vmatprep.subr.mxu0 0.0
        %696 = vmatpush1.msra.mxu0 0.0
        %697 = vmatprep.subr.mxu0 0.0
        %698 = vmatpush1.msra.mxu0 0.0
        %699 = vmatprep.subr.mxu0 0.0
        %700 = vmatpush1.msra.mxu0 0.0
        %701 = vmatprep.subr.mxu0 0.0
        %702 = vmatpush1.msra.mxu0 0.0
        %703 = vmatprep.subr.mxu0 0.0
        %704 = vmatpush1.msra.mxu0 0.0
        %705 = vmatprep.subr.mxu0 0.0
        %706 = vmatpush1.msra.mxu0 0.0
        %707 = vmatprep.subr.mxu0 0.0
        %708 = vmatpush1.msra.mxu0 0.0
        %709 = vmatprep.mubr.f32.mxu0 0.0
        %710 = vmatmul.mubr.f32.gmra.mrb[0].mxu0 %v643
        %v711 = vpop.f32.mrb[0].mxu0
        %v712 = vadd.f32 0.0, %v711
        %v713 = vpop.f32.mrb[0].mxu0
        %714 = vdwg.mxu0
        %v715 = vadd.f32 %v632, %v712
        %v716 = vld [vmem:[%s635 + $0x1] sm:$0xf]
        %s717 = scalar_lea.vmem %s1, 224
        %v718 = vld [vmem:[%s717] sm:$0xff]
        %v719 = vld [vmem:[%s717 + $0x8] sm:$0xff]
        %v720 = vld [vmem:[%s717 + $0x10] sm:$0xff]
        %v721 = vld [vmem:[%s717 + $0x18] sm:$0xff]
        %v723 = vsel %vm163, %v716, 0
        %725 = vmatprep.subr.mxu0 0.0
        %726 = vmatpush1.msra.mxu0 %v718
        %727 = vmatprep.subr.mxu0 0.0
        %728 = vmatpush1.msra.mxu0 %v719
        %729 = vmatprep.subr.mxu0 0.0
        %730 = vmatpush1.msra.mxu0 %v720
        %731 = vmatprep.subr.mxu0 0.0
        %732 = vmatpush1.msra.mxu0 %v721
        %733 = vmatprep.subr.mxu0 0.0
        %734 = vmatpush1.msra.mxu0 0.0
        %735 = vmatprep.subr.mxu0 0.0
        %736 = vmatpush1.msra.mxu0 0.0
        %737 = vmatprep.subr.mxu0 0.0
        %738 = vmatpush1.msra.mxu0 0.0
        %739 = vmatprep.subr.mxu0 0.0
        %740 = vmatpush1.msra.mxu0 0.0
        %741 = vmatprep.subr.mxu0 0.0
        %742 = vmatpush1.msra.mxu0 0.0
        %743 = vmatprep.subr.mxu0 0.0
        %744 = vmatpush1.msra.mxu0 0.0
        %745 = vmatprep.subr.mxu0 0.0
        %746 = vmatpush1.msra.mxu0 0.0
        %747 = vmatprep.subr.mxu0 0.0
        %748 = vmatpush1.msra.mxu0 0.0
        %749 = vmatprep.subr.mxu0 0.0
        %750 = vmatpush1.msra.mxu0 0.0
        %751 = vmatprep.subr.mxu0 0.0
        %752 = vmatpush1.msra.mxu0 0.0
        %753 = vmatprep.subr.mxu0 0.0
        %754 = vmatpush1.msra.mxu0 0.0
        %755 = vmatprep.subr.mxu0 0.0
        %756 = vmatpush1.msra.mxu0 0.0
        %757 = vmatprep.subr.mxu0 0.0
        %758 = vmatpush1.msra.mxu0 0.0
        %759 = vmatprep.subr.mxu0 0.0
        %760 = vmatpush1.msra.mxu0 0.0
        %761 = vmatprep.subr.mxu0 0.0
        %762 = vmatpush1.msra.mxu0 0.0
        %763 = vmatprep.subr.mxu0 0.0
        %764 = vmatpush1.msra.mxu0 0.0
        %765 = vmatprep.subr.mxu0 0.0
        %766 = vmatpush1.msra.mxu0 0.0
        %767 = vmatprep.subr.mxu0 0.0
        %768 = vmatpush1.msra.mxu0 0.0
        %769 = vmatprep.subr.mxu0 0.0
        %770 = vmatpush1.msra.mxu0 0.0
        %771 = vmatprep.subr.mxu0 0.0
        %772 = vmatpush1.msra.mxu0 0.0
        %773 = vmatprep.subr.mxu0 0.0
        %774 = vmatpush1.msra.mxu0 0.0
        %775 = vmatprep.subr.mxu0 0.0
        %776 = vmatpush1.msra.mxu0 0.0
        %777 = vmatprep.subr.mxu0 0.0
        %778 = vmatpush1.msra.mxu0 0.0
        %779 = vmatprep.subr.mxu0 0.0
        %780 = vmatpush1.msra.mxu0 0.0
        %781 = vmatprep.subr.mxu0 0.0
        %782 = vmatpush1.msra.mxu0 0.0
        %783 = vmatprep.subr.mxu0 0.0
        %784 = vmatpush1.msra.mxu0 0.0
        %785 = vmatprep.subr.mxu0 0.0
        %786 = vmatpush1.msra.mxu0 0.0
        %787 = vmatprep.subr.mxu0 0.0
        %788 = vmatpush1.msra.mxu0 0.0
        %789 = vmatprep.mubr.f32.mxu0 0.0
        %790 = vmatmul.mubr.f32.gmra.mrb[0].mxu0 %v723
        %v791 = vpop.f32.mrb[0].mxu0
        %v792 = vadd.f32 0.0, %v791
        %v793 = vpop.f32.mrb[0].mxu0
        %794 = vdwg.mxu0
        %v795 = vadd.f32 %v715, %v792
        %v796 = vld [vmem:[%s635 + $0x2] sm:$0xf]
        %s797 = scalar_lea.vmem %s1, 256
        %v798 = vld [vmem:[%s797] sm:$0xff]
        %v799 = vld [vmem:[%s797 + $0x8] sm:$0xff]
        %v800 = vld [vmem:[%s797 + $0x10] sm:$0xff]
        %v801 = vld [vmem:[%s797 + $0x18] sm:$0xff]
        %v803 = vsel %vm163, %v796, 0
        %805 = vmatprep.subr.mxu0 0.0
        %806 = vmatpush1.msra.mxu0 %v798
        %807 = vmatprep.subr.mxu0 0.0
        %808 = vmatpush1.msra.mxu0 %v799
        %809 = vmatprep.subr.mxu0 0.0
        %810 = vmatpush1.msra.mxu0 %v800
        %811 = vmatprep.subr.mxu0 0.0
        %812 = vmatpush1.msra.mxu0 %v801
        %813 = vmatprep.subr.mxu0 0.0
        %814 = vmatpush1.msra.mxu0 0.0
        %815 = vmatprep.subr.mxu0 0.0
        %816 = vmatpush1.msra.mxu0 0.0
        %817 = vmatprep.subr.mxu0 0.0
        %818 = vmatpush1.msra.mxu0 0.0
        %819 = vmatprep.subr.mxu0 0.0
        %820 = vmatpush1.msra.mxu0 0.0
        %821 = vmatprep.subr.mxu0 0.0
        %822 = vmatpush1.msra.mxu0 0.0
        %823 = vmatprep.subr.mxu0 0.0
        %824 = vmatpush1.msra.mxu0 0.0
        %825 = vmatprep.subr.mxu0 0.0
        %826 = vmatpush1.msra.mxu0 0.0
        %827 = vmatprep.subr.mxu0 0.0
        %828 = vmatpush1.msra.mxu0 0.0
        %829 = vmatprep.subr.mxu0 0.0
        %830 = vmatpush1.msra.mxu0 0.0
        %831 = vmatprep.subr.mxu0 0.0
        %832 = vmatpush1.msra.mxu0 0.0
        %833 = vmatprep.subr.mxu0 0.0
        %834 = vmatpush1.msra.mxu0 0.0
        %835 = vmatprep.subr.mxu0 0.0
        %836 = vmatpush1.msra.mxu0 0.0
        %837 = vmatprep.subr.mxu0 0.0
        %838 = vmatpush1.msra.mxu0 0.0
        %839 = vmatprep.subr.mxu0 0.0
        %840 = vmatpush1.msra.mxu0 0.0
        %841 = vmatprep.subr.mxu0 0.0
        %842 = vmatpush1.msra.mxu0 0.0
        %843 = vmatprep.subr.mxu0 0.0
        %844 = vmatpush1.msra.mxu0 0.0
        %845 = vmatprep.subr.mxu0 0.0
        %846 = vmatpush1.msra.mxu0 0.0
        %847 = vmatprep.subr.mxu0 0.0
        %848 = vmatpush1.msra.mxu0 0.0
        %849 = vmatprep.subr.mxu0 0.0
        %850 = vmatpush1.msra.mxu0 0.0
        %851 = vmatprep.subr.mxu0 0.0
        %852 = vmatpush1.msra.mxu0 0.0
        %853 = vmatprep.subr.mxu0 0.0
        %854 = vmatpush1.msra.mxu0 0.0
        %855 = vmatprep.subr.mxu0 0.0
        %856 = vmatpush1.msra.mxu0 0.0
        %857 = vmatprep.subr.mxu0 0.0
        %858 = vmatpush1.msra.mxu0 0.0
        %859 = vmatprep.subr.mxu0 0.0
        %860 = vmatpush1.msra.mxu0 0.0
        %861 = vmatprep.subr.mxu0 0.0
        %862 = vmatpush1.msra.mxu0 0.0
        %863 = vmatprep.subr.mxu0 0.0
        %864 = vmatpush1.msra.mxu0 0.0
        %865 = vmatprep.subr.mxu0 0.0
        %866 = vmatpush1.msra.mxu0 0.0
        %867 = vmatprep.subr.mxu0 0.0
        %868 = vmatpush1.msra.mxu0 0.0
        %869 = vmatprep.mubr.f32.mxu0 0.0
        %870 = vmatmul.mubr.f32.gmra.mrb[0].mxu0 %v803
        %v871 = vpop.f32.mrb[0].mxu0
        %v872 = vadd.f32 0.0, %v871
        %v873 = vpop.f32.mrb[0].mxu0
        %874 = vdwg.mxu0
        %v875 = vadd.f32 %v795, %v872
        %s876 = smul.u32 %s145, 4
        %s877 = scalar_lea.vmem %s143, %s876
        %vm878 = vcmask 60416
        %879 = vst.msk [vmem:[%s877] sm:$0xf] %vm878, %v875
      $region33: #{multi_mri_fc_layers_forward.274} parent=27 // loop_footer
        %s149 = sadd.s32 1, %s145
      $region34: #{multi_mri_fc_layers_forward.274} parent=27 // loop_footer_branch
        %144 = sbr.rel target = $region30
      $region35: #{multi_mri_fc_layers_forward.274} parent=27 // loop_exit
        _
      %p880 = scmp.lt.s32.totalorder %s13, 1
      %s881 = scalar_select %p880, %s13, 1
      %s882 = smul.addr %s881, 4
      %s883 = smul.addr %s882, 4
      %s884 = scalar_lea.vmem %s2, %s883
      // Predicated region
      $region36: #{multi_mri_fc_layers_forward.274} parent=27 // pred_check
        %p885 = pneg %p78
      $region37: #{multi_mri_fc_layers_forward.274} parent=27 // pred_check_branch
        %887 = sbr.rel (%p885) target = $region39
      $region38: #{multi_mri_fc_layers_forward.274} parent=27 // pred_region
        _
      $region39: #{multi_mri_fc_layers_forward.274} parent=27 // pred_fallthru
        _
    $region28: #{multi_mri_fc_layers_forward.274} parent=5 // pred_fallthru
      _
    %p888 = scmp.le.s32.totalorder 2, %s8
    // Predicated region
    $region40: #{multi_mri_fc_layers_forward.274} parent=5 // pred_check
      %p889 = pneg %p888
    $region41: #{multi_mri_fc_layers_forward.274} parent=5 // pred_check_branch
      %891 = sbr.rel (%p889) target = $region43
    $region42: #{multi_mri_fc_layers_forward.274} parent=5 // pred_region
      %s892 = ssub.s32 %s8, 2
      // Predicated region
      $region44: #{multi_mri_fc_layers_forward.274} parent=42 // pred_check
        %p893 = pneg %p84
      $region45: #{multi_mri_fc_layers_forward.274} parent=42 // pred_check_branch
        %895 = sbr.rel (%p893) target = $region47
      $region46: #{multi_mri_fc_layers_forward.274} parent=42 // pred_region
        %p896 = scmp.lt.s32.totalorder %s14, 1
        %s897 = scalar_select %p896, %s14, 1
        %s898 = smul.addr %s897, 4
        %s899 = smul.addr %s898, 4
        %s900 = scalar_lea.vmem %s2, %s899
      $region47: #{multi_mri_fc_layers_forward.274} parent=42 // pred_fallthru
        _
    $region43: #{multi_mri_fc_layers_forward.274} parent=5 // pred_fallthru
      _
  $region6: #{multi_mri_fc_layers_forward.274} parent=0 // loop_footer
    %s12 = sadd.s32 1, %s8
  $region7: #{multi_mri_fc_layers_forward.274} parent=0 // loop_footer_branch
    %7 = sbr.rel target = $region3
  $region8: #{multi_mri_fc_layers_forward.274} parent=0 // loop_exit
    _

// kernel: multi_mri_fc_layers_forward.275
$region0: #{multi_mri_fc_layers_forward.275}
  #allocation0 [shape = 'u32[]', space=smem, size = 0x4, offset = 0x4, fixed_abs, tag = 'smem constant byte address 0x4 - core index']
  #allocation1 [shape = 'u32[144,128]{1,0:T(1,128)}', space=vmem, size = 0x12000, scoped, tag = 'internal scratch']
  %s0 = inlined_call_operand.vmem [shape: f32[32,24], index: 0, kind: input, shape index: {}]
  %s1 = inlined_call_operand.vmem [shape: f32[24,32], index: 1, kind: input, shape index: {}]
  %s2 = inlined_call_operand.vmem [shape: f32[1,24], index: 2, kind: input, shape index: {}]
  %s3 = inlined_call_operand.vmem [shape: f32[1,24], index: 3, kind: input, shape index: {}]
  %s4 = inlined_call_operand.vmem [shape: f32[1,32], index: 4, kind: input, shape index: {}]
  %s5 = inlined_call_operand.vmem [shape: f32[1,32], index: 5, kind: input, shape index: {}]
  %s6 = inlined_call_operand.vmem [shape: f32[32,32], index: 6, kind: output, shape index: {}]
  %s7 = sld [smem:[#allocation0]]
  $region34: #{multi_mri_fc_layers_forward.275} parent=0
    _
  %s9 = ssub.s32 1, %s7
  %s10 = scalar_select 0, %s9, %s7
  // Predicated region
  $region2: #{multi_mri_fc_layers_forward.275} parent=0 // pred_check
    _
  $region3: #{multi_mri_fc_layers_forward.275} parent=0 // pred_check_branch
    %12 = sbr.rel (0) target = $region5
  $region4: #{multi_mri_fc_layers_forward.275} parent=0 // pred_region
    _
  $region5: #{multi_mri_fc_layers_forward.275} parent=0 // pred_fallthru
    _
  // Predicated region
  $region6: #{multi_mri_fc_layers_forward.275} parent=0 // pred_check
    _
  $region7: #{multi_mri_fc_layers_forward.275} parent=0 // pred_check_branch
    %14 = sbr.rel (0) target = $region9
  $region8: #{multi_mri_fc_layers_forward.275} parent=0 // pred_region
    _
  $region9: #{multi_mri_fc_layers_forward.275} parent=0 // pred_fallthru
    _
  // Predicated region
  $region10: #{multi_mri_fc_layers_forward.275} parent=0 // pred_check
    _
  $region11: #{multi_mri_fc_layers_forward.275} parent=0 // pred_check_branch
    %16 = sbr.rel (0) target = $region13
  $region12: #{multi_mri_fc_layers_forward.275} parent=0 // pred_region
    _
  $region13: #{multi_mri_fc_layers_forward.275} parent=0 // pred_fallthru
    _
  // Predicated region
  $region14: #{multi_mri_fc_layers_forward.275} parent=0 // pred_check
    _
  $region15: #{multi_mri_fc_layers_forward.275} parent=0 // pred_check_branch
    %18 = sbr.rel (0) target = $region17
  $region16: #{multi_mri_fc_layers_forward.275} parent=0 // pred_region
    _
  $region17: #{multi_mri_fc_layers_forward.275} parent=0 // pred_fallthru
    _
  // Predicated region
  $region18: #{multi_mri_fc_layers_forward.275} parent=0 // pred_check
    _
  $region19: #{multi_mri_fc_layers_forward.275} parent=0 // pred_check_branch
    %20 = sbr.rel (0) target = $region21
  $region20: #{multi_mri_fc_layers_forward.275} parent=0 // pred_region
    _
  $region21: #{multi_mri_fc_layers_forward.275} parent=0 // pred_fallthru
    _
  // Predicated region
  $region22: #{multi_mri_fc_layers_forward.275} parent=0 // pred_check
    _
  $region23: #{multi_mri_fc_layers_forward.275} parent=0 // pred_check_branch
    %22 = sbr.rel (0) target = $region25
  $region24: #{multi_mri_fc_layers_forward.275} parent=0 // pred_region
    _
  $region25: #{multi_mri_fc_layers_forward.275} parent=0 // pred_fallthru
    _
  %v23 = vld [vmem:[%s0] sm:$0xff]
  %v24 = vld [vmem:[%s0 + $0x8] sm:$0xff]
  %v25 = vld [vmem:[%s0 + $0x10] sm:$0xff]
  %v26 = vld [vmem:[%s0 + $0x18] sm:$0xff]
  %v27 = vld [vmem:[%s2] sm:$0x1]
  %v29 = vlaneseq
  %v30 = vshrl.u32 %v29, 7
  %v31 = vsub.s32 0, %v30
  %v32 = vrot.slane %v27, %v31
  %v34 = vmul.f32 %v23, %v32
  %v35 = vmul.f32 %v24, %v32
  %v36 = vmul.f32 %v25, %v32
  %v37 = vmul.f32 %v26, %v32
  %v38 = vld [vmem:[%s3] sm:$0x1]
  %v40 = vlaneseq
  %v41 = vshrl.u32 %v40, 7
  %v42 = vsub.s32 0, %v41
  %v43 = vrot.slane %v38, %v42
  %v45 = vadd.f32 %v34, %v43
  %v46 = vadd.f32 %v35, %v43
  %v47 = vadd.f32 %v36, %v43
  %v48 = vadd.f32 %v37, %v43
  %v49 = vmax.f32 %v45, 0.0
  %v50 = vmax.f32 %v46, 0.0
  %v51 = vmax.f32 %v47, 0.0
  %v52 = vmax.f32 %v48, 0.0
  %v53 = vld [vmem:[%s1] sm:$0xff]
  %v54 = vld [vmem:[%s1 + $0x8] sm:$0xff]
  %v55 = vld [vmem:[%s1 + $0x10] sm:$0xff]
  %vm56 = vcmask 195584
  %v58 = vsel %vm56, %v49, 0
  %v61 = vsel %vm56, %v50, 0
  %v64 = vsel %vm56, %v51, 0
  %v67 = vsel %vm56, %v52, 0
  %69 = vmatprep.subr.mxu0 0.0
  %70 = vmatpush1.msra.mxu0 %v53
  %71 = vmatprep.subr.mxu0 0.0
  %72 = vmatpush1.msra.mxu0 %v54
  %73 = vmatprep.subr.mxu0 0.0
  %74 = vmatpush1.msra.mxu0 %v55
  %75 = vmatprep.subr.mxu0 0.0
  %76 = vmatpush1.msra.mxu0 0.0
  %77 = vmatprep.subr.mxu0 0.0
  %78 = vmatpush1.msra.mxu0 0.0
  %79 = vmatprep.subr.mxu0 0.0
  %80 = vmatpush1.msra.mxu0 0.0
  %81 = vmatprep.subr.mxu0 0.0
  %82 = vmatpush1.msra.mxu0 0.0
  %83 = vmatprep.subr.mxu0 0.0
  %84 = vmatpush1.msra.mxu0 0.0
  %85 = vmatprep.subr.mxu0 0.0
  %86 = vmatpush1.msra.mxu0 0.0
  %87 = vmatprep.subr.mxu0 0.0
  %88 = vmatpush1.msra.mxu0 0.0
  %89 = vmatprep.subr.mxu0 0.0
  %90 = vmatpush1.msra.mxu0 0.0
  %91 = vmatprep.subr.mxu0 0.0
  %92 = vmatpush1.msra.mxu0 0.0
  %93 = vmatprep.subr.mxu0 0.0
  %94 = vmatpush1.msra.mxu0 0.0
  %95 = vmatprep.subr.mxu0 0.0
  %96 = vmatpush1.msra.mxu0 0.0
  %97 = vmatprep.subr.mxu0 0.0
  %98 = vmatpush1.msra.mxu0 0.0
  %99 = vmatprep.subr.mxu0 0.0
  %100 = vmatpush1.msra.mxu0 0.0
  %101 = vmatprep.subr.mxu0 0.0
  %102 = vmatpush1.msra.mxu0 0.0
  %103 = vmatprep.subr.mxu0 0.0
  %104 = vmatpush1.msra.mxu0 0.0
  %105 = vmatprep.subr.mxu0 0.0
  %106 = vmatpush1.msra.mxu0 0.0
  %107 = vmatprep.subr.mxu0 0.0
  %108 = vmatpush1.msra.mxu0 0.0
  %109 = vmatprep.subr.mxu0 0.0
  %110 = vmatpush1.msra.mxu0 0.0
  %111 = vmatprep.subr.mxu0 0.0
  %112 = vmatpush1.msra.mxu0 0.0
  %113 = vmatprep.subr.mxu0 0.0
  %114 = vmatpush1.msra.mxu0 0.0
  %115 = vmatprep.subr.mxu0 0.0
  %116 = vmatpush1.msra.mxu0 0.0
  %117 = vmatprep.subr.mxu0 0.0
  %118 = vmatpush1.msra.mxu0 0.0
  %119 = vmatprep.subr.mxu0 0.0
  %120 = vmatpush1.msra.mxu0 0.0
  %121 = vmatprep.subr.mxu0 0.0
  %122 = vmatpush1.msra.mxu0 0.0
  %123 = vmatprep.subr.mxu0 0.0
  %124 = vmatpush1.msra.mxu0 0.0
  %125 = vmatprep.subr.mxu0 0.0
  %126 = vmatpush1.msra.mxu0 0.0
  %127 = vmatprep.subr.mxu0 0.0
  %128 = vmatpush1.msra.mxu0 0.0
  %129 = vmatprep.subr.mxu0 0.0
  %130 = vmatpush1.msra.mxu0 0.0
  %131 = vmatprep.subr.mxu0 0.0
  %132 = vmatpush1.msra.mxu0 0.0
  %133 = vmatprep.mubr.f32.mxu0 0.0
  %134 = vmatmul.mubr.f32.gmra.mrb[0].mxu0 %v58
  %v135 = vpop.f32.mrb[0].mxu0
  %v136 = vadd.f32 0.0, %v135
  %v137 = vpop.f32.mrb[0].mxu0
  %138 = vmatprep.mubr.f32.mxu0 0.0
  %139 = vmatmul.mubr.f32.gmra.mrb[0].mxu0 %v61
  %v140 = vpop.f32.mrb[0].mxu0
  %v141 = vadd.f32 0.0, %v140
  %v142 = vpop.f32.mrb[0].mxu0
  %143 = vmatprep.mubr.f32.mxu0 0.0
  %144 = vmatmul.mubr.f32.gmra.mrb[0].mxu0 %v64
  %v145 = vpop.f32.mrb[0].mxu0
  %v146 = vadd.f32 0.0, %v145
  %v147 = vpop.f32.mrb[0].mxu0
  %148 = vmatprep.mubr.f32.mxu0 0.0
  %149 = vmatmul.mubr.f32.gmra.mrb[0].mxu0 %v67
  %v150 = vpop.f32.mrb[0].mxu0
  %v151 = vadd.f32 0.0, %v150
  %v152 = vpop.f32.mrb[0].mxu0
  %153 = vdwg.mxu0
  %v154 = vld [vmem:[%s4] sm:$0x1]
  %v156 = vlaneseq
  %v157 = vshrl.u32 %v156, 7
  %v158 = vsub.s32 0, %v157
  %v159 = vrot.slane %v154, %v158
  %v161 = vmul.f32 %v136, %v159
  %v162 = vmul.f32 %v141, %v159
  %v163 = vmul.f32 %v146, %v159
  %v164 = vmul.f32 %v151, %v159
  %v165 = vld [vmem:[%s5] sm:$0x1]
  %v167 = vlaneseq
  %v168 = vshrl.u32 %v167, 7
  %v169 = vsub.s32 0, %v168
  %v170 = vrot.slane %v165, %v169
  %v172 = vadd.f32 %v161, %v170
  %v173 = vadd.f32 %v162, %v170
  %v174 = vadd.f32 %v163, %v170
  %v175 = vadd.f32 %v164, %v170
  %v176 = vmax.f32 %v172, 0.0
  %v177 = vmax.f32 %v173, 0.0
  %v178 = vmax.f32 %v174, 0.0
  %v179 = vmax.f32 %v175, 0.0
  %vm180 = vcmask 261120
  %181 = vst.msk [vmem:[%s6] sm:$0xff] %vm180, %v176
  %182 = vst.msk [vmem:[%s6 + $0x8] sm:$0xff] %vm180, %v177
  %183 = vst.msk [vmem:[%s6 + $0x10] sm:$0xff] %vm180, %v178
  %184 = vst.msk [vmem:[%s6 + $0x18] sm:$0xff] %vm180, %v179
  // Predicated region
  $region26: #{multi_mri_fc_layers_forward.275} parent=0 // pred_check
    _
  $region27: #{multi_mri_fc_layers_forward.275} parent=0 // pred_check_branch
    %186 = sbr.rel (0) target = $region29
  $region28: #{multi_mri_fc_layers_forward.275} parent=0 // pred_region
    _
  $region29: #{multi_mri_fc_layers_forward.275} parent=0 // pred_fallthru
    _
  // Predicated region
  $region30: #{multi_mri_fc_layers_forward.275} parent=0 // pred_check
    _
  $region31: #{multi_mri_fc_layers_forward.275} parent=0 // pred_check_branch
    %188 = sbr.rel (0) target = $region33
  $region32: #{multi_mri_fc_layers_forward.275} parent=0 // pred_region
    _
  $region33: #{multi_mri_fc_layers_forward.275} parent=0 // pred_fallthru
    _

// kernel: multi_mri_fc_layers_forward.278
$region0: #{multi_mri_fc_layers_forward.278}
  #allocation0 [shape = 'u32[]', space=smem, size = 0x4, offset = 0x4, fixed_abs, tag = 'smem constant byte address 0x4 - core index']
  #allocation1 [shape = 'u32[144,128]{1,0:T(1,128)}', space=vmem, size = 0x12000, scoped, tag = 'internal scratch']
  %s0 = inlined_call_operand.vmem [shape: f32[8,16], index: 0, kind: input, shape index: {}]
  %s1 = inlined_call_operand.vmem [shape: f32[8,16], index: 1, kind: input, shape index: {}]
  %s2 = inlined_call_operand.vmem [shape: f32[8,16], index: 2, kind: input, shape index: {}]
  %s3 = inlined_call_operand.vmem [shape: f32[8,16], index: 3, kind: input, shape index: {}]
  %s4 = inlined_call_operand.vmem [shape: f32[8,16], index: 4, kind: output, shape index: {}]
  %s5 = sld [smem:[#allocation0]]
  $region26: #{multi_mri_fc_layers_forward.278} parent=0
    _
  %s7 = ssub.s32 1, %s5
  %s8 = scalar_select 0, %s7, %s5
  // Predicated region
  $region2: #{multi_mri_fc_layers_forward.278} parent=0 // pred_check
    _
  $region3: #{multi_mri_fc_layers_forward.278} parent=0 // pred_check_branch
    %10 = sbr.rel (0) target = $region5
  $region4: #{multi_mri_fc_layers_forward.278} parent=0 // pred_region
    _
  $region5: #{multi_mri_fc_layers_forward.278} parent=0 // pred_fallthru
    _
  // Predicated region
  $region6: #{multi_mri_fc_layers_forward.278} parent=0 // pred_check
    _
  $region7: #{multi_mri_fc_layers_forward.278} parent=0 // pred_check_branch
    %12 = sbr.rel (0) target = $region9
  $region8: #{multi_mri_fc_layers_forward.278} parent=0 // pred_region
    _
  $region9: #{multi_mri_fc_layers_forward.278} parent=0 // pred_fallthru
    _
  // Predicated region
  $region10: #{multi_mri_fc_layers_forward.278} parent=0 // pred_check
    _
  $region11: #{multi_mri_fc_layers_forward.278} parent=0 // pred_check_branch
    %14 = sbr.rel (0) target = $region13
  $region12: #{multi_mri_fc_layers_forward.278} parent=0 // pred_region
    _
  $region13: #{multi_mri_fc_layers_forward.278} parent=0 // pred_fallthru
    _
  // Predicated region
  $region14: #{multi_mri_fc_layers_forward.278} parent=0 // pred_check
    _
  $region15: #{multi_mri_fc_layers_forward.278} parent=0 // pred_check_branch
    %16 = sbr.rel (0) target = $region17
  $region16: #{multi_mri_fc_layers_forward.278} parent=0 // pred_region
    _
  $region17: #{multi_mri_fc_layers_forward.278} parent=0 // pred_fallthru
    _
  %v17 = vld [vmem:[%s0] sm:$0xff]
  %v18 = vld [vmem:[%s1] sm:$0xff]
  %v19 = vadd.f32 %v17, %v18
  %v20 = vld [vmem:[%s2] sm:$0xff]
  %v21 = vadd.f32 %v19, %v20
  %v22 = vld [vmem:[%s3] sm:$0xff]
  %v23 = vadd.f32 %v21, %v22
  %v24 = vmul.f32 %v23, 0.25
  %vm25 = vcmask 130048
  %26 = vst.msk [vmem:[%s4] sm:$0xff] %vm25, %v24
  // Predicated region
  $region18: #{multi_mri_fc_layers_forward.278} parent=0 // pred_check
    _
  $region19: #{multi_mri_fc_layers_forward.278} parent=0 // pred_check_branch
    %28 = sbr.rel (0) target = $region21
  $region20: #{multi_mri_fc_layers_forward.278} parent=0 // pred_region
    _
  $region21: #{multi_mri_fc_layers_forward.278} parent=0 // pred_fallthru
    _
  // Predicated region
  $region22: #{multi_mri_fc_layers_forward.278} parent=0 // pred_check
    _
  $region23: #{multi_mri_fc_layers_forward.278} parent=0 // pred_check_branch
    %30 = sbr.rel (0) target = $region25
  $region24: #{multi_mri_fc_layers_forward.278} parent=0 // pred_region
    _
  $region25: #{multi_mri_fc_layers_forward.278} parent=0 // pred_fallthru
    _

// kernel: multi_mri_fc_layers_forward.279
$region0: #{multi_mri_fc_layers_forward.279}
  #allocation0 [shape = 'u32[]', space=smem, size = 0x4, offset = 0x4, fixed_abs, tag = 'smem constant byte address 0x4 - core index']
  #allocation1 [shape = 'u32[144,128]{1,0:T(1,128)}', space=vmem, size = 0x12000, scoped, tag = 'internal scratch']
  %s0 = inlined_call_operand.vmem [shape: f32[8,16], index: 0, kind: input, shape index: {}]
  %s1 = inlined_call_operand.vmem [shape: f32[16,32], index: 1, kind: input, shape index: {}]
  %s2 = inlined_call_operand.vmem [shape: f32[1,16], index: 2, kind: input, shape index: {}]
  %s3 = inlined_call_operand.vmem [shape: f32[1,16], index: 3, kind: input, shape index: {}]
  %s4 = inlined_call_operand.vmem [shape: f32[1,32], index: 4, kind: input, shape index: {}]
  %s5 = inlined_call_operand.vmem [shape: f32[1,32], index: 5, kind: input, shape index: {}]
  %s6 = inlined_call_operand.vmem [shape: f32[8,32], index: 6, kind: output, shape index: {}]
  %s7 = sld [smem:[#allocation0]]
  $region34: #{multi_mri_fc_layers_forward.279} parent=0
    _
  %s9 = ssub.s32 1, %s7
  %s10 = scalar_select 0, %s9, %s7
  // Predicated region
  $region2: #{multi_mri_fc_layers_forward.279} parent=0 // pred_check
    _
  $region3: #{multi_mri_fc_layers_forward.279} parent=0 // pred_check_branch
    %12 = sbr.rel (0) target = $region5
  $region4: #{multi_mri_fc_layers_forward.279} parent=0 // pred_region
    _
  $region5: #{multi_mri_fc_layers_forward.279} parent=0 // pred_fallthru
    _
  // Predicated region
  $region6: #{multi_mri_fc_layers_forward.279} parent=0 // pred_check
    _
  $region7: #{multi_mri_fc_layers_forward.279} parent=0 // pred_check_branch
    %14 = sbr.rel (0) target = $region9
  $region8: #{multi_mri_fc_layers_forward.279} parent=0 // pred_region
    _
  $region9: #{multi_mri_fc_layers_forward.279} parent=0 // pred_fallthru
    _
  // Predicated region
  $region10: #{multi_mri_fc_layers_forward.279} parent=0 // pred_check
    _
  $region11: #{multi_mri_fc_layers_forward.279} parent=0 // pred_check_branch
    %16 = sbr.rel (0) target = $region13
  $region12: #{multi_mri_fc_layers_forward.279} parent=0 // pred_region
    _
  $region13: #{multi_mri_fc_layers_forward.279} parent=0 // pred_fallthru
    _
  // Predicated region
  $region14: #{multi_mri_fc_layers_forward.279} parent=0 // pred_check
    _
  $region15: #{multi_mri_fc_layers_forward.279} parent=0 // pred_check_branch
    %18 = sbr.rel (0) target = $region17
  $region16: #{multi_mri_fc_layers_forward.279} parent=0 // pred_region
    _
  $region17: #{multi_mri_fc_layers_forward.279} parent=0 // pred_fallthru
    _
  // Predicated region
  $region18: #{multi_mri_fc_layers_forward.279} parent=0 // pred_check
    _
  $region19: #{multi_mri_fc_layers_forward.279} parent=0 // pred_check_branch
    %20 = sbr.rel (0) target = $region21
  $region20: #{multi_mri_fc_layers_forward.279} parent=0 // pred_region
    _
  $region21: #{multi_mri_fc_layers_forward.279} parent=0 // pred_fallthru
    _
  // Predicated region
  $region22: #{multi_mri_fc_layers_forward.279} parent=0 // pred_check
    _
  $region23: #{multi_mri_fc_layers_forward.279} parent=0 // pred_check_branch
    %22 = sbr.rel (0) target = $region25
  $region24: #{multi_mri_fc_layers_forward.279} parent=0 // pred_region
    _
  $region25: #{multi_mri_fc_layers_forward.279} parent=0 // pred_fallthru
    _
  %v23 = vld [vmem:[%s0] sm:$0xff]
  %v24 = vld [vmem:[%s2] sm:$0x1]
  %v26 = vlaneseq
  %v27 = vshrl.u32 %v26, 7
  %v28 = vsub.s32 0, %v27
  %v29 = vrot.slane %v24, %v28
  %v31 = vmul.f32 %v23, %v29
  %v32 = vld [vmem:[%s3] sm:$0x1]
  %v34 = vlaneseq
  %v35 = vshrl.u32 %v34, 7
  %v36 = vsub.s32 0, %v35
  %v37 = vrot.slane %v32, %v36
  %v39 = vadd.f32 %v31, %v37
  %v40 = vmax.f32 %v39, 0.0
  %v41 = vld [vmem:[%s1] sm:$0xff]
  %v42 = vld [vmem:[%s1 + $0x8] sm:$0xff]
  %vm43 = vcmask 130048
  %v45 = vsel %vm43, %v40, 0
  %47 = vmatprep.subr.mxu0 0.0
  %48 = vmatpush1.msra.mxu0 %v41
  %49 = vmatprep.subr.mxu0 0.0
  %50 = vmatpush1.msra.mxu0 %v42
  %51 = vmatprep.subr.mxu0 0.0
  %52 = vmatpush1.msra.mxu0 0.0
  %53 = vmatprep.subr.mxu0 0.0
  %54 = vmatpush1.msra.mxu0 0.0
  %55 = vmatprep.subr.mxu0 0.0
  %56 = vmatpush1.msra.mxu0 0.0
  %57 = vmatprep.subr.mxu0 0.0
  %58 = vmatpush1.msra.mxu0 0.0
  %59 = vmatprep.subr.mxu0 0.0
  %60 = vmatpush1.msra.mxu0 0.0
  %61 = vmatprep.subr.mxu0 0.0
  %62 = vmatpush1.msra.mxu0 0.0
  %63 = vmatprep.subr.mxu0 0.0
  %64 = vmatpush1.msra.mxu0 0.0
  %65 = vmatprep.subr.mxu0 0.0
  %66 = vmatpush1.msra.mxu0 0.0
  %67 = vmatprep.subr.mxu0 0.0
  %68 = vmatpush1.msra.mxu0 0.0
  %69 = vmatprep.subr.mxu0 0.0
  %70 = vmatpush1.msra.mxu0 0.0
  %71 = vmatprep.subr.mxu0 0.0
  %72 = vmatpush1.msra.mxu0 0.0
  %73 = vmatprep.subr.mxu0 0.0
  %74 = vmatpush1.msra.mxu0 0.0
  %75 = vmatprep.subr.mxu0 0.0
  %76 = vmatpush1.msra.mxu0 0.0
  %77 = vmatprep.subr.mxu0 0.0
  %78 = vmatpush1.msra.mxu0 0.0
  %79 = vmatprep.subr.mxu0 0.0
  %80 = vmatpush1.msra.mxu0 0.0
  %81 = vmatprep.subr.mxu0 0.0
  %82 = vmatpush1.msra.mxu0 0.0
  %83 = vmatprep.subr.mxu0 0.0
  %84 = vmatpush1.msra.mxu0 0.0
  %85 = vmatprep.subr.mxu0 0.0
  %86 = vmatpush1.msra.mxu0 0.0
  %87 = vmatprep.subr.mxu0 0.0
  %88 = vmatpush1.msra.mxu0 0.0
  %89 = vmatprep.subr.mxu0 0.0
  %90 = vmatpush1.msra.mxu0 0.0
  %91 = vmatprep.subr.mxu0 0.0
  %92 = vmatpush1.msra.mxu0 0.0
  %93 = vmatprep.subr.mxu0 0.0
  %94 = vmatpush1.msra.mxu0 0.0
  %95 = vmatprep.subr.mxu0 0.0
  %96 = vmatpush1.msra.mxu0 0.0
  %97 = vmatprep.subr.mxu0 0.0
  %98 = vmatpush1.msra.mxu0 0.0
  %99 = vmatprep.subr.mxu0 0.0
  %100 = vmatpush1.msra.mxu0 0.0
  %101 = vmatprep.subr.mxu0 0.0
  %102 = vmatpush1.msra.mxu0 0.0
  %103 = vmatprep.subr.mxu0 0.0
  %104 = vmatpush1.msra.mxu0 0.0
  %105 = vmatprep.subr.mxu0 0.0
  %106 = vmatpush1.msra.mxu0 0.0
  %107 = vmatprep.subr.mxu0 0.0
  %108 = vmatpush1.msra.mxu0 0.0
  %109 = vmatprep.subr.mxu0 0.0
  %110 = vmatpush1.msra.mxu0 0.0
  %111 = vmatprep.mubr.f32.mxu0 0.0
  %112 = vmatmul.mubr.f32.gmra.mrb[0].mxu0 %v45
  %v113 = vpop.f32.mrb[0].mxu0
  %v114 = vadd.f32 0.0, %v113
  %v115 = vpop.f32.mrb[0].mxu0
  %116 = vdwg.mxu0
  %v117 = vld [vmem:[%s4] sm:$0x1]
  %v119 = vlaneseq
  %v120 = vshrl.u32 %v119, 7
  %v121 = vsub.s32 0, %v120
  %v122 = vrot.slane %v117, %v121
  %v124 = vmul.f32 %v114, %v122
  %v125 = vld [vmem:[%s5] sm:$0x1]
  %v127 = vlaneseq
  %v128 = vshrl.u32 %v127, 7
  %v129 = vsub.s32 0, %v128
  %v130 = vrot.slane %v125, %v129
  %v132 = vadd.f32 %v124, %v130
  %v133 = vmax.f32 %v132, 0.0
  %vm134 = vcmask 261120
  %135 = vst.msk [vmem:[%s6] sm:$0xff] %vm134, %v133
  // Predicated region
  $region26: #{multi_mri_fc_layers_forward.279} parent=0 // pred_check
    _
  $region27: #{multi_mri_fc_layers_forward.279} parent=0 // pred_check_branch
    %137 = sbr.rel (0) target = $region29
  $region28: #{multi_mri_fc_layers_forward.279} parent=0 // pred_region
    _
  $region29: #{multi_mri_fc_layers_forward.279} parent=0 // pred_fallthru
    _
  // Predicated region
  $region30: #{multi_mri_fc_layers_forward.279} parent=0 // pred_check
    _
  $region31: #{multi_mri_fc_layers_forward.279} parent=0 // pred_check_branch
    %139 = sbr.rel (0) target = $region33
  $region32: #{multi_mri_fc_layers_forward.279} parent=0 // pred_region
    _
  $region33: #{multi_mri_fc_layers_forward.279} parent=0 // pred_fallthru
    _

// kernel: multi_mri_fc_layers_forward.281
$region0: #{multi_mri_fc_layers_forward.281}
  #allocation0 [shape = 'u32[]', space=smem, size = 0x4, offset = 0x4, fixed_abs, tag = 'smem constant byte address 0x4 - core index']
  #allocation1 [shape = 'u32[144,128]{1,0:T(1,128)}', space=vmem, size = 0x12000, scoped, tag = 'internal scratch']
  %s0 = inlined_call_operand.vmem [shape: f32[8,24], index: 0, kind: input, shape index: {}]
  %s1 = inlined_call_operand.vmem [shape: f32[24,32], index: 1, kind: input, shape index: {}]
  %s2 = inlined_call_operand.vmem [shape: f32[1,24], index: 2, kind: input, shape index: {}]
  %s3 = inlined_call_operand.vmem [shape: f32[1,24], index: 3, kind: input, shape index: {}]
  %s4 = inlined_call_operand.vmem [shape: f32[1,32], index: 4, kind: input, shape index: {}]
  %s5 = inlined_call_operand.vmem [shape: f32[1,32], index: 5, kind: input, shape index: {}]
  %s6 = inlined_call_operand.vmem [shape: f32[8,32], index: 6, kind: output, shape index: {}]
  %s7 = sld [smem:[#allocation0]]
  $region34: #{multi_mri_fc_layers_forward.281} parent=0
    _
  %s9 = ssub.s32 1, %s7
  %s10 = scalar_select 0, %s9, %s7
  // Predicated region
  $region2: #{multi_mri_fc_layers_forward.281} parent=0 // pred_check
    _
  $region3: #{multi_mri_fc_layers_forward.281} parent=0 // pred_check_branch
    %12 = sbr.rel (0) target = $region5
  $region4: #{multi_mri_fc_layers_forward.281} parent=0 // pred_region
    _
  $region5: #{multi_mri_fc_layers_forward.281} parent=0 // pred_fallthru
    _
  // Predicated region
  $region6: #{multi_mri_fc_layers_forward.281} parent=0 // pred_check
    _
  $region7: #{multi_mri_fc_layers_forward.281} parent=0 // pred_check_branch
    %14 = sbr.rel (0) target = $region9
  $region8: #{multi_mri_fc_layers_forward.281} parent=0 // pred_region
    _
  $region9: #{multi_mri_fc_layers_forward.281} parent=0 // pred_fallthru
    _
  // Predicated region
  $region10: #{multi_mri_fc_layers_forward.281} parent=0 // pred_check
    _
  $region11: #{multi_mri_fc_layers_forward.281} parent=0 // pred_check_branch
    %16 = sbr.rel (0) target = $region13
  $region12: #{multi_mri_fc_layers_forward.281} parent=0 // pred_region
    _
  $region13: #{multi_mri_fc_layers_forward.281} parent=0 // pred_fallthru
    _
  // Predicated region
  $region14: #{multi_mri_fc_layers_forward.281} parent=0 // pred_check
    _
  $region15: #{multi_mri_fc_layers_forward.281} parent=0 // pred_check_branch
    %18 = sbr.rel (0) target = $region17
  $region16: #{multi_mri_fc_layers_forward.281} parent=0 // pred_region
    _
  $region17: #{multi_mri_fc_layers_forward.281} parent=0 // pred_fallthru
    _
  // Predicated region
  $region18: #{multi_mri_fc_layers_forward.281} parent=0 // pred_check
    _
  $region19: #{multi_mri_fc_layers_forward.281} parent=0 // pred_check_branch
    %20 = sbr.rel (0) target = $region21
  $region20: #{multi_mri_fc_layers_forward.281} parent=0 // pred_region
    _
  $region21: #{multi_mri_fc_layers_forward.281} parent=0 // pred_fallthru
    _
  // Predicated region
  $region22: #{multi_mri_fc_layers_forward.281} parent=0 // pred_check
    _
  $region23: #{multi_mri_fc_layers_forward.281} parent=0 // pred_check_branch
    %22 = sbr.rel (0) target = $region25
  $region24: #{multi_mri_fc_layers_forward.281} parent=0 // pred_region
    _
  $region25: #{multi_mri_fc_layers_forward.281} parent=0 // pred_fallthru
    _
  %v23 = vld [vmem:[%s0] sm:$0xff]
  %v24 = vld [vmem:[%s2] sm:$0x1]
  %v26 = vlaneseq
  %v27 = vshrl.u32 %v26, 7
  %v28 = vsub.s32 0, %v27
  %v29 = vrot.slane %v24, %v28
  %v31 = vmul.f32 %v23, %v29
  %v32 = vld [vmem:[%s3] sm:$0x1]
  %v34 = vlaneseq
  %v35 = vshrl.u32 %v34, 7
  %v36 = vsub.s32 0, %v35
  %v37 = vrot.slane %v32, %v36
  %v39 = vadd.f32 %v31, %v37
  %v40 = vmax.f32 %v39, 0.0
  %v41 = vld [vmem:[%s1] sm:$0xff]
  %v42 = vld [vmem:[%s1 + $0x8] sm:$0xff]
  %v43 = vld [vmem:[%s1 + $0x10] sm:$0xff]
  %vm44 = vcmask 195584
  %v46 = vsel %vm44, %v40, 0
  %48 = vmatprep.subr.mxu0 0.0
  %49 = vmatpush1.msra.mxu0 %v41
  %50 = vmatprep.subr.mxu0 0.0
  %51 = vmatpush1.msra.mxu0 %v42
  %52 = vmatprep.subr.mxu0 0.0
  %53 = vmatpush1.msra.mxu0 %v43
  %54 = vmatprep.subr.mxu0 0.0
  %55 = vmatpush1.msra.mxu0 0.0
  %56 = vmatprep.subr.mxu0 0.0
  %57 = vmatpush1.msra.mxu0 0.0
  %58 = vmatprep.subr.mxu0 0.0
  %59 = vmatpush1.msra.mxu0 0.0
  %60 = vmatprep.subr.mxu0 0.0
  %61 = vmatpush1.msra.mxu0 0.0
  %62 = vmatprep.subr.mxu0 0.0
  %63 = vmatpush1.msra.mxu0 0.0
  %64 = vmatprep.subr.mxu0 0.0
  %65 = vmatpush1.msra.mxu0 0.0
  %66 = vmatprep.subr.mxu0 0.0
  %67 = vmatpush1.msra.mxu0 0.0
  %68 = vmatprep.subr.mxu0 0.0
  %69 = vmatpush1.msra.mxu0 0.0
  %70 = vmatprep.subr.mxu0 0.0
  %71 = vmatpush1.msra.mxu0 0.0
  %72 = vmatprep.subr.mxu0 0.0
  %73 = vmatpush1.msra.mxu0 0.0
  %74 = vmatprep.subr.mxu0 0.0
  %75 = vmatpush1.msra.mxu0 0.0
  %76 = vmatprep.subr.mxu0 0.0
  %77 = vmatpush1.msra.mxu0 0.0
  %78 = vmatprep.subr.mxu0 0.0
  %79 = vmatpush1.msra.mxu0 0.0
  %80 = vmatprep.subr.mxu0 0.0
  %81 = vmatpush1.msra.mxu0 0.0
  %82 = vmatprep.subr.mxu0 0.0
  %83 = vmatpush1.msra.mxu0 0.0
  %84 = vmatprep.subr.mxu0 0.0
  %85 = vmatpush1.msra.mxu0 0.0
  %86 = vmatprep.subr.mxu0 0.0
  %87 = vmatpush1.msra.mxu0 0.0
  %88 = vmatprep.subr.mxu0 0.0
  %89 = vmatpush1.msra.mxu0 0.0
  %90 = vmatprep.subr.mxu0 0.0
  %91 = vmatpush1.msra.mxu0 0.0
  %92 = vmatprep.subr.mxu0 0.0
  %93 = vmatpush1.msra.mxu0 0.0
  %94 = vmatprep.subr.mxu0 0.0
  %95 = vmatpush1.msra.mxu0 0.0
  %96 = vmatprep.subr.mxu0 0.0
  %97 = vmatpush1.msra.mxu0 0.0
  %98 = vmatprep.subr.mxu0 0.0
  %99 = vmatpush1.msra.mxu0 0.0
  %100 = vmatprep.subr.mxu0 0.0
  %101 = vmatpush1.msra.mxu0 0.0
  %102 = vmatprep.subr.mxu0 0.0
  %103 = vmatpush1.msra.mxu0 0.0
  %104 = vmatprep.subr.mxu0 0.0
  %105 = vmatpush1.msra.mxu0 0.0
  %106 = vmatprep.subr.mxu0 0.0
  %107 = vmatpush1.msra.mxu0 0.0
  %108 = vmatprep.subr.mxu0 0.0
  %109 = vmatpush1.msra.mxu0 0.0
  %110 = vmatprep.subr.mxu0 0.0
  %111 = vmatpush1.msra.mxu0 0.0
  %112 = vmatprep.mubr.f32.mxu0 0.0
  %113 = vmatmul.mubr.f32.gmra.mrb[0].mxu0 %v46
  %v114 = vpop.f32.mrb[0].mxu0
  %v115 = vadd.f32 0.0, %v114
  %v116 = vpop.f32.mrb[0].mxu0
  %117 = vdwg.mxu0
  %v118 = vld [vmem:[%s4] sm:$0x1]
  %v120 = vlaneseq
  %v121 = vshrl.u32 %v120, 7
  %v122 = vsub.s32 0, %v121
  %v123 = vrot.slane %v118, %v122
  %v125 = vmul.f32 %v115, %v123
  %v126 = vld [vmem:[%s5] sm:$0x1]
  %v128 = vlaneseq
  %v129 = vshrl.u32 %v128, 7
  %v130 = vsub.s32 0, %v129
  %v131 = vrot.slane %v126, %v130
  %v133 = vadd.f32 %v125, %v131
  %v134 = vmax.f32 %v133, 0.0
  %vm135 = vcmask 261120
  %136 = vst.msk [vmem:[%s6] sm:$0xff] %vm135, %v134
  // Predicated region
  $region26: #{multi_mri_fc_layers_forward.281} parent=0 // pred_check
    _
  $region27: #{multi_mri_fc_layers_forward.281} parent=0 // pred_check_branch
    %138 = sbr.rel (0) target = $region29
  $region28: #{multi_mri_fc_layers_forward.281} parent=0 // pred_region
    _
  $region29: #{multi_mri_fc_layers_forward.281} parent=0 // pred_fallthru
    _
  // Predicated region
  $region30: #{multi_mri_fc_layers_forward.281} parent=0 // pred_check
    _
  $region31: #{multi_mri_fc_layers_forward.281} parent=0 // pred_check_branch
    %140 = sbr.rel (0) target = $region33
  $region32: #{multi_mri_fc_layers_forward.281} parent=0 // pred_region
    _
  $region33: #{multi_mri_fc_layers_forward.281} parent=0 // pred_fallthru
    _

// kernel: multi_mri_fc_layers_forward.283
$region0: #{multi_mri_fc_layers_forward.283}
  #allocation0 [shape = 'u32[]', space=smem, size = 0x4, offset = 0x4, fixed_abs, tag = 'smem constant byte address 0x4 - core index']
  #allocation1 [shape = 'u32[144,128]{1,0:T(1,128)}', space=vmem, size = 0x12000, scoped, tag = 'internal scratch']
  %s0 = inlined_call_operand.vmem [shape: f32[8,32], index: 0, kind: input, shape index: {}]
  %s1 = inlined_call_operand.vmem [shape: f32[32,16], index: 1, kind: input, shape index: {}]
  %s2 = inlined_call_operand.vmem [shape: f32[1,32], index: 2, kind: input, shape index: {}]
  %s3 = inlined_call_operand.vmem [shape: f32[1,32], index: 3, kind: input, shape index: {}]
  %s4 = inlined_call_operand.vmem [shape: f32[8,16], index: 4, kind: output, shape index: {}]
  %s5 = sld [smem:[#allocation0]]
  $region26: #{multi_mri_fc_layers_forward.283} parent=0
    _
  %s7 = ssub.s32 1, %s5
  %s8 = scalar_select 0, %s7, %s5
  // Predicated region
  $region2: #{multi_mri_fc_layers_forward.283} parent=0 // pred_check
    _
  $region3: #{multi_mri_fc_layers_forward.283} parent=0 // pred_check_branch
    %10 = sbr.rel (0) target = $region5
  $region4: #{multi_mri_fc_layers_forward.283} parent=0 // pred_region
    _
  $region5: #{multi_mri_fc_layers_forward.283} parent=0 // pred_fallthru
    _
  // Predicated region
  $region6: #{multi_mri_fc_layers_forward.283} parent=0 // pred_check
    _
  $region7: #{multi_mri_fc_layers_forward.283} parent=0 // pred_check_branch
    %12 = sbr.rel (0) target = $region9
  $region8: #{multi_mri_fc_layers_forward.283} parent=0 // pred_region
    _
  $region9: #{multi_mri_fc_layers_forward.283} parent=0 // pred_fallthru
    _
  // Predicated region
  $region10: #{multi_mri_fc_layers_forward.283} parent=0 // pred_check
    _
  $region11: #{multi_mri_fc_layers_forward.283} parent=0 // pred_check_branch
    %14 = sbr.rel (0) target = $region13
  $region12: #{multi_mri_fc_layers_forward.283} parent=0 // pred_region
    _
  $region13: #{multi_mri_fc_layers_forward.283} parent=0 // pred_fallthru
    _
  // Predicated region
  $region14: #{multi_mri_fc_layers_forward.283} parent=0 // pred_check
    _
  $region15: #{multi_mri_fc_layers_forward.283} parent=0 // pred_check_branch
    %16 = sbr.rel (0) target = $region17
  $region16: #{multi_mri_fc_layers_forward.283} parent=0 // pred_region
    _
  $region17: #{multi_mri_fc_layers_forward.283} parent=0 // pred_fallthru
    _
  %v17 = vld [vmem:[%s0] sm:$0xff]
  %v18 = vld [vmem:[%s2] sm:$0x1]
  %v20 = vlaneseq
  %v21 = vshrl.u32 %v20, 7
  %v22 = vsub.s32 0, %v21
  %v23 = vrot.slane %v18, %v22
  %v25 = vmul.f32 %v17, %v23
  %v26 = vld [vmem:[%s3] sm:$0x1]
  %v28 = vlaneseq
  %v29 = vshrl.u32 %v28, 7
  %v30 = vsub.s32 0, %v29
  %v31 = vrot.slane %v26, %v30
  %v33 = vadd.f32 %v25, %v31
  %v34 = vmax.f32 %v33, 0.0
  %v35 = vld [vmem:[%s1] sm:$0xff]
  %v36 = vld [vmem:[%s1 + $0x8] sm:$0xff]
  %v37 = vld [vmem:[%s1 + $0x10] sm:$0xff]
  %v38 = vld [vmem:[%s1 + $0x18] sm:$0xff]
  %vm39 = vcmask 261120
  %v41 = vsel %vm39, %v34, 0
  %43 = vmatprep.subr.mxu0 0.0
  %44 = vmatpush1.msra.mxu0 %v35
  %45 = vmatprep.subr.mxu0 0.0
  %46 = vmatpush1.msra.mxu0 %v36
  %47 = vmatprep.subr.mxu0 0.0
  %48 = vmatpush1.msra.mxu0 %v37
  %49 = vmatprep.subr.mxu0 0.0
  %50 = vmatpush1.msra.mxu0 %v38
  %51 = vmatprep.subr.mxu0 0.0
  %52 = vmatpush1.msra.mxu0 0.0
  %53 = vmatprep.subr.mxu0 0.0
  %54 = vmatpush1.msra.mxu0 0.0
  %55 = vmatprep.subr.mxu0 0.0
  %56 = vmatpush1.msra.mxu0 0.0
  %57 = vmatprep.subr.mxu0 0.0
  %58 = vmatpush1.msra.mxu0 0.0
  %59 = vmatprep.subr.mxu0 0.0
  %60 = vmatpush1.msra.mxu0 0.0
  %61 = vmatprep.subr.mxu0 0.0
  %62 = vmatpush1.msra.mxu0 0.0
  %63 = vmatprep.subr.mxu0 0.0
  %64 = vmatpush1.msra.mxu0 0.0
  %65 = vmatprep.subr.mxu0 0.0
  %66 = vmatpush1.msra.mxu0 0.0
  %67 = vmatprep.subr.mxu0 0.0
  %68 = vmatpush1.msra.mxu0 0.0
  %69 = vmatprep.subr.mxu0 0.0
  %70 = vmatpush1.msra.mxu0 0.0
  %71 = vmatprep.subr.mxu0 0.0
  %72 = vmatpush1.msra.mxu0 0.0
  %73 = vmatprep.subr.mxu0 0.0
  %74 = vmatpush1.msra.mxu0 0.0
  %75 = vmatprep.subr.mxu0 0.0
  %76 = vmatpush1.msra.mxu0 0.0
  %77 = vmatprep.subr.mxu0 0.0
  %78 = vmatpush1.msra.mxu0 0.0
  %79 = vmatprep.subr.mxu0 0.0
  %80 = vmatpush1.msra.mxu0 0.0
  %81 = vmatprep.subr.mxu0 0.0
  %82 = vmatpush1.msra.mxu0 0.0
  %83 = vmatprep.subr.mxu0 0.0
  %84 = vmatpush1.msra.mxu0 0.0
  %85 = vmatprep.subr.mxu0 0.0
  %86 = vmatpush1.msra.mxu0 0.0
  %87 = vmatprep.subr.mxu0 0.0
  %88 = vmatpush1.msra.mxu0 0.0
  %89 = vmatprep.subr.mxu0 0.0
  %90 = vmatpush1.msra.mxu0 0.0
  %91 = vmatprep.subr.mxu0 0.0
  %92 = vmatpush1.msra.mxu0 0.0
  %93 = vmatprep.subr.mxu0 0.0
  %94 = vmatpush1.msra.mxu0 0.0
  %95 = vmatprep.subr.mxu0 0.0
  %96 = vmatpush1.msra.mxu0 0.0
  %97 = vmatprep.subr.mxu0 0.0
  %98 = vmatpush1.msra.mxu0 0.0
  %99 = vmatprep.subr.mxu0 0.0
  %100 = vmatpush1.msra.mxu0 0.0
  %101 = vmatprep.subr.mxu0 0.0
  %102 = vmatpush1.msra.mxu0 0.0
  %103 = vmatprep.subr.mxu0 0.0
  %104 = vmatpush1.msra.mxu0 0.0
  %105 = vmatprep.subr.mxu0 0.0
  %106 = vmatpush1.msra.mxu0 0.0
  %107 = vmatprep.mubr.f32.mxu0 0.0
  %108 = vmatmul.mubr.f32.gmra.mrb[0].mxu0 %v41
  %v109 = vpop.f32.mrb[0].mxu0
  %v110 = vadd.f32 0.0, %v109
  %v111 = vpop.f32.mrb[0].mxu0
  %112 = vdwg.mxu0
  %vm113 = vcmask 130048
  %114 = vst.msk [vmem:[%s4] sm:$0xff] %vm113, %v110
  // Predicated region
  $region18: #{multi_mri_fc_layers_forward.283} parent=0 // pred_check
    _
  $region19: #{multi_mri_fc_layers_forward.283} parent=0 // pred_check_branch
    %116 = sbr.rel (0) target = $region21
  $region20: #{multi_mri_fc_layers_forward.283} parent=0 // pred_region
    _
  $region21: #{multi_mri_fc_layers_forward.283} parent=0 // pred_fallthru
    _
  // Predicated region
  $region22: #{multi_mri_fc_layers_forward.283} parent=0 // pred_check
    _
  $region23: #{multi_mri_fc_layers_forward.283} parent=0 // pred_check_branch
    %118 = sbr.rel (0) target = $region25
  $region24: #{multi_mri_fc_layers_forward.283} parent=0 // pred_region
    _
  $region25: #{multi_mri_fc_layers_forward.283} parent=0 // pred_fallthru
    _

// kernel: multi_mri_fc_layers_forward.280
$region0: #{multi_mri_fc_layers_forward.280}
  #allocation0 [shape = 'u32[]', space=smem, size = 0x4, offset = 0x4, fixed_abs, tag = 'smem constant byte address 0x4 - core index']
  #allocation1 [shape = 'u32[144,128]{1,0:T(1,128)}', space=vmem, size = 0x12000, scoped, tag = 'internal scratch']
  %s0 = inlined_call_operand.vmem [shape: f32[2,4,4,32], index: 0, kind: input, shape index: {}]
  %s1 = inlined_call_operand.vmem [shape: f32[9,32,8], index: 1, kind: input, shape index: {}]
  %s2 = inlined_call_operand.vmem [shape: f32[2,2,2,8], index: 2, kind: output, shape index: {}]
  %s3 = sld [smem:[#allocation0]]
  $region48: #{multi_mri_fc_layers_forward.280} parent=0
    _
  %s5 = ssub.s32 1, %s3
  %s6 = scalar_select 0, %s5, %s3
  loop: start=0, step=1, limit=4
  $region2: #{multi_mri_fc_layers_forward.280} parent=0 // loop_pre_header
    _
  $region3: #{multi_mri_fc_layers_forward.280} parent=0 // loop_header
    %s8 = sphi 0, %s12
    %p9 = scmp.ge.s32.totalorder %s8, 4
    %s18 = sphi 0, %s20
    %s21 = sphi 0, %s18
    %s22 = sphi 0, %s21
    %s38 = sphi 0, %s22
    %s42 = sphi 0, %s42
    %s44 = sphi 0, %s42
    %s45 = sphi 0, %s44
    %s59 = sphi 0, %s45
    %s65 = sphi 0, %s67
    %s68 = sphi 0, %s65
    %s69 = sphi 0, %s68
    %s85 = sphi 0, %s69
  $region4: #{multi_mri_fc_layers_forward.280} parent=0 // loop_header_branch
    %11 = sbr.rel (%p9) target = $region8
  $region5: #{multi_mri_fc_layers_forward.280} parent=0 // loop_body
    %s13 = ssub.s32 %s8, 1
    %s14 = ssub.s32 %s8, 2
    %s15 = sadd.s32 %s8, 1
    %s16 = ssub.s32 %s8, %s15
    %p17 = scmp.eq.s32.totalorder %s16, 0
    %s19 = sadd.s32 %s18, 1
    %s20 = scalar_select %p17, %s18, %s19
    %p23 = pneg %p17
    %p24 = scmp.eq.s32.totalorder %s8, 1
    %p25 = por %p23, %p24
    %p26 = scmp.ne.s32.totalorder %s18, %s21
    %p27 = scmp.eq.s32.totalorder %s8, 0
    %p28 = por %p26, %p27
    %p29 = scmp.ne.s32.totalorder %s18, %s21
    %p30 = scmp.eq.s32.totalorder %s13, 1
    %p31 = por %p29, %p30
    %p32 = scmp.ne.s32.totalorder %s21, %s22
    %p33 = scmp.eq.s32.totalorder %s13, 0
    %p34 = por %p32, %p33
    %p35 = scmp.ne.s32.totalorder %s21, %s22
    %p36 = scmp.eq.s32.totalorder %s14, 1
    %p37 = por %p35, %p36
    %p39 = scmp.ne.s32.totalorder %s22, %s38
    %p40 = scmp.eq.s32.totalorder %s14, 0
    %p41 = por %p39, %p40
    %s43 = sadd.s32 %s42, 1
    %p46 = scmp.eq.s32.totalorder %s8, 1
    %p47 = scmp.ne.s32.totalorder %s42, %s44
    %p48 = scmp.eq.s32.totalorder %s8, 0
    %p49 = por %p47, %p48
    %p50 = scmp.ne.s32.totalorder %s42, %s44
    %p51 = scmp.eq.s32.totalorder %s13, 1
    %p52 = por %p50, %p51
    %p53 = scmp.ne.s32.totalorder %s44, %s45
    %p54 = scmp.eq.s32.totalorder %s13, 0
    %p55 = por %p53, %p54
    %p56 = scmp.ne.s32.totalorder %s44, %s45
    %p57 = scmp.eq.s32.totalorder %s14, 1
    %p58 = por %p56, %p57
    %p60 = scmp.ne.s32.totalorder %s45, %s59
    %p61 = scmp.eq.s32.totalorder %s14, 0
    %p62 = por %p60, %p61
    %s63 = ssub.s32 %s8, %s15
    %p64 = scmp.eq.s32.totalorder %s63, 0
    %s66 = sadd.s32 %s65, 1
    %s67 = scalar_select %p64, %s65, %s66
    %p70 = pneg %p64
    %p71 = scmp.eq.s32.totalorder %s8, 1
    %p72 = por %p70, %p71
    %p73 = scmp.ne.s32.totalorder %s65, %s68
    %p74 = scmp.eq.s32.totalorder %s8, 0
    %p75 = por %p73, %p74
    %p76 = scmp.ne.s32.totalorder %s65, %s68
    %p77 = scmp.eq.s32.totalorder %s13, 1
    %p78 = por %p76, %p77
    %p79 = scmp.ne.s32.totalorder %s68, %s69
    %p80 = scmp.eq.s32.totalorder %s13, 0
    %p81 = por %p79, %p80
    %p82 = scmp.ne.s32.totalorder %s68, %s69
    %p83 = scmp.eq.s32.totalorder %s14, 1
    %p84 = por %p82, %p83
    %p86 = scmp.ne.s32.totalorder %s69, %s85
    %p87 = scmp.eq.s32.totalorder %s14, 0
    %p88 = por %p86, %p87
    %p89 = scmp.le.s32.totalorder 1, %s8
    %p90 = scmp.lt.s32.totalorder %s8, 3
    %p91 = pnand %p89, %p90
    %p92 = pneg %p91
    // Predicated region
    $region9: #{multi_mri_fc_layers_forward.280} parent=5 // pred_check
      _
    $region10: #{multi_mri_fc_layers_forward.280} parent=5 // pred_check_branch
      %94 = sbr.rel (%p91) target = $region12
    $region11: #{multi_mri_fc_layers_forward.280} parent=5 // pred_region
      %s95 = ssub.s32 %s8, 1
      // Predicated region
      $region13: #{multi_mri_fc_layers_forward.280} parent=11 // pred_check
        %p96 = pneg %p55
      $region14: #{multi_mri_fc_layers_forward.280} parent=11 // pred_check_branch
        %98 = sbr.rel (%p96) target = $region16
      $region15: #{multi_mri_fc_layers_forward.280} parent=11 // pred_region
        _
      $region16: #{multi_mri_fc_layers_forward.280} parent=11 // pred_fallthru
        _
    $region12: #{multi_mri_fc_layers_forward.280} parent=5 // pred_fallthru
      _
    %p99 = scmp.lt.s32.totalorder %s8, 2
    // Predicated region
    $region17: #{multi_mri_fc_layers_forward.280} parent=5 // pred_check
      %p100 = pneg %p99
    $region18: #{multi_mri_fc_layers_forward.280} parent=5 // pred_check_branch
      %102 = sbr.rel (%p100) target = $region20
    $region19: #{multi_mri_fc_layers_forward.280} parent=5 // pred_region
      // Predicated region
      $region21: #{multi_mri_fc_layers_forward.280} parent=19 // pred_check
        %p103 = pneg %p28
      $region22: #{multi_mri_fc_layers_forward.280} parent=19 // pred_check_branch
        %105 = sbr.rel (%p103) target = $region24
      $region23: #{multi_mri_fc_layers_forward.280} parent=19 // pred_region
        %p106 = scmp.lt.s32.totalorder %s8, 1
        %s107 = scalar_select %p106, %s8, 1
        %s108 = smul.addr %s107, 4
        %s109 = smul.addr %s108, 4
        %s110 = scalar_lea.vmem %s0, %s109
      $region24: #{multi_mri_fc_layers_forward.280} parent=19 // pred_fallthru
        _
    $region20: #{multi_mri_fc_layers_forward.280} parent=5 // pred_fallthru
      _
    %p111 = scmp.le.s32.totalorder 1, %s8
    %p112 = scmp.lt.s32.totalorder %s8, 3
    %p113 = pnand %p111, %p112
    %p114 = pneg %p113
    // Predicated region
    $region25: #{multi_mri_fc_layers_forward.280} parent=5 // pred_check
      _
    $region26: #{multi_mri_fc_layers_forward.280} parent=5 // pred_check_branch
      %116 = sbr.rel (%p113) target = $region28
    $region27: #{multi_mri_fc_layers_forward.280} parent=5 // pred_region
      %s117 = ssub.s32 %s8, 1
      %p118 = scmp.lt.s32.totalorder %s13, 1
      %s119 = scalar_select %p118, %s13, 1
      %s120 = smul.addr %s119, 4
      %s121 = smul.addr %s120, 4
      %s122 = scalar_lea.vmem %s0, %s121
      %p123 = pneg %p34
      %p124 = pneg %p31
      %p125 = pneg %p55
      %p126 = pneg %p52
      %p127 = pneg %p81
      %p128 = pneg %p78
      %p129 = scmp.lt.s32.totalorder %s13, 1
      %s130 = scalar_select %p129, %s13, 1
      %s131 = smul.addr %s130, 2
      %s132 = smul.addr %s131, 2
      %s133 = scalar_lea.vmem %s2, %s132
      %p134 = scmp.lt.s32.totalorder %s13, 1
      %s135 = scalar_select %p134, %s13, 1
      %s136 = smul.addr %s135, 4
      %s137 = smul.addr %s136, 4
      %s138 = scalar_lea.vmem %s0, %s137
      %p139 = scmp.lt.s32.totalorder %s13, 1
      %s140 = scalar_select %p139, %s13, 1
      %s141 = smul.addr %s140, 2
      %s142 = smul.addr %s141, 2
      %s143 = scalar_lea.vmem %s2, %s142
      loop: start=0, step=1, limit=2
      $region29: #{multi_mri_fc_layers_forward.280} parent=27 // loop_pre_header
        _
      $region30: #{multi_mri_fc_layers_forward.280} parent=27 // loop_header
        %s145 = sphi 0, %s149
        %p146 = scmp.ge.s32.totalorder %s145, 2
      $region31: #{multi_mri_fc_layers_forward.280} parent=27 // loop_header_branch
        %148 = sbr.rel (%p146) target = $region35
      $region32: #{multi_mri_fc_layers_forward.280} parent=27 // loop_body
        %s150 = smul.u32 %s145, 4
        %s151 = scalar_lea.vmem %s138, %s150
        %v152 = vld [vmem:[%s151] sm:$0x3]
        %v153 = vld [vmem:[%s1] sm:$0xff]
        %v154 = vld [vmem:[%s1 + $0x8] sm:$0xff]
        %v155 = vld [vmem:[%s1 + $0x10] sm:$0xff]
        %v156 = vld [vmem:[%s1 + $0x18] sm:$0xff]
        %v157 = vld [vmem:[%s151 + $0x1] sm:$0x3]
        %s158 = scalar_lea.vmem %s1, 32
        %v159 = vld [vmem:[%s158] sm:$0xff]
        %v160 = vld [vmem:[%s158 + $0x8] sm:$0xff]
        %v161 = vld [vmem:[%s158 + $0x10] sm:$0xff]
        %v162 = vld [vmem:[%s158 + $0x18] sm:$0xff]
        %vm163 = vcmask 261120
        %v165 = vsel %vm163, %v157, 0
        %167 = vmatprep.subr.mxu0 0.0
        %168 = vmatpush1.msra.mxu0 %v159
        %169 = vmatprep.subr.mxu0 0.0
        %170 = vmatpush1.msra.mxu0 %v160
        %171 = vmatprep.subr.mxu0 0.0
        %172 = vmatpush1.msra.mxu0 %v161
        %173 = vmatprep.subr.mxu0 0.0
        %174 = vmatpush1.msra.mxu0 %v162
        %175 = vmatprep.subr.mxu0 0.0
        %176 = vmatpush1.msra.mxu0 0.0
        %177 = vmatprep.subr.mxu0 0.0
        %178 = vmatpush1.msra.mxu0 0.0
        %179 = vmatprep.subr.mxu0 0.0
        %180 = vmatpush1.msra.mxu0 0.0
        %181 = vmatprep.subr.mxu0 0.0
        %182 = vmatpush1.msra.mxu0 0.0
        %183 = vmatprep.subr.mxu0 0.0
        %184 = vmatpush1.msra.mxu0 0.0
        %185 = vmatprep.subr.mxu0 0.0
        %186 = vmatpush1.msra.mxu0 0.0
        %187 = vmatprep.subr.mxu0 0.0
        %188 = vmatpush1.msra.mxu0 0.0
        %189 = vmatprep.subr.mxu0 0.0
        %190 = vmatpush1.msra.mxu0 0.0
        %191 = vmatprep.subr.mxu0 0.0
        %192 = vmatpush1.msra.mxu0 0.0
        %193 = vmatprep.subr.mxu0 0.0
        %194 = vmatpush1.msra.mxu0 0.0
        %195 = vmatprep.subr.mxu0 0.0
        %196 = vmatpush1.msra.mxu0 0.0
        %197 = vmatprep.subr.mxu0 0.0
        %198 = vmatpush1.msra.mxu0 0.0
        %199 = vmatprep.subr.mxu0 0.0
        %200 = vmatpush1.msra.mxu0 0.0
        %201 = vmatprep.subr.mxu0 0.0
        %202 = vmatpush1.msra.mxu0 0.0
        %203 = vmatprep.subr.mxu0 0.0
        %204 = vmatpush1.msra.mxu0 0.0
        %205 = vmatprep.subr.mxu0 0.0
        %206 = vmatpush1.msra.mxu0 0.0
        %207 = vmatprep.subr.mxu0 0.0
        %208 = vmatpush1.msra.mxu0 0.0
        %209 = vmatprep.subr.mxu0 0.0
        %210 = vmatpush1.msra.mxu0 0.0
        %211 = vmatprep.subr.mxu0 0.0
        %212 = vmatpush1.msra.mxu0 0.0
        %213 = vmatprep.subr.mxu0 0.0
        %214 = vmatpush1.msra.mxu0 0.0
        %215 = vmatprep.subr.mxu0 0.0
        %216 = vmatpush1.msra.mxu0 0.0
        %217 = vmatprep.subr.mxu0 0.0
        %218 = vmatpush1.msra.mxu0 0.0
        %219 = vmatprep.subr.mxu0 0.0
        %220 = vmatpush1.msra.mxu0 0.0
        %221 = vmatprep.subr.mxu0 0.0
        %222 = vmatpush1.msra.mxu0 0.0
        %223 = vmatprep.subr.mxu0 0.0
        %224 = vmatpush1.msra.mxu0 0.0
        %225 = vmatprep.subr.mxu0 0.0
        %226 = vmatpush1.msra.mxu0 0.0
        %227 = vmatprep.subr.mxu0 0.0
        %228 = vmatpush1.msra.mxu0 0.0
        %229 = vmatprep.subr.mxu0 0.0
        %230 = vmatpush1.msra.mxu0 0.0
        %231 = vmatprep.mubr.f32.mxu0 0.0
        %232 = vmatmul.mubr.f32.gmra.mrb[0].mxu0 %v165
        %v233 = vpop.f32.mrb[0].mxu0
        %v234 = vadd.f32 0.0, %v233
        %v235 = vpop.f32.mrb[0].mxu0
        %236 = vdwg.mxu0
        %v238 = vsel %vm163, %v152, 0
        %240 = vmatprep.subr.mxu0 0.0
        %241 = vmatpush1.msra.mxu0 %v153
        %242 = vmatprep.subr.mxu0 0.0
        %243 = vmatpush1.msra.mxu0 %v154
        %244 = vmatprep.subr.mxu0 0.0
        %245 = vmatpush1.msra.mxu0 %v155
        %246 = vmatprep.subr.mxu0 0.0
        %247 = vmatpush1.msra.mxu0 %v156
        %248 = vmatprep.subr.mxu0 0.0
        %249 = vmatpush1.msra.mxu0 0.0
        %250 = vmatprep.subr.mxu0 0.0
        %251 = vmatpush1.msra.mxu0 0.0
        %252 = vmatprep.subr.mxu0 0.0
        %253 = vmatpush1.msra.mxu0 0.0
        %254 = vmatprep.subr.mxu0 0.0
        %255 = vmatpush1.msra.mxu0 0.0
        %256 = vmatprep.subr.mxu0 0.0
        %257 = vmatpush1.msra.mxu0 0.0
        %258 = vmatprep.subr.mxu0 0.0
        %259 = vmatpush1.msra.mxu0 0.0
        %260 = vmatprep.subr.mxu0 0.0
        %261 = vmatpush1.msra.mxu0 0.0
        %262 = vmatprep.subr.mxu0 0.0
        %263 = vmatpush1.msra.mxu0 0.0
        %264 = vmatprep.subr.mxu0 0.0
        %265 = vmatpush1.msra.mxu0 0.0
        %266 = vmatprep.subr.mxu0 0.0
        %267 = vmatpush1.msra.mxu0 0.0
        %268 = vmatprep.subr.mxu0 0.0
        %269 = vmatpush1.msra.mxu0 0.0
        %270 = vmatprep.subr.mxu0 0.0
        %271 = vmatpush1.msra.mxu0 0.0
        %272 = vmatprep.subr.mxu0 0.0
        %273 = vmatpush1.msra.mxu0 0.0
        %274 = vmatprep.subr.mxu0 0.0
        %275 = vmatpush1.msra.mxu0 0.0
        %276 = vmatprep.subr.mxu0 0.0
        %277 = vmatpush1.msra.mxu0 0.0
        %278 = vmatprep.subr.mxu0 0.0
        %279 = vmatpush1.msra.mxu0 0.0
        %280 = vmatprep.subr.mxu0 0.0
        %281 = vmatpush1.msra.mxu0 0.0
        %282 = vmatprep.subr.mxu0 0.0
        %283 = vmatpush1.msra.mxu0 0.0
        %284 = vmatprep.subr.mxu0 0.0
        %285 = vmatpush1.msra.mxu0 0.0
        %286 = vmatprep.subr.mxu0 0.0
        %287 = vmatpush1.msra.mxu0 0.0
        %288 = vmatprep.subr.mxu0 0.0
        %289 = vmatpush1.msra.mxu0 0.0
        %290 = vmatprep.subr.mxu0 0.0
        %291 = vmatpush1.msra.mxu0 0.0
        %292 = vmatprep.subr.mxu0 0.0
        %293 = vmatpush1.msra.mxu0 0.0
        %294 = vmatprep.subr.mxu0 0.0
        %295 = vmatpush1.msra.mxu0 0.0
        %296 = vmatprep.subr.mxu0 0.0
        %297 = vmatpush1.msra.mxu0 0.0
        %298 = vmatprep.subr.mxu0 0.0
        %299 = vmatpush1.msra.mxu0 0.0
        %300 = vmatprep.subr.mxu0 0.0
        %301 = vmatpush1.msra.mxu0 0.0
        %302 = vmatprep.subr.mxu0 0.0
        %303 = vmatpush1.msra.mxu0 0.0
        %304 = vmatprep.mubr.f32.mxu0 0.0
        %305 = vmatmul.mubr.f32.gmra.mrb[0].mxu0 %v238
        %v306 = vpop.f32.mrb[0].mxu0
        %v307 = vadd.f32 %v234, %v306
        %v308 = vpop.f32.mrb[0].mxu0
        %309 = vdwg.mxu0
        %v310 = vld [vmem:[%s151 + $0x2] sm:$0x3]
        %s311 = scalar_lea.vmem %s1, 64
        %v312 = vld [vmem:[%s311] sm:$0xff]
        %v313 = vld [vmem:[%s311 + $0x8] sm:$0xff]
        %v314 = vld [vmem:[%s311 + $0x10] sm:$0xff]
        %v315 = vld [vmem:[%s311 + $0x18] sm:$0xff]
        %v317 = vsel %vm163, %v310, 0
        %319 = vmatprep.subr.mxu0 0.0
        %320 = vmatpush1.msra.mxu0 %v312
        %321 = vmatprep.subr.mxu0 0.0
        %322 = vmatpush1.msra.mxu0 %v313
        %323 = vmatprep.subr.mxu0 0.0
        %324 = vmatpush1.msra.mxu0 %v314
        %325 = vmatprep.subr.mxu0 0.0
        %326 = vmatpush1.msra.mxu0 %v315
        %327 = vmatprep.subr.mxu0 0.0
        %328 = vmatpush1.msra.mxu0 0.0
        %329 = vmatprep.subr.mxu0 0.0
        %330 = vmatpush1.msra.mxu0 0.0
        %331 = vmatprep.subr.mxu0 0.0
        %332 = vmatpush1.msra.mxu0 0.0
        %333 = vmatprep.subr.mxu0 0.0
        %334 = vmatpush1.msra.mxu0 0.0
        %335 = vmatprep.subr.mxu0 0.0
        %336 = vmatpush1.msra.mxu0 0.0
        %337 = vmatprep.subr.mxu0 0.0
        %338 = vmatpush1.msra.mxu0 0.0
        %339 = vmatprep.subr.mxu0 0.0
        %340 = vmatpush1.msra.mxu0 0.0
        %341 = vmatprep.subr.mxu0 0.0
        %342 = vmatpush1.msra.mxu0 0.0
        %343 = vmatprep.subr.mxu0 0.0
        %344 = vmatpush1.msra.mxu0 0.0
        %345 = vmatprep.subr.mxu0 0.0
        %346 = vmatpush1.msra.mxu0 0.0
        %347 = vmatprep.subr.mxu0 0.0
        %348 = vmatpush1.msra.mxu0 0.0
        %349 = vmatprep.subr.mxu0 0.0
        %350 = vmatpush1.msra.mxu0 0.0
        %351 = vmatprep.subr.mxu0 0.0
        %352 = vmatpush1.msra.mxu0 0.0
        %353 = vmatprep.subr.mxu0 0.0
        %354 = vmatpush1.msra.mxu0 0.0
        %355 = vmatprep.subr.mxu0 0.0
        %356 = vmatpush1.msra.mxu0 0.0
        %357 = vmatprep.subr.mxu0 0.0
        %358 = vmatpush1.msra.mxu0 0.0
        %359 = vmatprep.subr.mxu0 0.0
        %360 = vmatpush1.msra.mxu0 0.0
        %361 = vmatprep.subr.mxu0 0.0
        %362 = vmatpush1.msra.mxu0 0.0
        %363 = vmatprep.subr.mxu0 0.0
        %364 = vmatpush1.msra.mxu0 0.0
        %365 = vmatprep.subr.mxu0 0.0
        %366 = vmatpush1.msra.mxu0 0.0
        %367 = vmatprep.subr.mxu0 0.0
        %368 = vmatpush1.msra.mxu0 0.0
        %369 = vmatprep.subr.mxu0 0.0
        %370 = vmatpush1.msra.mxu0 0.0
        %371 = vmatprep.subr.mxu0 0.0
        %372 = vmatpush1.msra.mxu0 0.0
        %373 = vmatprep.subr.mxu0 0.0
        %374 = vmatpush1.msra.mxu0 0.0
        %375 = vmatprep.subr.mxu0 0.0
        %376 = vmatpush1.msra.mxu0 0.0
        %377 = vmatprep.subr.mxu0 0.0
        %378 = vmatpush1.msra.mxu0 0.0
        %379 = vmatprep.subr.mxu0 0.0
        %380 = vmatpush1.msra.mxu0 0.0
        %381 = vmatprep.subr.mxu0 0.0
        %382 = vmatpush1.msra.mxu0 0.0
        %383 = vmatprep.mubr.f32.mxu0 0.0
        %384 = vmatmul.mubr.f32.gmra.mrb[0].mxu0 %v317
        %v385 = vpop.f32.mrb[0].mxu0
        %v386 = vadd.f32 0.0, %v385
        %v387 = vpop.f32.mrb[0].mxu0
        %388 = vdwg.mxu0
        %v389 = vadd.f32 %v307, %v386
        %s390 = sadd.s32 %s145, 1
        %s391 = smul.u32 %s390, 4
        %s392 = scalar_lea.vmem %s138, %s391
        %v393 = vld [vmem:[%s392] sm:$0x3]
        %s394 = scalar_lea.vmem %s1, 96
        %v395 = vld [vmem:[%s394] sm:$0xff]
        %v396 = vld [vmem:[%s394 + $0x8] sm:$0xff]
        %v397 = vld [vmem:[%s394 + $0x10] sm:$0xff]
        %v398 = vld [vmem:[%s394 + $0x18] sm:$0xff]
        %v400 = vsel %vm163, %v393, 0
        %402 = vmatprep.subr.mxu0 0.0
        %403 = vmatpush1.msra.mxu0 %v395
        %404 = vmatprep.subr.mxu0 0.0
        %405 = vmatpush1.msra.mxu0 %v396
        %406 = vmatprep.subr.mxu0 0.0
        %407 = vmatpush1.msra.mxu0 %v397
        %408 = vmatprep.subr.mxu0 0.0
        %409 = vmatpush1.msra.mxu0 %v398
        %410 = vmatprep.subr.mxu0 0.0
        %411 = vmatpush1.msra.mxu0 0.0
        %412 = vmatprep.subr.mxu0 0.0
        %413 = vmatpush1.msra.mxu0 0.0
        %414 = vmatprep.subr.mxu0 0.0
        %415 = vmatpush1.msra.mxu0 0.0
        %416 = vmatprep.subr.mxu0 0.0
        %417 = vmatpush1.msra.mxu0 0.0
        %418 = vmatprep.subr.mxu0 0.0
        %419 = vmatpush1.msra.mxu0 0.0
        %420 = vmatprep.subr.mxu0 0.0
        %421 = vmatpush1.msra.mxu0 0.0
        %422 = vmatprep.subr.mxu0 0.0
        %423 = vmatpush1.msra.mxu0 0.0
        %424 = vmatprep.subr.mxu0 0.0
        %425 = vmatpush1.msra.mxu0 0.0
        %426 = vmatprep.subr.mxu0 0.0
        %427 = vmatpush1.msra.mxu0 0.0
        %428 = vmatprep.subr.mxu0 0.0
        %429 = vmatpush1.msra.mxu0 0.0
        %430 = vmatprep.subr.mxu0 0.0
        %431 = vmatpush1.msra.mxu0 0.0
        %432 = vmatprep.subr.mxu0 0.0
        %433 = vmatpush1.msra.mxu0 0.0
        %434 = vmatprep.subr.mxu0 0.0
        %435 = vmatpush1.msra.mxu0 0.0
        %436 = vmatprep.subr.mxu0 0.0
        %437 = vmatpush1.msra.mxu0 0.0
        %438 = vmatprep.subr.mxu0 0.0
        %439 = vmatpush1.msra.mxu0 0.0
        %440 = vmatprep.subr.mxu0 0.0
        %441 = vmatpush1.msra.mxu0 0.0
        %442 = vmatprep.subr.mxu0 0.0
        %443 = vmatpush1.msra.mxu0 0.0
        %444 = vmatprep.subr.mxu0 0.0
        %445 = vmatpush1.msra.mxu0 0.0
        %446 = vmatprep.subr.mxu0 0.0
        %447 = vmatpush1.msra.mxu0 0.0
        %448 = vmatprep.subr.mxu0 0.0
        %449 = vmatpush1.msra.mxu0 0.0
        %450 = vmatprep.subr.mxu0 0.0
        %451 = vmatpush1.msra.mxu0 0.0
        %452 = vmatprep.subr.mxu0 0.0
        %453 = vmatpush1.msra.mxu0 0.0
        %454 = vmatprep.subr.mxu0 0.0
        %455 = vmatpush1.msra.mxu0 0.0
        %456 = vmatprep.subr.mxu0 0.0
        %457 = vmatpush1.msra.mxu0 0.0
        %458 = vmatprep.subr.mxu0 0.0
        %459 = vmatpush1.msra.mxu0 0.0
        %460 = vmatprep.subr.mxu0 0.0
        %461 = vmatpush1.msra.mxu0 0.0
        %462 = vmatprep.subr.mxu0 0.0
        %463 = vmatpush1.msra.mxu0 0.0
        %464 = vmatprep.subr.mxu0 0.0
        %465 = vmatpush1.msra.mxu0 0.0
        %466 = vmatprep.mubr.f32.mxu0 0.0
        %467 = vmatmul.mubr.f32.gmra.mrb[0].mxu0 %v400
        %v468 = vpop.f32.mrb[0].mxu0
        %v469 = vadd.f32 0.0, %v468
        %v470 = vpop.f32.mrb[0].mxu0
        %471 = vdwg.mxu0
        %v472 = vadd.f32 %v389, %v469
        %v473 = vld [vmem:[%s392 + $0x1] sm:$0x3]
        %s474 = scalar_lea.vmem %s1, 128
        %v475 = vld [vmem:[%s474] sm:$0xff]
        %v476 = vld [vmem:[%s474 + $0x8] sm:$0xff]
        %v477 = vld [vmem:[%s474 + $0x10] sm:$0xff]
        %v478 = vld [vmem:[%s474 + $0x18] sm:$0xff]
        %v480 = vsel %vm163, %v473, 0
        %482 = vmatprep.subr.mxu0 0.0
        %483 = vmatpush1.msra.mxu0 %v475
        %484 = vmatprep.subr.mxu0 0.0
        %485 = vmatpush1.msra.mxu0 %v476
        %486 = vmatprep.subr.mxu0 0.0
        %487 = vmatpush1.msra.mxu0 %v477
        %488 = vmatprep.subr.mxu0 0.0
        %489 = vmatpush1.msra.mxu0 %v478
        %490 = vmatprep.subr.mxu0 0.0
        %491 = vmatpush1.msra.mxu0 0.0
        %492 = vmatprep.subr.mxu0 0.0
        %493 = vmatpush1.msra.mxu0 0.0
        %494 = vmatprep.subr.mxu0 0.0
        %495 = vmatpush1.msra.mxu0 0.0
        %496 = vmatprep.subr.mxu0 0.0
        %497 = vmatpush1.msra.mxu0 0.0
        %498 = vmatprep.subr.mxu0 0.0
        %499 = vmatpush1.msra.mxu0 0.0
        %500 = vmatprep.subr.mxu0 0.0
        %501 = vmatpush1.msra.mxu0 0.0
        %502 = vmatprep.subr.mxu0 0.0
        %503 = vmatpush1.msra.mxu0 0.0
        %504 = vmatprep.subr.mxu0 0.0
        %505 = vmatpush1.msra.mxu0 0.0
        %506 = vmatprep.subr.mxu0 0.0
        %507 = vmatpush1.msra.mxu0 0.0
        %508 = vmatprep.subr.mxu0 0.0
        %509 = vmatpush1.msra.mxu0 0.0
        %510 = vmatprep.subr.mxu0 0.0
        %511 = vmatpush1.msra.mxu0 0.0
        %512 = vmatprep.subr.mxu0 0.0
        %513 = vmatpush1.msra.mxu0 0.0
        %514 = vmatprep.subr.mxu0 0.0
        %515 = vmatpush1.msra.mxu0 0.0
        %516 = vmatprep.subr.mxu0 0.0
        %517 = vmatpush1.msra.mxu0 0.0
        %518 = vmatprep.subr.mxu0 0.0
        %519 = vmatpush1.msra.mxu0 0.0
        %520 = vmatprep.subr.mxu0 0.0
        %521 = vmatpush1.msra.mxu0 0.0
        %522 = vmatprep.subr.mxu0 0.0
        %523 = vmatpush1.msra.mxu0 0.0
        %524 = vmatprep.subr.mxu0 0.0
        %525 = vmatpush1.msra.mxu0 0.0
        %526 = vmatprep.subr.mxu0 0.0
        %527 = vmatpush1.msra.mxu0 0.0
        %528 = vmatprep.subr.mxu0 0.0
        %529 = vmatpush1.msra.mxu0 0.0
        %530 = vmatprep.subr.mxu0 0.0
        %531 = vmatpush1.msra.mxu0 0.0
        %532 = vmatprep.subr.mxu0 0.0
        %533 = vmatpush1.msra.mxu0 0.0
        %534 = vmatprep.subr.mxu0 0.0
        %535 = vmatpush1.msra.mxu0 0.0
        %536 = vmatprep.subr.mxu0 0.0
        %537 = vmatpush1.msra.mxu0 0.0
        %538 = vmatprep.subr.mxu0 0.0
        %539 = vmatpush1.msra.mxu0 0.0
        %540 = vmatprep.subr.mxu0 0.0
        %541 = vmatpush1.msra.mxu0 0.0
        %542 = vmatprep.subr.mxu0 0.0
        %543 = vmatpush1.msra.mxu0 0.0
        %544 = vmatprep.subr.mxu0 0.0
        %545 = vmatpush1.msra.mxu0 0.0
        %546 = vmatprep.mubr.f32.mxu0 0.0
        %547 = vmatmul.mubr.f32.gmra.mrb[0].mxu0 %v480
        %v548 = vpop.f32.mrb[0].mxu0
        %v549 = vadd.f32 0.0, %v548
        %v550 = vpop.f32.mrb[0].mxu0
        %551 = vdwg.mxu0
        %v552 = vadd.f32 %v472, %v549
        %v553 = vld [vmem:[%s392 + $0x2] sm:$0x3]
        %s554 = scalar_lea.vmem %s1, 160
        %v555 = vld [vmem:[%s554] sm:$0xff]
        %v556 = vld [vmem:[%s554 + $0x8] sm:$0xff]
        %v557 = vld [vmem:[%s554 + $0x10] sm:$0xff]
        %v558 = vld [vmem:[%s554 + $0x18] sm:$0xff]
        %v560 = vsel %vm163, %v553, 0
        %562 = vmatprep.subr.mxu0 0.0
        %563 = vmatpush1.msra.mxu0 %v555
        %564 = vmatprep.subr.mxu0 0.0
        %565 = vmatpush1.msra.mxu0 %v556
        %566 = vmatprep.subr.mxu0 0.0
        %567 = vmatpush1.msra.mxu0 %v557
        %568 = vmatprep.subr.mxu0 0.0
        %569 = vmatpush1.msra.mxu0 %v558
        %570 = vmatprep.subr.mxu0 0.0
        %571 = vmatpush1.msra.mxu0 0.0
        %572 = vmatprep.subr.mxu0 0.0
        %573 = vmatpush1.msra.mxu0 0.0
        %574 = vmatprep.subr.mxu0 0.0
        %575 = vmatpush1.msra.mxu0 0.0
        %576 = vmatprep.subr.mxu0 0.0
        %577 = vmatpush1.msra.mxu0 0.0
        %578 = vmatprep.subr.mxu0 0.0
        %579 = vmatpush1.msra.mxu0 0.0
        %580 = vmatprep.subr.mxu0 0.0
        %581 = vmatpush1.msra.mxu0 0.0
        %582 = vmatprep.subr.mxu0 0.0
        %583 = vmatpush1.msra.mxu0 0.0
        %584 = vmatprep.subr.mxu0 0.0
        %585 = vmatpush1.msra.mxu0 0.0
        %586 = vmatprep.subr.mxu0 0.0
        %587 = vmatpush1.msra.mxu0 0.0
        %588 = vmatprep.subr.mxu0 0.0
        %589 = vmatpush1.msra.mxu0 0.0
        %590 = vmatprep.subr.mxu0 0.0
        %591 = vmatpush1.msra.mxu0 0.0
        %592 = vmatprep.subr.mxu0 0.0
        %593 = vmatpush1.msra.mxu0 0.0
        %594 = vmatprep.subr.mxu0 0.0
        %595 = vmatpush1.msra.mxu0 0.0
        %596 = vmatprep.subr.mxu0 0.0
        %597 = vmatpush1.msra.mxu0 0.0
        %598 = vmatprep.subr.mxu0 0.0
        %599 = vmatpush1.msra.mxu0 0.0
        %600 = vmatprep.subr.mxu0 0.0
        %601 = vmatpush1.msra.mxu0 0.0
        %602 = vmatprep.subr.mxu0 0.0
        %603 = vmatpush1.msra.mxu0 0.0
        %604 = vmatprep.subr.mxu0 0.0
        %605 = vmatpush1.msra.mxu0 0.0
        %606 = vmatprep.subr.mxu0 0.0
        %607 = vmatpush1.msra.mxu0 0.0
        %608 = vmatprep.subr.mxu0 0.0
        %609 = vmatpush1.msra.mxu0 0.0
        %610 = vmatprep.subr.mxu0 0.0
        %611 = vmatpush1.msra.mxu0 0.0
        %612 = vmatprep.subr.mxu0 0.0
        %613 = vmatpush1.msra.mxu0 0.0
        %614 = vmatprep.subr.mxu0 0.0
        %615 = vmatpush1.msra.mxu0 0.0
        %616 = vmatprep.subr.mxu0 0.0
        %617 = vmatpush1.msra.mxu0 0.0
        %618 = vmatprep.subr.mxu0 0.0
        %619 = vmatpush1.msra.mxu0 0.0
        %620 = vmatprep.subr.mxu0 0.0
        %621 = vmatpush1.msra.mxu0 0.0
        %622 = vmatprep.subr.mxu0 0.0
        %623 = vmatpush1.msra.mxu0 0.0
        %624 = vmatprep.subr.mxu0 0.0
        %625 = vmatpush1.msra.mxu0 0.0
        %626 = vmatprep.mubr.f32.mxu0 0.0
        %627 = vmatmul.mubr.f32.gmra.mrb[0].mxu0 %v560
        %v628 = vpop.f32.mrb[0].mxu0
        %v629 = vadd.f32 0.0, %v628
        %v630 = vpop.f32.mrb[0].mxu0
        %631 = vdwg.mxu0
        %v632 = vadd.f32 %v552, %v629
        %s633 = sadd.s32 %s145, 2
        %s634 = smul.u32 %s633, 4
        %s635 = scalar_lea.vmem %s138, %s634
        %v636 = vld [vmem:[%s635] sm:$0x3]
        %s637 = scalar_lea.vmem %s1, 192
        %v638 = vld [vmem:[%s637] sm:$0xff]
        %v639 = vld [vmem:[%s637 + $0x8] sm:$0xff]
        %v640 = vld [vmem:[%s637 + $0x10] sm:$0xff]
        %v641 = vld [vmem:[%s637 + $0x18] sm:$0xff]
        %v643 = vsel %vm163, %v636, 0
        %645 = vmatprep.subr.mxu0 0.0
        %646 = vmatpush1.msra.mxu0 %v638
        %647 = vmatprep.subr.mxu0 0.0
        %648 = vmatpush1.msra.mxu0 %v639
        %649 = vmatprep.subr.mxu0 0.0
        %650 = vmatpush1.msra.mxu0 %v640
        %651 = vmatprep.subr.mxu0 0.0
        %652 = vmatpush1.msra.mxu0 %v641
        %653 = vmatprep.subr.mxu0 0.0
        %654 = vmatpush1.msra.mxu0 0.0
        %655 = vmatprep.subr.mxu0 0.0
        %656 = vmatpush1.msra.mxu0 0.0
        %657 = vmatprep.subr.mxu0 0.0
        %658 = vmatpush1.msra.mxu0 0.0
        %659 = vmatprep.subr.mxu0 0.0
        %660 = vmatpush1.msra.mxu0 0.0
        %661 = vmatprep.subr.mxu0 0.0
        %662 = vmatpush1.msra.mxu0 0.0
        %663 = vmatprep.subr.mxu0 0.0
        %664 = vmatpush1.msra.mxu0 0.0
        %665 = vmatprep.subr.mxu0 0.0
        %666 = vmatpush1.msra.mxu0 0.0
        %667 = vmatprep.subr.mxu0 0.0
        %668 = vmatpush1.msra.mxu0 0.0
        %669 = vmatprep.subr.mxu0 0.0
        %670 = vmatpush1.msra.mxu0 0.0
        %671 = vmatprep.subr.mxu0 0.0
        %672 = vmatpush1.msra.mxu0 0.0
        %673 = vmatprep.subr.mxu0 0.0
        %674 = vmatpush1.msra.mxu0 0.0
        %675 = vmatprep.subr.mxu0 0.0
        %676 = vmatpush1.msra.mxu0 0.0
        %677 = vmatprep.subr.mxu0 0.0
        %678 = vmatpush1.msra.mxu0 0.0
        %679 = vmatprep.subr.mxu0 0.0
        %680 = vmatpush1.msra.mxu0 0.0
        %681 = vmatprep.subr.mxu0 0.0
        %682 = vmatpush1.msra.mxu0 0.0
        %683 = vmatprep.subr.mxu0 0.0
        %684 = vmatpush1.msra.mxu0 0.0
        %685 = vmatprep.subr.mxu0 0.0
        %686 = vmatpush1.msra.mxu0 0.0
        %687 = vmatprep.subr.mxu0 0.0
        %688 = vmatpush1.msra.mxu0 0.0
        %689 = vmatprep.subr.mxu0 0.0
        %690 = vmatpush1.msra.mxu0 0.0
        %691 = vmatprep.subr.mxu0 0.0
        %692 = vmatpush1.msra.mxu0 0.0
        %693 = vmatprep.subr.mxu0 0.0
        %694 = vmatpush1.msra.mxu0 0.0
        %695 = vmatprep.subr.mxu0 0.0
        %696 = vmatpush1.msra.mxu0 0.0
        %697 = vmatprep.subr.mxu0 0.0
        %698 = vmatpush1.msra.mxu0 0.0
        %699 = vmatprep.subr.mxu0 0.0
        %700 = vmatpush1.msra.mxu0 0.0
        %701 = vmatprep.subr.mxu0 0.0
        %702 = vmatpush1.msra.mxu0 0.0
        %703 = vmatprep.subr.mxu0 0.0
        %704 = vmatpush1.msra.mxu0 0.0
        %705 = vmatprep.subr.mxu0 0.0
        %706 = vmatpush1.msra.mxu0 0.0
        %707 = vmatprep.subr.mxu0 0.0
        %708 = vmatpush1.msra.mxu0 0.0
        %709 = vmatprep.mubr.f32.mxu0 0.0
        %710 = vmatmul.mubr.f32.gmra.mrb[0].mxu0 %v643
        %v711 = vpop.f32.mrb[0].mxu0
        %v712 = vadd.f32 0.0, %v711
        %v713 = vpop.f32.mrb[0].mxu0
        %714 = vdwg.mxu0
        %v715 = vadd.f32 %v632, %v712
        %v716 = vld [vmem:[%s635 + $0x1] sm:$0x3]
        %s717 = scalar_lea.vmem %s1, 224
        %v718 = vld [vmem:[%s717] sm:$0xff]
        %v719 = vld [vmem:[%s717 + $0x8] sm:$0xff]
        %v720 = vld [vmem:[%s717 + $0x10] sm:$0xff]
        %v721 = vld [vmem:[%s717 + $0x18] sm:$0xff]
        %v723 = vsel %vm163, %v716, 0
        %725 = vmatprep.subr.mxu0 0.0
        %726 = vmatpush1.msra.mxu0 %v718
        %727 = vmatprep.subr.mxu0 0.0
        %728 = vmatpush1.msra.mxu0 %v719
        %729 = vmatprep.subr.mxu0 0.0
        %730 = vmatpush1.msra.mxu0 %v720
        %731 = vmatprep.subr.mxu0 0.0
        %732 = vmatpush1.msra.mxu0 %v721
        %733 = vmatprep.subr.mxu0 0.0
        %734 = vmatpush1.msra.mxu0 0.0
        %735 = vmatprep.subr.mxu0 0.0
        %736 = vmatpush1.msra.mxu0 0.0
        %737 = vmatprep.subr.mxu0 0.0
        %738 = vmatpush1.msra.mxu0 0.0
        %739 = vmatprep.subr.mxu0 0.0
        %740 = vmatpush1.msra.mxu0 0.0
        %741 = vmatprep.subr.mxu0 0.0
        %742 = vmatpush1.msra.mxu0 0.0
        %743 = vmatprep.subr.mxu0 0.0
        %744 = vmatpush1.msra.mxu0 0.0
        %745 = vmatprep.subr.mxu0 0.0
        %746 = vmatpush1.msra.mxu0 0.0
        %747 = vmatprep.subr.mxu0 0.0
        %748 = vmatpush1.msra.mxu0 0.0
        %749 = vmatprep.subr.mxu0 0.0
        %750 = vmatpush1.msra.mxu0 0.0
        %751 = vmatprep.subr.mxu0 0.0
        %752 = vmatpush1.msra.mxu0 0.0
        %753 = vmatprep.subr.mxu0 0.0
        %754 = vmatpush1.msra.mxu0 0.0
        %755 = vmatprep.subr.mxu0 0.0
        %756 = vmatpush1.msra.mxu0 0.0
        %757 = vmatprep.subr.mxu0 0.0
        %758 = vmatpush1.msra.mxu0 0.0
        %759 = vmatprep.subr.mxu0 0.0
        %760 = vmatpush1.msra.mxu0 0.0
        %761 = vmatprep.subr.mxu0 0.0
        %762 = vmatpush1.msra.mxu0 0.0
        %763 = vmatprep.subr.mxu0 0.0
        %764 = vmatpush1.msra.mxu0 0.0
        %765 = vmatprep.subr.mxu0 0.0
        %766 = vmatpush1.msra.mxu0 0.0
        %767 = vmatprep.subr.mxu0 0.0
        %768 = vmatpush1.msra.mxu0 0.0
        %769 = vmatprep.subr.mxu0 0.0
        %770 = vmatpush1.msra.mxu0 0.0
        %771 = vmatprep.subr.mxu0 0.0
        %772 = vmatpush1.msra.mxu0 0.0
        %773 = vmatprep.subr.mxu0 0.0
        %774 = vmatpush1.msra.mxu0 0.0
        %775 = vmatprep.subr.mxu0 0.0
        %776 = vmatpush1.msra.mxu0 0.0
        %777 = vmatprep.subr.mxu0 0.0
        %778 = vmatpush1.msra.mxu0 0.0
        %779 = vmatprep.subr.mxu0 0.0
        %780 = vmatpush1.msra.mxu0 0.0
        %781 = vmatprep.subr.mxu0 0.0
        %782 = vmatpush1.msra.mxu0 0.0
        %783 = vmatprep.subr.mxu0 0.0
        %784 = vmatpush1.msra.mxu0 0.0
        %785 = vmatprep.subr.mxu0 0.0
        %786 = vmatpush1.msra.mxu0 0.0
        %787 = vmatprep.subr.mxu0 0.0
        %788 = vmatpush1.msra.mxu0 0.0
        %789 = vmatprep.mubr.f32.mxu0 0.0
        %790 = vmatmul.mubr.f32.gmra.mrb[0].mxu0 %v723
        %v791 = vpop.f32.mrb[0].mxu0
        %v792 = vadd.f32 0.0, %v791
        %v793 = vpop.f32.mrb[0].mxu0
        %794 = vdwg.mxu0
        %v795 = vadd.f32 %v715, %v792
        %v796 = vld [vmem:[%s635 + $0x2] sm:$0x3]
        %s797 = scalar_lea.vmem %s1, 256
        %v798 = vld [vmem:[%s797] sm:$0xff]
        %v799 = vld [vmem:[%s797 + $0x8] sm:$0xff]
        %v800 = vld [vmem:[%s797 + $0x10] sm:$0xff]
        %v801 = vld [vmem:[%s797 + $0x18] sm:$0xff]
        %v803 = vsel %vm163, %v796, 0
        %805 = vmatprep.subr.mxu0 0.0
        %806 = vmatpush1.msra.mxu0 %v798
        %807 = vmatprep.subr.mxu0 0.0
        %808 = vmatpush1.msra.mxu0 %v799
        %809 = vmatprep.subr.mxu0 0.0
        %810 = vmatpush1.msra.mxu0 %v800
        %811 = vmatprep.subr.mxu0 0.0
        %812 = vmatpush1.msra.mxu0 %v801
        %813 = vmatprep.subr.mxu0 0.0
        %814 = vmatpush1.msra.mxu0 0.0
        %815 = vmatprep.subr.mxu0 0.0
        %816 = vmatpush1.msra.mxu0 0.0
        %817 = vmatprep.subr.mxu0 0.0
        %818 = vmatpush1.msra.mxu0 0.0
        %819 = vmatprep.subr.mxu0 0.0
        %820 = vmatpush1.msra.mxu0 0.0
        %821 = vmatprep.subr.mxu0 0.0
        %822 = vmatpush1.msra.mxu0 0.0
        %823 = vmatprep.subr.mxu0 0.0
        %824 = vmatpush1.msra.mxu0 0.0
        %825 = vmatprep.subr.mxu0 0.0
        %826 = vmatpush1.msra.mxu0 0.0
        %827 = vmatprep.subr.mxu0 0.0
        %828 = vmatpush1.msra.mxu0 0.0
        %829 = vmatprep.subr.mxu0 0.0
        %830 = vmatpush1.msra.mxu0 0.0
        %831 = vmatprep.subr.mxu0 0.0
        %832 = vmatpush1.msra.mxu0 0.0
        %833 = vmatprep.subr.mxu0 0.0
        %834 = vmatpush1.msra.mxu0 0.0
        %835 = vmatprep.subr.mxu0 0.0
        %836 = vmatpush1.msra.mxu0 0.0
        %837 = vmatprep.subr.mxu0 0.0
        %838 = vmatpush1.msra.mxu0 0.0
        %839 = vmatprep.subr.mxu0 0.0
        %840 = vmatpush1.msra.mxu0 0.0
        %841 = vmatprep.subr.mxu0 0.0
        %842 = vmatpush1.msra.mxu0 0.0
        %843 = vmatprep.subr.mxu0 0.0
        %844 = vmatpush1.msra.mxu0 0.0
        %845 = vmatprep.subr.mxu0 0.0
        %846 = vmatpush1.msra.mxu0 0.0
        %847 = vmatprep.subr.mxu0 0.0
        %848 = vmatpush1.msra.mxu0 0.0
        %849 = vmatprep.subr.mxu0 0.0
        %850 = vmatpush1.msra.mxu0 0.0
        %851 = vmatprep.subr.mxu0 0.0
        %852 = vmatpush1.msra.mxu0 0.0
        %853 = vmatprep.subr.mxu0 0.0
        %854 = vmatpush1.msra.mxu0 0.0
        %855 = vmatprep.subr.mxu0 0.0
        %856 = vmatpush1.msra.mxu0 0.0
        %857 = vmatprep.subr.mxu0 0.0
        %858 = vmatpush1.msra.mxu0 0.0
        %859 = vmatprep.subr.mxu0 0.0
        %860 = vmatpush1.msra.mxu0 0.0
        %861 = vmatprep.subr.mxu0 0.0
        %862 = vmatpush1.msra.mxu0 0.0
        %863 = vmatprep.subr.mxu0 0.0
        %864 = vmatpush1.msra.mxu0 0.0
        %865 = vmatprep.subr.mxu0 0.0
        %866 = vmatpush1.msra.mxu0 0.0
        %867 = vmatprep.subr.mxu0 0.0
        %868 = vmatpush1.msra.mxu0 0.0
        %869 = vmatprep.mubr.f32.mxu0 0.0
        %870 = vmatmul.mubr.f32.gmra.mrb[0].mxu0 %v803
        %v871 = vpop.f32.mrb[0].mxu0
        %v872 = vadd.f32 0.0, %v871
        %v873 = vpop.f32.mrb[0].mxu0
        %874 = vdwg.mxu0
        %v875 = vadd.f32 %v795, %v872
        %s876 = smul.u32 %s145, 2
        %s877 = scalar_lea.vmem %s143, %s876
        %vm878 = vcmask 58368
        %879 = vst.msk [vmem:[%s877] sm:$0x3] %vm878, %v875
      $region33: #{multi_mri_fc_layers_forward.280} parent=27 // loop_footer
        %s149 = sadd.s32 1, %s145
      $region34: #{multi_mri_fc_layers_forward.280} parent=27 // loop_footer_branch
        %144 = sbr.rel target = $region30
      $region35: #{multi_mri_fc_layers_forward.280} parent=27 // loop_exit
        _
      %p880 = scmp.lt.s32.totalorder %s13, 1
      %s881 = scalar_select %p880, %s13, 1
      %s882 = smul.addr %s881, 2
      %s883 = smul.addr %s882, 2
      %s884 = scalar_lea.vmem %s2, %s883
      // Predicated region
      $region36: #{multi_mri_fc_layers_forward.280} parent=27 // pred_check
        %p885 = pneg %p78
      $region37: #{multi_mri_fc_layers_forward.280} parent=27 // pred_check_branch
        %887 = sbr.rel (%p885) target = $region39
      $region38: #{multi_mri_fc_layers_forward.280} parent=27 // pred_region
        _
      $region39: #{multi_mri_fc_layers_forward.280} parent=27 // pred_fallthru
        _
    $region28: #{multi_mri_fc_layers_forward.280} parent=5 // pred_fallthru
      _
    %p888 = scmp.le.s32.totalorder 2, %s8
    // Predicated region
    $region40: #{multi_mri_fc_layers_forward.280} parent=5 // pred_check
      %p889 = pneg %p888
    $region41: #{multi_mri_fc_layers_forward.280} parent=5 // pred_check_branch
      %891 = sbr.rel (%p889) target = $region43
    $region42: #{multi_mri_fc_layers_forward.280} parent=5 // pred_region
      %s892 = ssub.s32 %s8, 2
      // Predicated region
      $region44: #{multi_mri_fc_layers_forward.280} parent=42 // pred_check
        %p893 = pneg %p84
      $region45: #{multi_mri_fc_layers_forward.280} parent=42 // pred_check_branch
        %895 = sbr.rel (%p893) target = $region47
      $region46: #{multi_mri_fc_layers_forward.280} parent=42 // pred_region
        %p896 = scmp.lt.s32.totalorder %s14, 1
        %s897 = scalar_select %p896, %s14, 1
        %s898 = smul.addr %s897, 2
        %s899 = smul.addr %s898, 2
        %s900 = scalar_lea.vmem %s2, %s899
      $region47: #{multi_mri_fc_layers_forward.280} parent=42 // pred_fallthru
        _
    $region43: #{multi_mri_fc_layers_forward.280} parent=5 // pred_fallthru
      _
  $region6: #{multi_mri_fc_layers_forward.280} parent=0 // loop_footer
    %s12 = sadd.s32 1, %s8
  $region7: #{multi_mri_fc_layers_forward.280} parent=0 // loop_footer_branch
    %7 = sbr.rel target = $region3
  $region8: #{multi_mri_fc_layers_forward.280} parent=0 // loop_exit
    _

// kernel: multi_mri_fc_layers_forward.284
$region0: #{multi_mri_fc_layers_forward.284}
  #allocation0 [shape = 'u32[]', space=smem, size = 0x4, offset = 0x4, fixed_abs, tag = 'smem constant byte address 0x4 - core index']
  #allocation1 [shape = 'u32[144,128]{1,0:T(1,128)}', space=vmem, size = 0x12000, scoped, tag = 'internal scratch']
  %s0 = inlined_call_operand.vmem [shape: f32[2,16], index: 0, kind: input, shape index: {}]
  %s1 = inlined_call_operand.vmem [shape: f32[2,16], index: 1, kind: input, shape index: {}]
  %s2 = inlined_call_operand.vmem [shape: f32[2,16], index: 2, kind: input, shape index: {}]
  %s3 = inlined_call_operand.vmem [shape: f32[2,16], index: 3, kind: input, shape index: {}]
  %s4 = inlined_call_operand.vmem [shape: f32[2,16], index: 4, kind: output, shape index: {}]
  %s5 = sld [smem:[#allocation0]]
  $region26: #{multi_mri_fc_layers_forward.284} parent=0
    _
  %s7 = ssub.s32 1, %s5
  %s8 = scalar_select 0, %s7, %s5
  // Predicated region
  $region2: #{multi_mri_fc_layers_forward.284} parent=0 // pred_check
    _
  $region3: #{multi_mri_fc_layers_forward.284} parent=0 // pred_check_branch
    %10 = sbr.rel (0) target = $region5
  $region4: #{multi_mri_fc_layers_forward.284} parent=0 // pred_region
    _
  $region5: #{multi_mri_fc_layers_forward.284} parent=0 // pred_fallthru
    _
  // Predicated region
  $region6: #{multi_mri_fc_layers_forward.284} parent=0 // pred_check
    _
  $region7: #{multi_mri_fc_layers_forward.284} parent=0 // pred_check_branch
    %12 = sbr.rel (0) target = $region9
  $region8: #{multi_mri_fc_layers_forward.284} parent=0 // pred_region
    _
  $region9: #{multi_mri_fc_layers_forward.284} parent=0 // pred_fallthru
    _
  // Predicated region
  $region10: #{multi_mri_fc_layers_forward.284} parent=0 // pred_check
    _
  $region11: #{multi_mri_fc_layers_forward.284} parent=0 // pred_check_branch
    %14 = sbr.rel (0) target = $region13
  $region12: #{multi_mri_fc_layers_forward.284} parent=0 // pred_region
    _
  $region13: #{multi_mri_fc_layers_forward.284} parent=0 // pred_fallthru
    _
  // Predicated region
  $region14: #{multi_mri_fc_layers_forward.284} parent=0 // pred_check
    _
  $region15: #{multi_mri_fc_layers_forward.284} parent=0 // pred_check_branch
    %16 = sbr.rel (0) target = $region17
  $region16: #{multi_mri_fc_layers_forward.284} parent=0 // pred_region
    _
  $region17: #{multi_mri_fc_layers_forward.284} parent=0 // pred_fallthru
    _
  %v17 = vld [vmem:[%s0] sm:$0x3]
  %v18 = vld [vmem:[%s1] sm:$0x3]
  %v19 = vadd.f32 %v17, %v18
  %v20 = vld [vmem:[%s2] sm:$0x3]
  %v21 = vadd.f32 %v19, %v20
  %v22 = vld [vmem:[%s3] sm:$0x3]
  %v23 = vadd.f32 %v21, %v22
  %v24 = vmul.f32 %v23, 0.25
  %vm25 = vcmask 123904
  %26 = vst.msk [vmem:[%s4] sm:$0x3] %vm25, %v24
  // Predicated region
  $region18: #{multi_mri_fc_layers_forward.284} parent=0 // pred_check
    _
  $region19: #{multi_mri_fc_layers_forward.284} parent=0 // pred_check_branch
    %28 = sbr.rel (0) target = $region21
  $region20: #{multi_mri_fc_layers_forward.284} parent=0 // pred_region
    _
  $region21: #{multi_mri_fc_layers_forward.284} parent=0 // pred_fallthru
    _
  // Predicated region
  $region22: #{multi_mri_fc_layers_forward.284} parent=0 // pred_check
    _
  $region23: #{multi_mri_fc_layers_forward.284} parent=0 // pred_check_branch
    %30 = sbr.rel (0) target = $region25
  $region24: #{multi_mri_fc_layers_forward.284} parent=0 // pred_region
    _
  $region25: #{multi_mri_fc_layers_forward.284} parent=0 // pred_fallthru
    _

// kernel: multi_mri_fc_layers_forward.285
$region0: #{multi_mri_fc_layers_forward.285}
  #allocation0 [shape = 'u32[]', space=smem, size = 0x4, offset = 0x4, fixed_abs, tag = 'smem constant byte address 0x4 - core index']
  #allocation1 [shape = 'u32[144,128]{1,0:T(1,128)}', space=vmem, size = 0x12000, scoped, tag = 'internal scratch']
  %s0 = inlined_call_operand.vmem [shape: f32[2,16], index: 0, kind: input, shape index: {}]
  %s1 = inlined_call_operand.vmem [shape: f32[16,32], index: 1, kind: input, shape index: {}]
  %s2 = inlined_call_operand.vmem [shape: f32[1,16], index: 2, kind: input, shape index: {}]
  %s3 = inlined_call_operand.vmem [shape: f32[1,16], index: 3, kind: input, shape index: {}]
  %s4 = inlined_call_operand.vmem [shape: f32[1,32], index: 4, kind: input, shape index: {}]
  %s5 = inlined_call_operand.vmem [shape: f32[1,32], index: 5, kind: input, shape index: {}]
  %s6 = inlined_call_operand.vmem [shape: f32[2,32], index: 6, kind: output, shape index: {}]
  %s7 = sld [smem:[#allocation0]]
  $region34: #{multi_mri_fc_layers_forward.285} parent=0
    _
  %s9 = ssub.s32 1, %s7
  %s10 = scalar_select 0, %s9, %s7
  // Predicated region
  $region2: #{multi_mri_fc_layers_forward.285} parent=0 // pred_check
    _
  $region3: #{multi_mri_fc_layers_forward.285} parent=0 // pred_check_branch
    %12 = sbr.rel (0) target = $region5
  $region4: #{multi_mri_fc_layers_forward.285} parent=0 // pred_region
    _
  $region5: #{multi_mri_fc_layers_forward.285} parent=0 // pred_fallthru
    _
  // Predicated region
  $region6: #{multi_mri_fc_layers_forward.285} parent=0 // pred_check
    _
  $region7: #{multi_mri_fc_layers_forward.285} parent=0 // pred_check_branch
    %14 = sbr.rel (0) target = $region9
  $region8: #{multi_mri_fc_layers_forward.285} parent=0 // pred_region
    _
  $region9: #{multi_mri_fc_layers_forward.285} parent=0 // pred_fallthru
    _
  // Predicated region
  $region10: #{multi_mri_fc_layers_forward.285} parent=0 // pred_check
    _
  $region11: #{multi_mri_fc_layers_forward.285} parent=0 // pred_check_branch
    %16 = sbr.rel (0) target = $region13
  $region12: #{multi_mri_fc_layers_forward.285} parent=0 // pred_region
    _
  $region13: #{multi_mri_fc_layers_forward.285} parent=0 // pred_fallthru
    _
  // Predicated region
  $region14: #{multi_mri_fc_layers_forward.285} parent=0 // pred_check
    _
  $region15: #{multi_mri_fc_layers_forward.285} parent=0 // pred_check_branch
    %18 = sbr.rel (0) target = $region17
  $region16: #{multi_mri_fc_layers_forward.285} parent=0 // pred_region
    _
  $region17: #{multi_mri_fc_layers_forward.285} parent=0 // pred_fallthru
    _
  // Predicated region
  $region18: #{multi_mri_fc_layers_forward.285} parent=0 // pred_check
    _
  $region19: #{multi_mri_fc_layers_forward.285} parent=0 // pred_check_branch
    %20 = sbr.rel (0) target = $region21
  $region20: #{multi_mri_fc_layers_forward.285} parent=0 // pred_region
    _
  $region21: #{multi_mri_fc_layers_forward.285} parent=0 // pred_fallthru
    _
  // Predicated region
  $region22: #{multi_mri_fc_layers_forward.285} parent=0 // pred_check
    _
  $region23: #{multi_mri_fc_layers_forward.285} parent=0 // pred_check_branch
    %22 = sbr.rel (0) target = $region25
  $region24: #{multi_mri_fc_layers_forward.285} parent=0 // pred_region
    _
  $region25: #{multi_mri_fc_layers_forward.285} parent=0 // pred_fallthru
    _
  %v23 = vld [vmem:[%s0] sm:$0x3]
  %v24 = vld [vmem:[%s2] sm:$0x1]
  %v26 = vlaneseq
  %v27 = vshrl.u32 %v26, 7
  %v28 = vsub.s32 0, %v27
  %v29 = vrot.slane %v24, %v28
  %v31 = vmul.f32 %v23, %v29
  %v32 = vld [vmem:[%s3] sm:$0x1]
  %v34 = vlaneseq
  %v35 = vshrl.u32 %v34, 7
  %v36 = vsub.s32 0, %v35
  %v37 = vrot.slane %v32, %v36
  %v39 = vadd.f32 %v31, %v37
  %v40 = vmax.f32 %v39, 0.0
  %v41 = vld [vmem:[%s1] sm:$0xff]
  %v42 = vld [vmem:[%s1 + $0x8] sm:$0xff]
  %vm43 = vcmask 130048
  %v45 = vsel %vm43, %v40, 0
  %47 = vmatprep.subr.mxu0 0.0
  %48 = vmatpush1.msra.mxu0 %v41
  %49 = vmatprep.subr.mxu0 0.0
  %50 = vmatpush1.msra.mxu0 %v42
  %51 = vmatprep.subr.mxu0 0.0
  %52 = vmatpush1.msra.mxu0 0.0
  %53 = vmatprep.subr.mxu0 0.0
  %54 = vmatpush1.msra.mxu0 0.0
  %55 = vmatprep.subr.mxu0 0.0
  %56 = vmatpush1.msra.mxu0 0.0
  %57 = vmatprep.subr.mxu0 0.0
  %58 = vmatpush1.msra.mxu0 0.0
  %59 = vmatprep.subr.mxu0 0.0
  %60 = vmatpush1.msra.mxu0 0.0
  %61 = vmatprep.subr.mxu0 0.0
  %62 = vmatpush1.msra.mxu0 0.0
  %63 = vmatprep.subr.mxu0 0.0
  %64 = vmatpush1.msra.mxu0 0.0
  %65 = vmatprep.subr.mxu0 0.0
  %66 = vmatpush1.msra.mxu0 0.0
  %67 = vmatprep.subr.mxu0 0.0
  %68 = vmatpush1.msra.mxu0 0.0
  %69 = vmatprep.subr.mxu0 0.0
  %70 = vmatpush1.msra.mxu0 0.0
  %71 = vmatprep.subr.mxu0 0.0
  %72 = vmatpush1.msra.mxu0 0.0
  %73 = vmatprep.subr.mxu0 0.0
  %74 = vmatpush1.msra.mxu0 0.0
  %75 = vmatprep.subr.mxu0 0.0
  %76 = vmatpush1.msra.mxu0 0.0
  %77 = vmatprep.subr.mxu0 0.0
  %78 = vmatpush1.msra.mxu0 0.0
  %79 = vmatprep.subr.mxu0 0.0
  %80 = vmatpush1.msra.mxu0 0.0
  %81 = vmatprep.subr.mxu0 0.0
  %82 = vmatpush1.msra.mxu0 0.0
  %83 = vmatprep.subr.mxu0 0.0
  %84 = vmatpush1.msra.mxu0 0.0
  %85 = vmatprep.subr.mxu0 0.0
  %86 = vmatpush1.msra.mxu0 0.0
  %87 = vmatprep.subr.mxu0 0.0
  %88 = vmatpush1.msra.mxu0 0.0
  %89 = vmatprep.subr.mxu0 0.0
  %90 = vmatpush1.msra.mxu0 0.0
  %91 = vmatprep.subr.mxu0 0.0
  %92 = vmatpush1.msra.mxu0 0.0
  %93 = vmatprep.subr.mxu0 0.0
  %94 = vmatpush1.msra.mxu0 0.0
  %95 = vmatprep.subr.mxu0 0.0
  %96 = vmatpush1.msra.mxu0 0.0
  %97 = vmatprep.subr.mxu0 0.0
  %98 = vmatpush1.msra.mxu0 0.0
  %99 = vmatprep.subr.mxu0 0.0
  %100 = vmatpush1.msra.mxu0 0.0
  %101 = vmatprep.subr.mxu0 0.0
  %102 = vmatpush1.msra.mxu0 0.0
  %103 = vmatprep.subr.mxu0 0.0
  %104 = vmatpush1.msra.mxu0 0.0
  %105 = vmatprep.subr.mxu0 0.0
  %106 = vmatpush1.msra.mxu0 0.0
  %107 = vmatprep.subr.mxu0 0.0
  %108 = vmatpush1.msra.mxu0 0.0
  %109 = vmatprep.subr.mxu0 0.0
  %110 = vmatpush1.msra.mxu0 0.0
  %111 = vmatprep.mubr.f32.mxu0 0.0
  %112 = vmatmul.mubr.f32.gmra.mrb[0].mxu0 %v45
  %v113 = vpop.f32.mrb[0].mxu0
  %v114 = vadd.f32 0.0, %v113
  %v115 = vpop.f32.mrb[0].mxu0
  %116 = vdwg.mxu0
  %v117 = vld [vmem:[%s4] sm:$0x1]
  %v119 = vlaneseq
  %v120 = vshrl.u32 %v119, 7
  %v121 = vsub.s32 0, %v120
  %v122 = vrot.slane %v117, %v121
  %v124 = vmul.f32 %v114, %v122
  %v125 = vld [vmem:[%s5] sm:$0x1]
  %v127 = vlaneseq
  %v128 = vshrl.u32 %v127, 7
  %v129 = vsub.s32 0, %v128
  %v130 = vrot.slane %v125, %v129
  %v132 = vadd.f32 %v124, %v130
  %v133 = vmax.f32 %v132, 0.0
  %vm134 = vcmask 254976
  %135 = vst.msk [vmem:[%s6] sm:$0x3] %vm134, %v133
  // Predicated region
  $region26: #{multi_mri_fc_layers_forward.285} parent=0 // pred_check
    _
  $region27: #{multi_mri_fc_layers_forward.285} parent=0 // pred_check_branch
    %137 = sbr.rel (0) target = $region29
  $region28: #{multi_mri_fc_layers_forward.285} parent=0 // pred_region
    _
  $region29: #{multi_mri_fc_layers_forward.285} parent=0 // pred_fallthru
    _
  // Predicated region
  $region30: #{multi_mri_fc_layers_forward.285} parent=0 // pred_check
    _
  $region31: #{multi_mri_fc_layers_forward.285} parent=0 // pred_check_branch
    %139 = sbr.rel (0) target = $region33
  $region32: #{multi_mri_fc_layers_forward.285} parent=0 // pred_region
    _
  $region33: #{multi_mri_fc_layers_forward.285} parent=0 // pred_fallthru
    _

// kernel: multi_mri_fc_layers_forward.287
$region0: #{multi_mri_fc_layers_forward.287}
  #allocation0 [shape = 'u32[]', space=smem, size = 0x4, offset = 0x4, fixed_abs, tag = 'smem constant byte address 0x4 - core index']
  #allocation1 [shape = 'u32[144,128]{1,0:T(1,128)}', space=vmem, size = 0x12000, scoped, tag = 'internal scratch']
  %s0 = inlined_call_operand.vmem [shape: f32[2,24], index: 0, kind: input, shape index: {}]
  %s1 = inlined_call_operand.vmem [shape: f32[24,32], index: 1, kind: input, shape index: {}]
  %s2 = inlined_call_operand.vmem [shape: f32[1,24], index: 2, kind: input, shape index: {}]
  %s3 = inlined_call_operand.vmem [shape: f32[1,24], index: 3, kind: input, shape index: {}]
  %s4 = inlined_call_operand.vmem [shape: f32[1,32], index: 4, kind: input, shape index: {}]
  %s5 = inlined_call_operand.vmem [shape: f32[1,32], index: 5, kind: input, shape index: {}]
  %s6 = inlined_call_operand.vmem [shape: f32[2,32], index: 6, kind: output, shape index: {}]
  %s7 = sld [smem:[#allocation0]]
  $region34: #{multi_mri_fc_layers_forward.287} parent=0
    _
  %s9 = ssub.s32 1, %s7
  %s10 = scalar_select 0, %s9, %s7
  // Predicated region
  $region2: #{multi_mri_fc_layers_forward.287} parent=0 // pred_check
    _
  $region3: #{multi_mri_fc_layers_forward.287} parent=0 // pred_check_branch
    %12 = sbr.rel (0) target = $region5
  $region4: #{multi_mri_fc_layers_forward.287} parent=0 // pred_region
    _
  $region5: #{multi_mri_fc_layers_forward.287} parent=0 // pred_fallthru
    _
  // Predicated region
  $region6: #{multi_mri_fc_layers_forward.287} parent=0 // pred_check
    _
  $region7: #{multi_mri_fc_layers_forward.287} parent=0 // pred_check_branch
    %14 = sbr.rel (0) target = $region9
  $region8: #{multi_mri_fc_layers_forward.287} parent=0 // pred_region
    _
  $region9: #{multi_mri_fc_layers_forward.287} parent=0 // pred_fallthru
    _
  // Predicated region
  $region10: #{multi_mri_fc_layers_forward.287} parent=0 // pred_check
    _
  $region11: #{multi_mri_fc_layers_forward.287} parent=0 // pred_check_branch
    %16 = sbr.rel (0) target = $region13
  $region12: #{multi_mri_fc_layers_forward.287} parent=0 // pred_region
    _
  $region13: #{multi_mri_fc_layers_forward.287} parent=0 // pred_fallthru
    _
  // Predicated region
  $region14: #{multi_mri_fc_layers_forward.287} parent=0 // pred_check
    _
  $region15: #{multi_mri_fc_layers_forward.287} parent=0 // pred_check_branch
    %18 = sbr.rel (0) target = $region17
  $region16: #{multi_mri_fc_layers_forward.287} parent=0 // pred_region
    _
  $region17: #{multi_mri_fc_layers_forward.287} parent=0 // pred_fallthru
    _
  // Predicated region
  $region18: #{multi_mri_fc_layers_forward.287} parent=0 // pred_check
    _
  $region19: #{multi_mri_fc_layers_forward.287} parent=0 // pred_check_branch
    %20 = sbr.rel (0) target = $region21
  $region20: #{multi_mri_fc_layers_forward.287} parent=0 // pred_region
    _
  $region21: #{multi_mri_fc_layers_forward.287} parent=0 // pred_fallthru
    _
  // Predicated region
  $region22: #{multi_mri_fc_layers_forward.287} parent=0 // pred_check
    _
  $region23: #{multi_mri_fc_layers_forward.287} parent=0 // pred_check_branch
    %22 = sbr.rel (0) target = $region25
  $region24: #{multi_mri_fc_layers_forward.287} parent=0 // pred_region
    _
  $region25: #{multi_mri_fc_layers_forward.287} parent=0 // pred_fallthru
    _
  %v23 = vld [vmem:[%s0] sm:$0x3]
  %v24 = vld [vmem:[%s2] sm:$0x1]
  %v26 = vlaneseq
  %v27 = vshrl.u32 %v26, 7
  %v28 = vsub.s32 0, %v27
  %v29 = vrot.slane %v24, %v28
  %v31 = vmul.f32 %v23, %v29
  %v32 = vld [vmem:[%s3] sm:$0x1]
  %v34 = vlaneseq
  %v35 = vshrl.u32 %v34, 7
  %v36 = vsub.s32 0, %v35
  %v37 = vrot.slane %v32, %v36
  %v39 = vadd.f32 %v31, %v37
  %v40 = vmax.f32 %v39, 0.0
  %v41 = vld [vmem:[%s1] sm:$0xff]
  %v42 = vld [vmem:[%s1 + $0x8] sm:$0xff]
  %v43 = vld [vmem:[%s1 + $0x10] sm:$0xff]
  %vm44 = vcmask 195584
  %v46 = vsel %vm44, %v40, 0
  %48 = vmatprep.subr.mxu0 0.0
  %49 = vmatpush1.msra.mxu0 %v41
  %50 = vmatprep.subr.mxu0 0.0
  %51 = vmatpush1.msra.mxu0 %v42
  %52 = vmatprep.subr.mxu0 0.0
  %53 = vmatpush1.msra.mxu0 %v43
  %54 = vmatprep.subr.mxu0 0.0
  %55 = vmatpush1.msra.mxu0 0.0
  %56 = vmatprep.subr.mxu0 0.0
  %57 = vmatpush1.msra.mxu0 0.0
  %58 = vmatprep.subr.mxu0 0.0
  %59 = vmatpush1.msra.mxu0 0.0
  %60 = vmatprep.subr.mxu0 0.0
  %61 = vmatpush1.msra.mxu0 0.0
  %62 = vmatprep.subr.mxu0 0.0
  %63 = vmatpush1.msra.mxu0 0.0
  %64 = vmatprep.subr.mxu0 0.0
  %65 = vmatpush1.msra.mxu0 0.0
  %66 = vmatprep.subr.mxu0 0.0
  %67 = vmatpush1.msra.mxu0 0.0
  %68 = vmatprep.subr.mxu0 0.0
  %69 = vmatpush1.msra.mxu0 0.0
  %70 = vmatprep.subr.mxu0 0.0
  %71 = vmatpush1.msra.mxu0 0.0
  %72 = vmatprep.subr.mxu0 0.0
  %73 = vmatpush1.msra.mxu0 0.0
  %74 = vmatprep.subr.mxu0 0.0
  %75 = vmatpush1.msra.mxu0 0.0
  %76 = vmatprep.subr.mxu0 0.0
  %77 = vmatpush1.msra.mxu0 0.0
  %78 = vmatprep.subr.mxu0 0.0
  %79 = vmatpush1.msra.mxu0 0.0
  %80 = vmatprep.subr.mxu0 0.0
  %81 = vmatpush1.msra.mxu0 0.0
  %82 = vmatprep.subr.mxu0 0.0
  %83 = vmatpush1.msra.mxu0 0.0
  %84 = vmatprep.subr.mxu0 0.0
  %85 = vmatpush1.msra.mxu0 0.0
  %86 = vmatprep.subr.mxu0 0.0
  %87 = vmatpush1.msra.mxu0 0.0
  %88 = vmatprep.subr.mxu0 0.0
  %89 = vmatpush1.msra.mxu0 0.0
  %90 = vmatprep.subr.mxu0 0.0
  %91 = vmatpush1.msra.mxu0 0.0
  %92 = vmatprep.subr.mxu0 0.0
  %93 = vmatpush1.msra.mxu0 0.0
  %94 = vmatprep.subr.mxu0 0.0
  %95 = vmatpush1.msra.mxu0 0.0
  %96 = vmatprep.subr.mxu0 0.0
  %97 = vmatpush1.msra.mxu0 0.0
  %98 = vmatprep.subr.mxu0 0.0
  %99 = vmatpush1.msra.mxu0 0.0
  %100 = vmatprep.subr.mxu0 0.0
  %101 = vmatpush1.msra.mxu0 0.0
  %102 = vmatprep.subr.mxu0 0.0
  %103 = vmatpush1.msra.mxu0 0.0
  %104 = vmatprep.subr.mxu0 0.0
  %105 = vmatpush1.msra.mxu0 0.0
  %106 = vmatprep.subr.mxu0 0.0
  %107 = vmatpush1.msra.mxu0 0.0
  %108 = vmatprep.subr.mxu0 0.0
  %109 = vmatpush1.msra.mxu0 0.0
  %110 = vmatprep.subr.mxu0 0.0
  %111 = vmatpush1.msra.mxu0 0.0
  %112 = vmatprep.mubr.f32.mxu0 0.0
  %113 = vmatmul.mubr.f32.gmra.mrb[0].mxu0 %v46
  %v114 = vpop.f32.mrb[0].mxu0
  %v115 = vadd.f32 0.0, %v114
  %v116 = vpop.f32.mrb[0].mxu0
  %117 = vdwg.mxu0
  %v118 = vld [vmem:[%s4] sm:$0x1]
  %v120 = vlaneseq
  %v121 = vshrl.u32 %v120, 7
  %v122 = vsub.s32 0, %v121
  %v123 = vrot.slane %v118, %v122
  %v125 = vmul.f32 %v115, %v123
  %v126 = vld [vmem:[%s5] sm:$0x1]
  %v128 = vlaneseq
  %v129 = vshrl.u32 %v128, 7
  %v130 = vsub.s32 0, %v129
  %v131 = vrot.slane %v126, %v130
  %v133 = vadd.f32 %v125, %v131
  %v134 = vmax.f32 %v133, 0.0
  %vm135 = vcmask 254976
  %136 = vst.msk [vmem:[%s6] sm:$0x3] %vm135, %v134
  // Predicated region
  $region26: #{multi_mri_fc_layers_forward.287} parent=0 // pred_check
    _
  $region27: #{multi_mri_fc_layers_forward.287} parent=0 // pred_check_branch
    %138 = sbr.rel (0) target = $region29
  $region28: #{multi_mri_fc_layers_forward.287} parent=0 // pred_region
    _
  $region29: #{multi_mri_fc_layers_forward.287} parent=0 // pred_fallthru
    _
  // Predicated region
  $region30: #{multi_mri_fc_layers_forward.287} parent=0 // pred_check
    _
  $region31: #{multi_mri_fc_layers_forward.287} parent=0 // pred_check_branch
    %140 = sbr.rel (0) target = $region33
  $region32: #{multi_mri_fc_layers_forward.287} parent=0 // pred_region
    _
  $region33: #{multi_mri_fc_layers_forward.287} parent=0 // pred_fallthru
    _

// kernel: multi_mri_fc_layers_forward.286
$region0: #{multi_mri_fc_layers_forward.286}
  #allocation0 [shape = 'u32[]', space=smem, size = 0x4, offset = 0x4, fixed_abs, tag = 'smem constant byte address 0x4 - core index']
  #allocation1 [shape = 'u32[144,128]{1,0:T(1,128)}', space=vmem, size = 0x12000, scoped, tag = 'internal scratch']
  %s0 = inlined_call_operand.vmem [shape: f32[2,3,3,32], index: 0, kind: input, shape index: {}]
  %s1 = inlined_call_operand.vmem [shape: f32[9,32,8], index: 1, kind: input, shape index: {}]
  %s2 = inlined_call_operand.vmem [shape: f32[2,1,1,8], index: 2, kind: output, shape index: {}]
  %s3 = sld [smem:[#allocation0]]
  $region41: #{multi_mri_fc_layers_forward.286} parent=0
    _
  %s5 = ssub.s32 1, %s3
  %s6 = scalar_select 0, %s5, %s3
  loop: start=0, step=1, limit=4
  $region2: #{multi_mri_fc_layers_forward.286} parent=0 // loop_pre_header
    _
  $region3: #{multi_mri_fc_layers_forward.286} parent=0 // loop_header
    %s8 = sphi 0, %s12
    %p9 = scmp.ge.s32.totalorder %s8, 4
    %s18 = sphi 0, %s20
    %s21 = sphi 0, %s18
    %s22 = sphi 0, %s21
    %s38 = sphi 0, %s22
    %s42 = sphi 0, %s42
    %s44 = sphi 0, %s42
    %s45 = sphi 0, %s44
    %s59 = sphi 0, %s45
    %s65 = sphi 0, %s67
    %s68 = sphi 0, %s65
    %s69 = sphi 0, %s68
    %s85 = sphi 0, %s69
  $region4: #{multi_mri_fc_layers_forward.286} parent=0 // loop_header_branch
    %11 = sbr.rel (%p9) target = $region8
  $region5: #{multi_mri_fc_layers_forward.286} parent=0 // loop_body
    %s13 = ssub.s32 %s8, 1
    %s14 = ssub.s32 %s8, 2
    %s15 = sadd.s32 %s8, 1
    %s16 = ssub.s32 %s8, %s15
    %p17 = scmp.eq.s32.totalorder %s16, 0
    %s19 = sadd.s32 %s18, 1
    %s20 = scalar_select %p17, %s18, %s19
    %p23 = pneg %p17
    %p24 = scmp.eq.s32.totalorder %s8, 1
    %p25 = por %p23, %p24
    %p26 = scmp.ne.s32.totalorder %s18, %s21
    %p27 = scmp.eq.s32.totalorder %s8, 0
    %p28 = por %p26, %p27
    %p29 = scmp.ne.s32.totalorder %s18, %s21
    %p30 = scmp.eq.s32.totalorder %s13, 1
    %p31 = por %p29, %p30
    %p32 = scmp.ne.s32.totalorder %s21, %s22
    %p33 = scmp.eq.s32.totalorder %s13, 0
    %p34 = por %p32, %p33
    %p35 = scmp.ne.s32.totalorder %s21, %s22
    %p36 = scmp.eq.s32.totalorder %s14, 1
    %p37 = por %p35, %p36
    %p39 = scmp.ne.s32.totalorder %s22, %s38
    %p40 = scmp.eq.s32.totalorder %s14, 0
    %p41 = por %p39, %p40
    %s43 = sadd.s32 %s42, 1
    %p46 = scmp.eq.s32.totalorder %s8, 1
    %p47 = scmp.ne.s32.totalorder %s42, %s44
    %p48 = scmp.eq.s32.totalorder %s8, 0
    %p49 = por %p47, %p48
    %p50 = scmp.ne.s32.totalorder %s42, %s44
    %p51 = scmp.eq.s32.totalorder %s13, 1
    %p52 = por %p50, %p51
    %p53 = scmp.ne.s32.totalorder %s44, %s45
    %p54 = scmp.eq.s32.totalorder %s13, 0
    %p55 = por %p53, %p54
    %p56 = scmp.ne.s32.totalorder %s44, %s45
    %p57 = scmp.eq.s32.totalorder %s14, 1
    %p58 = por %p56, %p57
    %p60 = scmp.ne.s32.totalorder %s45, %s59
    %p61 = scmp.eq.s32.totalorder %s14, 0
    %p62 = por %p60, %p61
    %s63 = ssub.s32 %s8, %s15
    %p64 = scmp.eq.s32.totalorder %s63, 0
    %s66 = sadd.s32 %s65, 1
    %s67 = scalar_select %p64, %s65, %s66
    %p70 = pneg %p64
    %p71 = scmp.eq.s32.totalorder %s8, 1
    %p72 = por %p70, %p71
    %p73 = scmp.ne.s32.totalorder %s65, %s68
    %p74 = scmp.eq.s32.totalorder %s8, 0
    %p75 = por %p73, %p74
    %p76 = scmp.ne.s32.totalorder %s65, %s68
    %p77 = scmp.eq.s32.totalorder %s13, 1
    %p78 = por %p76, %p77
    %p79 = scmp.ne.s32.totalorder %s68, %s69
    %p80 = scmp.eq.s32.totalorder %s13, 0
    %p81 = por %p79, %p80
    %p82 = scmp.ne.s32.totalorder %s68, %s69
    %p83 = scmp.eq.s32.totalorder %s14, 1
    %p84 = por %p82, %p83
    %p86 = scmp.ne.s32.totalorder %s69, %s85
    %p87 = scmp.eq.s32.totalorder %s14, 0
    %p88 = por %p86, %p87
    %p89 = scmp.le.s32.totalorder 1, %s8
    %p90 = scmp.lt.s32.totalorder %s8, 3
    %p91 = pnand %p89, %p90
    %p92 = pneg %p91
    // Predicated region
    $region9: #{multi_mri_fc_layers_forward.286} parent=5 // pred_check
      _
    $region10: #{multi_mri_fc_layers_forward.286} parent=5 // pred_check_branch
      %94 = sbr.rel (%p91) target = $region12
    $region11: #{multi_mri_fc_layers_forward.286} parent=5 // pred_region
      %s95 = ssub.s32 %s8, 1
      // Predicated region
      $region13: #{multi_mri_fc_layers_forward.286} parent=11 // pred_check
        %p96 = pneg %p55
      $region14: #{multi_mri_fc_layers_forward.286} parent=11 // pred_check_branch
        %98 = sbr.rel (%p96) target = $region16
      $region15: #{multi_mri_fc_layers_forward.286} parent=11 // pred_region
        _
      $region16: #{multi_mri_fc_layers_forward.286} parent=11 // pred_fallthru
        _
    $region12: #{multi_mri_fc_layers_forward.286} parent=5 // pred_fallthru
      _
    %p99 = scmp.lt.s32.totalorder %s8, 2
    // Predicated region
    $region17: #{multi_mri_fc_layers_forward.286} parent=5 // pred_check
      %p100 = pneg %p99
    $region18: #{multi_mri_fc_layers_forward.286} parent=5 // pred_check_branch
      %102 = sbr.rel (%p100) target = $region20
    $region19: #{multi_mri_fc_layers_forward.286} parent=5 // pred_region
      // Predicated region
      $region21: #{multi_mri_fc_layers_forward.286} parent=19 // pred_check
        %p103 = pneg %p28
      $region22: #{multi_mri_fc_layers_forward.286} parent=19 // pred_check_branch
        %105 = sbr.rel (%p103) target = $region24
      $region23: #{multi_mri_fc_layers_forward.286} parent=19 // pred_region
        %p106 = scmp.lt.s32.totalorder %s8, 1
        %s107 = scalar_select %p106, %s8, 1
        %s108 = smul.addr %s107, 3
        %s109 = smul.addr %s108, 4
        %s110 = scalar_lea.vmem %s0, %s109
      $region24: #{multi_mri_fc_layers_forward.286} parent=19 // pred_fallthru
        _
    $region20: #{multi_mri_fc_layers_forward.286} parent=5 // pred_fallthru
      _
    %p111 = scmp.le.s32.totalorder 1, %s8
    %p112 = scmp.lt.s32.totalorder %s8, 3
    %p113 = pnand %p111, %p112
    %p114 = pneg %p113
    // Predicated region
    $region25: #{multi_mri_fc_layers_forward.286} parent=5 // pred_check
      _
    $region26: #{multi_mri_fc_layers_forward.286} parent=5 // pred_check_branch
      %116 = sbr.rel (%p113) target = $region28
    $region27: #{multi_mri_fc_layers_forward.286} parent=5 // pred_region
      %s117 = ssub.s32 %s8, 1
      %p118 = scmp.lt.s32.totalorder %s13, 1
      %s119 = scalar_select %p118, %s13, 1
      %s120 = smul.addr %s119, 3
      %s121 = smul.addr %s120, 4
      %s122 = scalar_lea.vmem %s0, %s121
      %p123 = pneg %p34
      %p124 = pneg %p31
      %p125 = pneg %p55
      %p126 = pneg %p52
      %p127 = pneg %p81
      %p128 = pneg %p78
      %p129 = scmp.lt.s32.totalorder %s13, 1
      %s130 = scalar_select %p129, %s13, 1
      %s131 = scalar_lea.vmem %s2, %s130
      %p132 = scmp.lt.s32.totalorder %s13, 1
      %s133 = scalar_select %p132, %s13, 1
      %s134 = smul.addr %s133, 3
      %s135 = smul.addr %s134, 4
      %s136 = scalar_lea.vmem %s0, %s135
      %p137 = scmp.lt.s32.totalorder %s13, 1
      %s138 = scalar_select %p137, %s13, 1
      %s139 = scalar_lea.vmem %s2, %s138
      %v140 = vld [vmem:[%s136] sm:$0x1]
      %v141 = vld [vmem:[%s1] sm:$0xff]
      %v142 = vld [vmem:[%s1 + $0x8] sm:$0xff]
      %v143 = vld [vmem:[%s1 + $0x10] sm:$0xff]
      %v144 = vld [vmem:[%s1 + $0x18] sm:$0xff]
      %v145 = vld [vmem:[%s136 + $0x1] sm:$0x1]
      %s146 = scalar_lea.vmem %s1, 32
      %v147 = vld [vmem:[%s146] sm:$0xff]
      %v148 = vld [vmem:[%s146 + $0x8] sm:$0xff]
      %v149 = vld [vmem:[%s146 + $0x10] sm:$0xff]
      %v150 = vld [vmem:[%s146 + $0x18] sm:$0xff]
      %vm151 = vcmask 261120
      %v153 = vsel %vm151, %v145, 0
      %155 = vmatprep.subr.mxu0 0.0
      %156 = vmatpush1.msra.mxu0 %v147
      %157 = vmatprep.subr.mxu0 0.0
      %158 = vmatpush1.msra.mxu0 %v148
      %159 = vmatprep.subr.mxu0 0.0
      %160 = vmatpush1.msra.mxu0 %v149
      %161 = vmatprep.subr.mxu0 0.0
      %162 = vmatpush1.msra.mxu0 %v150
      %163 = vmatprep.subr.mxu0 0.0
      %164 = vmatpush1.msra.mxu0 0.0
      %165 = vmatprep.subr.mxu0 0.0
      %166 = vmatpush1.msra.mxu0 0.0
      %167 = vmatprep.subr.mxu0 0.0
      %168 = vmatpush1.msra.mxu0 0.0
      %169 = vmatprep.subr.mxu0 0.0
      %170 = vmatpush1.msra.mxu0 0.0
      %171 = vmatprep.subr.mxu0 0.0
      %172 = vmatpush1.msra.mxu0 0.0
      %173 = vmatprep.subr.mxu0 0.0
      %174 = vmatpush1.msra.mxu0 0.0
      %175 = vmatprep.subr.mxu0 0.0
      %176 = vmatpush1.msra.mxu0 0.0
      %177 = vmatprep.subr.mxu0 0.0
      %178 = vmatpush1.msra.mxu0 0.0
      %179 = vmatprep.subr.mxu0 0.0
      %180 = vmatpush1.msra.mxu0 0.0
      %181 = vmatprep.subr.mxu0 0.0
      %182 = vmatpush1.msra.mxu0 0.0
      %183 = vmatprep.subr.mxu0 0.0
      %184 = vmatpush1.msra.mxu0 0.0
      %185 = vmatprep.subr.mxu0 0.0
      %186 = vmatpush1.msra.mxu0 0.0
      %187 = vmatprep.subr.mxu0 0.0
      %188 = vmatpush1.msra.mxu0 0.0
      %189 = vmatprep.subr.mxu0 0.0
      %190 = vmatpush1.msra.mxu0 0.0
      %191 = vmatprep.subr.mxu0 0.0
      %192 = vmatpush1.msra.mxu0 0.0
      %193 = vmatprep.subr.mxu0 0.0
      %194 = vmatpush1.msra.mxu0 0.0
      %195 = vmatprep.subr.mxu0 0.0
      %196 = vmatpush1.msra.mxu0 0.0
      %197 = vmatprep.subr.mxu0 0.0
      %198 = vmatpush1.msra.mxu0 0.0
      %199 = vmatprep.subr.mxu0 0.0
      %200 = vmatpush1.msra.mxu0 0.0
      %201 = vmatprep.subr.mxu0 0.0
      %202 = vmatpush1.msra.mxu0 0.0
      %203 = vmatprep.subr.mxu0 0.0
      %204 = vmatpush1.msra.mxu0 0.0
      %205 = vmatprep.subr.mxu0 0.0
      %206 = vmatpush1.msra.mxu0 0.0
      %207 = vmatprep.subr.mxu0 0.0
      %208 = vmatpush1.msra.mxu0 0.0
      %209 = vmatprep.subr.mxu0 0.0
      %210 = vmatpush1.msra.mxu0 0.0
      %211 = vmatprep.subr.mxu0 0.0
      %212 = vmatpush1.msra.mxu0 0.0
      %213 = vmatprep.subr.mxu0 0.0
      %214 = vmatpush1.msra.mxu0 0.0
      %215 = vmatprep.subr.mxu0 0.0
      %216 = vmatpush1.msra.mxu0 0.0
      %217 = vmatprep.subr.mxu0 0.0
      %218 = vmatpush1.msra.mxu0 0.0
      %219 = vmatprep.mubr.f32.mxu0 0.0
      %220 = vmatmul.mubr.f32.gmra.mrb[0].mxu0 %v153
      %v221 = vpop.f32.mrb[0].mxu0
      %v222 = vadd.f32 0.0, %v221
      %v223 = vpop.f32.mrb[0].mxu0
      %224 = vdwg.mxu0
      %v226 = vsel %vm151, %v140, 0
      %228 = vmatprep.subr.mxu0 0.0
      %229 = vmatpush1.msra.mxu0 %v141
      %230 = vmatprep.subr.mxu0 0.0
      %231 = vmatpush1.msra.mxu0 %v142
      %232 = vmatprep.subr.mxu0 0.0
      %233 = vmatpush1.msra.mxu0 %v143
      %234 = vmatprep.subr.mxu0 0.0
      %235 = vmatpush1.msra.mxu0 %v144
      %236 = vmatprep.subr.mxu0 0.0
      %237 = vmatpush1.msra.mxu0 0.0
      %238 = vmatprep.subr.mxu0 0.0
      %239 = vmatpush1.msra.mxu0 0.0
      %240 = vmatprep.subr.mxu0 0.0
      %241 = vmatpush1.msra.mxu0 0.0
      %242 = vmatprep.subr.mxu0 0.0
      %243 = vmatpush1.msra.mxu0 0.0
      %244 = vmatprep.subr.mxu0 0.0
      %245 = vmatpush1.msra.mxu0 0.0
      %246 = vmatprep.subr.mxu0 0.0
      %247 = vmatpush1.msra.mxu0 0.0
      %248 = vmatprep.subr.mxu0 0.0
      %249 = vmatpush1.msra.mxu0 0.0
      %250 = vmatprep.subr.mxu0 0.0
      %251 = vmatpush1.msra.mxu0 0.0
      %252 = vmatprep.subr.mxu0 0.0
      %253 = vmatpush1.msra.mxu0 0.0
      %254 = vmatprep.subr.mxu0 0.0
      %255 = vmatpush1.msra.mxu0 0.0
      %256 = vmatprep.subr.mxu0 0.0
      %257 = vmatpush1.msra.mxu0 0.0
      %258 = vmatprep.subr.mxu0 0.0
      %259 = vmatpush1.msra.mxu0 0.0
      %260 = vmatprep.subr.mxu0 0.0
      %261 = vmatpush1.msra.mxu0 0.0
      %262 = vmatprep.subr.mxu0 0.0
      %263 = vmatpush1.msra.mxu0 0.0
      %264 = vmatprep.subr.mxu0 0.0
      %265 = vmatpush1.msra.mxu0 0.0
      %266 = vmatprep.subr.mxu0 0.0
      %267 = vmatpush1.msra.mxu0 0.0
      %268 = vmatprep.subr.mxu0 0.0
      %269 = vmatpush1.msra.mxu0 0.0
      %270 = vmatprep.subr.mxu0 0.0
      %271 = vmatpush1.msra.mxu0 0.0
      %272 = vmatprep.subr.mxu0 0.0
      %273 = vmatpush1.msra.mxu0 0.0
      %274 = vmatprep.subr.mxu0 0.0
      %275 = vmatpush1.msra.mxu0 0.0
      %276 = vmatprep.subr.mxu0 0.0
      %277 = vmatpush1.msra.mxu0 0.0
      %278 = vmatprep.subr.mxu0 0.0
      %279 = vmatpush1.msra.mxu0 0.0
      %280 = vmatprep.subr.mxu0 0.0
      %281 = vmatpush1.msra.mxu0 0.0
      %282 = vmatprep.subr.mxu0 0.0
      %283 = vmatpush1.msra.mxu0 0.0
      %284 = vmatprep.subr.mxu0 0.0
      %285 = vmatpush1.msra.mxu0 0.0
      %286 = vmatprep.subr.mxu0 0.0
      %287 = vmatpush1.msra.mxu0 0.0
      %288 = vmatprep.subr.mxu0 0.0
      %289 = vmatpush1.msra.mxu0 0.0
      %290 = vmatprep.subr.mxu0 0.0
      %291 = vmatpush1.msra.mxu0 0.0
      %292 = vmatprep.mubr.f32.mxu0 0.0
      %293 = vmatmul.mubr.f32.gmra.mrb[0].mxu0 %v226
      %v294 = vpop.f32.mrb[0].mxu0
      %v295 = vadd.f32 %v222, %v294
      %v296 = vpop.f32.mrb[0].mxu0
      %297 = vdwg.mxu0
      %v298 = vld [vmem:[%s136 + $0x2] sm:$0x1]
      %s299 = scalar_lea.vmem %s1, 64
      %v300 = vld [vmem:[%s299] sm:$0xff]
      %v301 = vld [vmem:[%s299 + $0x8] sm:$0xff]
      %v302 = vld [vmem:[%s299 + $0x10] sm:$0xff]
      %v303 = vld [vmem:[%s299 + $0x18] sm:$0xff]
      %v305 = vsel %vm151, %v298, 0
      %307 = vmatprep.subr.mxu0 0.0
      %308 = vmatpush1.msra.mxu0 %v300
      %309 = vmatprep.subr.mxu0 0.0
      %310 = vmatpush1.msra.mxu0 %v301
      %311 = vmatprep.subr.mxu0 0.0
      %312 = vmatpush1.msra.mxu0 %v302
      %313 = vmatprep.subr.mxu0 0.0
      %314 = vmatpush1.msra.mxu0 %v303
      %315 = vmatprep.subr.mxu0 0.0
      %316 = vmatpush1.msra.mxu0 0.0
      %317 = vmatprep.subr.mxu0 0.0
      %318 = vmatpush1.msra.mxu0 0.0
      %319 = vmatprep.subr.mxu0 0.0
      %320 = vmatpush1.msra.mxu0 0.0
      %321 = vmatprep.subr.mxu0 0.0
      %322 = vmatpush1.msra.mxu0 0.0
      %323 = vmatprep.subr.mxu0 0.0
      %324 = vmatpush1.msra.mxu0 0.0
      %325 = vmatprep.subr.mxu0 0.0
      %326 = vmatpush1.msra.mxu0 0.0
      %327 = vmatprep.subr.mxu0 0.0
      %328 = vmatpush1.msra.mxu0 0.0
      %329 = vmatprep.subr.mxu0 0.0
      %330 = vmatpush1.msra.mxu0 0.0
      %331 = vmatprep.subr.mxu0 0.0
      %332 = vmatpush1.msra.mxu0 0.0
      %333 = vmatprep.subr.mxu0 0.0
      %334 = vmatpush1.msra.mxu0 0.0
      %335 = vmatprep.subr.mxu0 0.0
      %336 = vmatpush1.msra.mxu0 0.0
      %337 = vmatprep.subr.mxu0 0.0
      %338 = vmatpush1.msra.mxu0 0.0
      %339 = vmatprep.subr.mxu0 0.0
      %340 = vmatpush1.msra.mxu0 0.0
      %341 = vmatprep.subr.mxu0 0.0
      %342 = vmatpush1.msra.mxu0 0.0
      %343 = vmatprep.subr.mxu0 0.0
      %344 = vmatpush1.msra.mxu0 0.0
      %345 = vmatprep.subr.mxu0 0.0
      %346 = vmatpush1.msra.mxu0 0.0
      %347 = vmatprep.subr.mxu0 0.0
      %348 = vmatpush1.msra.mxu0 0.0
      %349 = vmatprep.subr.mxu0 0.0
      %350 = vmatpush1.msra.mxu0 0.0
      %351 = vmatprep.subr.mxu0 0.0
      %352 = vmatpush1.msra.mxu0 0.0
      %353 = vmatprep.subr.mxu0 0.0
      %354 = vmatpush1.msra.mxu0 0.0
      %355 = vmatprep.subr.mxu0 0.0
      %356 = vmatpush1.msra.mxu0 0.0
      %357 = vmatprep.subr.mxu0 0.0
      %358 = vmatpush1.msra.mxu0 0.0
      %359 = vmatprep.subr.mxu0 0.0
      %360 = vmatpush1.msra.mxu0 0.0
      %361 = vmatprep.subr.mxu0 0.0
      %362 = vmatpush1.msra.mxu0 0.0
      %363 = vmatprep.subr.mxu0 0.0
      %364 = vmatpush1.msra.mxu0 0.0
      %365 = vmatprep.subr.mxu0 0.0
      %366 = vmatpush1.msra.mxu0 0.0
      %367 = vmatprep.subr.mxu0 0.0
      %368 = vmatpush1.msra.mxu0 0.0
      %369 = vmatprep.subr.mxu0 0.0
      %370 = vmatpush1.msra.mxu0 0.0
      %371 = vmatprep.mubr.f32.mxu0 0.0
      %372 = vmatmul.mubr.f32.gmra.mrb[0].mxu0 %v305
      %v373 = vpop.f32.mrb[0].mxu0
      %v374 = vadd.f32 0.0, %v373
      %v375 = vpop.f32.mrb[0].mxu0
      %376 = vdwg.mxu0
      %v377 = vadd.f32 %v295, %v374
      %s378 = scalar_lea.vmem %s136, 4
      %v379 = vld [vmem:[%s378] sm:$0x1]
      %s380 = scalar_lea.vmem %s1, 96
      %v381 = vld [vmem:[%s380] sm:$0xff]
      %v382 = vld [vmem:[%s380 + $0x8] sm:$0xff]
      %v383 = vld [vmem:[%s380 + $0x10] sm:$0xff]
      %v384 = vld [vmem:[%s380 + $0x18] sm:$0xff]
      %v386 = vsel %vm151, %v379, 0
      %388 = vmatprep.subr.mxu0 0.0
      %389 = vmatpush1.msra.mxu0 %v381
      %390 = vmatprep.subr.mxu0 0.0
      %391 = vmatpush1.msra.mxu0 %v382
      %392 = vmatprep.subr.mxu0 0.0
      %393 = vmatpush1.msra.mxu0 %v383
      %394 = vmatprep.subr.mxu0 0.0
      %395 = vmatpush1.msra.mxu0 %v384
      %396 = vmatprep.subr.mxu0 0.0
      %397 = vmatpush1.msra.mxu0 0.0
      %398 = vmatprep.subr.mxu0 0.0
      %399 = vmatpush1.msra.mxu0 0.0
      %400 = vmatprep.subr.mxu0 0.0
      %401 = vmatpush1.msra.mxu0 0.0
      %402 = vmatprep.subr.mxu0 0.0
      %403 = vmatpush1.msra.mxu0 0.0
      %404 = vmatprep.subr.mxu0 0.0
      %405 = vmatpush1.msra.mxu0 0.0
      %406 = vmatprep.subr.mxu0 0.0
      %407 = vmatpush1.msra.mxu0 0.0
      %408 = vmatprep.subr.mxu0 0.0
      %409 = vmatpush1.msra.mxu0 0.0
      %410 = vmatprep.subr.mxu0 0.0
      %411 = vmatpush1.msra.mxu0 0.0
      %412 = vmatprep.subr.mxu0 0.0
      %413 = vmatpush1.msra.mxu0 0.0
      %414 = vmatprep.subr.mxu0 0.0
      %415 = vmatpush1.msra.mxu0 0.0
      %416 = vmatprep.subr.mxu0 0.0
      %417 = vmatpush1.msra.mxu0 0.0
      %418 = vmatprep.subr.mxu0 0.0
      %419 = vmatpush1.msra.mxu0 0.0
      %420 = vmatprep.subr.mxu0 0.0
      %421 = vmatpush1.msra.mxu0 0.0
      %422 = vmatprep.subr.mxu0 0.0
      %423 = vmatpush1.msra.mxu0 0.0
      %424 = vmatprep.subr.mxu0 0.0
      %425 = vmatpush1.msra.mxu0 0.0
      %426 = vmatprep.subr.mxu0 0.0
      %427 = vmatpush1.msra.mxu0 0.0
      %428 = vmatprep.subr.mxu0 0.0
      %429 = vmatpush1.msra.mxu0 0.0
      %430 = vmatprep.subr.mxu0 0.0
      %431 = vmatpush1.msra.mxu0 0.0
      %432 = vmatprep.subr.mxu0 0.0
      %433 = vmatpush1.msra.mxu0 0.0
      %434 = vmatprep.subr.mxu0 0.0
      %435 = vmatpush1.msra.mxu0 0.0
      %436 = vmatprep.subr.mxu0 0.0
      %437 = vmatpush1.msra.mxu0 0.0
      %438 = vmatprep.subr.mxu0 0.0
      %439 = vmatpush1.msra.mxu0 0.0
      %440 = vmatprep.subr.mxu0 0.0
      %441 = vmatpush1.msra.mxu0 0.0
      %442 = vmatprep.subr.mxu0 0.0
      %443 = vmatpush1.msra.mxu0 0.0
      %444 = vmatprep.subr.mxu0 0.0
      %445 = vmatpush1.msra.mxu0 0.0
      %446 = vmatprep.subr.mxu0 0.0
      %447 = vmatpush1.msra.mxu0 0.0
      %448 = vmatprep.subr.mxu0 0.0
      %449 = vmatpush1.msra.mxu0 0.0
      %450 = vmatprep.subr.mxu0 0.0
      %451 = vmatpush1.msra.mxu0 0.0
      %452 = vmatprep.mubr.f32.mxu0 0.0
      %453 = vmatmul.mubr.f32.gmra.mrb[0].mxu0 %v386
      %v454 = vpop.f32.mrb[0].mxu0
      %v455 = vadd.f32 0.0, %v454
      %v456 = vpop.f32.mrb[0].mxu0
      %457 = vdwg.mxu0
      %v458 = vadd.f32 %v377, %v455
      %v459 = vld [vmem:[%s378 + $0x1] sm:$0x1]
      %s460 = scalar_lea.vmem %s1, 128
      %v461 = vld [vmem:[%s460] sm:$0xff]
      %v462 = vld [vmem:[%s460 + $0x8] sm:$0xff]
      %v463 = vld [vmem:[%s460 + $0x10] sm:$0xff]
      %v464 = vld [vmem:[%s460 + $0x18] sm:$0xff]
      %v466 = vsel %vm151, %v459, 0
      %468 = vmatprep.subr.mxu0 0.0
      %469 = vmatpush1.msra.mxu0 %v461
      %470 = vmatprep.subr.mxu0 0.0
      %471 = vmatpush1.msra.mxu0 %v462
      %472 = vmatprep.subr.mxu0 0.0
      %473 = vmatpush1.msra.mxu0 %v463
      %474 = vmatprep.subr.mxu0 0.0
      %475 = vmatpush1.msra.mxu0 %v464
      %476 = vmatprep.subr.mxu0 0.0
      %477 = vmatpush1.msra.mxu0 0.0
      %478 = vmatprep.subr.mxu0 0.0
      %479 = vmatpush1.msra.mxu0 0.0
      %480 = vmatprep.subr.mxu0 0.0
      %481 = vmatpush1.msra.mxu0 0.0
      %482 = vmatprep.subr.mxu0 0.0
      %483 = vmatpush1.msra.mxu0 0.0
      %484 = vmatprep.subr.mxu0 0.0
      %485 = vmatpush1.msra.mxu0 0.0
      %486 = vmatprep.subr.mxu0 0.0
      %487 = vmatpush1.msra.mxu0 0.0
      %488 = vmatprep.subr.mxu0 0.0
      %489 = vmatpush1.msra.mxu0 0.0
      %490 = vmatprep.subr.mxu0 0.0
      %491 = vmatpush1.msra.mxu0 0.0
      %492 = vmatprep.subr.mxu0 0.0
      %493 = vmatpush1.msra.mxu0 0.0
      %494 = vmatprep.subr.mxu0 0.0
      %495 = vmatpush1.msra.mxu0 0.0
      %496 = vmatprep.subr.mxu0 0.0
      %497 = vmatpush1.msra.mxu0 0.0
      %498 = vmatprep.subr.mxu0 0.0
      %499 = vmatpush1.msra.mxu0 0.0
      %500 = vmatprep.subr.mxu0 0.0
      %501 = vmatpush1.msra.mxu0 0.0
      %502 = vmatprep.subr.mxu0 0.0
      %503 = vmatpush1.msra.mxu0 0.0
      %504 = vmatprep.subr.mxu0 0.0
      %505 = vmatpush1.msra.mxu0 0.0
      %506 = vmatprep.subr.mxu0 0.0
      %507 = vmatpush1.msra.mxu0 0.0
      %508 = vmatprep.subr.mxu0 0.0
      %509 = vmatpush1.msra.mxu0 0.0
      %510 = vmatprep.subr.mxu0 0.0
      %511 = vmatpush1.msra.mxu0 0.0
      %512 = vmatprep.subr.mxu0 0.0
      %513 = vmatpush1.msra.mxu0 0.0
      %514 = vmatprep.subr.mxu0 0.0
      %515 = vmatpush1.msra.mxu0 0.0
      %516 = vmatprep.subr.mxu0 0.0
      %517 = vmatpush1.msra.mxu0 0.0
      %518 = vmatprep.subr.mxu0 0.0
      %519 = vmatpush1.msra.mxu0 0.0
      %520 = vmatprep.subr.mxu0 0.0
      %521 = vmatpush1.msra.mxu0 0.0
      %522 = vmatprep.subr.mxu0 0.0
      %523 = vmatpush1.msra.mxu0 0.0
      %524 = vmatprep.subr.mxu0 0.0
      %525 = vmatpush1.msra.mxu0 0.0
      %526 = vmatprep.subr.mxu0 0.0
      %527 = vmatpush1.msra.mxu0 0.0
      %528 = vmatprep.subr.mxu0 0.0
      %529 = vmatpush1.msra.mxu0 0.0
      %530 = vmatprep.subr.mxu0 0.0
      %531 = vmatpush1.msra.mxu0 0.0
      %532 = vmatprep.mubr.f32.mxu0 0.0
      %533 = vmatmul.mubr.f32.gmra.mrb[0].mxu0 %v466
      %v534 = vpop.f32.mrb[0].mxu0
      %v535 = vadd.f32 0.0, %v534
      %v536 = vpop.f32.mrb[0].mxu0
      %537 = vdwg.mxu0
      %v538 = vadd.f32 %v458, %v535
      %v539 = vld [vmem:[%s378 + $0x2] sm:$0x1]
      %s540 = scalar_lea.vmem %s1, 160
      %v541 = vld [vmem:[%s540] sm:$0xff]
      %v542 = vld [vmem:[%s540 + $0x8] sm:$0xff]
      %v543 = vld [vmem:[%s540 + $0x10] sm:$0xff]
      %v544 = vld [vmem:[%s540 + $0x18] sm:$0xff]
      %v546 = vsel %vm151, %v539, 0
      %548 = vmatprep.subr.mxu0 0.0
      %549 = vmatpush1.msra.mxu0 %v541
      %550 = vmatprep.subr.mxu0 0.0
      %551 = vmatpush1.msra.mxu0 %v542
      %552 = vmatprep.subr.mxu0 0.0
      %553 = vmatpush1.msra.mxu0 %v543
      %554 = vmatprep.subr.mxu0 0.0
      %555 = vmatpush1.msra.mxu0 %v544
      %556 = vmatprep.subr.mxu0 0.0
      %557 = vmatpush1.msra.mxu0 0.0
      %558 = vmatprep.subr.mxu0 0.0
      %559 = vmatpush1.msra.mxu0 0.0
      %560 = vmatprep.subr.mxu0 0.0
      %561 = vmatpush1.msra.mxu0 0.0
      %562 = vmatprep.subr.mxu0 0.0
      %563 = vmatpush1.msra.mxu0 0.0
      %564 = vmatprep.subr.mxu0 0.0
      %565 = vmatpush1.msra.mxu0 0.0
      %566 = vmatprep.subr.mxu0 0.0
      %567 = vmatpush1.msra.mxu0 0.0
      %568 = vmatprep.subr.mxu0 0.0
      %569 = vmatpush1.msra.mxu0 0.0
      %570 = vmatprep.subr.mxu0 0.0
      %571 = vmatpush1.msra.mxu0 0.0
      %572 = vmatprep.subr.mxu0 0.0
      %573 = vmatpush1.msra.mxu0 0.0
      %574 = vmatprep.subr.mxu0 0.0
      %575 = vmatpush1.msra.mxu0 0.0
      %576 = vmatprep.subr.mxu0 0.0
      %577 = vmatpush1.msra.mxu0 0.0
      %578 = vmatprep.subr.mxu0 0.0
      %579 = vmatpush1.msra.mxu0 0.0
      %580 = vmatprep.subr.mxu0 0.0
      %581 = vmatpush1.msra.mxu0 0.0
      %582 = vmatprep.subr.mxu0 0.0
      %583 = vmatpush1.msra.mxu0 0.0
      %584 = vmatprep.subr.mxu0 0.0
      %585 = vmatpush1.msra.mxu0 0.0
      %586 = vmatprep.subr.mxu0 0.0
      %587 = vmatpush1.msra.mxu0 0.0
      %588 = vmatprep.subr.mxu0 0.0
      %589 = vmatpush1.msra.mxu0 0.0
      %590 = vmatprep.subr.mxu0 0.0
      %591 = vmatpush1.msra.mxu0 0.0
      %592 = vmatprep.subr.mxu0 0.0
      %593 = vmatpush1.msra.mxu0 0.0
      %594 = vmatprep.subr.mxu0 0.0
      %595 = vmatpush1.msra.mxu0 0.0
      %596 = vmatprep.subr.mxu0 0.0
      %597 = vmatpush1.msra.mxu0 0.0
      %598 = vmatprep.subr.mxu0 0.0
      %599 = vmatpush1.msra.mxu0 0.0
      %600 = vmatprep.subr.mxu0 0.0
      %601 = vmatpush1.msra.mxu0 0.0
      %602 = vmatprep.subr.mxu0 0.0
      %603 = vmatpush1.msra.mxu0 0.0
      %604 = vmatprep.subr.mxu0 0.0
      %605 = vmatpush1.msra.mxu0 0.0
      %606 = vmatprep.subr.mxu0 0.0
      %607 = vmatpush1.msra.mxu0 0.0
      %608 = vmatprep.subr.mxu0 0.0
      %609 = vmatpush1.msra.mxu0 0.0
      %610 = vmatprep.subr.mxu0 0.0
      %611 = vmatpush1.msra.mxu0 0.0
      %612 = vmatprep.mubr.f32.mxu0 0.0
      %613 = vmatmul.mubr.f32.gmra.mrb[0].mxu0 %v546
      %v614 = vpop.f32.mrb[0].mxu0
      %v615 = vadd.f32 0.0, %v614
      %v616 = vpop.f32.mrb[0].mxu0
      %617 = vdwg.mxu0
      %v618 = vadd.f32 %v538, %v615
      %s619 = scalar_lea.vmem %s136, 8
      %v620 = vld [vmem:[%s619] sm:$0x1]
      %s621 = scalar_lea.vmem %s1, 192
      %v622 = vld [vmem:[%s621] sm:$0xff]
      %v623 = vld [vmem:[%s621 + $0x8] sm:$0xff]
      %v624 = vld [vmem:[%s621 + $0x10] sm:$0xff]
      %v625 = vld [vmem:[%s621 + $0x18] sm:$0xff]
      %v627 = vsel %vm151, %v620, 0
      %629 = vmatprep.subr.mxu0 0.0
      %630 = vmatpush1.msra.mxu0 %v622
      %631 = vmatprep.subr.mxu0 0.0
      %632 = vmatpush1.msra.mxu0 %v623
      %633 = vmatprep.subr.mxu0 0.0
      %634 = vmatpush1.msra.mxu0 %v624
      %635 = vmatprep.subr.mxu0 0.0
      %636 = vmatpush1.msra.mxu0 %v625
      %637 = vmatprep.subr.mxu0 0.0
      %638 = vmatpush1.msra.mxu0 0.0
      %639 = vmatprep.subr.mxu0 0.0
      %640 = vmatpush1.msra.mxu0 0.0
      %641 = vmatprep.subr.mxu0 0.0
      %642 = vmatpush1.msra.mxu0 0.0
      %643 = vmatprep.subr.mxu0 0.0
      %644 = vmatpush1.msra.mxu0 0.0
      %645 = vmatprep.subr.mxu0 0.0
      %646 = vmatpush1.msra.mxu0 0.0
      %647 = vmatprep.subr.mxu0 0.0
      %648 = vmatpush1.msra.mxu0 0.0
      %649 = vmatprep.subr.mxu0 0.0
      %650 = vmatpush1.msra.mxu0 0.0
      %651 = vmatprep.subr.mxu0 0.0
      %652 = vmatpush1.msra.mxu0 0.0
      %653 = vmatprep.subr.mxu0 0.0
      %654 = vmatpush1.msra.mxu0 0.0
      %655 = vmatprep.subr.mxu0 0.0
      %656 = vmatpush1.msra.mxu0 0.0
      %657 = vmatprep.subr.mxu0 0.0
      %658 = vmatpush1.msra.mxu0 0.0
      %659 = vmatprep.subr.mxu0 0.0
      %660 = vmatpush1.msra.mxu0 0.0
      %661 = vmatprep.subr.mxu0 0.0
      %662 = vmatpush1.msra.mxu0 0.0
      %663 = vmatprep.subr.mxu0 0.0
      %664 = vmatpush1.msra.mxu0 0.0
      %665 = vmatprep.subr.mxu0 0.0
      %666 = vmatpush1.msra.mxu0 0.0
      %667 = vmatprep.subr.mxu0 0.0
      %668 = vmatpush1.msra.mxu0 0.0
      %669 = vmatprep.subr.mxu0 0.0
      %670 = vmatpush1.msra.mxu0 0.0
      %671 = vmatprep.subr.mxu0 0.0
      %672 = vmatpush1.msra.mxu0 0.0
      %673 = vmatprep.subr.mxu0 0.0
      %674 = vmatpush1.msra.mxu0 0.0
      %675 = vmatprep.subr.mxu0 0.0
      %676 = vmatpush1.msra.mxu0 0.0
      %677 = vmatprep.subr.mxu0 0.0
      %678 = vmatpush1.msra.mxu0 0.0
      %679 = vmatprep.subr.mxu0 0.0
      %680 = vmatpush1.msra.mxu0 0.0
      %681 = vmatprep.subr.mxu0 0.0
      %682 = vmatpush1.msra.mxu0 0.0
      %683 = vmatprep.subr.mxu0 0.0
      %684 = vmatpush1.msra.mxu0 0.0
      %685 = vmatprep.subr.mxu0 0.0
      %686 = vmatpush1.msra.mxu0 0.0
      %687 = vmatprep.subr.mxu0 0.0
      %688 = vmatpush1.msra.mxu0 0.0
      %689 = vmatprep.subr.mxu0 0.0
      %690 = vmatpush1.msra.mxu0 0.0
      %691 = vmatprep.subr.mxu0 0.0
      %692 = vmatpush1.msra.mxu0 0.0
      %693 = vmatprep.mubr.f32.mxu0 0.0
      %694 = vmatmul.mubr.f32.gmra.mrb[0].mxu0 %v627
      %v695 = vpop.f32.mrb[0].mxu0
      %v696 = vadd.f32 0.0, %v695
      %v697 = vpop.f32.mrb[0].mxu0
      %698 = vdwg.mxu0
      %v699 = vadd.f32 %v618, %v696
      %v700 = vld [vmem:[%s619 + $0x1] sm:$0x1]
      %s701 = scalar_lea.vmem %s1, 224
      %v702 = vld [vmem:[%s701] sm:$0xff]
      %v703 = vld [vmem:[%s701 + $0x8] sm:$0xff]
      %v704 = vld [vmem:[%s701 + $0x10] sm:$0xff]
      %v705 = vld [vmem:[%s701 + $0x18] sm:$0xff]
      %v707 = vsel %vm151, %v700, 0
      %709 = vmatprep.subr.mxu0 0.0
      %710 = vmatpush1.msra.mxu0 %v702
      %711 = vmatprep.subr.mxu0 0.0
      %712 = vmatpush1.msra.mxu0 %v703
      %713 = vmatprep.subr.mxu0 0.0
      %714 = vmatpush1.msra.mxu0 %v704
      %715 = vmatprep.subr.mxu0 0.0
      %716 = vmatpush1.msra.mxu0 %v705
      %717 = vmatprep.subr.mxu0 0.0
      %718 = vmatpush1.msra.mxu0 0.0
      %719 = vmatprep.subr.mxu0 0.0
      %720 = vmatpush1.msra.mxu0 0.0
      %721 = vmatprep.subr.mxu0 0.0
      %722 = vmatpush1.msra.mxu0 0.0
      %723 = vmatprep.subr.mxu0 0.0
      %724 = vmatpush1.msra.mxu0 0.0
      %725 = vmatprep.subr.mxu0 0.0
      %726 = vmatpush1.msra.mxu0 0.0
      %727 = vmatprep.subr.mxu0 0.0
      %728 = vmatpush1.msra.mxu0 0.0
      %729 = vmatprep.subr.mxu0 0.0
      %730 = vmatpush1.msra.mxu0 0.0
      %731 = vmatprep.subr.mxu0 0.0
      %732 = vmatpush1.msra.mxu0 0.0
      %733 = vmatprep.subr.mxu0 0.0
      %734 = vmatpush1.msra.mxu0 0.0
      %735 = vmatprep.subr.mxu0 0.0
      %736 = vmatpush1.msra.mxu0 0.0
      %737 = vmatprep.subr.mxu0 0.0
      %738 = vmatpush1.msra.mxu0 0.0
      %739 = vmatprep.subr.mxu0 0.0
      %740 = vmatpush1.msra.mxu0 0.0
      %741 = vmatprep.subr.mxu0 0.0
      %742 = vmatpush1.msra.mxu0 0.0
      %743 = vmatprep.subr.mxu0 0.0
      %744 = vmatpush1.msra.mxu0 0.0
      %745 = vmatprep.subr.mxu0 0.0
      %746 = vmatpush1.msra.mxu0 0.0
      %747 = vmatprep.subr.mxu0 0.0
      %748 = vmatpush1.msra.mxu0 0.0
      %749 = vmatprep.subr.mxu0 0.0
      %750 = vmatpush1.msra.mxu0 0.0
      %751 = vmatprep.subr.mxu0 0.0
      %752 = vmatpush1.msra.mxu0 0.0
      %753 = vmatprep.subr.mxu0 0.0
      %754 = vmatpush1.msra.mxu0 0.0
      %755 = vmatprep.subr.mxu0 0.0
      %756 = vmatpush1.msra.mxu0 0.0
      %757 = vmatprep.subr.mxu0 0.0
      %758 = vmatpush1.msra.mxu0 0.0
      %759 = vmatprep.subr.mxu0 0.0
      %760 = vmatpush1.msra.mxu0 0.0
      %761 = vmatprep.subr.mxu0 0.0
      %762 = vmatpush1.msra.mxu0 0.0
      %763 = vmatprep.subr.mxu0 0.0
      %764 = vmatpush1.msra.mxu0 0.0
      %765 = vmatprep.subr.mxu0 0.0
      %766 = vmatpush1.msra.mxu0 0.0
      %767 = vmatprep.subr.mxu0 0.0
      %768 = vmatpush1.msra.mxu0 0.0
      %769 = vmatprep.subr.mxu0 0.0
      %770 = vmatpush1.msra.mxu0 0.0
      %771 = vmatprep.subr.mxu0 0.0
      %772 = vmatpush1.msra.mxu0 0.0
      %773 = vmatprep.mubr.f32.mxu0 0.0
      %774 = vmatmul.mubr.f32.gmra.mrb[0].mxu0 %v707
      %v775 = vpop.f32.mrb[0].mxu0
      %v776 = vadd.f32 0.0, %v775
      %v777 = vpop.f32.mrb[0].mxu0
      %778 = vdwg.mxu0
      %v779 = vadd.f32 %v699, %v776
      %v780 = vld [vmem:[%s619 + $0x2] sm:$0x1]
      %s781 = scalar_lea.vmem %s1, 256
      %v782 = vld [vmem:[%s781] sm:$0xff]
      %v783 = vld [vmem:[%s781 + $0x8] sm:$0xff]
      %v784 = vld [vmem:[%s781 + $0x10] sm:$0xff]
      %v785 = vld [vmem:[%s781 + $0x18] sm:$0xff]
      %v787 = vsel %vm151, %v780, 0
      %789 = vmatprep.subr.mxu0 0.0
      %790 = vmatpush1.msra.mxu0 %v782
      %791 = vmatprep.subr.mxu0 0.0
      %792 = vmatpush1.msra.mxu0 %v783
      %793 = vmatprep.subr.mxu0 0.0
      %794 = vmatpush1.msra.mxu0 %v784
      %795 = vmatprep.subr.mxu0 0.0
      %796 = vmatpush1.msra.mxu0 %v785
      %797 = vmatprep.subr.mxu0 0.0
      %798 = vmatpush1.msra.mxu0 0.0
      %799 = vmatprep.subr.mxu0 0.0
      %800 = vmatpush1.msra.mxu0 0.0
      %801 = vmatprep.subr.mxu0 0.0
      %802 = vmatpush1.msra.mxu0 0.0
      %803 = vmatprep.subr.mxu0 0.0
      %804 = vmatpush1.msra.mxu0 0.0
      %805 = vmatprep.subr.mxu0 0.0
      %806 = vmatpush1.msra.mxu0 0.0
      %807 = vmatprep.subr.mxu0 0.0
      %808 = vmatpush1.msra.mxu0 0.0
      %809 = vmatprep.subr.mxu0 0.0
      %810 = vmatpush1.msra.mxu0 0.0
      %811 = vmatprep.subr.mxu0 0.0
      %812 = vmatpush1.msra.mxu0 0.0
      %813 = vmatprep.subr.mxu0 0.0
      %814 = vmatpush1.msra.mxu0 0.0
      %815 = vmatprep.subr.mxu0 0.0
      %816 = vmatpush1.msra.mxu0 0.0
      %817 = vmatprep.subr.mxu0 0.0
      %818 = vmatpush1.msra.mxu0 0.0
      %819 = vmatprep.subr.mxu0 0.0
      %820 = vmatpush1.msra.mxu0 0.0
      %821 = vmatprep.subr.mxu0 0.0
      %822 = vmatpush1.msra.mxu0 0.0
      %823 = vmatprep.subr.mxu0 0.0
      %824 = vmatpush1.msra.mxu0 0.0
      %825 = vmatprep.subr.mxu0 0.0
      %826 = vmatpush1.msra.mxu0 0.0
      %827 = vmatprep.subr.mxu0 0.0
      %828 = vmatpush1.msra.mxu0 0.0
      %829 = vmatprep.subr.mxu0 0.0
      %830 = vmatpush1.msra.mxu0 0.0
      %831 = vmatprep.subr.mxu0 0.0
      %832 = vmatpush1.msra.mxu0 0.0
      %833 = vmatprep.subr.mxu0 0.0
      %834 = vmatpush1.msra.mxu0 0.0
      %835 = vmatprep.subr.mxu0 0.0
      %836 = vmatpush1.msra.mxu0 0.0
      %837 = vmatprep.subr.mxu0 0.0
      %838 = vmatpush1.msra.mxu0 0.0
      %839 = vmatprep.subr.mxu0 0.0
      %840 = vmatpush1.msra.mxu0 0.0
      %841 = vmatprep.subr.mxu0 0.0
      %842 = vmatpush1.msra.mxu0 0.0
      %843 = vmatprep.subr.mxu0 0.0
      %844 = vmatpush1.msra.mxu0 0.0
      %845 = vmatprep.subr.mxu0 0.0
      %846 = vmatpush1.msra.mxu0 0.0
      %847 = vmatprep.subr.mxu0 0.0
      %848 = vmatpush1.msra.mxu0 0.0
      %849 = vmatprep.subr.mxu0 0.0
      %850 = vmatpush1.msra.mxu0 0.0
      %851 = vmatprep.subr.mxu0 0.0
      %852 = vmatpush1.msra.mxu0 0.0
      %853 = vmatprep.mubr.f32.mxu0 0.0
      %854 = vmatmul.mubr.f32.gmra.mrb[0].mxu0 %v787
      %v855 = vpop.f32.mrb[0].mxu0
      %v856 = vadd.f32 0.0, %v855
      %v857 = vpop.f32.mrb[0].mxu0
      %858 = vdwg.mxu0
      %v859 = vadd.f32 %v779, %v856
      %vm860 = vcmask 57344
      %861 = vst.msk [vmem:[%s139] sm:$0x1] %vm860, %v859
      %p862 = scmp.lt.s32.totalorder %s13, 1
      %s863 = scalar_select %p862, %s13, 1
      %s864 = scalar_lea.vmem %s2, %s863
      // Predicated region
      $region29: #{multi_mri_fc_layers_forward.286} parent=27 // pred_check
        %p865 = pneg %p78
      $region30: #{multi_mri_fc_layers_forward.286} parent=27 // pred_check_branch
        %867 = sbr.rel (%p865) target = $region32
      $region31: #{multi_mri_fc_layers_forward.286} parent=27 // pred_region
        _
      $region32: #{multi_mri_fc_layers_forward.286} parent=27 // pred_fallthru
        _
    $region28: #{multi_mri_fc_layers_forward.286} parent=5 // pred_fallthru
      _
    %p868 = scmp.le.s32.totalorder 2, %s8
    // Predicated region
    $region33: #{multi_mri_fc_layers_forward.286} parent=5 // pred_check
      %p869 = pneg %p868
    $region34: #{multi_mri_fc_layers_forward.286} parent=5 // pred_check_branch
      %871 = sbr.rel (%p869) target = $region36
    $region35: #{multi_mri_fc_layers_forward.286} parent=5 // pred_region
      %s872 = ssub.s32 %s8, 2
      // Predicated region
      $region37: #{multi_mri_fc_layers_forward.286} parent=35 // pred_check
        %p873 = pneg %p84
      $region38: #{multi_mri_fc_layers_forward.286} parent=35 // pred_check_branch
        %875 = sbr.rel (%p873) target = $region40
      $region39: #{multi_mri_fc_layers_forward.286} parent=35 // pred_region
        %p876 = scmp.lt.s32.totalorder %s14, 1
        %s877 = scalar_select %p876, %s14, 1
        %s878 = scalar_lea.vmem %s2, %s877
      $region40: #{multi_mri_fc_layers_forward.286} parent=35 // pred_fallthru
        _
    $region36: #{multi_mri_fc_layers_forward.286} parent=5 // pred_fallthru
      _
  $region6: #{multi_mri_fc_layers_forward.286} parent=0 // loop_footer
    %s12 = sadd.s32 1, %s8
  $region7: #{multi_mri_fc_layers_forward.286} parent=0 // loop_footer_branch
    %7 = sbr.rel target = $region3
  $region8: #{multi_mri_fc_layers_forward.286} parent=0 // loop_exit
    _

// kernel: multi_mri_fc_layers_forward.289
$region0: #{multi_mri_fc_layers_forward.289}
  #allocation0 [shape = 'u32[]', space=smem, size = 0x4, offset = 0x4, fixed_abs, tag = 'smem constant byte address 0x4 - core index']
  #allocation1 [shape = 'u32[144,128]{1,0:T(1,128)}', space=vmem, size = 0x12000, scoped, tag = 'internal scratch']
  #allocation2 [shape = 'f32[2,2]{1,0:T(2,128)}', space=vmem, size = 0x400, scoped, tag = 'scratch operand']
  %s0 = inlined_call_operand.vmem [shape: f32[2,512], index: 0, kind: input, shape index: {}]
  %s1 = inlined_call_operand.vmem [shape: f32[512,2], index: 1, kind: input, shape index: {}]
  %s2 = inlined_call_operand.vmem [shape: f32[1,512], index: 2, kind: input, shape index: {}]
  %s3 = inlined_call_operand.vmem [shape: f32[1,512], index: 3, kind: input, shape index: {}]
  %s4 = inlined_call_operand.vmem [shape: f32[1,2], index: 4, kind: input, shape index: {}]
  %s5 = inlined_call_operand.hbm [shape: f32[2,2], index: 5, kind: output, shape index: {}]
  %s6 = sld [smem:[#allocation0]]
  $region38: #{multi_mri_fc_layers_forward.289} parent=0
    _
  %s8 = ssub.s32 1, %s6
  %s9 = scalar_select 0, %s8, %s6
  $region1: #{multi_mri_fc_layers_forward.289} parent=0
    #allocation3 [shape = 'u8[1024]{0}', space=vmem, size = 0x400, scoped, tag = 'output window, operand 0, single buffered']
    #allocation4 [shape = 's32[1]{0}', space=sflag, size = 0x4, scoped, tag = 'scoped memory for multi_mri_fc_layers_forward.289']
    %10 = vsyncpa [#allocation4], 0
    // Predicated region
    $region2: #{multi_mri_fc_layers_forward.289} parent=1 // pred_check
      _
    $region3: #{multi_mri_fc_layers_forward.289} parent=1 // pred_check_branch
      %12 = sbr.rel (0) target = $region5
    $region4: #{multi_mri_fc_layers_forward.289} parent=1 // pred_region
      _
    $region5: #{multi_mri_fc_layers_forward.289} parent=1 // pred_fallthru
      _
    // Predicated region
    $region6: #{multi_mri_fc_layers_forward.289} parent=1 // pred_check
      _
    $region7: #{multi_mri_fc_layers_forward.289} parent=1 // pred_check_branch
      %14 = sbr.rel (0) target = $region9
    $region8: #{multi_mri_fc_layers_forward.289} parent=1 // pred_region
      _
    $region9: #{multi_mri_fc_layers_forward.289} parent=1 // pred_fallthru
      _
    // Predicated region
    $region10: #{multi_mri_fc_layers_forward.289} parent=1 // pred_check
      _
    $region11: #{multi_mri_fc_layers_forward.289} parent=1 // pred_check_branch
      %16 = sbr.rel (0) target = $region13
    $region12: #{multi_mri_fc_layers_forward.289} parent=1 // pred_region
      _
    $region13: #{multi_mri_fc_layers_forward.289} parent=1 // pred_fallthru
      _
    // Predicated region
    $region14: #{multi_mri_fc_layers_forward.289} parent=1 // pred_check
      _
    $region15: #{multi_mri_fc_layers_forward.289} parent=1 // pred_check_branch
      %18 = sbr.rel (0) target = $region17
    $region16: #{multi_mri_fc_layers_forward.289} parent=1 // pred_region
      _
    $region17: #{multi_mri_fc_layers_forward.289} parent=1 // pred_fallthru
      _
    // Predicated region
    $region18: #{multi_mri_fc_layers_forward.289} parent=1 // pred_check
      _
    $region19: #{multi_mri_fc_layers_forward.289} parent=1 // pred_check_branch
      %20 = sbr.rel (0) target = $region21
    $region20: #{multi_mri_fc_layers_forward.289} parent=1 // pred_region
      _
    $region21: #{multi_mri_fc_layers_forward.289} parent=1 // pred_fallthru
      _
    %p21 = scmp.eq.s32.totalorder 0, 0
    // Predicated region
    $region22: #{multi_mri_fc_layers_forward.289} parent=1 // pred_check
      %p22 = pneg %p21
    $region23: #{multi_mri_fc_layers_forward.289} parent=1 // pred_check_branch
      %24 = sbr.rel (%p22) target = $region25
    $region24: #{multi_mri_fc_layers_forward.289} parent=1 // pred_region
      %vm25 = vcmask 9216
      %26 = vst.msk [vmem:[#allocation2] sm:$0x3] %vm25, 0.0
    $region25: #{multi_mri_fc_layers_forward.289} parent=1 // pred_fallthru
      _
    %v27 = vld [vmem:[%s0] sm:$0xff]
    %v28 = vld [vmem:[%s2] sm:$0xf]
    %v30 = vlaneseq
    %v31 = vshrl.u32 %v30, 7
    %v32 = vsub.s32 0, %v31
    %v33 = vrot.slane %v28, %v32
    %v34 = vlaneseq
    %v35 = vshrl.u32 %v34, 7
    %v36 = vsub.s32 1, %v35
    %v37 = vrot.slane %v28, %v36
    %v38 = vlaneseq
    %v39 = vshrl.u32 %v38, 7
    %v40 = vsub.s32 2, %v39
    %v41 = vrot.slane %v28, %v40
    %v42 = vlaneseq
    %v43 = vshrl.u32 %v42, 7
    %v44 = vsub.s32 3, %v43
    %v45 = vrot.slane %v28, %v44
    %v46 = vcombine.low %v33, %v37
    %v47 = vcombine.low %v41, %v45
    %v49 = vunpack.c.l.s4 1983009808
    %v50 = vunpack.c.0.s8 %v49
    %v51 = vlaneseq
    %v52 = vshrl.u32 %v51, 7
    %v53 = vsub.s32 %v50, %v52
    %v54 = vrot.slane %v46, %v53
    %v56 = vunpack.c.l.s4 1983009808
    %v57 = vunpack.c.0.s8 %v56
    %v58 = vlaneseq
    %v59 = vshrl.u32 %v58, 7
    %v60 = vsub.s32 %v57, %v59
    %v61 = vrot.slane %v47, %v60
    %v62 = vcombine.low %v54, %v61
    %v64 = vmul.f32 %v27, %v62
    %v65 = vld [vmem:[%s3] sm:$0xf]
    %v67 = vlaneseq
    %v68 = vshrl.u32 %v67, 7
    %v69 = vsub.s32 0, %v68
    %v70 = vrot.slane %v65, %v69
    %v71 = vlaneseq
    %v72 = vshrl.u32 %v71, 7
    %v73 = vsub.s32 1, %v72
    %v74 = vrot.slane %v65, %v73
    %v75 = vlaneseq
    %v76 = vshrl.u32 %v75, 7
    %v77 = vsub.s32 2, %v76
    %v78 = vrot.slane %v65, %v77
    %v79 = vlaneseq
    %v80 = vshrl.u32 %v79, 7
    %v81 = vsub.s32 3, %v80
    %v82 = vrot.slane %v65, %v81
    %v83 = vcombine.low %v70, %v74
    %v84 = vcombine.low %v78, %v82
    %v86 = vunpack.c.l.s4 1983009808
    %v87 = vunpack.c.0.s8 %v86
    %v88 = vlaneseq
    %v89 = vshrl.u32 %v88, 7
    %v90 = vsub.s32 %v87, %v89
    %v91 = vrot.slane %v83, %v90
    %v93 = vunpack.c.l.s4 1983009808
    %v94 = vunpack.c.0.s8 %v93
    %v95 = vlaneseq
    %v96 = vshrl.u32 %v95, 7
    %v97 = vsub.s32 %v94, %v96
    %v98 = vrot.slane %v84, %v97
    %v99 = vcombine.low %v91, %v98
    %v101 = vadd.f32 %v64, %v99
    %v102 = vld [vmem:[#allocation2] sm:$0x3]
    %v103 = vld [vmem:[%s1] sm:$0xff]
    %v104 = vld [vmem:[%s1 + $0x8] sm:$0xff]
    %v105 = vld [vmem:[%s1 + $0x10] sm:$0xff]
    %v106 = vld [vmem:[%s1 + $0x18] sm:$0xff]
    %v107 = vld [vmem:[%s1 + $0x20] sm:$0xff]
    %v108 = vld [vmem:[%s1 + $0x28] sm:$0xff]
    %v109 = vld [vmem:[%s1 + $0x30] sm:$0xff]
    %v110 = vld [vmem:[%s1 + $0x38] sm:$0xff]
    %v111 = vld [vmem:[%s1 + $0x40] sm:$0xff]
    %v112 = vld [vmem:[%s1 + $0x48] sm:$0xff]
    %v113 = vld [vmem:[%s1 + $0x50] sm:$0xff]
    %v114 = vld [vmem:[%s1 + $0x58] sm:$0xff]
    %v115 = vld [vmem:[%s1 + $0x60] sm:$0xff]
    %v116 = vld [vmem:[%s1 + $0x68] sm:$0xff]
    %v117 = vld [vmem:[%s1 + $0x70] sm:$0xff]
    %v118 = vld [vmem:[%s1 + $0x78] sm:$0xff]
    %v119 = vld [vmem:[%s1 + $0x80] sm:$0xff]
    %v120 = vld [vmem:[%s1 + $0x88] sm:$0xff]
    %v121 = vld [vmem:[%s1 + $0x90] sm:$0xff]
    %v122 = vld [vmem:[%s1 + $0x98] sm:$0xff]
    %v123 = vld [vmem:[%s1 + $0xa0] sm:$0xff]
    %v124 = vld [vmem:[%s1 + $0xa8] sm:$0xff]
    %v125 = vld [vmem:[%s1 + $0xb0] sm:$0xff]
    %v126 = vld [vmem:[%s1 + $0xb8] sm:$0xff]
    %v127 = vld [vmem:[%s1 + $0xc0] sm:$0xff]
    %v128 = vld [vmem:[%s1 + $0xc8] sm:$0xff]
    %v129 = vld [vmem:[%s1 + $0xd0] sm:$0xff]
    %v130 = vld [vmem:[%s1 + $0xd8] sm:$0xff]
    %v131 = vld [vmem:[%s1 + $0xe0] sm:$0xff]
    %v132 = vld [vmem:[%s1 + $0xe8] sm:$0xff]
    %v133 = vld [vmem:[%s1 + $0xf0] sm:$0xff]
    %v134 = vld [vmem:[%s1 + $0xf8] sm:$0xff]
    %v135 = vld [vmem:[%s1 + $0x100] sm:$0xff]
    %v136 = vld [vmem:[%s1 + $0x108] sm:$0xff]
    %v137 = vld [vmem:[%s1 + $0x110] sm:$0xff]
    %v138 = vld [vmem:[%s1 + $0x118] sm:$0xff]
    %v139 = vld [vmem:[%s1 + $0x120] sm:$0xff]
    %v140 = vld [vmem:[%s1 + $0x128] sm:$0xff]
    %v141 = vld [vmem:[%s1 + $0x130] sm:$0xff]
    %v142 = vld [vmem:[%s1 + $0x138] sm:$0xff]
    %v143 = vld [vmem:[%s1 + $0x140] sm:$0xff]
    %v144 = vld [vmem:[%s1 + $0x148] sm:$0xff]
    %v145 = vld [vmem:[%s1 + $0x150] sm:$0xff]
    %v146 = vld [vmem:[%s1 + $0x158] sm:$0xff]
    %v147 = vld [vmem:[%s1 + $0x160] sm:$0xff]
    %v148 = vld [vmem:[%s1 + $0x168] sm:$0xff]
    %v149 = vld [vmem:[%s1 + $0x170] sm:$0xff]
    %v150 = vld [vmem:[%s1 + $0x178] sm:$0xff]
    %v151 = vld [vmem:[%s1 + $0x180] sm:$0xff]
    %v152 = vld [vmem:[%s1 + $0x188] sm:$0xff]
    %v153 = vld [vmem:[%s1 + $0x190] sm:$0xff]
    %v154 = vld [vmem:[%s1 + $0x198] sm:$0xff]
    %v155 = vld [vmem:[%s1 + $0x1a0] sm:$0xff]
    %v156 = vld [vmem:[%s1 + $0x1a8] sm:$0xff]
    %v157 = vld [vmem:[%s1 + $0x1b0] sm:$0xff]
    %v158 = vld [vmem:[%s1 + $0x1b8] sm:$0xff]
    %v159 = vld [vmem:[%s1 + $0x1c0] sm:$0xff]
    %v160 = vld [vmem:[%s1 + $0x1c8] sm:$0xff]
    %v161 = vld [vmem:[%s1 + $0x1d0] sm:$0xff]
    %v162 = vld [vmem:[%s1 + $0x1d8] sm:$0xff]
    %v163 = vld [vmem:[%s1 + $0x1e0] sm:$0xff]
    %v164 = vld [vmem:[%s1 + $0x1e8] sm:$0xff]
    %v165 = vld [vmem:[%s1 + $0x1f0] sm:$0xff]
    %v166 = vld [vmem:[%s1 + $0x1f8] sm:$0xff]
    %v168 = vcombine.high %v101, %v101
    %v170 = vunpack.c.l.s4 1983009808
    %v171 = vunpack.c.0.s8 %v170
    %v172 = vlaneseq
    %v173 = vshrl.u32 %v172, 7
    %v174 = vsub.s32 %v171, %v173
    %v175 = vrot.slane %v101, %v174
    %v177 = vunpack.c.l.s4 1983009808
    %v178 = vunpack.c.0.s8 %v177
    %v179 = vlaneseq
    %v180 = vshrl.u32 %v179, 7
    %v181 = vsub.s32 %v178, %v180
    %v182 = vrot.slane %v168, %v181
    %v183 = vcombine.high %v175, %v175
    %v184 = vcombine.high %v182, %v182
    %189 = vmatprep.subr.mxu0 0.0
    %190 = vmatpush1.msra.mxu0 %v103
    %191 = vmatprep.subr.mxu0 0.0
    %192 = vmatpush1.msra.mxu0 %v104
    %193 = vmatprep.subr.mxu0 0.0
    %194 = vmatpush1.msra.mxu0 %v105
    %195 = vmatprep.subr.mxu0 0.0
    %196 = vmatpush1.msra.mxu0 %v106
    %197 = vmatprep.subr.mxu0 0.0
    %198 = vmatpush1.msra.mxu0 %v107
    %199 = vmatprep.subr.mxu0 0.0
    %200 = vmatpush1.msra.mxu0 %v108
    %201 = vmatprep.subr.mxu0 0.0
    %202 = vmatpush1.msra.mxu0 %v109
    %203 = vmatprep.subr.mxu0 0.0
    %204 = vmatpush1.msra.mxu0 %v110
    %205 = vmatprep.subr.mxu0 0.0
    %206 = vmatpush1.msra.mxu0 %v111
    %207 = vmatprep.subr.mxu0 0.0
    %208 = vmatpush1.msra.mxu0 %v112
    %209 = vmatprep.subr.mxu0 0.0
    %210 = vmatpush1.msra.mxu0 %v113
    %211 = vmatprep.subr.mxu0 0.0
    %212 = vmatpush1.msra.mxu0 %v114
    %213 = vmatprep.subr.mxu0 0.0
    %214 = vmatpush1.msra.mxu0 %v115
    %215 = vmatprep.subr.mxu0 0.0
    %216 = vmatpush1.msra.mxu0 %v116
    %217 = vmatprep.subr.mxu0 0.0
    %218 = vmatpush1.msra.mxu0 %v117
    %219 = vmatprep.subr.mxu0 0.0
    %220 = vmatpush1.msra.mxu0 %v118
    %221 = vmatprep.subr.mxu0 0.0
    %222 = vmatpush1.msra.mxu0 %v119
    %223 = vmatprep.subr.mxu0 0.0
    %224 = vmatpush1.msra.mxu0 %v120
    %225 = vmatprep.subr.mxu0 0.0
    %226 = vmatpush1.msra.mxu0 %v121
    %227 = vmatprep.subr.mxu0 0.0
    %228 = vmatpush1.msra.mxu0 %v122
    %229 = vmatprep.subr.mxu0 0.0
    %230 = vmatpush1.msra.mxu0 %v123
    %231 = vmatprep.subr.mxu0 0.0
    %232 = vmatpush1.msra.mxu0 %v124
    %233 = vmatprep.subr.mxu0 0.0
    %234 = vmatpush1.msra.mxu0 %v125
    %235 = vmatprep.subr.mxu0 0.0
    %236 = vmatpush1.msra.mxu0 %v126
    %237 = vmatprep.subr.mxu0 0.0
    %238 = vmatpush1.msra.mxu0 %v127
    %239 = vmatprep.subr.mxu0 0.0
    %240 = vmatpush1.msra.mxu0 %v128
    %241 = vmatprep.subr.mxu0 0.0
    %242 = vmatpush1.msra.mxu0 %v129
    %243 = vmatprep.subr.mxu0 0.0
    %244 = vmatpush1.msra.mxu0 %v130
    %245 = vmatprep.subr.mxu0 0.0
    %246 = vmatpush1.msra.mxu0 %v131
    %247 = vmatprep.subr.mxu0 0.0
    %248 = vmatpush1.msra.mxu0 %v132
    %249 = vmatprep.subr.mxu0 0.0
    %250 = vmatpush1.msra.mxu0 %v133
    %251 = vmatprep.subr.mxu0 0.0
    %252 = vmatpush1.msra.mxu0 %v134
    %253 = vmatprep.mubr.f32.mxu0 %v183
    %254 = vmatmul.mubr.f32.gmra.mrb[0].mxu0 %v175
    %v255 = vpop.f32.mrb[0].mxu0
    %v256 = vadd.f32 0.0, %v255
    %v257 = vpop.f32.mrb[0].mxu0
    %258 = vdwg.mxu0
    %259 = vmatprep.subr.mxu0 0.0
    %260 = vmatpush1.msra.mxu0 %v135
    %261 = vmatprep.subr.mxu0 0.0
    %262 = vmatpush1.msra.mxu0 %v136
    %263 = vmatprep.subr.mxu0 0.0
    %264 = vmatpush1.msra.mxu0 %v137
    %265 = vmatprep.subr.mxu0 0.0
    %266 = vmatpush1.msra.mxu0 %v138
    %267 = vmatprep.subr.mxu0 0.0
    %268 = vmatpush1.msra.mxu0 %v139
    %269 = vmatprep.subr.mxu0 0.0
    %270 = vmatpush1.msra.mxu0 %v140
    %271 = vmatprep.subr.mxu0 0.0
    %272 = vmatpush1.msra.mxu0 %v141
    %273 = vmatprep.subr.mxu0 0.0
    %274 = vmatpush1.msra.mxu0 %v142
    %275 = vmatprep.subr.mxu0 0.0
    %276 = vmatpush1.msra.mxu0 %v143
    %277 = vmatprep.subr.mxu0 0.0
    %278 = vmatpush1.msra.mxu0 %v144
    %279 = vmatprep.subr.mxu0 0.0
    %280 = vmatpush1.msra.mxu0 %v145
    %281 = vmatprep.subr.mxu0 0.0
    %282 = vmatpush1.msra.mxu0 %v146
    %283 = vmatprep.subr.mxu0 0.0
    %284 = vmatpush1.msra.mxu0 %v147
    %285 = vmatprep.subr.mxu0 0.0
    %286 = vmatpush1.msra.mxu0 %v148
    %287 = vmatprep.subr.mxu0 0.0
    %288 = vmatpush1.msra.mxu0 %v149
    %289 = vmatprep.subr.mxu0 0.0
    %290 = vmatpush1.msra.mxu0 %v150
    %291 = vmatprep.subr.mxu0 0.0
    %292 = vmatpush1.msra.mxu0 %v151
    %293 = vmatprep.subr.mxu0 0.0
    %294 = vmatpush1.msra.mxu0 %v152
    %295 = vmatprep.subr.mxu0 0.0
    %296 = vmatpush1.msra.mxu0 %v153
    %297 = vmatprep.subr.mxu0 0.0
    %298 = vmatpush1.msra.mxu0 %v154
    %299 = vmatprep.subr.mxu0 0.0
    %300 = vmatpush1.msra.mxu0 %v155
    %301 = vmatprep.subr.mxu0 0.0
    %302 = vmatpush1.msra.mxu0 %v156
    %303 = vmatprep.subr.mxu0 0.0
    %304 = vmatpush1.msra.mxu0 %v157
    %305 = vmatprep.subr.mxu0 0.0
    %306 = vmatpush1.msra.mxu0 %v158
    %307 = vmatprep.subr.mxu0 0.0
    %308 = vmatpush1.msra.mxu0 %v159
    %309 = vmatprep.subr.mxu0 0.0
    %310 = vmatpush1.msra.mxu0 %v160
    %311 = vmatprep.subr.mxu0 0.0
    %312 = vmatpush1.msra.mxu0 %v161
    %313 = vmatprep.subr.mxu0 0.0
    %314 = vmatpush1.msra.mxu0 %v162
    %315 = vmatprep.subr.mxu0 0.0
    %316 = vmatpush1.msra.mxu0 %v163
    %317 = vmatprep.subr.mxu0 0.0
    %318 = vmatpush1.msra.mxu0 %v164
    %319 = vmatprep.subr.mxu0 0.0
    %320 = vmatpush1.msra.mxu0 %v165
    %321 = vmatprep.subr.mxu0 0.0
    %322 = vmatpush1.msra.mxu0 %v166
    %323 = vmatprep.mubr.f32.mxu0 %v184
    %324 = vmatmul.mubr.f32.gmra.mrb[0].mxu0 %v182
    %v325 = vpop.f32.mrb[0].mxu0
    %v326 = vadd.f32 %v256, %v325
    %v327 = vpop.f32.mrb[0].mxu0
    %328 = vdwg.mxu0
    %v329 = vadd.f32 %v102, %v326
    %vm330 = vcmask 9216
    %331 = vst.msk [vmem:[#allocation2] sm:$0x3] %vm330, %v329
    // Predicated region
    $region26: #{multi_mri_fc_layers_forward.289} parent=1 // pred_check
      %p332 = pneg %p21
    $region27: #{multi_mri_fc_layers_forward.289} parent=1 // pred_check_branch
      %334 = sbr.rel (%p332) target = $region29
    $region28: #{multi_mri_fc_layers_forward.289} parent=1 // pred_region
      %v335 = vld [vmem:[#allocation2] sm:$0x3]
      %v336 = vld [vmem:[%s4] sm:$0x1]
      %v338 = vlaneseq
      %v339 = vshrl.u32 %v338, 7
      %v340 = vsub.s32 0, %v339
      %v341 = vrot.slane %v336, %v340
      %v343 = vadd.f32 %v335, %v341
      %344 = vst.msk [vmem:[#allocation3] sm:$0x3] %vm330, %v343
    $region29: #{multi_mri_fc_layers_forward.289} parent=1 // pred_fallthru
      _
    // Predicated region
    $region30: #{multi_mri_fc_layers_forward.289} parent=1 // pred_check
      _
    $region31: #{multi_mri_fc_layers_forward.289} parent=1 // pred_check_branch
      %346 = sbr.rel (0) target = $region33
    $region32: #{multi_mri_fc_layers_forward.289} parent=1 // pred_region
      %s348 = ssub.s32 32, 32
      %349 = vsyncadd [#allocation4], %s348
      %s351 = sshll.u32 [#allocation3], 4
      %s352 = int_to_ptr.vmem [resolvable:$true] %s351
      %354 = dma.vmem_to_hbm [thread:$0]  %s352, 32, %s5, [#allocation4]
    $region33: #{multi_mri_fc_layers_forward.289} parent=1 // pred_fallthru
      _
    // Predicated region
    $region34: #{multi_mri_fc_layers_forward.289} parent=1 // pred_check
      _
    $region35: #{multi_mri_fc_layers_forward.289} parent=1 // pred_check_branch
      %356 = sbr.rel (0) target = $region37
    $region36: #{multi_mri_fc_layers_forward.289} parent=1 // pred_region
      %357 = dma.done [#allocation4], 32
    $region37: #{multi_mri_fc_layers_forward.289} parent=1 // pred_fallthru
      _
    %358 = vsyncpa [#allocation4], 1

</llo_original>
